<compile_context>
chip_gen: v7x
topology: tpu7x:2x2x1
jax: 0.10.0
libtpu: 0.0.40
codegen_flags: <defaults>
</compile_context>

<pallas_src>
import functools

import jax
import jax.numpy as jnp
from jax.experimental import pallas as pl
from jax.experimental.pallas import tpu as pltpu

EPS = 1e-5
LANE = 128
F32B, BF16B = 4, 2


def _round_up(x, m):
    return (x + m - 1) // m * m


def _pick_row_tile(p):
    # Largest row tile (<=1024) that divides P while leaving >= 2 grid steps, so the
    # stats accumulation and the double-buffered pipeline are actually exercised.
    # P is a multiple of 8 (asserted by the caller) so t=8 always divides when P >= 16.
    for t in (1024, 512, 256, 128, 64, 32, 16, 8):
        if p % t == 0 and p // t >= 2:
            return t
    return p


def _vmem_limit(need_bytes):
    # Per-call scoped-VMEM limit from actual buffer sizes (2x headroom for compiler
    # temporaries), floored so small configs are never starved, capped below physical.
    return int(min(max(2 * need_bytes, 32 * 1024 * 1024), 96 * 1024 * 1024))


def _cparams(sem, need_bytes):
    return pltpu.CompilerParams(dimension_semantics=(sem,),
                                vmem_limit_bytes=_vmem_limit(need_bytes))


def _pad_last(a, target):
    pad = target - a.shape[-1]
    if pad == 0:
        return a
    return jnp.pad(a, [(0, 0)] * (a.ndim - 1) + [(0, pad)])


def _pad2(a, rows, cols):
    return jnp.pad(a, ((0, rows - a.shape[0]), (0, cols - a.shape[1])))


def _affine_from_stats(sum_row, sq_row, gamma, beta, count):
    # sum_row / sq_row: (1, C) per-channel sum and sum-of-squares over all N*H*W rows.
    mean = sum_row[0] / count
    var = jnp.maximum(sq_row[0] / count - mean * mean, 0.0)
    scale = gamma * jax.lax.rsqrt(var + EPS)
    shift = beta - mean * scale
    return scale[None, :], shift[None, :]


# ----------------------- pass 0: per-channel sum / sumsq of x --------------------------
def stats_kernel(x_ref, sum_ref, sq_ref):
    @pl.when(pl.program_id(0) == 0)
    def _():
        sum_ref[...] = jnp.zeros_like(sum_ref)
        sq_ref[...] = jnp.zeros_like(sq_ref)

    x = x_ref[...]
    sum_ref[...] += jnp.sum(x, axis=0, keepdims=True)
    sq_ref[...] += jnp.sum(x * x, axis=0, keepdims=True)


# --------------- pass 1: h1 = conv1(relu(bn1(x))) + stats of h1 (for bn2) --------------
def stage1_kernel(x_ref, s1_ref, t1_ref, w1_ref, c1b_ref, h1_ref, sum_ref, sq_ref):
    @pl.when(pl.program_id(0) == 0)
    def _():
        sum_ref[...] = jnp.zeros_like(sum_ref)
        sq_ref[...] = jnp.zeros_like(sq_ref)

    a = jnp.maximum(x_ref[...] * s1_ref[...] + t1_ref[...], 0.0)
    h = jnp.dot(a.astype(jnp.bfloat16), w1_ref[...],
                preferred_element_type=jnp.float32) + c1b_ref[...]
    h1_ref[...] = h.astype(jnp.bfloat16)          # bf16 HBM stream
    sum_ref[...] += jnp.sum(h, axis=0, keepdims=True)
    sq_ref[...] += jnp.sum(h * h, axis=0, keepdims=True)


# ----- pass 2: h2 = conv2_3x3(relu(bn2(h1))) fused per image + stats of h2 (for bn3) ---
def _make_stage2_kernel(height, width, margin):
    hw = height * width
    seg = hw + 2 * margin         # one variant segment (interior + zero halo rows)

    def stage2_kernel(h1_ref, s2_ref, t2_ref, w2_ref, c2b_ref,
                      h2_ref, sum_ref, sq_ref, vpad_ref):
        @pl.when(pl.program_id(0) == 0)
        def _():
            sum_ref[...] = jnp.zeros_like(sum_ref)
            sq_ref[...] = jnp.zeros_like(sq_ref)
            vpad_ref[...] = jnp.zeros_like(vpad_ref)   # zero the halo margins once

        # bn2 + ReLU in f32 (scale/shift from global batch stats).
        a = jnp.maximum(h1_ref[0].astype(jnp.float32) * s2_ref[...] + t2_ref[...], 0.0)

        # Three bf16 variants: full (centre taps), last-column-zeroed (kx==0 taps read
        # x-1, so source col W-1 is always out-of-image), first-column-zeroed (kx==2).
        # Built ONCE per image -> no per-tap masks in the tap windows.
        col = jax.lax.broadcasted_iota(jnp.int32, (hw, 1), 0) % width
        a_c = a.astype(jnp.bfloat16)
        a_r = jnp.where(col <= width - 2, a, 0.0).astype(jnp.bfloat16)
        a_l = jnp.where(col >= 1, a, 0.0).astype(jnp.bfloat16)
        vpad_ref[pl.ds(0 * seg + margin, hw), :] = a_c
        vpad_ref[pl.ds(1 * seg + margin, hw), :] = a_r
        vpad_ref[pl.ds(2 * seg + margin, hw), :] = a_l

        # 3x3 conv as ONE deep-K matmul: (HW, 9*C) bf16 im2col @ (9*C, C) bf16 weights.
        variant_of_kx = (1, 0, 2)     # kx==0 -> right-masked, kx==1 -> full, kx==2 -> left-masked
        wins = []
        for k in range(9):
            ky, kx = k // 3, k % 3
            shift = (ky - 1) * width + (kx - 1)
            base = variant_of_kx[kx] * seg + margin + shift
            wins.append(vpad_ref[pl.ds(base, hw), :])
        im2col = jnp.concatenate(wins, axis=-1)                       # (HW, 9*C) bf16
        h2 = jnp.dot(im2col, w2_ref[...],
                     preferred_element_type=jnp.float32) + c2b_ref[...]
        h2_ref[0] = h2.astype(jnp.bfloat16)        # bf16 HBM stream
        sum_ref[...] += jnp.sum(h2, axis=0, keepdims=True)
        sq_ref[...] += jnp.sum(h2 * h2, axis=0, keepdims=True)

    return stage2_kernel


# ------------ pass 3: out = conv3(relu(bn3(h2))) + residual (proj / identity) ----------
def _make_stage3_kernel(has_proj):
    if has_proj:
        def stage3_kernel(h2_ref, x_ref, s3_ref, t3_ref, w3_ref, c3b_ref,
                          w4_ref, c4b_ref, o_ref):
            a = jnp.maximum(h2_ref[...].astype(jnp.float32) * s3_ref[...] + t3_ref[...], 0.0)
            out = jnp.dot(a.astype(jnp.bfloat16), w3_ref[...],
                          preferred_element_type=jnp.float32) + c3b_ref[...]
            res = jnp.dot(x_ref[...].astype(jnp.bfloat16), w4_ref[...],
                          preferred_element_type=jnp.float32) + c4b_ref[...]
            o_ref[...] = out + res
    else:
        def stage3_kernel(h2_ref, x_ref, s3_ref, t3_ref, w3_ref, c3b_ref, o_ref):
            a = jnp.maximum(h2_ref[...].astype(jnp.float32) * s3_ref[...] + t3_ref[...], 0.0)
            out = jnp.dot(a.astype(jnp.bfloat16), w3_ref[...],
                          preferred_element_type=jnp.float32) + c3b_ref[...]
            o_ref[...] = out + x_ref[...]          # identity residual kept in f32
    return stage3_kernel


# ------------------------------------ forward ------------------------------------------
def bottleneck_forward(x_nchw, p, in_planes, out_planes):
    n, c_in, height, width = x_nchw.shape
    assert c_in == in_planes
    mid = out_planes // 2 if out_planes >= in_planes else in_planes // 2
    hw = height * width
    rows = n * hw
    assert rows % 8 == 0 and hw % 8 == 0

    cin_p = _round_up(in_planes, LANE)
    mid_p = _round_up(mid, LANE)
    cout_p = _round_up(out_planes, LANE)
    tp = _pick_row_tile(rows)
    margin = _round_up(width + 1, 8)        # halo rows above/below each flattened image
    seg = hw + 2 * margin
    f32, bf16 = jnp.float32, jnp.bfloat16
    has_proj = in_planes != out_planes

    # ---- lane-dense (zero-padded) parameter views; weights stored as bf16 for the MXU --
    g1, b1 = _pad_last(p["g1"], cin_p), _pad_last(p["b1"], cin_p)
    g2, b2 = _pad_last(p["g2"], mid_p), _pad_last(p["b2"], mid_p)
    g3, b3 = _pad_last(p["g3"], mid_p), _pad_last(p["b3"], mid_p)
    w1 = _pad2(p["w1_oihw"][:, :, 0, 0].T, cin_p, mid_p).astype(bf16)      # (Cin_p, Mid_p)
    c1b = _pad_last(p["c1b"], mid_p)[None, :]
    w2 = jnp.transpose(p["w2_oihw"], (2, 3, 1, 0)).reshape(9, mid, mid)    # (9, in, out)
    w2 = jnp.pad(w2, ((0, 0), (0, mid_p - mid), (0, mid_p - mid))).astype(bf16)
    w2_flat = w2.reshape(9 * mid_p, mid_p)                                 # deep-K weights
    c2b = _pad_last(p["c2b"], mid_p)[None, :]
    w3 = _pad2(p["w3_oihw"][:, :, 0, 0].T, mid_p, cout_p).astype(bf16)
    c3b = _pad_last(p["c3b"], cout_p)[None, :]
    if has_proj:
        w4 = _pad2(p["w4_oihw"][:, :, 0, 0].T, cin_p, cout_p).astype(bf16)
        c4b = _pad_last(p["c4b"], cout_p)[None, :]

    # NCHW -> lane-padded (P, Cin_p) activation matrix (rows ordered n, y, x).  This
    # transpose is interface cost only; inside a full network the (P, C) layout would be
    # carried across consecutive blocks.
    x2d = _pad_last(jnp.transpose(x_nchw, (0, 2, 3, 1)).reshape(rows, in_planes), cin_p)

    # -------- pass 0: batch statistics of x (for bn1), row-tiled accumulation ----------
    need0 = 2 * tp * cin_p * F32B + 4 * cin_p * F32B
    sum_x, sq_x = pl.pallas_call(
        stats_kernel,
        out_shape=(jax.ShapeDtypeStruct((1, cin_p), f32),
                   jax.ShapeDtypeStruct((1, cin_p), f32)),
        grid=(rows // tp,),
        in_specs=[pl.BlockSpec((tp, cin_p), lambda i: (i, 0))],
        out_specs=(pl.BlockSpec((1, cin_p), lambda i: (0, 0)),
                   pl.BlockSpec((1, cin_p), lambda i: (0, 0))),
        compiler_params=_cparams("arbitrary", need0),
    )(x2d)
    s1, t1 = _affine_from_stats(sum_x, sq_x, g1, b1, float(rows))

    # -------- pass 1: bn1 -> relu -> conv1 (1x1), row-tiled, + stats for bn2 -----------
    need1 = (2 * tp * cin_p * F32B + 2 * tp * mid_p * BF16B
             + 2 * cin_p * mid_p * BF16B + 6 * (cin_p + mid_p) * F32B
             + tp * mid_p * F32B)
    h1, sum1, sq1 = pl.pallas_call(
        stage1_kernel,
        out_shape=(jax.ShapeDtypeStruct((rows, mid_p), bf16),
                   jax.ShapeDtypeStruct((1, mid_p), f32),
                   jax.ShapeDtypeStruct((1, mid_p), f32)),
        grid=(rows // tp,),
        in_specs=[pl.BlockSpec((tp, cin_p), lambda i: (i, 0)),
                  pl.BlockSpec((1, cin_p), lambda i: (0, 0)),
                  pl.BlockSpec((1, cin_p), lambda i: (0, 0)),
                  pl.BlockSpec((cin_p, mid_p), lambda i: (0, 0)),
                  pl.BlockSpec((1, mid_p), lambda i: (0, 0))],
        out_specs=(pl.BlockSpec((tp, mid_p), lambda i: (i, 0)),
                   pl.BlockSpec((1, mid_p), lambda i: (0, 0)),
                   pl.BlockSpec((1, mid_p), lambda i: (0, 0))),
        compiler_params=_cparams("arbitrary", need1),
    )(x2d, s1, t1, w1, c1b)
    s2, t2 = _affine_from_stats(sum1, sq1, g2, b2, float(rows))

    # -------- pass 2: bn2 -> relu -> conv2 (3x3) fused in-kernel, + stats for bn3 ------
    need2 = (2 * hw * mid_p * BF16B * 2            # h1 in + h2 out, double-buffered
             + 2 * 9 * mid_p * mid_p * BF16B       # w2_flat, double-buffered
             + 3 * seg * mid_p * BF16B             # halo scratch (3 bf16 variants)
             + hw * 9 * mid_p * BF16B              # im2col value
             + 2 * hw * mid_p * F32B               # f32 bn activation + matmul result
             + 8 * mid_p * F32B)
    h2_img, sum2, sq2 = pl.pallas_call(
        _make_stage2_kernel(height, width, margin),
        out_shape=(jax.ShapeDtypeStruct((n, hw, mid_p), bf16),
                   jax.ShapeDtypeStruct((1, mid_p), f32),
                   jax.ShapeDtypeStruct((1, mid_p), f32)),
        grid=(n,),
        in_specs=[pl.BlockSpec((1, hw, mid_p), lambda i: (i, 0, 0)),
                  pl.BlockSpec((1, mid_p), lambda i: (0, 0)),
                  pl.BlockSpec((1, mid_p), lambda i: (0, 0)),
                  pl.BlockSpec((9 * mid_p, mid_p), lambda i: (0, 0)),
                  pl.BlockSpec((1, mid_p), lambda i: (0, 0))],
        out_specs=(pl.BlockSpec((1, hw, mid_p), lambda i: (i, 0, 0)),
                   pl.BlockSpec((1, mid_p), lambda i: (0, 0)),
                   pl.BlockSpec((1, mid_p), lambda i: (0, 0))),
        scratch_shapes=[pltpu.VMEM((3 * seg, mid_p), bf16)],
        compiler_params=_cparams("arbitrary", need2),
    )(h1.reshape(n, hw, mid_p), s2, t2, w2_flat, c2b)
    s3, t3 = _affine_from_stats(sum2, sq2, g3, b3, float(rows))

    # -------- pass 3: bn3 -> relu -> conv3 (1x1) + residual, row-tiled, "parallel" -----
    h2 = h2_img.reshape(rows, mid_p)
    operands = [h2, x2d, s3, t3, w3, c3b]
    in_specs = [pl.BlockSpec((tp, mid_p), lambda i: (i, 0)),
                pl.BlockSpec((tp, cin_p), lambda i: (i, 0)),
                pl.BlockSpec((1, mid_p), lambda i: (0, 0)),
                pl.BlockSpec((1, mid_p), lambda i: (0, 0)),
                pl.BlockSpec((mid_p, cout_p), lambda i: (0, 0)),
                pl.BlockSpec((1, cout_p), lambda i: (0, 0))]
    need3 = (2 * tp * mid_p * BF16B + 2 * tp * cin_p * F32B
             + 2 * tp * cout_p * F32B + 2 * mid_p * cout_p * BF16B
             + 8 * (mid_p + cout_p) * F32B)
    if has_proj:
        operands += [w4, c4b]
        in_specs += [pl.BlockSpec((cin_p, cout_p), lambda i: (0, 0)),
                     pl.BlockSpec((1, cout_p), lambda i: (0, 0))]
        need3 += 2 * cin_p * cout_p * BF16B
    out2d = pl.pallas_call(
        _make_stage3_kernel(has_proj),
        out_shape=jax.ShapeDtypeStruct((rows, cout_p), f32),
        grid=(rows // tp,),
        in_specs=in_specs,
        out_specs=pl.BlockSpec((tp, cout_p), lambda i: (i, 0)),
        compiler_params=_cparams("parallel", need3),
    )(*operands)

    out = out2d[:, :out_planes].reshape(n, height, width, out_planes)
    return jnp.transpose(out, (0, 3, 1, 2))


# ------------------------- reference (plain JAX, NCHW) ---------------------------------
def reference_forward(x, w, in_planes, out_planes):
    def bn(h, g, b):
        mean = h.mean(axis=(0, 2, 3), keepdims=True)
        var = ((h - mean) ** 2).mean(axis=(0, 2, 3), keepdims=True)
        return (h - mean) / jnp.sqrt(var + EPS) * g.reshape(1, -1, 1, 1) + b.reshape(1, -1, 1, 1)

    def conv(h, k, b, pad):
        y = jax.lax.conv_general_dilated(
            h, k, (1, 1), [(pad, pad), (pad, pad)],
            dimension_numbers=("NCHW", "OIHW", "NCHW"))
        return y + b.reshape(1, -1, 1, 1)

    out = jnp.maximum(bn(x, w["g1"], w["b1"]), 0.0)
    out = conv(out, w["w1_oihw"], w["c1b"], 0)
    out = jnp.maximum(bn(out, w["g2"], w["b2"]), 0.0)
    out = conv(out, w["w2_oihw"], w["c2b"], 1)
    out = jnp.maximum(bn(out, w["g3"], w["b3"]), 0.0)
    out = conv(out, w["w3_oihw"], w["c3b"], 0)
    residual = conv(x, w["w4_oihw"], w["c4b"], 0) if in_planes != out_planes else x
    return out + residual


def make_params(key, in_planes, out_planes):
    mid = out_planes // 2 if out_planes >= in_planes else in_planes // 2
    ks = jax.random.split(key, 14)
    return {
        "g1": 1.0 + 0.1 * jax.random.normal(ks[0], (in_planes,), jnp.float32),
        "b1": 0.1 * jax.random.normal(ks[1], (in_planes,), jnp.float32),
        "g2": 1.0 + 0.1 * jax.random.normal(ks[2], (mid,), jnp.float32),
        "b2": 0.1 * jax.random.normal(ks[3], (mid,), jnp.float32),
        "g3": 1.0 + 0.1 * jax.random.normal(ks[4], (mid,), jnp.float32),
        "b3": 0.1 * jax.random.normal(ks[5], (mid,), jnp.float32),
        "w1_oihw": 0.2 * jax.random.normal(ks[6], (mid, in_planes, 1, 1), jnp.float32),
        "c1b": 0.1 * jax.random.normal(ks[7], (mid,), jnp.float32),
        "w2_oihw": 0.2 * jax.random.normal(ks[8], (mid, mid, 3, 3), jnp.float32),
        "c2b": 0.1 * jax.random.normal(ks[9], (mid,), jnp.float32),
        "w3_oihw": 0.2 * jax.random.normal(ks[10], (out_planes, mid, 1, 1), jnp.float32),
        "c3b": 0.1 * jax.random.normal(ks[11], (out_planes,), jnp.float32),
        "w4_oihw": 0.2 * jax.random.normal(ks[12], (out_planes, in_planes, 1, 1), jnp.float32),
        "c4b": 0.1 * jax.random.normal(ks[13], (out_planes,), jnp.float32),
    }


if __name__ == "__main__":
    N, in_planes, out_planes, H, W = 2, 4, 8, 16, 16
    key = jax.random.PRNGKey(0)
    kx, kp = jax.random.split(key)
    x = jax.random.normal(kx, (N, in_planes, H, W), jnp.float32)
    params = make_params(kp, in_planes, out_planes)

    fwd = jax.jit(functools.partial(bottleneck_forward,
                                    in_planes=in_planes, out_planes=out_planes))
    out = jax.block_until_ready(fwd(x, params))

    ref = jax.block_until_ready(reference_forward(x, params, in_planes, out_planes))
    assert out.shape == (N, out_planes, H, W), out.shape
    max_err = float(jnp.max(jnp.abs(out - ref)))
    assert jnp.allclose(out, ref, atol=5e-2, rtol=5e-2), max_err
    print("KERNEL_OK")
</pallas_src>

<mosaic_0001>
module attributes {stable_mosaic.version = 11 : i64} {
  func.func @stats_kernel(%arg0: i32, %arg1: memref<256x128xf32, #tpu.memory_space<vmem>>, %arg2: memref<1x128xf32, #tpu.memory_space<vmem>>, %arg3: memref<1x128xf32, #tpu.memory_space<vmem>>) attributes {dimension_semantics = [#tpu.dimension_semantics<arbitrary>], iteration_bounds = array<i64: 2>, scalar_prefetch = 0 : i64, scratch_operands = 0 : i64, tpu.core_type = #tpu.core_type<tc>, window_params = [{transform_indices = @transform_0, window_bounds = array<i64: 256, 128>}, {pipeline_mode = #tpu.pipeline_mode<synchronous>, transform_indices = @transform_1, window_bounds = array<i64: 1, 128>}, {pipeline_mode = #tpu.pipeline_mode<synchronous>, transform_indices = @transform_2, window_bounds = array<i64: 1, 128>}]} {
    %c0_i32 = arith.constant 0 : i32
    %0 = arith.cmpi eq, %arg0, %c0_i32 : i32
    %1 = arith.extui %0 : i1 to i32
    %c0_i32_0 = arith.constant 0 : i32
    %2 = arith.cmpi ne, %1, %c0_i32_0 : i32
    scf.if %2 {
      %cst_11 = arith.constant 0.000000e+00 : f32
      %15 = vector.broadcast %cst_11 : f32 to vector<1x128xf32>
      %c0_12 = arith.constant 0 : index
      %c0_13 = arith.constant 0 : index
      %16 = vector.load %arg2[%c0_12, %c0_13] : memref<1x128xf32, #tpu.memory_space<vmem>>, vector<1x128xf32>
      tpu.vector_store %arg2[%c0_12, %c0_13], %15 {strides = array<i32>} : memref<1x128xf32, #tpu.memory_space<vmem>>, vector<1x128xf32>,
      %cst_14 = arith.constant 0.000000e+00 : f32
      %17 = vector.broadcast %cst_14 : f32 to vector<1x128xf32>
      %c0_15 = arith.constant 0 : index
      %c0_16 = arith.constant 0 : index
      %18 = vector.load %arg3[%c0_15, %c0_16] : memref<1x128xf32, #tpu.memory_space<vmem>>, vector<1x128xf32>
      tpu.vector_store %arg3[%c0_15, %c0_16], %17 {strides = array<i32>} : memref<1x128xf32, #tpu.memory_space<vmem>>, vector<1x128xf32>,
    } else {
    }
    %c0 = arith.constant 0 : index
    %c0_1 = arith.constant 0 : index
    %3 = vector.load %arg1[%c0, %c0_1] : memref<256x128xf32, #tpu.memory_space<vmem>>, vector<256x128xf32>
    %c0_2 = arith.constant 0 : index
    %c0_3 = arith.constant 0 : index
    %4 = vector.load %arg2[%c0_2, %c0_3] : memref<1x128xf32, #tpu.memory_space<vmem>>, vector<1x128xf32>
    %cst = arith.constant dense<0.000000e+00> : vector<128xf32>
    %5 = vector.multi_reduction <add>, %3, %cst [0] : vector<256x128xf32> to vector<128xf32>
    %6 = vector.shape_cast %5 : vector<128xf32> to vector<1x128xf32>
    %7 = arith.addf %4, %6 : vector<1x128xf32>
    %c0_4 = arith.constant 0 : index
    %c0_5 = arith.constant 0 : index
    %8 = vector.load %arg2[%c0_4, %c0_5] : memref<1x128xf32, #tpu.memory_space<vmem>>, vector<1x128xf32>
    tpu.vector_store %arg2[%c0_4, %c0_5], %7 {strides = array<i32>} : memref<1x128xf32, #tpu.memory_space<vmem>>, vector<1x128xf32>,
    %c0_6 = arith.constant 0 : index
    %c0_7 = arith.constant 0 : index
    %9 = vector.load %arg3[%c0_6, %c0_7] : memref<1x128xf32, #tpu.memory_space<vmem>>, vector<1x128xf32>
    %10 = arith.mulf %3, %3 : vector<256x128xf32>
    %cst_8 = arith.constant dense<0.000000e+00> : vector<128xf32>
    %11 = vector.multi_reduction <add>, %10, %cst_8 [0] : vector<256x128xf32> to vector<128xf32>
    %12 = vector.shape_cast %11 : vector<128xf32> to vector<1x128xf32>
    %13 = arith.addf %9, %12 : vector<1x128xf32>
    %c0_9 = arith.constant 0 : index
    %c0_10 = arith.constant 0 : index
    %14 = vector.load %arg3[%c0_9, %c0_10] : memref<1x128xf32, #tpu.memory_space<vmem>>, vector<1x128xf32>
    tpu.vector_store %arg3[%c0_9, %c0_10], %13 {strides = array<i32>} : memref<1x128xf32, #tpu.memory_space<vmem>>, vector<1x128xf32>,
    return
  }
  func.func @transform_0(%arg0: i32) -> (i32, i32) {
    %c0_i32 = arith.constant 0 : i32
    %c0_i32_0 = arith.constant 0 : i32
    return %arg0, %c0_i32 : i32, i32
  }
  func.func @transform_1(%arg0: i32) -> (i32, i32) {
    %c0_i32 = arith.constant 0 : i32
    %c0_i32_0 = arith.constant 0 : i32
    %c0_i32_1 = arith.constant 0 : i32
    return %c0_i32, %c0_i32_0 : i32, i32
  }
  func.func @transform_2(%arg0: i32) -> (i32, i32) {
    %c0_i32 = arith.constant 0 : i32
    %c0_i32_0 = arith.constant 0 : i32
    %c0_i32_1 = arith.constant 0 : i32
    return %c0_i32, %c0_i32_0 : i32, i32
  }
}

module attributes {stable_mosaic.version = 11 : i64} {
  func.func @stage1_kernel(%arg0: i32, %arg1: memref<256x128xf32, #tpu.memory_space<vmem>>, %arg2: memref<1x128xf32, #tpu.memory_space<vmem>>, %arg3: memref<1x128xf32, #tpu.memory_space<vmem>>, %arg4: memref<128x128xbf16, #tpu.memory_space<vmem>>, %arg5: memref<1x128xf32, #tpu.memory_space<vmem>>, %arg6: memref<256x128xbf16, #tpu.memory_space<vmem>>, %arg7: memref<1x128xf32, #tpu.memory_space<vmem>>, %arg8: memref<1x128xf32, #tpu.memory_space<vmem>>) attributes {dimension_semantics = [#tpu.dimension_semantics<arbitrary>], iteration_bounds = array<i64: 2>, scalar_prefetch = 0 : i64, scratch_operands = 0 : i64, tpu.core_type = #tpu.core_type<tc>, window_params = [{transform_indices = @transform_0, window_bounds = array<i64: 256, 128>}, {pipeline_mode = #tpu.pipeline_mode<synchronous>, transform_indices = @transform_1, window_bounds = array<i64: 1, 128>}, {pipeline_mode = #tpu.pipeline_mode<synchronous>, transform_indices = @transform_2, window_bounds = array<i64: 1, 128>}, {pipeline_mode = #tpu.pipeline_mode<synchronous>, transform_indices = @transform_3, window_bounds = array<i64: 128, 128>}, {pipeline_mode = #tpu.pipeline_mode<synchronous>, transform_indices = @transform_4, window_bounds = array<i64: 1, 128>}, {transform_indices = @transform_5, window_bounds = array<i64: 256, 128>}, {pipeline_mode = #tpu.pipeline_mode<synchronous>, transform_indices = @transform_6, window_bounds = array<i64: 1, 128>}, {pipeline_mode = #tpu.pipeline_mode<synchronous>, transform_indices = @transform_7, window_bounds = array<i64: 1, 128>}]} {
    %c0_i32 = arith.constant 0 : i32
    %0 = arith.cmpi eq, %arg0, %c0_i32 : i32
    %1 = arith.extui %0 : i1 to i32
    %c0_i32_0 = arith.constant 0 : i32
    %2 = arith.cmpi ne, %1, %c0_i32_0 : i32
    scf.if %2 {
      %cst_23 = arith.constant 0.000000e+00 : f32
      %31 = vector.broadcast %cst_23 : f32 to vector<1x128xf32>
      %c0_24 = arith.constant 0 : index
      %c0_25 = arith.constant 0 : index
      %32 = vector.load %arg7[%c0_24, %c0_25] : memref<1x128xf32, #tpu.memory_space<vmem>>, vector<1x128xf32>
      tpu.vector_store %arg7[%c0_24, %c0_25], %31 {strides = array<i32>} : memref<1x128xf32, #tpu.memory_space<vmem>>, vector<1x128xf32>,
      %cst_26 = arith.constant 0.000000e+00 : f32
      %33 = vector.broadcast %cst_26 : f32 to vector<1x128xf32>
      %c0_27 = arith.constant 0 : index
      %c0_28 = arith.constant 0 : index
      %34 = vector.load %arg8[%c0_27, %c0_28] : memref<1x128xf32, #tpu.memory_space<vmem>>, vector<1x128xf32>
      tpu.vector_store %arg8[%c0_27, %c0_28], %33 {strides = array<i32>} : memref<1x128xf32, #tpu.memory_space<vmem>>, vector<1x128xf32>,
    } else {
    }
    %c0 = arith.constant 0 : index
    %c0_1 = arith.constant 0 : index
    %3 = vector.load %arg1[%c0, %c0_1] : memref<256x128xf32, #tpu.memory_space<vmem>>, vector<256x128xf32>
    %c0_2 = arith.constant 0 : index
    %c0_3 = arith.constant 0 : index
    %4 = vector.load %arg2[%c0_2, %c0_3] : memref<1x128xf32, #tpu.memory_space<vmem>>, vector<1x128xf32>
    %5 = vector.broadcast %4 : vector<1x128xf32> to vector<256x128xf32>
    %6 = arith.mulf %3, %5 : vector<256x128xf32>
    %c0_4 = arith.constant 0 : index
    %c0_5 = arith.constant 0 : index
    %7 = vector.load %arg3[%c0_4, %c0_5] : memref<1x128xf32, #tpu.memory_space<vmem>>, vector<1x128xf32>
    %8 = vector.broadcast %7 : vector<1x128xf32> to vector<256x128xf32>
    %9 = arith.addf %6, %8 : vector<256x128xf32>
    %cst = arith.constant 0.000000e+00 : f32
    %10 = vector.broadcast %cst : f32 to vector<256x128xf32>
    %11 = arith.maximumf %9, %10 : vector<256x128xf32>
    %12 = arith.truncf %11 : vector<256x128xf32> to vector<256x128xbf16>
    %c0_6 = arith.constant 0 : index
    %c0_7 = arith.constant 0 : index
    %13 = vector.load %arg4[%c0_6, %c0_7] : memref<128x128xbf16, #tpu.memory_space<vmem>>, vector<128x128xbf16>
    %cst_8 = arith.constant dense<0.000000e+00> : vector<256x128xf32>
    %14 = tpu.matmul %12, %13, %cst_8 {dimension_numbers = #tpu.dot_dimension_numbers<[1], [0], [0], [1], [0, 0, 1, 1], [], []>} : vector<256x128xbf16>, vector<128x128xbf16>, vector<256x128xf32> -> vector<256x128xf32>
    %c0_9 = arith.constant 0 : index
    %c0_10 = arith.constant 0 : index
    %15 = vector.load %arg5[%c0_9, %c0_10] : memref<1x128xf32, #tpu.memory_space<vmem>>, vector<1x128xf32>
    %16 = vector.broadcast %15 : vector<1x128xf32> to vector<256x128xf32>
    %17 = arith.addf %14, %16 : vector<256x128xf32>
    %18 = arith.truncf %17 : vector<256x128xf32> to vector<256x128xbf16>
    %c0_11 = arith.constant 0 : index
    %c0_12 = arith.constant 0 : index
    %19 = vector.load %arg6[%c0_11, %c0_12] : memref<256x128xbf16, #tpu.memory_space<vmem>>, vector<256x128xbf16>
    tpu.vector_store %arg6[%c0_11, %c0_12], %18 {strides = array<i32>} : memref<256x128xbf16, #tpu.memory_space<vmem>>, vector<256x128xbf16>,
    %c0_13 = arith.constant 0 : index
    %c0_14 = arith.constant 0 : index
    %20 = vector.load %arg7[%c0_13, %c0_14] : memref<1x128xf32, #tpu.memory_space<vmem>>, vector<1x128xf32>
    %cst_15 = arith.constant dense<0.000000e+00> : vector<128xf32>
    %21 = vector.multi_reduction <add>, %17, %cst_15 [0] : vector<256x128xf32> to vector<128xf32>
    %22 = vector.shape_cast %21 : vector<128xf32> to vector<1x128xf32>
    %23 = arith.addf %20, %22 : vector<1x128xf32>
    %c0_16 = arith.constant 0 : index
    %c0_17 = arith.constant 0 : index
    %24 = vector.load %arg7[%c0_16, %c0_17] : memref<1x128xf32, #tpu.memory_space<vmem>>, vector<1x128xf32>
    tpu.vector_store %arg7[%c0_16, %c0_17], %23 {strides = array<i32>} : memref<1x128xf32, #tpu.memory_space<vmem>>, vector<1x128xf32>,
    %c0_18 = arith.constant 0 : index
    %c0_19 = arith.constant 0 : index
    %25 = vector.load %arg8[%c0_18, %c0_19] : memref<1x128xf32, #tpu.memory_space<vmem>>, vector<1x128xf32>
    %26 = arith.mulf %17, %17 : vector<256x128xf32>
    %cst_20 = arith.constant dense<0.000000e+00> : vector<128xf32>
    %27 = vector.multi_reduction <add>, %26, %cst_20 [0] : vector<256x128xf32> to vector<128xf32>
    %28 = vector.shape_cast %27 : vector<128xf32> to vector<1x128xf32>
    %29 = arith.addf %25, %28 : vector<1x128xf32>
    %c0_21 = arith.constant 0 : index
    %c0_22 = arith.constant 0 : index
    %30 = vector.load %arg8[%c0_21, %c0_22] : memref<1x128xf32, #tpu.memory_space<vmem>>, vector<1x128xf32>
    tpu.vector_store %arg8[%c0_21, %c0_22], %29 {strides = array<i32>} : memref<1x128xf32, #tpu.memory_space<vmem>>, vector<1x128xf32>,
    return
  }
  func.func @transform_0(%arg0: i32) -> (i32, i32) {
    %c0_i32 = arith.constant 0 : i32
    %c0_i32_0 = arith.constant 0 : i32
    return %arg0, %c0_i32 : i32, i32
  }
  func.func @transform_1(%arg0: i32) -> (i32, i32) {
    %c0_i32 = arith.constant 0 : i32
    %c0_i32_0 = arith.constant 0 : i32
    %c0_i32_1 = arith.constant 0 : i32
    return %c0_i32, %c0_i32_0 : i32, i32
  }
  func.func @transform_2(%arg0: i32) -> (i32, i32) {
    %c0_i32 = arith.constant 0 : i32
    %c0_i32_0 = arith.constant 0 : i32
    %c0_i32_1 = arith.constant 0 : i32
    return %c0_i32, %c0_i32_0 : i32, i32
  }
  func.func @transform_3(%arg0: i32) -> (i32, i32) {
    %c0_i32 = arith.constant 0 : i32
    %c0_i32_0 = arith.constant 0 : i32
    %c0_i32_1 = arith.constant 0 : i32
    return %c0_i32, %c0_i32_0 : i32, i32
  }
  func.func @transform_4(%arg0: i32) -> (i32, i32) {
    %c0_i32 = arith.constant 0 : i32
    %c0_i32_0 = arith.constant 0 : i32
    %c0_i32_1 = arith.constant 0 : i32
    return %c0_i32, %c0_i32_0 : i32, i32
  }
  func.func @transform_5(%arg0: i32) -> (i32, i32) {
    %c0_i32 = arith.constant 0 : i32
    %c0_i32_0 = arith.constant 0 : i32
    return %arg0, %c0_i32 : i32, i32
  }
  func.func @transform_6(%arg0: i32) -> (i32, i32) {
    %c0_i32 = arith.constant 0 : i32
    %c0_i32_0 = arith.constant 0 : i32
    %c0_i32_1 = arith.constant 0 : i32
    return %c0_i32, %c0_i32_0 : i32, i32
  }
  func.func @transform_7(%arg0: i32) -> (i32, i32) {
    %c0_i32 = arith.constant 0 : i32
    %c0_i32_0 = arith.constant 0 : i32
    %c0_i32_1 = arith.constant 0 : i32
    return %c0_i32, %c0_i32_0 : i32, i32
  }
}

module attributes {stable_mosaic.version = 11 : i64} {
  func.func @stage2_kernel(%arg0: i32, %arg1: memref<1x256x128xbf16, #tpu.memory_space<vmem>>, %arg2: memref<1x128xf32, #tpu.memory_space<vmem>>, %arg3: memref<1x128xf32, #tpu.memory_space<vmem>>, %arg4: memref<1152x128xbf16, #tpu.memory_space<vmem>>, %arg5: memref<1x128xf32, #tpu.memory_space<vmem>>, %arg6: memref<1x256x128xbf16, #tpu.memory_space<vmem>>, %arg7: memref<1x128xf32, #tpu.memory_space<vmem>>, %arg8: memref<1x128xf32, #tpu.memory_space<vmem>>, %arg9: memref<912x128xbf16, #tpu.memory_space<vmem>>) attributes {dimension_semantics = [#tpu.dimension_semantics<arbitrary>], iteration_bounds = array<i64: 2>, scalar_prefetch = 0 : i64, scratch_operands = 1 : i64, tpu.core_type = #tpu.core_type<tc>, window_params = [{transform_indices = @transform_0, window_bounds = array<i64: 1, 256, 128>}, {pipeline_mode = #tpu.pipeline_mode<synchronous>, transform_indices = @transform_1, window_bounds = array<i64: 1, 128>}, {pipeline_mode = #tpu.pipeline_mode<synchronous>, transform_indices = @transform_2, window_bounds = array<i64: 1, 128>}, {pipeline_mode = #tpu.pipeline_mode<synchronous>, transform_indices = @transform_3, window_bounds = array<i64: 1152, 128>}, {pipeline_mode = #tpu.pipeline_mode<synchronous>, transform_indices = @transform_4, window_bounds = array<i64: 1, 128>}, {transform_indices = @transform_5, window_bounds = array<i64: 1, 256, 128>}, {pipeline_mode = #tpu.pipeline_mode<synchronous>, transform_indices = @transform_6, window_bounds = array<i64: 1, 128>}, {pipeline_mode = #tpu.pipeline_mode<synchronous>, transform_indices = @transform_7, window_bounds = array<i64: 1, 128>}]} {
    %c0_i32 = arith.constant 0 : i32
    %0 = arith.cmpi eq, %arg0, %c0_i32 : i32
    %1 = arith.extui %0 : i1 to i32
    %c0_i32_0 = arith.constant 0 : i32
    %2 = arith.cmpi ne, %1, %c0_i32_0 : i32
    scf.if %2 {
      %cst_45 = arith.constant 0.000000e+00 : f32
      %79 = vector.broadcast %cst_45 : f32 to vector<1x128xf32>
      %c0_46 = arith.constant 0 : index
      %c0_47 = arith.constant 0 : index
      %80 = vector.load %arg7[%c0_46, %c0_47] : memref<1x128xf32, #tpu.memory_space<vmem>>, vector<1x128xf32>
      tpu.vector_store %arg7[%c0_46, %c0_47], %79 {strides = array<i32>} : memref<1x128xf32, #tpu.memory_space<vmem>>, vector<1x128xf32>,
      %cst_48 = arith.constant 0.000000e+00 : f32
      %81 = vector.broadcast %cst_48 : f32 to vector<1x128xf32>
      %c0_49 = arith.constant 0 : index
      %c0_50 = arith.constant 0 : index
      %82 = vector.load %arg8[%c0_49, %c0_50] : memref<1x128xf32, #tpu.memory_space<vmem>>, vector<1x128xf32>
      tpu.vector_store %arg8[%c0_49, %c0_50], %81 {strides = array<i32>} : memref<1x128xf32, #tpu.memory_space<vmem>>, vector<1x128xf32>,
      %cst_51 = arith.constant 0.000000e+00 : bf16
      %83 = vector.broadcast %cst_51 : bf16 to vector<912x128xbf16>
      %c0_52 = arith.constant 0 : index
      %c0_53 = arith.constant 0 : index
      %84 = vector.load %arg9[%c0_52, %c0_53] : memref<912x128xbf16, #tpu.memory_space<vmem>>, vector<912x128xbf16>
      tpu.vector_store %arg9[%c0_52, %c0_53], %83 {strides = array<i32>} : memref<912x128xbf16, #tpu.memory_space<vmem>>, vector<912x128xbf16>,
    } else {
    }
    %c0 = arith.constant 0 : index
    %c0_1 = arith.constant 0 : index
    %c0_2 = arith.constant 0 : index
    %3 = vector.load %arg1[%c0, %c0_1, %c0_2] : memref<1x256x128xbf16, #tpu.memory_space<vmem>>, vector<1x256x128xbf16>
    %4 = vector.shape_cast %3 : vector<1x256x128xbf16> to vector<256x128xbf16>
    %5 = arith.extf %4 : vector<256x128xbf16> to vector<256x128xf32>
    %c0_3 = arith.constant 0 : index
    %c0_4 = arith.constant 0 : index
    %6 = vector.load %arg2[%c0_3, %c0_4] : memref<1x128xf32, #tpu.memory_space<vmem>>, vector<1x128xf32>
    %7 = vector.broadcast %6 : vector<1x128xf32> to vector<256x128xf32>
    %8 = arith.mulf %5, %7 : vector<256x128xf32>
    %c0_5 = arith.constant 0 : index
    %c0_6 = arith.constant 0 : index
    %9 = vector.load %arg3[%c0_5, %c0_6] : memref<1x128xf32, #tpu.memory_space<vmem>>, vector<1x128xf32>
    %10 = vector.broadcast %9 : vector<1x128xf32> to vector<256x128xf32>
    %11 = arith.addf %8, %10 : vector<256x128xf32>
    %cst = arith.constant 0.000000e+00 : f32
    %12 = vector.broadcast %cst : f32 to vector<256x128xf32>
    %13 = arith.maximumf %11, %12 : vector<256x128xf32>
    %14 = tpu.iota {dimensions = array<i32: 0>} : vector<256x1xi32>
    %c16_i32 = arith.constant 16 : i32
    %c0_i32_7 = arith.constant 0 : i32
    %15 = arith.cmpi eq, %c16_i32, %c0_i32_7 : i32
    %c1_i32 = arith.constant 1 : i32
    %16 = arith.select %15, %c1_i32, %c16_i32 : i32
    %17 = vector.broadcast %16 : i32 to vector<256x1xi32>
    %18 = arith.remsi %14, %17 : vector<256x1xi32>
    %c0_i32_8 = arith.constant 0 : i32
    %19 = vector.broadcast %c0_i32_8 : i32 to vector<256x1xi32>
    %20 = arith.cmpi ne, %18, %19 : vector<256x1xi32>
    %c0_i32_9 = arith.constant 0 : i32
    %21 = vector.broadcast %c0_i32_9 : i32 to vector<256x1xi32>
    %22 = arith.cmpi slt, %18, %21 : vector<256x1xi32>
    %c0_i32_10 = arith.constant 0 : i32
    %23 = arith.cmpi slt, %16, %c0_i32_10 : i32
    %24 = vector.broadcast %23 : i1 to vector<256x1xi1>
    %25 = vector.broadcast %24 : vector<256x1xi1> to vector<256x1xi1>
    %26 = arith.xori %22, %25 : vector<256x1xi1>
    %27 = arith.andi %26, %20 : vector<256x1xi1>
    %28 = vector.broadcast %16 : i32 to vector<256x1xi32>
    %29 = arith.addi %18, %28 : vector<256x1xi32>
    %30 = arith.select %27, %29, %18 : vector<256x1xi1>, vector<256x1xi32>
    %31 = arith.truncf %13 : vector<256x128xf32> to vector<256x128xbf16>
    %c14_i32 = arith.constant 14 : i32
    %32 = vector.broadcast %c14_i32 : i32 to vector<256x1xi32>
    %33 = arith.cmpi sle, %30, %32 : vector<256x1xi32>
    %cst_11 = arith.constant 0.000000e+00 : f32
    %34 = vector.shape_cast %33 : vector<256x1xi1> to vector<256x1xi1>
    %35 = vector.broadcast %34 : vector<256x1xi1> to vector<256x128xi1>
    %36 = vector.broadcast %cst_11 : f32 to vector<256x128xf32>
    %37 = arith.select %35, %13, %36 : vector<256x128xi1>, vector<256x128xf32>
    %38 = arith.truncf %37 : vector<256x128xf32> to vector<256x128xbf16>
    %c1_i32_12 = arith.constant 1 : i32
    %39 = vector.broadcast %c1_i32_12 : i32 to vector<256x1xi32>
    %40 = arith.cmpi sge, %30, %39 : vector<256x1xi32>
    %cst_13 = arith.constant 0.000000e+00 : f32
    %41 = vector.shape_cast %40 : vector<256x1xi1> to vector<256x1xi1>
    %42 = vector.broadcast %41 : vector<256x1xi1> to vector<256x128xi1>
    %43 = vector.broadcast %cst_13 : f32 to vector<256x128xf32>
    %44 = arith.select %42, %13, %43 : vector<256x128xi1>, vector<256x128xf32>
    %45 = arith.truncf %44 : vector<256x128xf32> to vector<256x128xbf16>
    %c24 = arith.constant 24 : index
    %c0_14 = arith.constant 0 : index
    %46 = vector.load %arg9[%c24, %c0_14] : memref<912x128xbf16, #tpu.memory_space<vmem>>, vector<256x128xbf16>
    tpu.vector_store %arg9[%c24, %c0_14], %31 {strides = array<i32>} : memref<912x128xbf16, #tpu.memory_space<vmem>>, vector<256x128xbf16>,
    %c328 = arith.constant 328 : index
    %c0_15 = arith.constant 0 : index
    %47 = vector.load %arg9[%c328, %c0_15] : memref<912x128xbf16, #tpu.memory_space<vmem>>, vector<256x128xbf16>
    tpu.vector_store %arg9[%c328, %c0_15], %38 {strides = array<i32>} : memref<912x128xbf16, #tpu.memory_space<vmem>>, vector<256x128xbf16>,
    %c632 = arith.constant 632 : index
    %c0_16 = arith.constant 0 : index
    %48 = vector.load %arg9[%c632, %c0_16] : memref<912x128xbf16, #tpu.memory_space<vmem>>, vector<256x128xbf16>
    tpu.vector_store %arg9[%c632, %c0_16], %45 {strides = array<i32>} : memref<912x128xbf16, #tpu.memory_space<vmem>>, vector<256x128xbf16>,
    %c311 = arith.constant 311 : index
    %c0_17 = arith.constant 0 : index
    %49 = vector.load %arg9[%c311, %c0_17] : memref<912x128xbf16, #tpu.memory_space<vmem>>, vector<256x128xbf16>
    %c8 = arith.constant 8 : index
    %c0_18 = arith.constant 0 : index
    %50 = vector.load %arg9[%c8, %c0_18] : memref<912x128xbf16, #tpu.memory_space<vmem>>, vector<256x128xbf16>
    %c617 = arith.constant 617 : index
    %c0_19 = arith.constant 0 : index
    %51 = vector.load %arg9[%c617, %c0_19] : memref<912x128xbf16, #tpu.memory_space<vmem>>, vector<256x128xbf16>
    %c327 = arith.constant 327 : index
    %c0_20 = arith.constant 0 : index
    %52 = vector.load %arg9[%c327, %c0_20] : memref<912x128xbf16, #tpu.memory_space<vmem>>, vector<256x128xbf16>
    %c24_21 = arith.constant 24 : index
    %c0_22 = arith.constant 0 : index
    %53 = vector.load %arg9[%c24_21, %c0_22] : memref<912x128xbf16, #tpu.memory_space<vmem>>, vector<256x128xbf16>
    %c633 = arith.constant 633 : index
    %c0_23 = arith.constant 0 : index
    %54 = vector.load %arg9[%c633, %c0_23] : memref<912x128xbf16, #tpu.memory_space<vmem>>, vector<256x128xbf16>
    %c343 = arith.constant 343 : index
    %c0_24 = arith.constant 0 : index
    %55 = vector.load %arg9[%c343, %c0_24] : memref<912x128xbf16, #tpu.memory_space<vmem>>, vector<256x128xbf16>
    %c40 = arith.constant 40 : index
    %c0_25 = arith.constant 0 : index
    %56 = vector.load %arg9[%c40, %c0_25] : memref<912x128xbf16, #tpu.memory_space<vmem>>, vector<256x128xbf16>
    %c649 = arith.constant 649 : index
    %c0_26 = arith.constant 0 : index
    %57 = vector.load %arg9[%c649, %c0_26] : memref<912x128xbf16, #tpu.memory_space<vmem>>, vector<256x128xbf16>
    %58 = tpu.concatenate %49, %50, %51, %52, %53, %54, %55, %56, %57 in 1 : vector<256x128xbf16>, vector<256x128xbf16>, vector<256x128xbf16>, vector<256x128xbf16>, vector<256x128xbf16>, vector<256x128xbf16>, vector<256x128xbf16>, vector<256x128xbf16>, vector<256x128xbf16> -> vector<256x1152xbf16>
    %c0_27 = arith.constant 0 : index
    %c0_28 = arith.constant 0 : index
    %59 = vector.load %arg4[%c0_27, %c0_28] : memref<1152x128xbf16, #tpu.memory_space<vmem>>, vector<1152x128xbf16>
    %cst_29 = arith.constant dense<0.000000e+00> : vector<256x128xf32>
    %60 = tpu.matmul %58, %59, %cst_29 {dimension_numbers = #tpu.dot_dimension_numbers<[1], [0], [0], [1], [0, 0, 1, 1], [], []>} : vector<256x1152xbf16>, vector<1152x128xbf16>, vector<256x128xf32> -> vector<256x128xf32>
    %c0_30 = arith.constant 0 : index
    %c0_31 = arith.constant 0 : index
    %61 = vector.load %arg5[%c0_30, %c0_31] : memref<1x128xf32, #tpu.memory_space<vmem>>, vector<1x128xf32>
    %62 = vector.broadcast %61 : vector<1x128xf32> to vector<256x128xf32>
    %63 = arith.addf %60, %62 : vector<256x128xf32>
    %64 = arith.truncf %63 : vector<256x128xf32> to vector<256x128xbf16>
    %c0_32 = arith.constant 0 : index
    %c0_33 = arith.constant 0 : index
    %c0_34 = arith.constant 0 : index
    %65 = vector.load %arg6[%c0_32, %c0_33, %c0_34] : memref<1x256x128xbf16, #tpu.memory_space<vmem>>, vector<1x256x128xbf16>
    %66 = vector.shape_cast %65 : vector<1x256x128xbf16> to vector<256x128xbf16>
    %67 = vector.shape_cast %64 : vector<256x128xbf16> to vector<1x256x128xbf16>
    tpu.vector_store %arg6[%c0_32, %c0_33, %c0_34], %67 {strides = array<i32>} : memref<1x256x128xbf16, #tpu.memory_space<vmem>>, vector<1x256x128xbf16>,
    %c0_35 = arith.constant 0 : index
    %c0_36 = arith.constant 0 : index
    %68 = vector.load %arg7[%c0_35, %c0_36] : memref<1x128xf32, #tpu.memory_space<vmem>>, vector<1x128xf32>
    %cst_37 = arith.constant dense<0.000000e+00> : vector<128xf32>
    %69 = vector.multi_reduction <add>, %63, %cst_37 [0] : vector<256x128xf32> to vector<128xf32>
    %70 = vector.shape_cast %69 : vector<128xf32> to vector<1x128xf32>
    %71 = arith.addf %68, %70 : vector<1x128xf32>
    %c0_38 = arith.constant 0 : index
    %c0_39 = arith.constant 0 : index
    %72 = vector.load %arg7[%c0_38, %c0_39] : memref<1x128xf32, #tpu.memory_space<vmem>>, vector<1x128xf32>
    tpu.vector_store %arg7[%c0_38, %c0_39], %71 {strides = array<i32>} : memref<1x128xf32, #tpu.memory_space<vmem>>, vector<1x128xf32>,
    %c0_40 = arith.constant 0 : index
    %c0_41 = arith.constant 0 : index
    %73 = vector.load %arg8[%c0_40, %c0_41] : memref<1x128xf32, #tpu.memory_space<vmem>>, vector<1x128xf32>
    %74 = arith.mulf %63, %63 : vector<256x128xf32>
    %cst_42 = arith.constant dense<0.000000e+00> : vector<128xf32>
    %75 = vector.multi_reduction <add>, %74, %cst_42 [0] : vector<256x128xf32> to vector<128xf32>
    %76 = vector.shape_cast %75 : vector<128xf32> to vector<1x128xf32>
    %77 = arith.addf %73, %76 : vector<1x128xf32>
    %c0_43 = arith.constant 0 : index
    %c0_44 = arith.constant 0 : index
    %78 = vector.load %arg8[%c0_43, %c0_44] : memref<1x128xf32, #tpu.memory_space<vmem>>, vector<1x128xf32>
    tpu.vector_store %arg8[%c0_43, %c0_44], %77 {strides = array<i32>} : memref<1x128xf32, #tpu.memory_space<vmem>>, vector<1x128xf32>,
    return
  }
  func.func @transform_0(%arg0: i32) -> (i32, i32, i32) {
    %c0_i32 = arith.constant 0 : i32
    %c0_i32_0 = arith.constant 0 : i32
    %c0_i32_1 = arith.constant 0 : i32
    return %arg0, %c0_i32, %c0_i32_0 : i32, i32, i32
  }
  func.func @transform_1(%arg0: i32) -> (i32, i32) {
    %c0_i32 = arith.constant 0 : i32
    %c0_i32_0 = arith.constant 0 : i32
    %c0_i32_1 = arith.constant 0 : i32
    return %c0_i32, %c0_i32_0 : i32, i32
  }
  func.func @transform_2(%arg0: i32) -> (i32, i32) {
    %c0_i32 = arith.constant 0 : i32
    %c0_i32_0 = arith.constant 0 : i32
    %c0_i32_1 = arith.constant 0 : i32
    return %c0_i32, %c0_i32_0 : i32, i32
  }
  func.func @transform_3(%arg0: i32) -> (i32, i32) {
    %c0_i32 = arith.constant 0 : i32
    %c0_i32_0 = arith.constant 0 : i32
    %c0_i32_1 = arith.constant 0 : i32
    return %c0_i32, %c0_i32_0 : i32, i32
  }
  func.func @transform_4(%arg0: i32) -> (i32, i32) {
    %c0_i32 = arith.constant 0 : i32
    %c0_i32_0 = arith.constant 0 : i32
    %c0_i32_1 = arith.constant 0 : i32
    return %c0_i32, %c0_i32_0 : i32, i32
  }
  func.func @transform_5(%arg0: i32) -> (i32, i32, i32) {
    %c0_i32 = arith.constant 0 : i32
    %c0_i32_0 = arith.constant 0 : i32
    %c0_i32_1 = arith.constant 0 : i32
    return %arg0, %c0_i32, %c0_i32_0 : i32, i32, i32
  }
  func.func @transform_6(%arg0: i32) -> (i32, i32) {
    %c0_i32 = arith.constant 0 : i32
    %c0_i32_0 = arith.constant 0 : i32
    %c0_i32_1 = arith.constant 0 : i32
    return %c0_i32, %c0_i32_0 : i32, i32
  }
  func.func @transform_7(%arg0: i32) -> (i32, i32) {
    %c0_i32 = arith.constant 0 : i32
    %c0_i32_0 = arith.constant 0 : i32
    %c0_i32_1 = arith.constant 0 : i32
    return %c0_i32, %c0_i32_0 : i32, i32
  }
}

module attributes {stable_mosaic.version = 11 : i64} {
  func.func @stage3_kernel(%arg0: i32, %arg1: memref<256x128xbf16, #tpu.memory_space<vmem>>, %arg2: memref<256x128xf32, #tpu.memory_space<vmem>>, %arg3: memref<1x128xf32, #tpu.memory_space<vmem>>, %arg4: memref<1x128xf32, #tpu.memory_space<vmem>>, %arg5: memref<128x128xbf16, #tpu.memory_space<vmem>>, %arg6: memref<1x128xf32, #tpu.memory_space<vmem>>, %arg7: memref<128x128xbf16, #tpu.memory_space<vmem>>, %arg8: memref<1x128xf32, #tpu.memory_space<vmem>>, %arg9: memref<256x128xf32, #tpu.memory_space<vmem>>) attributes {dimension_semantics = [#tpu.dimension_semantics<parallel>], iteration_bounds = array<i64: 2>, scalar_prefetch = 0 : i64, scratch_operands = 0 : i64, tpu.core_type = #tpu.core_type<tc>, window_params = [{transform_indices = @transform_0, window_bounds = array<i64: 256, 128>}, {transform_indices = @transform_1, window_bounds = array<i64: 256, 128>}, {pipeline_mode = #tpu.pipeline_mode<synchronous>, transform_indices = @transform_2, window_bounds = array<i64: 1, 128>}, {pipeline_mode = #tpu.pipeline_mode<synchronous>, transform_indices = @transform_3, window_bounds = array<i64: 1, 128>}, {pipeline_mode = #tpu.pipeline_mode<synchronous>, transform_indices = @transform_4, window_bounds = array<i64: 128, 128>}, {pipeline_mode = #tpu.pipeline_mode<synchronous>, transform_indices = @transform_5, window_bounds = array<i64: 1, 128>}, {pipeline_mode = #tpu.pipeline_mode<synchronous>, transform_indices = @transform_6, window_bounds = array<i64: 128, 128>}, {pipeline_mode = #tpu.pipeline_mode<synchronous>, transform_indices = @transform_7, window_bounds = array<i64: 1, 128>}, {transform_indices = @transform_8, window_bounds = array<i64: 256, 128>}]} {
    %c0 = arith.constant 0 : index
    %c0_0 = arith.constant 0 : index
    %0 = vector.load %arg1[%c0, %c0_0] : memref<256x128xbf16, #tpu.memory_space<vmem>>, vector<256x128xbf16>
    %1 = arith.extf %0 : vector<256x128xbf16> to vector<256x128xf32>
    %c0_1 = arith.constant 0 : index
    %c0_2 = arith.constant 0 : index
    %2 = vector.load %arg3[%c0_1, %c0_2] : memref<1x128xf32, #tpu.memory_space<vmem>>, vector<1x128xf32>
    %3 = vector.broadcast %2 : vector<1x128xf32> to vector<256x128xf32>
    %4 = arith.mulf %1, %3 : vector<256x128xf32>
    %c0_3 = arith.constant 0 : index
    %c0_4 = arith.constant 0 : index
    %5 = vector.load %arg4[%c0_3, %c0_4] : memref<1x128xf32, #tpu.memory_space<vmem>>, vector<1x128xf32>
    %6 = vector.broadcast %5 : vector<1x128xf32> to vector<256x128xf32>
    %7 = arith.addf %4, %6 : vector<256x128xf32>
    %cst = arith.constant 0.000000e+00 : f32
    %8 = vector.broadcast %cst : f32 to vector<256x128xf32>
    %9 = arith.maximumf %7, %8 : vector<256x128xf32>
    %10 = arith.truncf %9 : vector<256x128xf32> to vector<256x128xbf16>
    %c0_5 = arith.constant 0 : index
    %c0_6 = arith.constant 0 : index
    %11 = vector.load %arg5[%c0_5, %c0_6] : memref<128x128xbf16, #tpu.memory_space<vmem>>, vector<128x128xbf16>
    %cst_7 = arith.constant dense<0.000000e+00> : vector<256x128xf32>
    %12 = tpu.matmul %10, %11, %cst_7 {dimension_numbers = #tpu.dot_dimension_numbers<[1], [0], [0], [1], [0, 0, 1, 1], [], []>} : vector<256x128xbf16>, vector<128x128xbf16>, vector<256x128xf32> -> vector<256x128xf32>
    %c0_8 = arith.constant 0 : index
    %c0_9 = arith.constant 0 : index
    %13 = vector.load %arg6[%c0_8, %c0_9] : memref<1x128xf32, #tpu.memory_space<vmem>>, vector<1x128xf32>
    %14 = vector.broadcast %13 : vector<1x128xf32> to vector<256x128xf32>
    %15 = arith.addf %12, %14 : vector<256x128xf32>
    %c0_10 = arith.constant 0 : index
    %c0_11 = arith.constant 0 : index
    %16 = vector.load %arg2[%c0_10, %c0_11] : memref<256x128xf32, #tpu.memory_space<vmem>>, vector<256x128xf32>
    %17 = arith.truncf %16 : vector<256x128xf32> to vector<256x128xbf16>
    %c0_12 = arith.constant 0 : index
    %c0_13 = arith.constant 0 : index
    %18 = vector.load %arg7[%c0_12, %c0_13] : memref<128x128xbf16, #tpu.memory_space<vmem>>, vector<128x128xbf16>
    %cst_14 = arith.constant dense<0.000000e+00> : vector<256x128xf32>
    %19 = tpu.matmul %17, %18, %cst_14 {dimension_numbers = #tpu.dot_dimension_numbers<[1], [0], [0], [1], [0, 0, 1, 1], [], []>} : vector<256x128xbf16>, vector<128x128xbf16>, vector<256x128xf32> -> vector<256x128xf32>
    %c0_15 = arith.constant 0 : index
    %c0_16 = arith.constant 0 : index
    %20 = vector.load %arg8[%c0_15, %c0_16] : memref<1x128xf32, #tpu.memory_space<vmem>>, vector<1x128xf32>
    %21 = vector.broadcast %20 : vector<1x128xf32> to vector<256x128xf32>
    %22 = arith.addf %19, %21 : vector<256x128xf32>
    %23 = arith.addf %15, %22 : vector<256x128xf32>
    %c0_17 = arith.constant 0 : index
    %c0_18 = arith.constant 0 : index
    %24 = vector.load %arg9[%c0_17, %c0_18] : memref<256x128xf32, #tpu.memory_space<vmem>>, vector<256x128xf32>
    tpu.vector_store %arg9[%c0_17, %c0_18], %23 {strides = array<i32>} : memref<256x128xf32, #tpu.memory_space<vmem>>, vector<256x128xf32>,
    return
  }
  func.func @transform_0(%arg0: i32) -> (i32, i32) {
    %c0_i32 = arith.constant 0 : i32
    %c0_i32_0 = arith.constant 0 : i32
    return %arg0, %c0_i32 : i32, i32
  }
  func.func @transform_1(%arg0: i32) -> (i32, i32) {
    %c0_i32 = arith.constant 0 : i32
    %c0_i32_0 = arith.constant 0 : i32
    return %arg0, %c0_i32 : i32, i32
  }
  func.func @transform_2(%arg0: i32) -> (i32, i32) {
    %c0_i32 = arith.constant 0 : i32
    %c0_i32_0 = arith.constant 0 : i32
    %c0_i32_1 = arith.constant 0 : i32
    return %c0_i32, %c0_i32_0 : i32, i32
  }
  func.func @transform_3(%arg0: i32) -> (i32, i32) {
    %c0_i32 = arith.constant 0 : i32
    %c0_i32_0 = arith.constant 0 : i32
    %c0_i32_1 = arith.constant 0 : i32
    return %c0_i32, %c0_i32_0 : i32, i32
  }
  func.func @transform_4(%arg0: i32) -> (i32, i32) {
    %c0_i32 = arith.constant 0 : i32
    %c0_i32_0 = arith.constant 0 : i32
    %c0_i32_1 = arith.constant 0 : i32
    return %c0_i32, %c0_i32_0 : i32, i32
  }
  func.func @transform_5(%arg0: i32) -> (i32, i32) {
    %c0_i32 = arith.constant 0 : i32
    %c0_i32_0 = arith.constant 0 : i32
    %c0_i32_1 = arith.constant 0 : i32
    return %c0_i32, %c0_i32_0 : i32, i32
  }
  func.func @transform_6(%arg0: i32) -> (i32, i32) {
    %c0_i32 = arith.constant 0 : i32
    %c0_i32_0 = arith.constant 0 : i32
    %c0_i32_1 = arith.constant 0 : i32
    return %c0_i32, %c0_i32_0 : i32, i32
  }
  func.func @transform_7(%arg0: i32) -> (i32, i32) {
    %c0_i32 = arith.constant 0 : i32
    %c0_i32_0 = arith.constant 0 : i32
    %c0_i32_1 = arith.constant 0 : i32
    return %c0_i32, %c0_i32_0 : i32, i32
  }
  func.func @transform_8(%arg0: i32) -> (i32, i32) {
    %c0_i32 = arith.constant 0 : i32
    %c0_i32_0 = arith.constant 0 : i32
    return %arg0, %c0_i32 : i32, i32
  }
}

</mosaic_0001>

<llo_original>
// kernel: bottleneck_forward.4
$region0: #{bottleneck_forward.4}
  #allocation0 [shape = 'u32[]', space=smem, size = 0x4, offset = 0x4, fixed_abs, tag = 'smem constant byte address 0x4 - core index']
  #allocation1 [shape = 'u32[144,128]{1,0:T(1,128)}', space=vmem, size = 0x12000, scoped, tag = 'internal scratch']
  %s0 = inlined_call_operand.vmem [shape: f32[512,128], index: 0, kind: input, shape index: {}]
  %s1 = inlined_call_operand.vmem [shape: f32[1,128], index: 1, kind: output, shape index: {0}]
  %s2 = inlined_call_operand.vmem [shape: f32[1,128], index: 2, kind: output, shape index: {1}]
  %3 = xla_tuple %s1, %s2
  %s4 = sld [smem:[#allocation0]]
  $region49: #{bottleneck_forward.4} parent=0
    _
  %s6 = ssub.s32 1, %s4
  %s7 = scalar_select 0, %s6, %s4
  loop: start=0, step=1, limit=4
  $region2: #{bottleneck_forward.4} parent=0 // loop_pre_header
    _
  $region3: #{bottleneck_forward.4} parent=0 // loop_header
    %s9 = sphi 0, %s13
    %p10 = scmp.ge.s32.totalorder %s9, 4
    %s19 = sphi 0, %s21
    %s22 = sphi 0, %s19
    %s23 = sphi 0, %s22
    %s39 = sphi 0, %s23
    %s43 = sphi 0, %s43
    %s45 = sphi 0, %s43
    %s46 = sphi 0, %s45
    %s60 = sphi 0, %s46
    %s64 = sphi 0, %s64
    %s66 = sphi 0, %s64
    %s67 = sphi 0, %s66
    %s81 = sphi 0, %s67
  $region4: #{bottleneck_forward.4} parent=0 // loop_header_branch
    %12 = sbr.rel (%p10) target = $region8
  $region5: #{bottleneck_forward.4} parent=0 // loop_body
    %s14 = ssub.s32 %s9, 1
    %s15 = ssub.s32 %s9, 2
    %s16 = sadd.s32 %s9, 1
    %s17 = ssub.s32 %s9, %s16
    %p18 = scmp.eq.s32.totalorder %s17, 0
    %s20 = sadd.s32 %s19, 1
    %s21 = scalar_select %p18, %s19, %s20
    %p24 = pneg %p18
    %p25 = scmp.eq.s32.totalorder %s9, 1
    %p26 = por %p24, %p25
    %p27 = scmp.ne.s32.totalorder %s19, %s22
    %p28 = scmp.eq.s32.totalorder %s9, 0
    %p29 = por %p27, %p28
    %p30 = scmp.ne.s32.totalorder %s19, %s22
    %p31 = scmp.eq.s32.totalorder %s14, 1
    %p32 = por %p30, %p31
    %p33 = scmp.ne.s32.totalorder %s22, %s23
    %p34 = scmp.eq.s32.totalorder %s14, 0
    %p35 = por %p33, %p34
    %p36 = scmp.ne.s32.totalorder %s22, %s23
    %p37 = scmp.eq.s32.totalorder %s15, 1
    %p38 = por %p36, %p37
    %p40 = scmp.ne.s32.totalorder %s23, %s39
    %p41 = scmp.eq.s32.totalorder %s15, 0
    %p42 = por %p40, %p41
    %s44 = sadd.s32 %s43, 1
    %p47 = scmp.eq.s32.totalorder %s9, 1
    %p48 = scmp.ne.s32.totalorder %s43, %s45
    %p49 = scmp.eq.s32.totalorder %s9, 0
    %p50 = por %p48, %p49
    %p51 = scmp.ne.s32.totalorder %s43, %s45
    %p52 = scmp.eq.s32.totalorder %s14, 1
    %p53 = por %p51, %p52
    %p54 = scmp.ne.s32.totalorder %s45, %s46
    %p55 = scmp.eq.s32.totalorder %s14, 0
    %p56 = por %p54, %p55
    %p57 = scmp.ne.s32.totalorder %s45, %s46
    %p58 = scmp.eq.s32.totalorder %s15, 1
    %p59 = por %p57, %p58
    %p61 = scmp.ne.s32.totalorder %s46, %s60
    %p62 = scmp.eq.s32.totalorder %s15, 0
    %p63 = por %p61, %p62
    %s65 = sadd.s32 %s64, 1
    %p68 = scmp.eq.s32.totalorder %s9, 1
    %p69 = scmp.ne.s32.totalorder %s64, %s66
    %p70 = scmp.eq.s32.totalorder %s9, 0
    %p71 = por %p69, %p70
    %p72 = scmp.ne.s32.totalorder %s64, %s66
    %p73 = scmp.eq.s32.totalorder %s14, 1
    %p74 = por %p72, %p73
    %p75 = scmp.ne.s32.totalorder %s66, %s67
    %p76 = scmp.eq.s32.totalorder %s14, 0
    %p77 = por %p75, %p76
    %p78 = scmp.ne.s32.totalorder %s66, %s67
    %p79 = scmp.eq.s32.totalorder %s15, 1
    %p80 = por %p78, %p79
    %p82 = scmp.ne.s32.totalorder %s67, %s81
    %p83 = scmp.eq.s32.totalorder %s15, 0
    %p84 = por %p82, %p83
    %p85 = scmp.le.s32.totalorder 1, %s9
    %p86 = scmp.lt.s32.totalorder %s9, 3
    %p87 = pnand %p85, %p86
    %p88 = pneg %p87
    // Predicated region
    $region9: #{bottleneck_forward.4} parent=5 // pred_check
      _
    $region10: #{bottleneck_forward.4} parent=5 // pred_check_branch
      %90 = sbr.rel (%p87) target = $region12
    $region11: #{bottleneck_forward.4} parent=5 // pred_region
      %s91 = ssub.s32 %s9, 1
    $region12: #{bottleneck_forward.4} parent=5 // pred_fallthru
      _
    %p92 = scmp.lt.s32.totalorder %s9, 2
    // Predicated region
    $region13: #{bottleneck_forward.4} parent=5 // pred_check
      %p93 = pneg %p92
    $region14: #{bottleneck_forward.4} parent=5 // pred_check_branch
      %95 = sbr.rel (%p93) target = $region16
    $region15: #{bottleneck_forward.4} parent=5 // pred_region
      // Predicated region
      $region17: #{bottleneck_forward.4} parent=15 // pred_check
        %p96 = pneg %p29
      $region18: #{bottleneck_forward.4} parent=15 // pred_check_branch
        %98 = sbr.rel (%p96) target = $region20
      $region19: #{bottleneck_forward.4} parent=15 // pred_region
        %s99 = smul.u32 32, %s9
        %p100 = scmp.lt.s32.totalorder %s99, 63
        %s101 = scalar_select %p100, %s99, 63
        %s102 = smul.addr %s101, 8
        %s103 = scalar_lea.vmem %s0, %s102
        %s104 = smul.u32 32, %s9
      $region20: #{bottleneck_forward.4} parent=15 // pred_fallthru
        _
    $region16: #{bottleneck_forward.4} parent=5 // pred_fallthru
      _
    %p105 = scmp.le.s32.totalorder 1, %s9
    %p106 = scmp.lt.s32.totalorder %s9, 3
    %p107 = pnand %p105, %p106
    %p108 = pneg %p107
    // Predicated region
    $region21: #{bottleneck_forward.4} parent=5 // pred_check
      _
    $region22: #{bottleneck_forward.4} parent=5 // pred_check_branch
      %110 = sbr.rel (%p107) target = $region24
    $region23: #{bottleneck_forward.4} parent=5 // pred_region
      %s111 = ssub.s32 %s9, 1
      %s112 = smul.u32 32, %s14
      %p113 = scmp.lt.s32.totalorder %s112, 63
      %s114 = scalar_select %p113, %s112, 63
      %s115 = smul.addr %s114, 8
      %s116 = scalar_lea.vmem %s0, %s115
      %p117 = pneg %p35
      %p118 = pneg %p32
      %p119 = pneg %p56
      %p120 = pneg %p53
      %p121 = pneg %p77
      %p122 = pneg %p74
      %s123 = smul.u32 32, %s14
      %p124 = scmp.lt.s32.totalorder %s123, 63
      %s125 = scalar_select %p124, %s123, 63
      %s126 = smul.addr %s125, 8
      %s127 = scalar_lea.vmem %s0, %s126
      %s128 = smul.u32 32, %s14
      %p129 = scmp.eq.s32.totalorder %s14, 0
      // Predicated region
      $region25: #{bottleneck_forward.4} parent=23 // pred_check
        %p130 = pneg %p129
      $region26: #{bottleneck_forward.4} parent=23 // pred_check_branch
        %132 = sbr.rel (%p130) target = $region28
      $region27: #{bottleneck_forward.4} parent=23 // pred_region
        %133 = vst [vmem:[%s1] sm:$0x1] 0.0
        %134 = vst [vmem:[%s2] sm:$0x1] 0.0
      $region28: #{bottleneck_forward.4} parent=23 // pred_fallthru
        _
      %v135 = vld [vmem:[%s127] sm:$0xff]
      %v136 = vld [vmem:[%s127 + $0x8] sm:$0xff]
      %v137 = vld [vmem:[%s127 + $0x10] sm:$0xff]
      %v138 = vld [vmem:[%s127 + $0x18] sm:$0xff]
      %v139 = vld [vmem:[%s127 + $0x20] sm:$0xff]
      %v140 = vld [vmem:[%s127 + $0x28] sm:$0xff]
      %v141 = vld [vmem:[%s127 + $0x30] sm:$0xff]
      %v142 = vld [vmem:[%s127 + $0x38] sm:$0xff]
      %v143 = vld [vmem:[%s127 + $0x40] sm:$0xff]
      %v144 = vld [vmem:[%s127 + $0x48] sm:$0xff]
      %v145 = vld [vmem:[%s127 + $0x50] sm:$0xff]
      %v146 = vld [vmem:[%s127 + $0x58] sm:$0xff]
      %v147 = vld [vmem:[%s127 + $0x60] sm:$0xff]
      %v148 = vld [vmem:[%s127 + $0x68] sm:$0xff]
      %v149 = vld [vmem:[%s127 + $0x70] sm:$0xff]
      %v150 = vld [vmem:[%s127 + $0x78] sm:$0xff]
      %v151 = vld [vmem:[%s127 + $0x80] sm:$0xff]
      %v152 = vld [vmem:[%s127 + $0x88] sm:$0xff]
      %v153 = vld [vmem:[%s127 + $0x90] sm:$0xff]
      %v154 = vld [vmem:[%s127 + $0x98] sm:$0xff]
      %v155 = vld [vmem:[%s127 + $0xa0] sm:$0xff]
      %v156 = vld [vmem:[%s127 + $0xa8] sm:$0xff]
      %v157 = vld [vmem:[%s127 + $0xb0] sm:$0xff]
      %v158 = vld [vmem:[%s127 + $0xb8] sm:$0xff]
      %v159 = vld [vmem:[%s127 + $0xc0] sm:$0xff]
      %v160 = vld [vmem:[%s127 + $0xc8] sm:$0xff]
      %v161 = vld [vmem:[%s127 + $0xd0] sm:$0xff]
      %v162 = vld [vmem:[%s127 + $0xd8] sm:$0xff]
      %v163 = vld [vmem:[%s127 + $0xe0] sm:$0xff]
      %v164 = vld [vmem:[%s127 + $0xe8] sm:$0xff]
      %v165 = vld [vmem:[%s127 + $0xf0] sm:$0xff]
      %v166 = vld [vmem:[%s127 + $0xf8] sm:$0xff]
      %v167 = vld [vmem:[%s1] sm:$0x1]
      %v168 = vadd.f32 %v135, %v136
      %v169 = vadd.f32 %v168, %v137
      %v170 = vadd.f32 %v169, %v138
      %v171 = vadd.f32 %v170, %v139
      %v172 = vadd.f32 %v171, %v140
      %v173 = vadd.f32 %v172, %v141
      %v174 = vadd.f32 %v173, %v142
      %v175 = vadd.f32 %v174, %v143
      %v176 = vadd.f32 %v175, %v144
      %v177 = vadd.f32 %v176, %v145
      %v178 = vadd.f32 %v177, %v146
      %v179 = vadd.f32 %v178, %v147
      %v180 = vadd.f32 %v179, %v148
      %v181 = vadd.f32 %v180, %v149
      %v182 = vadd.f32 %v181, %v150
      %v183 = vadd.f32 %v182, %v151
      %v184 = vadd.f32 %v183, %v152
      %v185 = vadd.f32 %v184, %v153
      %v186 = vadd.f32 %v185, %v154
      %v187 = vadd.f32 %v186, %v155
      %v188 = vadd.f32 %v187, %v156
      %v189 = vadd.f32 %v188, %v157
      %v190 = vadd.f32 %v189, %v158
      %v191 = vadd.f32 %v190, %v159
      %v192 = vadd.f32 %v191, %v160
      %v193 = vadd.f32 %v192, %v161
      %v194 = vadd.f32 %v193, %v162
      %v195 = vadd.f32 %v194, %v163
      %v196 = vadd.f32 %v195, %v164
      %v197 = vadd.f32 %v196, %v165
      %v198 = vadd.f32 %v197, %v166
      %v199 = vrot.slane %v198, 4
      %v200 = vadd.f32 %v198, %v199
      %v201 = vrot.slane %v200, 2
      %v202 = vadd.f32 %v200, %v201
      %v203 = vrot.slane %v202, 1
      %v204 = vadd.f32 %v202, %v203
      %v205 = vadd.f32 %v167, %v204
      %206 = vst [vmem:[%s1] sm:$0x1] %v205
      %v207 = vld [vmem:[%s2] sm:$0x1]
      %v208 = vmul.f32 %v135, %v135
      %v209 = vmul.f32 %v136, %v136
      %v210 = vmul.f32 %v137, %v137
      %v211 = vmul.f32 %v138, %v138
      %v212 = vmul.f32 %v139, %v139
      %v213 = vmul.f32 %v140, %v140
      %v214 = vmul.f32 %v141, %v141
      %v215 = vmul.f32 %v142, %v142
      %v216 = vmul.f32 %v143, %v143
      %v217 = vmul.f32 %v144, %v144
      %v218 = vmul.f32 %v145, %v145
      %v219 = vmul.f32 %v146, %v146
      %v220 = vmul.f32 %v147, %v147
      %v221 = vmul.f32 %v148, %v148
      %v222 = vmul.f32 %v149, %v149
      %v223 = vmul.f32 %v150, %v150
      %v224 = vmul.f32 %v151, %v151
      %v225 = vmul.f32 %v152, %v152
      %v226 = vmul.f32 %v153, %v153
      %v227 = vmul.f32 %v154, %v154
      %v228 = vmul.f32 %v155, %v155
      %v229 = vmul.f32 %v156, %v156
      %v230 = vmul.f32 %v157, %v157
      %v231 = vmul.f32 %v158, %v158
      %v232 = vmul.f32 %v159, %v159
      %v233 = vmul.f32 %v160, %v160
      %v234 = vmul.f32 %v161, %v161
      %v235 = vmul.f32 %v162, %v162
      %v236 = vmul.f32 %v163, %v163
      %v237 = vmul.f32 %v164, %v164
      %v238 = vmul.f32 %v165, %v165
      %v239 = vmul.f32 %v166, %v166
      %v240 = vadd.f32 %v208, %v209
      %v241 = vadd.f32 %v240, %v210
      %v242 = vadd.f32 %v241, %v211
      %v243 = vadd.f32 %v242, %v212
      %v244 = vadd.f32 %v243, %v213
      %v245 = vadd.f32 %v244, %v214
      %v246 = vadd.f32 %v245, %v215
      %v247 = vadd.f32 %v246, %v216
      %v248 = vadd.f32 %v247, %v217
      %v249 = vadd.f32 %v248, %v218
      %v250 = vadd.f32 %v249, %v219
      %v251 = vadd.f32 %v250, %v220
      %v252 = vadd.f32 %v251, %v221
      %v253 = vadd.f32 %v252, %v222
      %v254 = vadd.f32 %v253, %v223
      %v255 = vadd.f32 %v254, %v224
      %v256 = vadd.f32 %v255, %v225
      %v257 = vadd.f32 %v256, %v226
      %v258 = vadd.f32 %v257, %v227
      %v259 = vadd.f32 %v258, %v228
      %v260 = vadd.f32 %v259, %v229
      %v261 = vadd.f32 %v260, %v230
      %v262 = vadd.f32 %v261, %v231
      %v263 = vadd.f32 %v262, %v232
      %v264 = vadd.f32 %v263, %v233
      %v265 = vadd.f32 %v264, %v234
      %v266 = vadd.f32 %v265, %v235
      %v267 = vadd.f32 %v266, %v236
      %v268 = vadd.f32 %v267, %v237
      %v269 = vadd.f32 %v268, %v238
      %v270 = vadd.f32 %v269, %v239
      %v271 = vrot.slane %v270, 4
      %v272 = vadd.f32 %v270, %v271
      %v273 = vrot.slane %v272, 2
      %v274 = vadd.f32 %v272, %v273
      %v275 = vrot.slane %v274, 1
      %v276 = vadd.f32 %v274, %v275
      %v277 = vadd.f32 %v207, %v276
      %278 = vst [vmem:[%s2] sm:$0x1] %v277
      // Predicated region
      $region29: #{bottleneck_forward.4} parent=23 // pred_check
        %p279 = pneg %p53
      $region30: #{bottleneck_forward.4} parent=23 // pred_check_branch
        %281 = sbr.rel (%p279) target = $region32
      $region31: #{bottleneck_forward.4} parent=23 // pred_region
        _
      $region32: #{bottleneck_forward.4} parent=23 // pred_fallthru
        _
      // Predicated region
      $region33: #{bottleneck_forward.4} parent=23 // pred_check
        %p282 = pneg %p74
      $region34: #{bottleneck_forward.4} parent=23 // pred_check_branch
        %284 = sbr.rel (%p282) target = $region36
      $region35: #{bottleneck_forward.4} parent=23 // pred_region
        _
      $region36: #{bottleneck_forward.4} parent=23 // pred_fallthru
        _
      // Predicated region
      $region37: #{bottleneck_forward.4} parent=23 // pred_check
        %p285 = pneg %p53
      $region38: #{bottleneck_forward.4} parent=23 // pred_check_branch
        %287 = sbr.rel (%p285) target = $region40
      $region39: #{bottleneck_forward.4} parent=23 // pred_region
        _
      $region40: #{bottleneck_forward.4} parent=23 // pred_fallthru
        _
      // Predicated region
      $region41: #{bottleneck_forward.4} parent=23 // pred_check
        %p288 = pneg %p74
      $region42: #{bottleneck_forward.4} parent=23 // pred_check_branch
        %290 = sbr.rel (%p288) target = $region44
      $region43: #{bottleneck_forward.4} parent=23 // pred_region
        _
      $region44: #{bottleneck_forward.4} parent=23 // pred_fallthru
        _
    $region24: #{bottleneck_forward.4} parent=5 // pred_fallthru
      _
    %p291 = scmp.le.s32.totalorder 2, %s9
    // Predicated region
    $region45: #{bottleneck_forward.4} parent=5 // pred_check
      %p292 = pneg %p291
    $region46: #{bottleneck_forward.4} parent=5 // pred_check_branch
      %294 = sbr.rel (%p292) target = $region48
    $region47: #{bottleneck_forward.4} parent=5 // pred_region
      %s295 = ssub.s32 %s9, 2
    $region48: #{bottleneck_forward.4} parent=5 // pred_fallthru
      _
  $region6: #{bottleneck_forward.4} parent=0 // loop_footer
    %s13 = sadd.s32 1, %s9
  $region7: #{bottleneck_forward.4} parent=0 // loop_footer_branch
    %8 = sbr.rel target = $region3
  $region8: #{bottleneck_forward.4} parent=0 // loop_exit
    _

// kernel: bottleneck_forward.5
$region0: #{bottleneck_forward.5}
  #allocation0 [shape = 'u32[]', space=smem, size = 0x4, offset = 0x4, fixed_abs, tag = 'smem constant byte address 0x4 - core index']
  #allocation1 [shape = 'u32[144,128]{1,0:T(1,128)}', space=vmem, size = 0x12000, scoped, tag = 'internal scratch']
  %s0 = inlined_call_operand.vmem [shape: f32[512,128], index: 0, kind: input, shape index: {}]
  %s1 = inlined_call_operand.vmem [shape: f32[1,128], index: 1, kind: input, shape index: {}]
  %s2 = inlined_call_operand.vmem [shape: f32[1,128], index: 2, kind: input, shape index: {}]
  %s3 = inlined_call_operand.vmem [shape: bf16[128,128], index: 3, kind: input, shape index: {}]
  %s4 = inlined_call_operand.vmem [shape: f32[1,128], index: 4, kind: input, shape index: {}]
  %s5 = inlined_call_operand.vmem [shape: bf16[512,128], index: 5, kind: output, shape index: {0}]
  %s6 = inlined_call_operand.vmem [shape: f32[1,128], index: 6, kind: output, shape index: {1}]
  %s7 = inlined_call_operand.vmem [shape: f32[1,128], index: 7, kind: output, shape index: {2}]
  %8 = xla_tuple %s5, %s6, %s7
  %s9 = sld [smem:[#allocation0]]
  $region73: #{bottleneck_forward.5} parent=0
    _
  %s11 = ssub.s32 1, %s9
  %s12 = scalar_select 0, %s11, %s9
  loop: start=0, step=1, limit=4
  $region2: #{bottleneck_forward.5} parent=0 // loop_pre_header
    _
  $region3: #{bottleneck_forward.5} parent=0 // loop_header
    %s14 = sphi 0, %s18
    %p15 = scmp.ge.s32.totalorder %s14, 4
    %s24 = sphi 0, %s26
    %s27 = sphi 0, %s24
    %s28 = sphi 0, %s27
    %s44 = sphi 0, %s28
    %s48 = sphi 0, %s48
    %s50 = sphi 0, %s48
    %s51 = sphi 0, %s50
    %s65 = sphi 0, %s51
    %s69 = sphi 0, %s69
    %s71 = sphi 0, %s69
    %s72 = sphi 0, %s71
    %s86 = sphi 0, %s72
    %s90 = sphi 0, %s90
    %s92 = sphi 0, %s90
    %s93 = sphi 0, %s92
    %s107 = sphi 0, %s93
    %s111 = sphi 0, %s111
    %s113 = sphi 0, %s111
    %s114 = sphi 0, %s113
    %s128 = sphi 0, %s114
    %s134 = sphi 0, %s136
    %s137 = sphi 0, %s134
    %s138 = sphi 0, %s137
    %s154 = sphi 0, %s138
    %s158 = sphi 0, %s158
    %s160 = sphi 0, %s158
    %s161 = sphi 0, %s160
    %s175 = sphi 0, %s161
    %s179 = sphi 0, %s179
    %s181 = sphi 0, %s179
    %s182 = sphi 0, %s181
    %s196 = sphi 0, %s182
  $region4: #{bottleneck_forward.5} parent=0 // loop_header_branch
    %17 = sbr.rel (%p15) target = $region8
  $region5: #{bottleneck_forward.5} parent=0 // loop_body
    %s19 = ssub.s32 %s14, 1
    %s20 = ssub.s32 %s14, 2
    %s21 = sadd.s32 %s14, 1
    %s22 = ssub.s32 %s14, %s21
    %p23 = scmp.eq.s32.totalorder %s22, 0
    %s25 = sadd.s32 %s24, 1
    %s26 = scalar_select %p23, %s24, %s25
    %p29 = pneg %p23
    %p30 = scmp.eq.s32.totalorder %s14, 1
    %p31 = por %p29, %p30
    %p32 = scmp.ne.s32.totalorder %s24, %s27
    %p33 = scmp.eq.s32.totalorder %s14, 0
    %p34 = por %p32, %p33
    %p35 = scmp.ne.s32.totalorder %s24, %s27
    %p36 = scmp.eq.s32.totalorder %s19, 1
    %p37 = por %p35, %p36
    %p38 = scmp.ne.s32.totalorder %s27, %s28
    %p39 = scmp.eq.s32.totalorder %s19, 0
    %p40 = por %p38, %p39
    %p41 = scmp.ne.s32.totalorder %s27, %s28
    %p42 = scmp.eq.s32.totalorder %s20, 1
    %p43 = por %p41, %p42
    %p45 = scmp.ne.s32.totalorder %s28, %s44
    %p46 = scmp.eq.s32.totalorder %s20, 0
    %p47 = por %p45, %p46
    %s49 = sadd.s32 %s48, 1
    %p52 = scmp.eq.s32.totalorder %s14, 1
    %p53 = scmp.ne.s32.totalorder %s48, %s50
    %p54 = scmp.eq.s32.totalorder %s14, 0
    %p55 = por %p53, %p54
    %p56 = scmp.ne.s32.totalorder %s48, %s50
    %p57 = scmp.eq.s32.totalorder %s19, 1
    %p58 = por %p56, %p57
    %p59 = scmp.ne.s32.totalorder %s50, %s51
    %p60 = scmp.eq.s32.totalorder %s19, 0
    %p61 = por %p59, %p60
    %p62 = scmp.ne.s32.totalorder %s50, %s51
    %p63 = scmp.eq.s32.totalorder %s20, 1
    %p64 = por %p62, %p63
    %p66 = scmp.ne.s32.totalorder %s51, %s65
    %p67 = scmp.eq.s32.totalorder %s20, 0
    %p68 = por %p66, %p67
    %s70 = sadd.s32 %s69, 1
    %p73 = scmp.eq.s32.totalorder %s14, 1
    %p74 = scmp.ne.s32.totalorder %s69, %s71
    %p75 = scmp.eq.s32.totalorder %s14, 0
    %p76 = por %p74, %p75
    %p77 = scmp.ne.s32.totalorder %s69, %s71
    %p78 = scmp.eq.s32.totalorder %s19, 1
    %p79 = por %p77, %p78
    %p80 = scmp.ne.s32.totalorder %s71, %s72
    %p81 = scmp.eq.s32.totalorder %s19, 0
    %p82 = por %p80, %p81
    %p83 = scmp.ne.s32.totalorder %s71, %s72
    %p84 = scmp.eq.s32.totalorder %s20, 1
    %p85 = por %p83, %p84
    %p87 = scmp.ne.s32.totalorder %s72, %s86
    %p88 = scmp.eq.s32.totalorder %s20, 0
    %p89 = por %p87, %p88
    %s91 = sadd.s32 %s90, 1
    %p94 = scmp.eq.s32.totalorder %s14, 1
    %p95 = scmp.ne.s32.totalorder %s90, %s92
    %p96 = scmp.eq.s32.totalorder %s14, 0
    %p97 = por %p95, %p96
    %p98 = scmp.ne.s32.totalorder %s90, %s92
    %p99 = scmp.eq.s32.totalorder %s19, 1
    %p100 = por %p98, %p99
    %p101 = scmp.ne.s32.totalorder %s92, %s93
    %p102 = scmp.eq.s32.totalorder %s19, 0
    %p103 = por %p101, %p102
    %p104 = scmp.ne.s32.totalorder %s92, %s93
    %p105 = scmp.eq.s32.totalorder %s20, 1
    %p106 = por %p104, %p105
    %p108 = scmp.ne.s32.totalorder %s93, %s107
    %p109 = scmp.eq.s32.totalorder %s20, 0
    %p110 = por %p108, %p109
    %s112 = sadd.s32 %s111, 1
    %p115 = scmp.eq.s32.totalorder %s14, 1
    %p116 = scmp.ne.s32.totalorder %s111, %s113
    %p117 = scmp.eq.s32.totalorder %s14, 0
    %p118 = por %p116, %p117
    %p119 = scmp.ne.s32.totalorder %s111, %s113
    %p120 = scmp.eq.s32.totalorder %s19, 1
    %p121 = por %p119, %p120
    %p122 = scmp.ne.s32.totalorder %s113, %s114
    %p123 = scmp.eq.s32.totalorder %s19, 0
    %p124 = por %p122, %p123
    %p125 = scmp.ne.s32.totalorder %s113, %s114
    %p126 = scmp.eq.s32.totalorder %s20, 1
    %p127 = por %p125, %p126
    %p129 = scmp.ne.s32.totalorder %s114, %s128
    %p130 = scmp.eq.s32.totalorder %s20, 0
    %p131 = por %p129, %p130
    %s132 = ssub.s32 %s14, %s21
    %p133 = scmp.eq.s32.totalorder %s132, 0
    %s135 = sadd.s32 %s134, 1
    %s136 = scalar_select %p133, %s134, %s135
    %p139 = pneg %p133
    %p140 = scmp.eq.s32.totalorder %s14, 1
    %p141 = por %p139, %p140
    %p142 = scmp.ne.s32.totalorder %s134, %s137
    %p143 = scmp.eq.s32.totalorder %s14, 0
    %p144 = por %p142, %p143
    %p145 = scmp.ne.s32.totalorder %s134, %s137
    %p146 = scmp.eq.s32.totalorder %s19, 1
    %p147 = por %p145, %p146
    %p148 = scmp.ne.s32.totalorder %s137, %s138
    %p149 = scmp.eq.s32.totalorder %s19, 0
    %p150 = por %p148, %p149
    %p151 = scmp.ne.s32.totalorder %s137, %s138
    %p152 = scmp.eq.s32.totalorder %s20, 1
    %p153 = por %p151, %p152
    %p155 = scmp.ne.s32.totalorder %s138, %s154
    %p156 = scmp.eq.s32.totalorder %s20, 0
    %p157 = por %p155, %p156
    %s159 = sadd.s32 %s158, 1
    %p162 = scmp.eq.s32.totalorder %s14, 1
    %p163 = scmp.ne.s32.totalorder %s158, %s160
    %p164 = scmp.eq.s32.totalorder %s14, 0
    %p165 = por %p163, %p164
    %p166 = scmp.ne.s32.totalorder %s158, %s160
    %p167 = scmp.eq.s32.totalorder %s19, 1
    %p168 = por %p166, %p167
    %p169 = scmp.ne.s32.totalorder %s160, %s161
    %p170 = scmp.eq.s32.totalorder %s19, 0
    %p171 = por %p169, %p170
    %p172 = scmp.ne.s32.totalorder %s160, %s161
    %p173 = scmp.eq.s32.totalorder %s20, 1
    %p174 = por %p172, %p173
    %p176 = scmp.ne.s32.totalorder %s161, %s175
    %p177 = scmp.eq.s32.totalorder %s20, 0
    %p178 = por %p176, %p177
    %s180 = sadd.s32 %s179, 1
    %p183 = scmp.eq.s32.totalorder %s14, 1
    %p184 = scmp.ne.s32.totalorder %s179, %s181
    %p185 = scmp.eq.s32.totalorder %s14, 0
    %p186 = por %p184, %p185
    %p187 = scmp.ne.s32.totalorder %s179, %s181
    %p188 = scmp.eq.s32.totalorder %s19, 1
    %p189 = por %p187, %p188
    %p190 = scmp.ne.s32.totalorder %s181, %s182
    %p191 = scmp.eq.s32.totalorder %s19, 0
    %p192 = por %p190, %p191
    %p193 = scmp.ne.s32.totalorder %s181, %s182
    %p194 = scmp.eq.s32.totalorder %s20, 1
    %p195 = por %p193, %p194
    %p197 = scmp.ne.s32.totalorder %s182, %s196
    %p198 = scmp.eq.s32.totalorder %s20, 0
    %p199 = por %p197, %p198
    %p200 = scmp.le.s32.totalorder 1, %s14
    %p201 = scmp.lt.s32.totalorder %s14, 3
    %p202 = pnand %p200, %p201
    %p203 = pneg %p202
    // Predicated region
    $region9: #{bottleneck_forward.5} parent=5 // pred_check
      _
    $region10: #{bottleneck_forward.5} parent=5 // pred_check_branch
      %205 = sbr.rel (%p202) target = $region12
    $region11: #{bottleneck_forward.5} parent=5 // pred_region
      %s206 = ssub.s32 %s14, 1
      // Predicated region
      $region13: #{bottleneck_forward.5} parent=11 // pred_check
        %p207 = pneg %p61
      $region14: #{bottleneck_forward.5} parent=11 // pred_check_branch
        %209 = sbr.rel (%p207) target = $region16
      $region15: #{bottleneck_forward.5} parent=11 // pred_region
        _
      $region16: #{bottleneck_forward.5} parent=11 // pred_fallthru
        _
      // Predicated region
      $region17: #{bottleneck_forward.5} parent=11 // pred_check
        %p210 = pneg %p82
      $region18: #{bottleneck_forward.5} parent=11 // pred_check_branch
        %212 = sbr.rel (%p210) target = $region20
      $region19: #{bottleneck_forward.5} parent=11 // pred_region
        _
      $region20: #{bottleneck_forward.5} parent=11 // pred_fallthru
        _
      // Predicated region
      $region21: #{bottleneck_forward.5} parent=11 // pred_check
        %p213 = pneg %p103
      $region22: #{bottleneck_forward.5} parent=11 // pred_check_branch
        %215 = sbr.rel (%p213) target = $region24
      $region23: #{bottleneck_forward.5} parent=11 // pred_region
        _
      $region24: #{bottleneck_forward.5} parent=11 // pred_fallthru
        _
      // Predicated region
      $region25: #{bottleneck_forward.5} parent=11 // pred_check
        %p216 = pneg %p124
      $region26: #{bottleneck_forward.5} parent=11 // pred_check_branch
        %218 = sbr.rel (%p216) target = $region28
      $region27: #{bottleneck_forward.5} parent=11 // pred_region
        _
      $region28: #{bottleneck_forward.5} parent=11 // pred_fallthru
        _
    $region12: #{bottleneck_forward.5} parent=5 // pred_fallthru
      _
    %p219 = scmp.lt.s32.totalorder %s14, 2
    // Predicated region
    $region29: #{bottleneck_forward.5} parent=5 // pred_check
      %p220 = pneg %p219
    $region30: #{bottleneck_forward.5} parent=5 // pred_check_branch
      %222 = sbr.rel (%p220) target = $region32
    $region31: #{bottleneck_forward.5} parent=5 // pred_region
      // Predicated region
      $region33: #{bottleneck_forward.5} parent=31 // pred_check
        %p223 = pneg %p34
      $region34: #{bottleneck_forward.5} parent=31 // pred_check_branch
        %225 = sbr.rel (%p223) target = $region36
      $region35: #{bottleneck_forward.5} parent=31 // pred_region
        %s226 = smul.u32 32, %s14
        %p227 = scmp.lt.s32.totalorder %s226, 63
        %s228 = scalar_select %p227, %s226, 63
        %s229 = smul.addr %s228, 8
        %s230 = scalar_lea.vmem %s0, %s229
        %s231 = smul.u32 32, %s14
      $region36: #{bottleneck_forward.5} parent=31 // pred_fallthru
        _
    $region32: #{bottleneck_forward.5} parent=5 // pred_fallthru
      _
    %p232 = scmp.le.s32.totalorder 1, %s14
    %p233 = scmp.lt.s32.totalorder %s14, 3
    %p234 = pnand %p232, %p233
    %p235 = pneg %p234
    // Predicated region
    $region37: #{bottleneck_forward.5} parent=5 // pred_check
      _
    $region38: #{bottleneck_forward.5} parent=5 // pred_check_branch
      %237 = sbr.rel (%p234) target = $region40
    $region39: #{bottleneck_forward.5} parent=5 // pred_region
      %s238 = ssub.s32 %s14, 1
      %s239 = smul.u32 32, %s19
      %p240 = scmp.lt.s32.totalorder %s239, 63
      %s241 = scalar_select %p240, %s239, 63
      %s242 = smul.addr %s241, 8
      %s243 = scalar_lea.vmem %s0, %s242
      %p244 = pneg %p40
      %p245 = pneg %p37
      %p246 = pneg %p61
      %p247 = pneg %p58
      %p248 = pneg %p82
      %p249 = pneg %p79
      %p250 = pneg %p103
      %p251 = pneg %p100
      %p252 = pneg %p124
      %p253 = pneg %p121
      %p254 = pneg %p150
      %p255 = pneg %p147
      %s256 = smul.u32 32, %s19
      %p257 = scmp.lt.s32.totalorder %s256, 63
      %s258 = scalar_select %p257, %s256, 63
      %s259 = smul.addr %s258, 4
      %s260 = scalar_lea.vmem %s5, %s259
      %p261 = pneg %p171
      %p262 = pneg %p168
      %p263 = pneg %p192
      %p264 = pneg %p189
      %s265 = smul.u32 32, %s19
      %p266 = scmp.lt.s32.totalorder %s265, 63
      %s267 = scalar_select %p266, %s265, 63
      %s268 = smul.addr %s267, 8
      %s269 = scalar_lea.vmem %s0, %s268
      %s270 = smul.u32 32, %s19
      %s271 = smul.u32 32, %s19
      %p272 = scmp.lt.s32.totalorder %s271, 63
      %s273 = scalar_select %p272, %s271, 63
      %s274 = smul.addr %s273, 4
      %s275 = scalar_lea.vmem %s5, %s274
      %s276 = smul.u32 32, %s19
      %p278 = scmp.eq.s32.totalorder %s19, 0
      // Predicated region
      $region41: #{bottleneck_forward.5} parent=39 // pred_check
        %p279 = pneg %p278
      $region42: #{bottleneck_forward.5} parent=39 // pred_check_branch
        %281 = sbr.rel (%p279) target = $region44
      $region43: #{bottleneck_forward.5} parent=39 // pred_region
        %282 = vst [vmem:[%s6] sm:$0x1] 0.0
        %283 = vst [vmem:[%s7] sm:$0x1] 0.0
      $region44: #{bottleneck_forward.5} parent=39 // pred_fallthru
        _
      %v284 = vld [vmem:[%s269] sm:$0xff]
      %v285 = vld [vmem:[%s269 + $0x8] sm:$0xff]
      %v286 = vld [vmem:[%s269 + $0x10] sm:$0xff]
      %v287 = vld [vmem:[%s269 + $0x18] sm:$0xff]
      %v288 = vld [vmem:[%s269 + $0x20] sm:$0xff]
      %v289 = vld [vmem:[%s269 + $0x28] sm:$0xff]
      %v290 = vld [vmem:[%s269 + $0x30] sm:$0xff]
      %v291 = vld [vmem:[%s269 + $0x38] sm:$0xff]
      %v292 = vld [vmem:[%s269 + $0x40] sm:$0xff]
      %v293 = vld [vmem:[%s269 + $0x48] sm:$0xff]
      %v294 = vld [vmem:[%s269 + $0x50] sm:$0xff]
      %v295 = vld [vmem:[%s269 + $0x58] sm:$0xff]
      %v296 = vld [vmem:[%s269 + $0x60] sm:$0xff]
      %v297 = vld [vmem:[%s269 + $0x68] sm:$0xff]
      %v298 = vld [vmem:[%s269 + $0x70] sm:$0xff]
      %v299 = vld [vmem:[%s269 + $0x78] sm:$0xff]
      %v300 = vld [vmem:[%s269 + $0x80] sm:$0xff]
      %v301 = vld [vmem:[%s269 + $0x88] sm:$0xff]
      %v302 = vld [vmem:[%s269 + $0x90] sm:$0xff]
      %v303 = vld [vmem:[%s269 + $0x98] sm:$0xff]
      %v304 = vld [vmem:[%s269 + $0xa0] sm:$0xff]
      %v305 = vld [vmem:[%s269 + $0xa8] sm:$0xff]
      %v306 = vld [vmem:[%s269 + $0xb0] sm:$0xff]
      %v307 = vld [vmem:[%s269 + $0xb8] sm:$0xff]
      %v308 = vld [vmem:[%s269 + $0xc0] sm:$0xff]
      %v309 = vld [vmem:[%s269 + $0xc8] sm:$0xff]
      %v310 = vld [vmem:[%s269 + $0xd0] sm:$0xff]
      %v311 = vld [vmem:[%s269 + $0xd8] sm:$0xff]
      %v312 = vld [vmem:[%s269 + $0xe0] sm:$0xff]
      %v313 = vld [vmem:[%s269 + $0xe8] sm:$0xff]
      %v314 = vld [vmem:[%s269 + $0xf0] sm:$0xff]
      %v315 = vld [vmem:[%s269 + $0xf8] sm:$0xff]
      %v316 = vld [vmem:[%s1] sm:$0x1]
      %v318 = vlaneseq
      %v319 = vshrl.u32 %v318, 7
      %v320 = vsub.s32 0, %v319
      %v321 = vrot.slane %v316, %v320
      %v323 = vmul.f32 %v284, %v321
      %v324 = vmul.f32 %v285, %v321
      %v325 = vmul.f32 %v286, %v321
      %v326 = vmul.f32 %v287, %v321
      %v327 = vmul.f32 %v288, %v321
      %v328 = vmul.f32 %v289, %v321
      %v329 = vmul.f32 %v290, %v321
      %v330 = vmul.f32 %v291, %v321
      %v331 = vmul.f32 %v292, %v321
      %v332 = vmul.f32 %v293, %v321
      %v333 = vmul.f32 %v294, %v321
      %v334 = vmul.f32 %v295, %v321
      %v335 = vmul.f32 %v296, %v321
      %v336 = vmul.f32 %v297, %v321
      %v337 = vmul.f32 %v298, %v321
      %v338 = vmul.f32 %v299, %v321
      %v339 = vmul.f32 %v300, %v321
      %v340 = vmul.f32 %v301, %v321
      %v341 = vmul.f32 %v302, %v321
      %v342 = vmul.f32 %v303, %v321
      %v343 = vmul.f32 %v304, %v321
      %v344 = vmul.f32 %v305, %v321
      %v345 = vmul.f32 %v306, %v321
      %v346 = vmul.f32 %v307, %v321
      %v347 = vmul.f32 %v308, %v321
      %v348 = vmul.f32 %v309, %v321
      %v349 = vmul.f32 %v310, %v321
      %v350 = vmul.f32 %v311, %v321
      %v351 = vmul.f32 %v312, %v321
      %v352 = vmul.f32 %v313, %v321
      %v353 = vmul.f32 %v314, %v321
      %v354 = vmul.f32 %v315, %v321
      %v355 = vld [vmem:[%s2] sm:$0x1]
      %v357 = vlaneseq
      %v358 = vshrl.u32 %v357, 7
      %v359 = vsub.s32 0, %v358
      %v360 = vrot.slane %v355, %v359
      %v362 = vadd.f32 %v323, %v360
      %v363 = vadd.f32 %v324, %v360
      %v364 = vadd.f32 %v325, %v360
      %v365 = vadd.f32 %v326, %v360
      %v366 = vadd.f32 %v327, %v360
      %v367 = vadd.f32 %v328, %v360
      %v368 = vadd.f32 %v329, %v360
      %v369 = vadd.f32 %v330, %v360
      %v370 = vadd.f32 %v331, %v360
      %v371 = vadd.f32 %v332, %v360
      %v372 = vadd.f32 %v333, %v360
      %v373 = vadd.f32 %v334, %v360
      %v374 = vadd.f32 %v335, %v360
      %v375 = vadd.f32 %v336, %v360
      %v376 = vadd.f32 %v337, %v360
      %v377 = vadd.f32 %v338, %v360
      %v378 = vadd.f32 %v339, %v360
      %v379 = vadd.f32 %v340, %v360
      %v380 = vadd.f32 %v341, %v360
      %v381 = vadd.f32 %v342, %v360
      %v382 = vadd.f32 %v343, %v360
      %v383 = vadd.f32 %v344, %v360
      %v384 = vadd.f32 %v345, %v360
      %v385 = vadd.f32 %v346, %v360
      %v386 = vadd.f32 %v347, %v360
      %v387 = vadd.f32 %v348, %v360
      %v388 = vadd.f32 %v349, %v360
      %v389 = vadd.f32 %v350, %v360
      %v390 = vadd.f32 %v351, %v360
      %v391 = vadd.f32 %v352, %v360
      %v392 = vadd.f32 %v353, %v360
      %v393 = vadd.f32 %v354, %v360
      %v394 = vmax.f32 %v362, 0.0
      %v395 = vmax.f32 %v363, 0.0
      %v396 = vmax.f32 %v364, 0.0
      %v397 = vmax.f32 %v365, 0.0
      %v398 = vmax.f32 %v366, 0.0
      %v399 = vmax.f32 %v367, 0.0
      %v400 = vmax.f32 %v368, 0.0
      %v401 = vmax.f32 %v369, 0.0
      %v402 = vmax.f32 %v370, 0.0
      %v403 = vmax.f32 %v371, 0.0
      %v404 = vmax.f32 %v372, 0.0
      %v405 = vmax.f32 %v373, 0.0
      %v406 = vmax.f32 %v374, 0.0
      %v407 = vmax.f32 %v375, 0.0
      %v408 = vmax.f32 %v376, 0.0
      %v409 = vmax.f32 %v377, 0.0
      %v410 = vmax.f32 %v378, 0.0
      %v411 = vmax.f32 %v379, 0.0
      %v412 = vmax.f32 %v380, 0.0
      %v413 = vmax.f32 %v381, 0.0
      %v414 = vmax.f32 %v382, 0.0
      %v415 = vmax.f32 %v383, 0.0
      %v416 = vmax.f32 %v384, 0.0
      %v417 = vmax.f32 %v385, 0.0
      %v418 = vmax.f32 %v386, 0.0
      %v419 = vmax.f32 %v387, 0.0
      %v420 = vmax.f32 %v388, 0.0
      %v421 = vmax.f32 %v389, 0.0
      %v422 = vmax.f32 %v390, 0.0
      %v423 = vmax.f32 %v391, 0.0
      %v424 = vmax.f32 %v392, 0.0
      %v425 = vmax.f32 %v393, 0.0
      %v426 = vpack.c.bf16 %v395, %v394
      %v427 = vpack.c.bf16 %v397, %v396
      %v428 = vpack.c.bf16 %v399, %v398
      %v429 = vpack.c.bf16 %v401, %v400
      %v430 = vpack.c.bf16 %v403, %v402
      %v431 = vpack.c.bf16 %v405, %v404
      %v432 = vpack.c.bf16 %v407, %v406
      %v433 = vpack.c.bf16 %v409, %v408
      %v434 = vpack.c.bf16 %v411, %v410
      %v435 = vpack.c.bf16 %v413, %v412
      %v436 = vpack.c.bf16 %v415, %v414
      %v437 = vpack.c.bf16 %v417, %v416
      %v438 = vpack.c.bf16 %v419, %v418
      %v439 = vpack.c.bf16 %v421, %v420
      %v440 = vpack.c.bf16 %v423, %v422
      %v441 = vpack.c.bf16 %v425, %v424
      %v442 = vld [vmem:[%s3] sm:$0xf]
      %v443 = vld [vmem:[%s3 + $0x4] sm:$0xf]
      %v444 = vld [vmem:[%s3 + $0x8] sm:$0xf]
      %v445 = vld [vmem:[%s3 + $0xc] sm:$0xf]
      %v446 = vld [vmem:[%s3 + $0x10] sm:$0xf]
      %v447 = vld [vmem:[%s3 + $0x14] sm:$0xf]
      %v448 = vld [vmem:[%s3 + $0x18] sm:$0xf]
      %v449 = vld [vmem:[%s3 + $0x1c] sm:$0xf]
      %v450 = vld [vmem:[%s3 + $0x20] sm:$0xf]
      %v451 = vld [vmem:[%s3 + $0x24] sm:$0xf]
      %v452 = vld [vmem:[%s3 + $0x28] sm:$0xf]
      %v453 = vld [vmem:[%s3 + $0x2c] sm:$0xf]
      %v454 = vld [vmem:[%s3 + $0x30] sm:$0xf]
      %v455 = vld [vmem:[%s3 + $0x34] sm:$0xf]
      %v456 = vld [vmem:[%s3 + $0x38] sm:$0xf]
      %v457 = vld [vmem:[%s3 + $0x3c] sm:$0xf]
      %v458 = vld [vmem:[%s4] sm:$0x1]
      %v460 = vlaneseq
      %v461 = vshrl.u32 %v460, 7
      %v462 = vsub.s32 0, %v461
      %v463 = vrot.slane %v458, %v462
      %v481 = vunpack.c.l.b16 %v442
      %v482 = vunpack.c.l.b16 %v443
      %v483 = vunpack.c.l.b16 %v444
      %v484 = vunpack.c.l.b16 %v445
      %v485 = vunpack.c.l.b16 %v446
      %v486 = vunpack.c.l.b16 %v447
      %v487 = vunpack.c.l.b16 %v448
      %v488 = vunpack.c.l.b16 %v449
      %v489 = vunpack.c.l.b16 %v450
      %v490 = vunpack.c.l.b16 %v451
      %v491 = vunpack.c.l.b16 %v452
      %v492 = vunpack.c.l.b16 %v453
      %v493 = vunpack.c.l.b16 %v454
      %v494 = vunpack.c.l.b16 %v455
      %v495 = vunpack.c.l.b16 %v456
      %v496 = vunpack.c.l.b16 %v457
      %v497 = vpack.c.b16 %v482, %v481
      %v498 = vpack.c.b16 %v484, %v483
      %v499 = vpack.c.b16 %v486, %v485
      %v500 = vpack.c.b16 %v488, %v487
      %v501 = vpack.c.b16 %v490, %v489
      %v502 = vpack.c.b16 %v492, %v491
      %v503 = vpack.c.b16 %v494, %v493
      %v504 = vpack.c.b16 %v496, %v495
      %513 = vmatprep.subr.bf16.mxu0 0
      %514 = vmatpush1.bf16.msra.mxu0 %v497
      %515 = vmatprep.subr.bf16.mxu0 0
      %516 = vmatpush1.bf16.msra.mxu0 %v498
      %517 = vmatprep.subr.bf16.mxu0 0
      %518 = vmatpush1.bf16.msra.mxu0 %v499
      %519 = vmatprep.subr.bf16.mxu0 0
      %520 = vmatpush1.bf16.msra.mxu0 %v500
      %521 = vmatprep.subr.bf16.mxu0 0
      %522 = vmatpush1.bf16.msra.mxu0 %v501
      %523 = vmatprep.subr.bf16.mxu0 0
      %524 = vmatpush1.bf16.msra.mxu0 %v502
      %525 = vmatprep.subr.bf16.mxu0 0
      %526 = vmatpush1.bf16.msra.mxu0 %v503
      %527 = vmatprep.subr.bf16.mxu0 0
      %528 = vmatpush1.bf16.msra.mxu0 %v504
      %529 = vmatprep.subr.bf16.mxu0 0
      %530 = vmatpush1.bf16.msra.mxu0 0
      %531 = vmatprep.subr.bf16.mxu0 0
      %532 = vmatpush1.bf16.msra.mxu0 0
      %533 = vmatprep.subr.bf16.mxu0 0
      %534 = vmatpush1.bf16.msra.mxu0 0
      %535 = vmatprep.subr.bf16.mxu0 0
      %536 = vmatpush1.bf16.msra.mxu0 0
      %537 = vmatprep.subr.bf16.mxu0 0
      %538 = vmatpush1.bf16.msra.mxu0 0
      %539 = vmatprep.subr.bf16.mxu0 0
      %540 = vmatpush1.bf16.msra.mxu0 0
      %541 = vmatprep.subr.bf16.mxu0 0
      %542 = vmatpush1.bf16.msra.mxu0 0
      %543 = vmatprep.subr.bf16.mxu0 0
      %544 = vmatpush1.bf16.msra.mxu0 0
      %545 = vmatprep.mubr.bf16.mxu0 0
      %546 = vmatmul.mubr.bf16.gmra.mrb[0].mxu0 %v426
      %v547 = vpop.f32.mrb[0].mxu0
      %v548 = vadd.f32 %v463, %v547
      %v549 = vpop.f32.mrb[0].mxu0
      %v550 = vpop.f32.mrb[0].mxu0
      %v551 = vadd.f32 %v463, %v550
      %v552 = vpop.f32.mrb[0].mxu0
      %553 = vmatprep.mubr.bf16.mxu0 0
      %554 = vmatmul.mubr.bf16.gmra.mrb[0].mxu0 %v427
      %v555 = vpop.f32.mrb[0].mxu0
      %v556 = vadd.f32 %v463, %v555
      %v557 = vpop.f32.mrb[0].mxu0
      %v558 = vpop.f32.mrb[0].mxu0
      %v559 = vadd.f32 %v463, %v558
      %v560 = vpop.f32.mrb[0].mxu0
      %561 = vmatprep.mubr.bf16.mxu0 0
      %562 = vmatmul.mubr.bf16.gmra.mrb[0].mxu0 %v428
      %v563 = vpop.f32.mrb[0].mxu0
      %v564 = vadd.f32 %v463, %v563
      %v565 = vpop.f32.mrb[0].mxu0
      %v566 = vpop.f32.mrb[0].mxu0
      %v567 = vadd.f32 %v463, %v566
      %v568 = vpop.f32.mrb[0].mxu0
      %569 = vmatprep.mubr.bf16.mxu0 0
      %570 = vmatmul.mubr.bf16.gmra.mrb[0].mxu0 %v429
      %v571 = vpop.f32.mrb[0].mxu0
      %v572 = vadd.f32 %v463, %v571
      %v573 = vpop.f32.mrb[0].mxu0
      %v574 = vpop.f32.mrb[0].mxu0
      %v575 = vadd.f32 %v463, %v574
      %v576 = vpop.f32.mrb[0].mxu0
      %577 = vmatprep.mubr.bf16.mxu0 0
      %578 = vmatmul.mubr.bf16.gmra.mrb[0].mxu0 %v430
      %v579 = vpop.f32.mrb[0].mxu0
      %v580 = vadd.f32 %v463, %v579
      %v581 = vpop.f32.mrb[0].mxu0
      %v582 = vpop.f32.mrb[0].mxu0
      %v583 = vadd.f32 %v463, %v582
      %v584 = vpop.f32.mrb[0].mxu0
      %585 = vmatprep.mubr.bf16.mxu0 0
      %586 = vmatmul.mubr.bf16.gmra.mrb[0].mxu0 %v431
      %v587 = vpop.f32.mrb[0].mxu0
      %v588 = vadd.f32 %v463, %v587
      %v589 = vpop.f32.mrb[0].mxu0
      %v590 = vpop.f32.mrb[0].mxu0
      %v591 = vadd.f32 %v463, %v590
      %v592 = vpop.f32.mrb[0].mxu0
      %593 = vmatprep.mubr.bf16.mxu0 0
      %594 = vmatmul.mubr.bf16.gmra.mrb[0].mxu0 %v432
      %v595 = vpop.f32.mrb[0].mxu0
      %v596 = vadd.f32 %v463, %v595
      %v597 = vpop.f32.mrb[0].mxu0
      %v598 = vpop.f32.mrb[0].mxu0
      %v599 = vadd.f32 %v463, %v598
      %v600 = vpop.f32.mrb[0].mxu0
      %601 = vmatprep.mubr.bf16.mxu0 0
      %602 = vmatmul.mubr.bf16.gmra.mrb[0].mxu0 %v433
      %v603 = vpop.f32.mrb[0].mxu0
      %v604 = vadd.f32 %v463, %v603
      %v605 = vpop.f32.mrb[0].mxu0
      %v606 = vpop.f32.mrb[0].mxu0
      %v607 = vadd.f32 %v463, %v606
      %v608 = vpop.f32.mrb[0].mxu0
      %609 = vmatprep.mubr.bf16.mxu0 0
      %610 = vmatmul.mubr.bf16.gmra.mrb[0].mxu0 %v434
      %v611 = vpop.f32.mrb[0].mxu0
      %v612 = vadd.f32 %v463, %v611
      %v613 = vpop.f32.mrb[0].mxu0
      %v614 = vpop.f32.mrb[0].mxu0
      %v615 = vadd.f32 %v463, %v614
      %v616 = vpop.f32.mrb[0].mxu0
      %617 = vmatprep.mubr.bf16.mxu0 0
      %618 = vmatmul.mubr.bf16.gmra.mrb[0].mxu0 %v435
      %v619 = vpop.f32.mrb[0].mxu0
      %v620 = vadd.f32 %v463, %v619
      %v621 = vpop.f32.mrb[0].mxu0
      %v622 = vpop.f32.mrb[0].mxu0
      %v623 = vadd.f32 %v463, %v622
      %v624 = vpop.f32.mrb[0].mxu0
      %625 = vmatprep.mubr.bf16.mxu0 0
      %626 = vmatmul.mubr.bf16.gmra.mrb[0].mxu0 %v436
      %v627 = vpop.f32.mrb[0].mxu0
      %v628 = vadd.f32 %v463, %v627
      %v629 = vpop.f32.mrb[0].mxu0
      %v630 = vpop.f32.mrb[0].mxu0
      %v631 = vadd.f32 %v463, %v630
      %v632 = vpop.f32.mrb[0].mxu0
      %633 = vmatprep.mubr.bf16.mxu0 0
      %634 = vmatmul.mubr.bf16.gmra.mrb[0].mxu0 %v437
      %v635 = vpop.f32.mrb[0].mxu0
      %v636 = vadd.f32 %v463, %v635
      %v637 = vpop.f32.mrb[0].mxu0
      %v638 = vpop.f32.mrb[0].mxu0
      %v639 = vadd.f32 %v463, %v638
      %v640 = vpop.f32.mrb[0].mxu0
      %641 = vmatprep.mubr.bf16.mxu0 0
      %642 = vmatmul.mubr.bf16.gmra.mrb[0].mxu0 %v438
      %v643 = vpop.f32.mrb[0].mxu0
      %v644 = vadd.f32 %v463, %v643
      %v645 = vpop.f32.mrb[0].mxu0
      %v646 = vpop.f32.mrb[0].mxu0
      %v647 = vadd.f32 %v463, %v646
      %v648 = vpop.f32.mrb[0].mxu0
      %649 = vmatprep.mubr.bf16.mxu0 0
      %650 = vmatmul.mubr.bf16.gmra.mrb[0].mxu0 %v439
      %v651 = vpop.f32.mrb[0].mxu0
      %v652 = vadd.f32 %v463, %v651
      %v653 = vpop.f32.mrb[0].mxu0
      %v654 = vpop.f32.mrb[0].mxu0
      %v655 = vadd.f32 %v463, %v654
      %v656 = vpop.f32.mrb[0].mxu0
      %657 = vmatprep.mubr.bf16.mxu0 0
      %658 = vmatmul.mubr.bf16.gmra.mrb[0].mxu0 %v440
      %v659 = vpop.f32.mrb[0].mxu0
      %v660 = vadd.f32 %v463, %v659
      %v661 = vpop.f32.mrb[0].mxu0
      %v662 = vpop.f32.mrb[0].mxu0
      %v663 = vadd.f32 %v463, %v662
      %v664 = vpop.f32.mrb[0].mxu0
      %665 = vmatprep.mubr.bf16.mxu0 0
      %666 = vmatmul.mubr.bf16.gmra.mrb[0].mxu0 %v441
      %v667 = vpop.f32.mrb[0].mxu0
      %v668 = vadd.f32 %v463, %v667
      %v669 = vpop.f32.mrb[0].mxu0
      %v670 = vpop.f32.mrb[0].mxu0
      %v671 = vadd.f32 %v463, %v670
      %v672 = vpop.f32.mrb[0].mxu0
      %673 = vdwg.mxu0
      %v674 = vpack.c.bf16 %v551, %v548
      %v675 = vpack.c.bf16 %v559, %v556
      %v676 = vpack.c.bf16 %v567, %v564
      %v677 = vpack.c.bf16 %v575, %v572
      %v678 = vpack.c.bf16 %v583, %v580
      %v679 = vpack.c.bf16 %v591, %v588
      %v680 = vpack.c.bf16 %v599, %v596
      %v681 = vpack.c.bf16 %v607, %v604
      %v682 = vpack.c.bf16 %v615, %v612
      %v683 = vpack.c.bf16 %v623, %v620
      %v684 = vpack.c.bf16 %v631, %v628
      %v685 = vpack.c.bf16 %v639, %v636
      %v686 = vpack.c.bf16 %v647, %v644
      %v687 = vpack.c.bf16 %v655, %v652
      %v688 = vpack.c.bf16 %v663, %v660
      %v689 = vpack.c.bf16 %v671, %v668
      %v706 = vunpack.c.l.b16 %v674
      %v707 = vunpack.c.h.b16 %v674
      %v708 = vunpack.c.l.b16 %v675
      %v709 = vunpack.c.h.b16 %v675
      %v710 = vunpack.c.l.b16 %v676
      %v711 = vunpack.c.h.b16 %v676
      %v712 = vunpack.c.l.b16 %v677
      %v713 = vunpack.c.h.b16 %v677
      %v714 = vunpack.c.l.b16 %v678
      %v715 = vunpack.c.h.b16 %v678
      %v716 = vunpack.c.l.b16 %v679
      %v717 = vunpack.c.h.b16 %v679
      %v718 = vunpack.c.l.b16 %v680
      %v719 = vunpack.c.h.b16 %v680
      %v720 = vunpack.c.l.b16 %v681
      %v721 = vunpack.c.h.b16 %v681
      %v722 = vunpack.c.l.b16 %v682
      %v723 = vunpack.c.h.b16 %v682
      %v724 = vunpack.c.l.b16 %v683
      %v725 = vunpack.c.h.b16 %v683
      %v726 = vunpack.c.l.b16 %v684
      %v727 = vunpack.c.h.b16 %v684
      %v728 = vunpack.c.l.b16 %v685
      %v729 = vunpack.c.h.b16 %v685
      %v730 = vunpack.c.l.b16 %v686
      %v731 = vunpack.c.h.b16 %v686
      %v732 = vunpack.c.l.b16 %v687
      %v733 = vunpack.c.h.b16 %v687
      %v734 = vunpack.c.l.b16 %v688
      %v735 = vunpack.c.h.b16 %v688
      %v736 = vunpack.c.l.b16 %v689
      %v737 = vunpack.c.h.b16 %v689
      %v738 = vpack.c.b16 %v706, %v706
      %v739 = vpack.c.b16 %v707, %v707
      %v740 = vpack.c.b16 %v708, %v708
      %v741 = vpack.c.b16 %v709, %v709
      %v742 = vpack.c.b16 %v710, %v710
      %v743 = vpack.c.b16 %v711, %v711
      %v744 = vpack.c.b16 %v712, %v712
      %v745 = vpack.c.b16 %v713, %v713
      %v746 = vpack.c.b16 %v714, %v714
      %v747 = vpack.c.b16 %v715, %v715
      %v748 = vpack.c.b16 %v716, %v716
      %v749 = vpack.c.b16 %v717, %v717
      %v750 = vpack.c.b16 %v718, %v718
      %v751 = vpack.c.b16 %v719, %v719
      %v752 = vpack.c.b16 %v720, %v720
      %v753 = vpack.c.b16 %v721, %v721
      %v754 = vpack.c.b16 %v722, %v722
      %v755 = vpack.c.b16 %v723, %v723
      %v756 = vpack.c.b16 %v724, %v724
      %v757 = vpack.c.b16 %v725, %v725
      %v758 = vpack.c.b16 %v726, %v726
      %v759 = vpack.c.b16 %v727, %v727
      %v760 = vpack.c.b16 %v728, %v728
      %v761 = vpack.c.b16 %v729, %v729
      %v762 = vpack.c.b16 %v730, %v730
      %v763 = vpack.c.b16 %v731, %v731
      %v764 = vpack.c.b16 %v732, %v732
      %v765 = vpack.c.b16 %v733, %v733
      %v766 = vpack.c.b16 %v734, %v734
      %v767 = vpack.c.b16 %v735, %v735
      %v768 = vpack.c.b16 %v736, %v736
      %v769 = vpack.c.b16 %v737, %v737
      %802 = vst [vmem:[%s275] sm:$0xf] %v738
      %803 = vst [vmem:[%s275 + $0x4] sm:$0xf] %v739
      %804 = vst [vmem:[%s275 + $0x8] sm:$0xf] %v740
      %805 = vst [vmem:[%s275 + $0xc] sm:$0xf] %v741
      %806 = vst [vmem:[%s275 + $0x10] sm:$0xf] %v742
      %807 = vst [vmem:[%s275 + $0x14] sm:$0xf] %v743
      %808 = vst [vmem:[%s275 + $0x18] sm:$0xf] %v744
      %809 = vst [vmem:[%s275 + $0x1c] sm:$0xf] %v745
      %810 = vst [vmem:[%s275 + $0x20] sm:$0xf] %v746
      %811 = vst [vmem:[%s275 + $0x24] sm:$0xf] %v747
      %812 = vst [vmem:[%s275 + $0x28] sm:$0xf] %v748
      %813 = vst [vmem:[%s275 + $0x2c] sm:$0xf] %v749
      %814 = vst [vmem:[%s275 + $0x30] sm:$0xf] %v750
      %815 = vst [vmem:[%s275 + $0x34] sm:$0xf] %v751
      %816 = vst [vmem:[%s275 + $0x38] sm:$0xf] %v752
      %817 = vst [vmem:[%s275 + $0x3c] sm:$0xf] %v753
      %818 = vst [vmem:[%s275 + $0x40] sm:$0xf] %v754
      %819 = vst [vmem:[%s275 + $0x44] sm:$0xf] %v755
      %820 = vst [vmem:[%s275 + $0x48] sm:$0xf] %v756
      %821 = vst [vmem:[%s275 + $0x4c] sm:$0xf] %v757
      %822 = vst [vmem:[%s275 + $0x50] sm:$0xf] %v758
      %823 = vst [vmem:[%s275 + $0x54] sm:$0xf] %v759
      %824 = vst [vmem:[%s275 + $0x58] sm:$0xf] %v760
      %825 = vst [vmem:[%s275 + $0x5c] sm:$0xf] %v761
      %826 = vst [vmem:[%s275 + $0x60] sm:$0xf] %v762
      %827 = vst [vmem:[%s275 + $0x64] sm:$0xf] %v763
      %828 = vst [vmem:[%s275 + $0x68] sm:$0xf] %v764
      %829 = vst [vmem:[%s275 + $0x6c] sm:$0xf] %v765
      %830 = vst [vmem:[%s275 + $0x70] sm:$0xf] %v766
      %831 = vst [vmem:[%s275 + $0x74] sm:$0xf] %v767
      %832 = vst [vmem:[%s275 + $0x78] sm:$0xf] %v768
      %833 = vst [vmem:[%s275 + $0x7c] sm:$0xf] %v769
      %v834 = vld [vmem:[%s6] sm:$0x1]
      %v835 = vadd.f32 %v548, %v551
      %v836 = vadd.f32 %v835, %v556
      %v837 = vadd.f32 %v836, %v559
      %v838 = vadd.f32 %v837, %v564
      %v839 = vadd.f32 %v838, %v567
      %v840 = vadd.f32 %v839, %v572
      %v841 = vadd.f32 %v840, %v575
      %v842 = vadd.f32 %v841, %v580
      %v843 = vadd.f32 %v842, %v583
      %v844 = vadd.f32 %v843, %v588
      %v845 = vadd.f32 %v844, %v591
      %v846 = vadd.f32 %v845, %v596
      %v847 = vadd.f32 %v846, %v599
      %v848 = vadd.f32 %v847, %v604
      %v849 = vadd.f32 %v848, %v607
      %v850 = vadd.f32 %v849, %v612
      %v851 = vadd.f32 %v850, %v615
      %v852 = vadd.f32 %v851, %v620
      %v853 = vadd.f32 %v852, %v623
      %v854 = vadd.f32 %v853, %v628
      %v855 = vadd.f32 %v854, %v631
      %v856 = vadd.f32 %v855, %v636
      %v857 = vadd.f32 %v856, %v639
      %v858 = vadd.f32 %v857, %v644
      %v859 = vadd.f32 %v858, %v647
      %v860 = vadd.f32 %v859, %v652
      %v861 = vadd.f32 %v860, %v655
      %v862 = vadd.f32 %v861, %v660
      %v863 = vadd.f32 %v862, %v663
      %v864 = vadd.f32 %v863, %v668
      %v865 = vadd.f32 %v864, %v671
      %v866 = vrot.slane %v865, 4
      %v867 = vadd.f32 %v865, %v866
      %v868 = vrot.slane %v867, 2
      %v869 = vadd.f32 %v867, %v868
      %v870 = vrot.slane %v869, 1
      %v871 = vadd.f32 %v869, %v870
      %v872 = vadd.f32 %v834, %v871
      %873 = vst [vmem:[%s6] sm:$0x1] %v872
      %v874 = vld [vmem:[%s7] sm:$0x1]
      %v875 = vmul.f32 %v548, %v548
      %v876 = vmul.f32 %v551, %v551
      %v877 = vmul.f32 %v556, %v556
      %v878 = vmul.f32 %v559, %v559
      %v879 = vmul.f32 %v564, %v564
      %v880 = vmul.f32 %v567, %v567
      %v881 = vmul.f32 %v572, %v572
      %v882 = vmul.f32 %v575, %v575
      %v883 = vmul.f32 %v580, %v580
      %v884 = vmul.f32 %v583, %v583
      %v885 = vmul.f32 %v588, %v588
      %v886 = vmul.f32 %v591, %v591
      %v887 = vmul.f32 %v596, %v596
      %v888 = vmul.f32 %v599, %v599
      %v889 = vmul.f32 %v604, %v604
      %v890 = vmul.f32 %v607, %v607
      %v891 = vmul.f32 %v612, %v612
      %v892 = vmul.f32 %v615, %v615
      %v893 = vmul.f32 %v620, %v620
      %v894 = vmul.f32 %v623, %v623
      %v895 = vmul.f32 %v628, %v628
      %v896 = vmul.f32 %v631, %v631
      %v897 = vmul.f32 %v636, %v636
      %v898 = vmul.f32 %v639, %v639
      %v899 = vmul.f32 %v644, %v644
      %v900 = vmul.f32 %v647, %v647
      %v901 = vmul.f32 %v652, %v652
      %v902 = vmul.f32 %v655, %v655
      %v903 = vmul.f32 %v660, %v660
      %v904 = vmul.f32 %v663, %v663
      %v905 = vmul.f32 %v668, %v668
      %v906 = vmul.f32 %v671, %v671
      %v907 = vadd.f32 %v875, %v876
      %v908 = vadd.f32 %v907, %v877
      %v909 = vadd.f32 %v908, %v878
      %v910 = vadd.f32 %v909, %v879
      %v911 = vadd.f32 %v910, %v880
      %v912 = vadd.f32 %v911, %v881
      %v913 = vadd.f32 %v912, %v882
      %v914 = vadd.f32 %v913, %v883
      %v915 = vadd.f32 %v914, %v884
      %v916 = vadd.f32 %v915, %v885
      %v917 = vadd.f32 %v916, %v886
      %v918 = vadd.f32 %v917, %v887
      %v919 = vadd.f32 %v918, %v888
      %v920 = vadd.f32 %v919, %v889
      %v921 = vadd.f32 %v920, %v890
      %v922 = vadd.f32 %v921, %v891
      %v923 = vadd.f32 %v922, %v892
      %v924 = vadd.f32 %v923, %v893
      %v925 = vadd.f32 %v924, %v894
      %v926 = vadd.f32 %v925, %v895
      %v927 = vadd.f32 %v926, %v896
      %v928 = vadd.f32 %v927, %v897
      %v929 = vadd.f32 %v928, %v898
      %v930 = vadd.f32 %v929, %v899
      %v931 = vadd.f32 %v930, %v900
      %v932 = vadd.f32 %v931, %v901
      %v933 = vadd.f32 %v932, %v902
      %v934 = vadd.f32 %v933, %v903
      %v935 = vadd.f32 %v934, %v904
      %v936 = vadd.f32 %v935, %v905
      %v937 = vadd.f32 %v936, %v906
      %v938 = vrot.slane %v937, 4
      %v939 = vadd.f32 %v937, %v938
      %v940 = vrot.slane %v939, 2
      %v941 = vadd.f32 %v939, %v940
      %v942 = vrot.slane %v941, 1
      %v943 = vadd.f32 %v941, %v942
      %v944 = vadd.f32 %v874, %v943
      %945 = vst [vmem:[%s7] sm:$0x1] %v944
      %s946 = smul.u32 32, %s19
      %p947 = scmp.lt.s32.totalorder %s946, 63
      %s948 = scalar_select %p947, %s946, 63
      %s949 = smul.addr %s948, 4
      %s950 = scalar_lea.vmem %s5, %s949
      // Predicated region
      $region45: #{bottleneck_forward.5} parent=39 // pred_check
        %p951 = pneg %p147
      $region46: #{bottleneck_forward.5} parent=39 // pred_check_branch
        %953 = sbr.rel (%p951) target = $region48
      $region47: #{bottleneck_forward.5} parent=39 // pred_region
        %s954 = smul.u32 32, %s19
      $region48: #{bottleneck_forward.5} parent=39 // pred_fallthru
        _
      // Predicated region
      $region49: #{bottleneck_forward.5} parent=39 // pred_check
        %p955 = pneg %p168
      $region50: #{bottleneck_forward.5} parent=39 // pred_check_branch
        %957 = sbr.rel (%p955) target = $region52
      $region51: #{bottleneck_forward.5} parent=39 // pred_region
        _
      $region52: #{bottleneck_forward.5} parent=39 // pred_fallthru
        _
      // Predicated region
      $region53: #{bottleneck_forward.5} parent=39 // pred_check
        %p958 = pneg %p189
      $region54: #{bottleneck_forward.5} parent=39 // pred_check_branch
        %960 = sbr.rel (%p958) target = $region56
      $region55: #{bottleneck_forward.5} parent=39 // pred_region
        _
      $region56: #{bottleneck_forward.5} parent=39 // pred_fallthru
        _
      // Predicated region
      $region57: #{bottleneck_forward.5} parent=39 // pred_check
        %p961 = pneg %p168
      $region58: #{bottleneck_forward.5} parent=39 // pred_check_branch
        %963 = sbr.rel (%p961) target = $region60
      $region59: #{bottleneck_forward.5} parent=39 // pred_region
        _
      $region60: #{bottleneck_forward.5} parent=39 // pred_fallthru
        _
      // Predicated region
      $region61: #{bottleneck_forward.5} parent=39 // pred_check
        %p964 = pneg %p189
      $region62: #{bottleneck_forward.5} parent=39 // pred_check_branch
        %966 = sbr.rel (%p964) target = $region64
      $region63: #{bottleneck_forward.5} parent=39 // pred_region
        _
      $region64: #{bottleneck_forward.5} parent=39 // pred_fallthru
        _
    $region40: #{bottleneck_forward.5} parent=5 // pred_fallthru
      _
    %p967 = scmp.le.s32.totalorder 2, %s14
    // Predicated region
    $region65: #{bottleneck_forward.5} parent=5 // pred_check
      %p968 = pneg %p967
    $region66: #{bottleneck_forward.5} parent=5 // pred_check_branch
      %970 = sbr.rel (%p968) target = $region68
    $region67: #{bottleneck_forward.5} parent=5 // pred_region
      %s971 = ssub.s32 %s14, 2
      // Predicated region
      $region69: #{bottleneck_forward.5} parent=67 // pred_check
        %p972 = pneg %p153
      $region70: #{bottleneck_forward.5} parent=67 // pred_check_branch
        %974 = sbr.rel (%p972) target = $region72
      $region71: #{bottleneck_forward.5} parent=67 // pred_region
        %s975 = smul.u32 32, %s20
        %p976 = scmp.lt.s32.totalorder %s975, 63
        %s977 = scalar_select %p976, %s975, 63
        %s978 = smul.addr %s977, 4
        %s979 = scalar_lea.vmem %s5, %s978
      $region72: #{bottleneck_forward.5} parent=67 // pred_fallthru
        _
    $region68: #{bottleneck_forward.5} parent=5 // pred_fallthru
      _
  $region6: #{bottleneck_forward.5} parent=0 // loop_footer
    %s18 = sadd.s32 1, %s14
  $region7: #{bottleneck_forward.5} parent=0 // loop_footer_branch
    %13 = sbr.rel target = $region3
  $region8: #{bottleneck_forward.5} parent=0 // loop_exit
    _

// kernel: bottleneck_forward.7
$region0: #{bottleneck_forward.7}
  #allocation0 [shape = 'u32[]', space=smem, size = 0x4, offset = 0x4, fixed_abs, tag = 'smem constant byte address 0x4 - core index']
  #allocation1 [shape = 'u32[144,128]{1,0:T(1,128)}', space=vmem, size = 0x12000, scoped, tag = 'internal scratch']
  %s0 = inlined_call_operand.vmem [shape: bf16[512,128], index: 0, kind: input, shape index: {}]
  %s1 = inlined_call_operand.vmem [shape: f32[512,128], index: 1, kind: input, shape index: {}]
  %s2 = inlined_call_operand.vmem [shape: f32[1,128], index: 2, kind: input, shape index: {}]
  %s3 = inlined_call_operand.vmem [shape: f32[1,128], index: 3, kind: input, shape index: {}]
  %s4 = inlined_call_operand.vmem [shape: bf16[128,128], index: 4, kind: input, shape index: {}]
  %s5 = inlined_call_operand.vmem [shape: f32[1,128], index: 5, kind: input, shape index: {}]
  %s6 = inlined_call_operand.vmem [shape: bf16[128,128], index: 6, kind: input, shape index: {}]
  %s7 = inlined_call_operand.vmem [shape: f32[1,128], index: 7, kind: input, shape index: {}]
  %s8 = inlined_call_operand.vmem [shape: f32[512,128], index: 8, kind: output, shape index: {}]
  %s9 = sld [smem:[#allocation0]]
  $region65: #{bottleneck_forward.7} parent=0
    _
  %s11 = ssub.s32 1, %s9
  %s12 = scalar_select 0, %s11, %s9
  loop: start=0, step=1, limit=4
  $region2: #{bottleneck_forward.7} parent=0 // loop_pre_header
    _
  $region3: #{bottleneck_forward.7} parent=0 // loop_header
    %s14 = sphi 0, %s18
    %p15 = scmp.ge.s32.totalorder %s14, 4
    %s24 = sphi 0, %s26
    %s27 = sphi 0, %s24
    %s28 = sphi 0, %s27
    %s44 = sphi 0, %s28
    %s50 = sphi 0, %s52
    %s53 = sphi 0, %s50
    %s54 = sphi 0, %s53
    %s70 = sphi 0, %s54
    %s74 = sphi 0, %s74
    %s76 = sphi 0, %s74
    %s77 = sphi 0, %s76
    %s91 = sphi 0, %s77
    %s95 = sphi 0, %s95
    %s97 = sphi 0, %s95
    %s98 = sphi 0, %s97
    %s112 = sphi 0, %s98
    %s116 = sphi 0, %s116
    %s118 = sphi 0, %s116
    %s119 = sphi 0, %s118
    %s133 = sphi 0, %s119
    %s137 = sphi 0, %s137
    %s139 = sphi 0, %s137
    %s140 = sphi 0, %s139
    %s154 = sphi 0, %s140
    %s158 = sphi 0, %s158
    %s160 = sphi 0, %s158
    %s161 = sphi 0, %s160
    %s175 = sphi 0, %s161
    %s179 = sphi 0, %s179
    %s181 = sphi 0, %s179
    %s182 = sphi 0, %s181
    %s196 = sphi 0, %s182
    %s202 = sphi 0, %s204
    %s205 = sphi 0, %s202
    %s206 = sphi 0, %s205
    %s222 = sphi 0, %s206
  $region4: #{bottleneck_forward.7} parent=0 // loop_header_branch
    %17 = sbr.rel (%p15) target = $region8
  $region5: #{bottleneck_forward.7} parent=0 // loop_body
    %s19 = ssub.s32 %s14, 1
    %s20 = ssub.s32 %s14, 2
    %s21 = sadd.s32 %s14, 1
    %s22 = ssub.s32 %s14, %s21
    %p23 = scmp.eq.s32.totalorder %s22, 0
    %s25 = sadd.s32 %s24, 1
    %s26 = scalar_select %p23, %s24, %s25
    %p29 = pneg %p23
    %p30 = scmp.eq.s32.totalorder %s14, 1
    %p31 = por %p29, %p30
    %p32 = scmp.ne.s32.totalorder %s24, %s27
    %p33 = scmp.eq.s32.totalorder %s14, 0
    %p34 = por %p32, %p33
    %p35 = scmp.ne.s32.totalorder %s24, %s27
    %p36 = scmp.eq.s32.totalorder %s19, 1
    %p37 = por %p35, %p36
    %p38 = scmp.ne.s32.totalorder %s27, %s28
    %p39 = scmp.eq.s32.totalorder %s19, 0
    %p40 = por %p38, %p39
    %p41 = scmp.ne.s32.totalorder %s27, %s28
    %p42 = scmp.eq.s32.totalorder %s20, 1
    %p43 = por %p41, %p42
    %p45 = scmp.ne.s32.totalorder %s28, %s44
    %p46 = scmp.eq.s32.totalorder %s20, 0
    %p47 = por %p45, %p46
    %s48 = ssub.s32 %s14, %s21
    %p49 = scmp.eq.s32.totalorder %s48, 0
    %s51 = sadd.s32 %s50, 1
    %s52 = scalar_select %p49, %s50, %s51
    %p55 = pneg %p49
    %p56 = scmp.eq.s32.totalorder %s14, 1
    %p57 = por %p55, %p56
    %p58 = scmp.ne.s32.totalorder %s50, %s53
    %p59 = scmp.eq.s32.totalorder %s14, 0
    %p60 = por %p58, %p59
    %p61 = scmp.ne.s32.totalorder %s50, %s53
    %p62 = scmp.eq.s32.totalorder %s19, 1
    %p63 = por %p61, %p62
    %p64 = scmp.ne.s32.totalorder %s53, %s54
    %p65 = scmp.eq.s32.totalorder %s19, 0
    %p66 = por %p64, %p65
    %p67 = scmp.ne.s32.totalorder %s53, %s54
    %p68 = scmp.eq.s32.totalorder %s20, 1
    %p69 = por %p67, %p68
    %p71 = scmp.ne.s32.totalorder %s54, %s70
    %p72 = scmp.eq.s32.totalorder %s20, 0
    %p73 = por %p71, %p72
    %s75 = sadd.s32 %s74, 1
    %p78 = scmp.eq.s32.totalorder %s14, 1
    %p79 = scmp.ne.s32.totalorder %s74, %s76
    %p80 = scmp.eq.s32.totalorder %s14, 0
    %p81 = por %p79, %p80
    %p82 = scmp.ne.s32.totalorder %s74, %s76
    %p83 = scmp.eq.s32.totalorder %s19, 1
    %p84 = por %p82, %p83
    %p85 = scmp.ne.s32.totalorder %s76, %s77
    %p86 = scmp.eq.s32.totalorder %s19, 0
    %p87 = por %p85, %p86
    %p88 = scmp.ne.s32.totalorder %s76, %s77
    %p89 = scmp.eq.s32.totalorder %s20, 1
    %p90 = por %p88, %p89
    %p92 = scmp.ne.s32.totalorder %s77, %s91
    %p93 = scmp.eq.s32.totalorder %s20, 0
    %p94 = por %p92, %p93
    %s96 = sadd.s32 %s95, 1
    %p99 = scmp.eq.s32.totalorder %s14, 1
    %p100 = scmp.ne.s32.totalorder %s95, %s97
    %p101 = scmp.eq.s32.totalorder %s14, 0
    %p102 = por %p100, %p101
    %p103 = scmp.ne.s32.totalorder %s95, %s97
    %p104 = scmp.eq.s32.totalorder %s19, 1
    %p105 = por %p103, %p104
    %p106 = scmp.ne.s32.totalorder %s97, %s98
    %p107 = scmp.eq.s32.totalorder %s19, 0
    %p108 = por %p106, %p107
    %p109 = scmp.ne.s32.totalorder %s97, %s98
    %p110 = scmp.eq.s32.totalorder %s20, 1
    %p111 = por %p109, %p110
    %p113 = scmp.ne.s32.totalorder %s98, %s112
    %p114 = scmp.eq.s32.totalorder %s20, 0
    %p115 = por %p113, %p114
    %s117 = sadd.s32 %s116, 1
    %p120 = scmp.eq.s32.totalorder %s14, 1
    %p121 = scmp.ne.s32.totalorder %s116, %s118
    %p122 = scmp.eq.s32.totalorder %s14, 0
    %p123 = por %p121, %p122
    %p124 = scmp.ne.s32.totalorder %s116, %s118
    %p125 = scmp.eq.s32.totalorder %s19, 1
    %p126 = por %p124, %p125
    %p127 = scmp.ne.s32.totalorder %s118, %s119
    %p128 = scmp.eq.s32.totalorder %s19, 0
    %p129 = por %p127, %p128
    %p130 = scmp.ne.s32.totalorder %s118, %s119
    %p131 = scmp.eq.s32.totalorder %s20, 1
    %p132 = por %p130, %p131
    %p134 = scmp.ne.s32.totalorder %s119, %s133
    %p135 = scmp.eq.s32.totalorder %s20, 0
    %p136 = por %p134, %p135
    %s138 = sadd.s32 %s137, 1
    %p141 = scmp.eq.s32.totalorder %s14, 1
    %p142 = scmp.ne.s32.totalorder %s137, %s139
    %p143 = scmp.eq.s32.totalorder %s14, 0
    %p144 = por %p142, %p143
    %p145 = scmp.ne.s32.totalorder %s137, %s139
    %p146 = scmp.eq.s32.totalorder %s19, 1
    %p147 = por %p145, %p146
    %p148 = scmp.ne.s32.totalorder %s139, %s140
    %p149 = scmp.eq.s32.totalorder %s19, 0
    %p150 = por %p148, %p149
    %p151 = scmp.ne.s32.totalorder %s139, %s140
    %p152 = scmp.eq.s32.totalorder %s20, 1
    %p153 = por %p151, %p152
    %p155 = scmp.ne.s32.totalorder %s140, %s154
    %p156 = scmp.eq.s32.totalorder %s20, 0
    %p157 = por %p155, %p156
    %s159 = sadd.s32 %s158, 1
    %p162 = scmp.eq.s32.totalorder %s14, 1
    %p163 = scmp.ne.s32.totalorder %s158, %s160
    %p164 = scmp.eq.s32.totalorder %s14, 0
    %p165 = por %p163, %p164
    %p166 = scmp.ne.s32.totalorder %s158, %s160
    %p167 = scmp.eq.s32.totalorder %s19, 1
    %p168 = por %p166, %p167
    %p169 = scmp.ne.s32.totalorder %s160, %s161
    %p170 = scmp.eq.s32.totalorder %s19, 0
    %p171 = por %p169, %p170
    %p172 = scmp.ne.s32.totalorder %s160, %s161
    %p173 = scmp.eq.s32.totalorder %s20, 1
    %p174 = por %p172, %p173
    %p176 = scmp.ne.s32.totalorder %s161, %s175
    %p177 = scmp.eq.s32.totalorder %s20, 0
    %p178 = por %p176, %p177
    %s180 = sadd.s32 %s179, 1
    %p183 = scmp.eq.s32.totalorder %s14, 1
    %p184 = scmp.ne.s32.totalorder %s179, %s181
    %p185 = scmp.eq.s32.totalorder %s14, 0
    %p186 = por %p184, %p185
    %p187 = scmp.ne.s32.totalorder %s179, %s181
    %p188 = scmp.eq.s32.totalorder %s19, 1
    %p189 = por %p187, %p188
    %p190 = scmp.ne.s32.totalorder %s181, %s182
    %p191 = scmp.eq.s32.totalorder %s19, 0
    %p192 = por %p190, %p191
    %p193 = scmp.ne.s32.totalorder %s181, %s182
    %p194 = scmp.eq.s32.totalorder %s20, 1
    %p195 = por %p193, %p194
    %p197 = scmp.ne.s32.totalorder %s182, %s196
    %p198 = scmp.eq.s32.totalorder %s20, 0
    %p199 = por %p197, %p198
    %s200 = ssub.s32 %s14, %s21
    %p201 = scmp.eq.s32.totalorder %s200, 0
    %s203 = sadd.s32 %s202, 1
    %s204 = scalar_select %p201, %s202, %s203
    %p207 = pneg %p201
    %p208 = scmp.eq.s32.totalorder %s14, 1
    %p209 = por %p207, %p208
    %p210 = scmp.ne.s32.totalorder %s202, %s205
    %p211 = scmp.eq.s32.totalorder %s14, 0
    %p212 = por %p210, %p211
    %p213 = scmp.ne.s32.totalorder %s202, %s205
    %p214 = scmp.eq.s32.totalorder %s19, 1
    %p215 = por %p213, %p214
    %p216 = scmp.ne.s32.totalorder %s205, %s206
    %p217 = scmp.eq.s32.totalorder %s19, 0
    %p218 = por %p216, %p217
    %p219 = scmp.ne.s32.totalorder %s205, %s206
    %p220 = scmp.eq.s32.totalorder %s20, 1
    %p221 = por %p219, %p220
    %p223 = scmp.ne.s32.totalorder %s206, %s222
    %p224 = scmp.eq.s32.totalorder %s20, 0
    %p225 = por %p223, %p224
    %p226 = scmp.le.s32.totalorder 1, %s14
    %p227 = scmp.lt.s32.totalorder %s14, 3
    %p228 = pnand %p226, %p227
    %p229 = pneg %p228
    // Predicated region
    $region9: #{bottleneck_forward.7} parent=5 // pred_check
      _
    $region10: #{bottleneck_forward.7} parent=5 // pred_check_branch
      %231 = sbr.rel (%p228) target = $region12
    $region11: #{bottleneck_forward.7} parent=5 // pred_region
      %s232 = ssub.s32 %s14, 1
      // Predicated region
      $region13: #{bottleneck_forward.7} parent=11 // pred_check
        %p233 = pneg %p87
      $region14: #{bottleneck_forward.7} parent=11 // pred_check_branch
        %235 = sbr.rel (%p233) target = $region16
      $region15: #{bottleneck_forward.7} parent=11 // pred_region
        _
      $region16: #{bottleneck_forward.7} parent=11 // pred_fallthru
        _
      // Predicated region
      $region17: #{bottleneck_forward.7} parent=11 // pred_check
        %p236 = pneg %p108
      $region18: #{bottleneck_forward.7} parent=11 // pred_check_branch
        %238 = sbr.rel (%p236) target = $region20
      $region19: #{bottleneck_forward.7} parent=11 // pred_region
        _
      $region20: #{bottleneck_forward.7} parent=11 // pred_fallthru
        _
      // Predicated region
      $region21: #{bottleneck_forward.7} parent=11 // pred_check
        %p239 = pneg %p129
      $region22: #{bottleneck_forward.7} parent=11 // pred_check_branch
        %241 = sbr.rel (%p239) target = $region24
      $region23: #{bottleneck_forward.7} parent=11 // pred_region
        _
      $region24: #{bottleneck_forward.7} parent=11 // pred_fallthru
        _
      // Predicated region
      $region25: #{bottleneck_forward.7} parent=11 // pred_check
        %p242 = pneg %p150
      $region26: #{bottleneck_forward.7} parent=11 // pred_check_branch
        %244 = sbr.rel (%p242) target = $region28
      $region27: #{bottleneck_forward.7} parent=11 // pred_region
        _
      $region28: #{bottleneck_forward.7} parent=11 // pred_fallthru
        _
      // Predicated region
      $region29: #{bottleneck_forward.7} parent=11 // pred_check
        %p245 = pneg %p171
      $region30: #{bottleneck_forward.7} parent=11 // pred_check_branch
        %247 = sbr.rel (%p245) target = $region32
      $region31: #{bottleneck_forward.7} parent=11 // pred_region
        _
      $region32: #{bottleneck_forward.7} parent=11 // pred_fallthru
        _
      // Predicated region
      $region33: #{bottleneck_forward.7} parent=11 // pred_check
        %p248 = pneg %p192
      $region34: #{bottleneck_forward.7} parent=11 // pred_check_branch
        %250 = sbr.rel (%p248) target = $region36
      $region35: #{bottleneck_forward.7} parent=11 // pred_region
        _
      $region36: #{bottleneck_forward.7} parent=11 // pred_fallthru
        _
    $region12: #{bottleneck_forward.7} parent=5 // pred_fallthru
      _
    %p251 = scmp.lt.s32.totalorder %s14, 2
    // Predicated region
    $region37: #{bottleneck_forward.7} parent=5 // pred_check
      %p252 = pneg %p251
    $region38: #{bottleneck_forward.7} parent=5 // pred_check_branch
      %254 = sbr.rel (%p252) target = $region40
    $region39: #{bottleneck_forward.7} parent=5 // pred_region
      // Predicated region
      $region41: #{bottleneck_forward.7} parent=39 // pred_check
        %p255 = pneg %p34
      $region42: #{bottleneck_forward.7} parent=39 // pred_check_branch
        %257 = sbr.rel (%p255) target = $region44
      $region43: #{bottleneck_forward.7} parent=39 // pred_region
        %s258 = smul.u32 32, %s14
        %p259 = scmp.lt.s32.totalorder %s258, 63
        %s260 = scalar_select %p259, %s258, 63
        %s261 = smul.addr %s260, 4
        %s262 = scalar_lea.vmem %s0, %s261
        %s263 = smul.u32 32, %s14
      $region44: #{bottleneck_forward.7} parent=39 // pred_fallthru
        _
      // Predicated region
      $region45: #{bottleneck_forward.7} parent=39 // pred_check
        %p264 = pneg %p60
      $region46: #{bottleneck_forward.7} parent=39 // pred_check_branch
        %266 = sbr.rel (%p264) target = $region48
      $region47: #{bottleneck_forward.7} parent=39 // pred_region
        %s267 = smul.u32 32, %s14
        %p268 = scmp.lt.s32.totalorder %s267, 63
        %s269 = scalar_select %p268, %s267, 63
        %s270 = smul.addr %s269, 8
        %s271 = scalar_lea.vmem %s1, %s270
        %s272 = smul.u32 32, %s14
      $region48: #{bottleneck_forward.7} parent=39 // pred_fallthru
        _
    $region40: #{bottleneck_forward.7} parent=5 // pred_fallthru
      _
    %p273 = scmp.le.s32.totalorder 1, %s14
    %p274 = scmp.lt.s32.totalorder %s14, 3
    %p275 = pnand %p273, %p274
    %p276 = pneg %p275
    // Predicated region
    $region49: #{bottleneck_forward.7} parent=5 // pred_check
      _
    $region50: #{bottleneck_forward.7} parent=5 // pred_check_branch
      %278 = sbr.rel (%p275) target = $region52
    $region51: #{bottleneck_forward.7} parent=5 // pred_region
      %s279 = ssub.s32 %s14, 1
      %s280 = smul.u32 32, %s19
      %p281 = scmp.lt.s32.totalorder %s280, 63
      %s282 = scalar_select %p281, %s280, 63
      %s283 = smul.addr %s282, 4
      %s284 = scalar_lea.vmem %s0, %s283
      %p285 = pneg %p40
      %p286 = pneg %p37
      %s287 = smul.u32 32, %s19
      %p288 = scmp.lt.s32.totalorder %s287, 63
      %s289 = scalar_select %p288, %s287, 63
      %s290 = smul.addr %s289, 8
      %s291 = scalar_lea.vmem %s1, %s290
      %p292 = pneg %p66
      %p293 = pneg %p63
      %p294 = pneg %p87
      %p295 = pneg %p84
      %p296 = pneg %p108
      %p297 = pneg %p105
      %p298 = pneg %p129
      %p299 = pneg %p126
      %p300 = pneg %p150
      %p301 = pneg %p147
      %p302 = pneg %p171
      %p303 = pneg %p168
      %p304 = pneg %p192
      %p305 = pneg %p189
      %p306 = pneg %p218
      %p307 = pneg %p215
      %s308 = smul.u32 32, %s19
      %p309 = scmp.lt.s32.totalorder %s308, 63
      %s310 = scalar_select %p309, %s308, 63
      %s311 = smul.addr %s310, 8
      %s312 = scalar_lea.vmem %s8, %s311
      %s313 = smul.u32 32, %s19
      %p314 = scmp.lt.s32.totalorder %s313, 63
      %s315 = scalar_select %p314, %s313, 63
      %s316 = smul.addr %s315, 4
      %s317 = scalar_lea.vmem %s0, %s316
      %s318 = smul.u32 32, %s19
      %s319 = smul.u32 32, %s19
      %p320 = scmp.lt.s32.totalorder %s319, 63
      %s321 = scalar_select %p320, %s319, 63
      %s322 = smul.addr %s321, 8
      %s323 = scalar_lea.vmem %s1, %s322
      %s324 = smul.u32 32, %s19
      %s325 = smul.u32 32, %s19
      %p326 = scmp.lt.s32.totalorder %s325, 63
      %s327 = scalar_select %p326, %s325, 63
      %s328 = smul.addr %s327, 8
      %s329 = scalar_lea.vmem %s8, %s328
      %s330 = smul.u32 32, %s19
      %v332 = vld [vmem:[%s317] sm:$0xf]
      %v333 = vld [vmem:[%s317 + $0x4] sm:$0xf]
      %v334 = vld [vmem:[%s317 + $0x8] sm:$0xf]
      %v335 = vld [vmem:[%s317 + $0xc] sm:$0xf]
      %v336 = vld [vmem:[%s317 + $0x10] sm:$0xf]
      %v337 = vld [vmem:[%s317 + $0x14] sm:$0xf]
      %v338 = vld [vmem:[%s317 + $0x18] sm:$0xf]
      %v339 = vld [vmem:[%s317 + $0x1c] sm:$0xf]
      %v340 = vld [vmem:[%s317 + $0x20] sm:$0xf]
      %v341 = vld [vmem:[%s317 + $0x24] sm:$0xf]
      %v342 = vld [vmem:[%s317 + $0x28] sm:$0xf]
      %v343 = vld [vmem:[%s317 + $0x2c] sm:$0xf]
      %v344 = vld [vmem:[%s317 + $0x30] sm:$0xf]
      %v345 = vld [vmem:[%s317 + $0x34] sm:$0xf]
      %v346 = vld [vmem:[%s317 + $0x38] sm:$0xf]
      %v347 = vld [vmem:[%s317 + $0x3c] sm:$0xf]
      %v348 = vld [vmem:[%s317 + $0x40] sm:$0xf]
      %v349 = vld [vmem:[%s317 + $0x44] sm:$0xf]
      %v350 = vld [vmem:[%s317 + $0x48] sm:$0xf]
      %v351 = vld [vmem:[%s317 + $0x4c] sm:$0xf]
      %v352 = vld [vmem:[%s317 + $0x50] sm:$0xf]
      %v353 = vld [vmem:[%s317 + $0x54] sm:$0xf]
      %v354 = vld [vmem:[%s317 + $0x58] sm:$0xf]
      %v355 = vld [vmem:[%s317 + $0x5c] sm:$0xf]
      %v356 = vld [vmem:[%s317 + $0x60] sm:$0xf]
      %v357 = vld [vmem:[%s317 + $0x64] sm:$0xf]
      %v358 = vld [vmem:[%s317 + $0x68] sm:$0xf]
      %v359 = vld [vmem:[%s317 + $0x6c] sm:$0xf]
      %v360 = vld [vmem:[%s317 + $0x70] sm:$0xf]
      %v361 = vld [vmem:[%s317 + $0x74] sm:$0xf]
      %v362 = vld [vmem:[%s317 + $0x78] sm:$0xf]
      %v363 = vld [vmem:[%s317 + $0x7c] sm:$0xf]
      %v364 = vunpack.c.l.bf16 %v332
      %v365 = vunpack.c.l.bf16 %v333
      %v366 = vunpack.c.l.bf16 %v334
      %v367 = vunpack.c.l.bf16 %v335
      %v368 = vunpack.c.l.bf16 %v336
      %v369 = vunpack.c.l.bf16 %v337
      %v370 = vunpack.c.l.bf16 %v338
      %v371 = vunpack.c.l.bf16 %v339
      %v372 = vunpack.c.l.bf16 %v340
      %v373 = vunpack.c.l.bf16 %v341
      %v374 = vunpack.c.l.bf16 %v342
      %v375 = vunpack.c.l.bf16 %v343
      %v376 = vunpack.c.l.bf16 %v344
      %v377 = vunpack.c.l.bf16 %v345
      %v378 = vunpack.c.l.bf16 %v346
      %v379 = vunpack.c.l.bf16 %v347
      %v380 = vunpack.c.l.bf16 %v348
      %v381 = vunpack.c.l.bf16 %v349
      %v382 = vunpack.c.l.bf16 %v350
      %v383 = vunpack.c.l.bf16 %v351
      %v384 = vunpack.c.l.bf16 %v352
      %v385 = vunpack.c.l.bf16 %v353
      %v386 = vunpack.c.l.bf16 %v354
      %v387 = vunpack.c.l.bf16 %v355
      %v388 = vunpack.c.l.bf16 %v356
      %v389 = vunpack.c.l.bf16 %v357
      %v390 = vunpack.c.l.bf16 %v358
      %v391 = vunpack.c.l.bf16 %v359
      %v392 = vunpack.c.l.bf16 %v360
      %v393 = vunpack.c.l.bf16 %v361
      %v394 = vunpack.c.l.bf16 %v362
      %v395 = vunpack.c.l.bf16 %v363
      %v396 = vld [vmem:[%s2] sm:$0x1]
      %v398 = vlaneseq
      %v399 = vshrl.u32 %v398, 7
      %v400 = vsub.s32 0, %v399
      %v401 = vrot.slane %v396, %v400
      %v403 = vmul.f32 %v364, %v401
      %v404 = vmul.f32 %v365, %v401
      %v405 = vmul.f32 %v366, %v401
      %v406 = vmul.f32 %v367, %v401
      %v407 = vmul.f32 %v368, %v401
      %v408 = vmul.f32 %v369, %v401
      %v409 = vmul.f32 %v370, %v401
      %v410 = vmul.f32 %v371, %v401
      %v411 = vmul.f32 %v372, %v401
      %v412 = vmul.f32 %v373, %v401
      %v413 = vmul.f32 %v374, %v401
      %v414 = vmul.f32 %v375, %v401
      %v415 = vmul.f32 %v376, %v401
      %v416 = vmul.f32 %v377, %v401
      %v417 = vmul.f32 %v378, %v401
      %v418 = vmul.f32 %v379, %v401
      %v419 = vmul.f32 %v380, %v401
      %v420 = vmul.f32 %v381, %v401
      %v421 = vmul.f32 %v382, %v401
      %v422 = vmul.f32 %v383, %v401
      %v423 = vmul.f32 %v384, %v401
      %v424 = vmul.f32 %v385, %v401
      %v425 = vmul.f32 %v386, %v401
      %v426 = vmul.f32 %v387, %v401
      %v427 = vmul.f32 %v388, %v401
      %v428 = vmul.f32 %v389, %v401
      %v429 = vmul.f32 %v390, %v401
      %v430 = vmul.f32 %v391, %v401
      %v431 = vmul.f32 %v392, %v401
      %v432 = vmul.f32 %v393, %v401
      %v433 = vmul.f32 %v394, %v401
      %v434 = vmul.f32 %v395, %v401
      %v435 = vld [vmem:[%s3] sm:$0x1]
      %v437 = vlaneseq
      %v438 = vshrl.u32 %v437, 7
      %v439 = vsub.s32 0, %v438
      %v440 = vrot.slane %v435, %v439
      %v442 = vadd.f32 %v403, %v440
      %v443 = vadd.f32 %v404, %v440
      %v444 = vadd.f32 %v405, %v440
      %v445 = vadd.f32 %v406, %v440
      %v446 = vadd.f32 %v407, %v440
      %v447 = vadd.f32 %v408, %v440
      %v448 = vadd.f32 %v409, %v440
      %v449 = vadd.f32 %v410, %v440
      %v450 = vadd.f32 %v411, %v440
      %v451 = vadd.f32 %v412, %v440
      %v452 = vadd.f32 %v413, %v440
      %v453 = vadd.f32 %v414, %v440
      %v454 = vadd.f32 %v415, %v440
      %v455 = vadd.f32 %v416, %v440
      %v456 = vadd.f32 %v417, %v440
      %v457 = vadd.f32 %v418, %v440
      %v458 = vadd.f32 %v419, %v440
      %v459 = vadd.f32 %v420, %v440
      %v460 = vadd.f32 %v421, %v440
      %v461 = vadd.f32 %v422, %v440
      %v462 = vadd.f32 %v423, %v440
      %v463 = vadd.f32 %v424, %v440
      %v464 = vadd.f32 %v425, %v440
      %v465 = vadd.f32 %v426, %v440
      %v466 = vadd.f32 %v427, %v440
      %v467 = vadd.f32 %v428, %v440
      %v468 = vadd.f32 %v429, %v440
      %v469 = vadd.f32 %v430, %v440
      %v470 = vadd.f32 %v431, %v440
      %v471 = vadd.f32 %v432, %v440
      %v472 = vadd.f32 %v433, %v440
      %v473 = vadd.f32 %v434, %v440
      %v474 = vmax.f32 %v442, 0.0
      %v475 = vmax.f32 %v443, 0.0
      %v476 = vmax.f32 %v444, 0.0
      %v477 = vmax.f32 %v445, 0.0
      %v478 = vmax.f32 %v446, 0.0
      %v479 = vmax.f32 %v447, 0.0
      %v480 = vmax.f32 %v448, 0.0
      %v481 = vmax.f32 %v449, 0.0
      %v482 = vmax.f32 %v450, 0.0
      %v483 = vmax.f32 %v451, 0.0
      %v484 = vmax.f32 %v452, 0.0
      %v485 = vmax.f32 %v453, 0.0
      %v486 = vmax.f32 %v454, 0.0
      %v487 = vmax.f32 %v455, 0.0
      %v488 = vmax.f32 %v456, 0.0
      %v489 = vmax.f32 %v457, 0.0
      %v490 = vmax.f32 %v458, 0.0
      %v491 = vmax.f32 %v459, 0.0
      %v492 = vmax.f32 %v460, 0.0
      %v493 = vmax.f32 %v461, 0.0
      %v494 = vmax.f32 %v462, 0.0
      %v495 = vmax.f32 %v463, 0.0
      %v496 = vmax.f32 %v464, 0.0
      %v497 = vmax.f32 %v465, 0.0
      %v498 = vmax.f32 %v466, 0.0
      %v499 = vmax.f32 %v467, 0.0
      %v500 = vmax.f32 %v468, 0.0
      %v501 = vmax.f32 %v469, 0.0
      %v502 = vmax.f32 %v470, 0.0
      %v503 = vmax.f32 %v471, 0.0
      %v504 = vmax.f32 %v472, 0.0
      %v505 = vmax.f32 %v473, 0.0
      %v506 = vpack.c.bf16 %v475, %v474
      %v507 = vpack.c.bf16 %v477, %v476
      %v508 = vpack.c.bf16 %v479, %v478
      %v509 = vpack.c.bf16 %v481, %v480
      %v510 = vpack.c.bf16 %v483, %v482
      %v511 = vpack.c.bf16 %v485, %v484
      %v512 = vpack.c.bf16 %v487, %v486
      %v513 = vpack.c.bf16 %v489, %v488
      %v514 = vpack.c.bf16 %v491, %v490
      %v515 = vpack.c.bf16 %v493, %v492
      %v516 = vpack.c.bf16 %v495, %v494
      %v517 = vpack.c.bf16 %v497, %v496
      %v518 = vpack.c.bf16 %v499, %v498
      %v519 = vpack.c.bf16 %v501, %v500
      %v520 = vpack.c.bf16 %v503, %v502
      %v521 = vpack.c.bf16 %v505, %v504
      %v522 = vld [vmem:[%s4] sm:$0xf]
      %v523 = vld [vmem:[%s4 + $0x4] sm:$0xf]
      %v524 = vld [vmem:[%s4 + $0x8] sm:$0xf]
      %v525 = vld [vmem:[%s4 + $0xc] sm:$0xf]
      %v526 = vld [vmem:[%s4 + $0x10] sm:$0xf]
      %v527 = vld [vmem:[%s4 + $0x14] sm:$0xf]
      %v528 = vld [vmem:[%s4 + $0x18] sm:$0xf]
      %v529 = vld [vmem:[%s4 + $0x1c] sm:$0xf]
      %v530 = vld [vmem:[%s4 + $0x20] sm:$0xf]
      %v531 = vld [vmem:[%s4 + $0x24] sm:$0xf]
      %v532 = vld [vmem:[%s4 + $0x28] sm:$0xf]
      %v533 = vld [vmem:[%s4 + $0x2c] sm:$0xf]
      %v534 = vld [vmem:[%s4 + $0x30] sm:$0xf]
      %v535 = vld [vmem:[%s4 + $0x34] sm:$0xf]
      %v536 = vld [vmem:[%s4 + $0x38] sm:$0xf]
      %v537 = vld [vmem:[%s4 + $0x3c] sm:$0xf]
      %v538 = vld [vmem:[%s5] sm:$0x1]
      %v540 = vlaneseq
      %v541 = vshrl.u32 %v540, 7
      %v542 = vsub.s32 0, %v541
      %v543 = vrot.slane %v538, %v542
      %v561 = vunpack.c.l.b16 %v522
      %v562 = vunpack.c.l.b16 %v523
      %v563 = vunpack.c.l.b16 %v524
      %v564 = vunpack.c.l.b16 %v525
      %v565 = vunpack.c.l.b16 %v526
      %v566 = vunpack.c.l.b16 %v527
      %v567 = vunpack.c.l.b16 %v528
      %v568 = vunpack.c.l.b16 %v529
      %v569 = vunpack.c.l.b16 %v530
      %v570 = vunpack.c.l.b16 %v531
      %v571 = vunpack.c.l.b16 %v532
      %v572 = vunpack.c.l.b16 %v533
      %v573 = vunpack.c.l.b16 %v534
      %v574 = vunpack.c.l.b16 %v535
      %v575 = vunpack.c.l.b16 %v536
      %v576 = vunpack.c.l.b16 %v537
      %v577 = vpack.c.b16 %v562, %v561
      %v578 = vpack.c.b16 %v564, %v563
      %v579 = vpack.c.b16 %v566, %v565
      %v580 = vpack.c.b16 %v568, %v567
      %v581 = vpack.c.b16 %v570, %v569
      %v582 = vpack.c.b16 %v572, %v571
      %v583 = vpack.c.b16 %v574, %v573
      %v584 = vpack.c.b16 %v576, %v575
      %593 = vmatprep.subr.bf16.mxu0 0
      %594 = vmatpush1.bf16.msra.mxu0 %v577
      %595 = vmatprep.subr.bf16.mxu0 0
      %596 = vmatpush1.bf16.msra.mxu0 %v578
      %597 = vmatprep.subr.bf16.mxu0 0
      %598 = vmatpush1.bf16.msra.mxu0 %v579
      %599 = vmatprep.subr.bf16.mxu0 0
      %600 = vmatpush1.bf16.msra.mxu0 %v580
      %601 = vmatprep.subr.bf16.mxu0 0
      %602 = vmatpush1.bf16.msra.mxu0 %v581
      %603 = vmatprep.subr.bf16.mxu0 0
      %604 = vmatpush1.bf16.msra.mxu0 %v582
      %605 = vmatprep.subr.bf16.mxu0 0
      %606 = vmatpush1.bf16.msra.mxu0 %v583
      %607 = vmatprep.subr.bf16.mxu0 0
      %608 = vmatpush1.bf16.msra.mxu0 %v584
      %609 = vmatprep.subr.bf16.mxu0 0
      %610 = vmatpush1.bf16.msra.mxu0 0
      %611 = vmatprep.subr.bf16.mxu0 0
      %612 = vmatpush1.bf16.msra.mxu0 0
      %613 = vmatprep.subr.bf16.mxu0 0
      %614 = vmatpush1.bf16.msra.mxu0 0
      %615 = vmatprep.subr.bf16.mxu0 0
      %616 = vmatpush1.bf16.msra.mxu0 0
      %617 = vmatprep.subr.bf16.mxu0 0
      %618 = vmatpush1.bf16.msra.mxu0 0
      %619 = vmatprep.subr.bf16.mxu0 0
      %620 = vmatpush1.bf16.msra.mxu0 0
      %621 = vmatprep.subr.bf16.mxu0 0
      %622 = vmatpush1.bf16.msra.mxu0 0
      %623 = vmatprep.subr.bf16.mxu0 0
      %624 = vmatpush1.bf16.msra.mxu0 0
      %625 = vmatprep.mubr.bf16.mxu0 0
      %626 = vmatmul.mubr.bf16.gmra.mrb[0].mxu0 %v506
      %v627 = vpop.f32.mrb[0].mxu0
      %v628 = vadd.f32 %v543, %v627
      %v629 = vpop.f32.mrb[0].mxu0
      %v630 = vpop.f32.mrb[0].mxu0
      %v631 = vadd.f32 %v543, %v630
      %v632 = vpop.f32.mrb[0].mxu0
      %633 = vmatprep.mubr.bf16.mxu0 0
      %634 = vmatmul.mubr.bf16.gmra.mrb[0].mxu0 %v507
      %v635 = vpop.f32.mrb[0].mxu0
      %v636 = vadd.f32 %v543, %v635
      %v637 = vpop.f32.mrb[0].mxu0
      %v638 = vpop.f32.mrb[0].mxu0
      %v639 = vadd.f32 %v543, %v638
      %v640 = vpop.f32.mrb[0].mxu0
      %641 = vmatprep.mubr.bf16.mxu0 0
      %642 = vmatmul.mubr.bf16.gmra.mrb[0].mxu0 %v508
      %v643 = vpop.f32.mrb[0].mxu0
      %v644 = vadd.f32 %v543, %v643
      %v645 = vpop.f32.mrb[0].mxu0
      %v646 = vpop.f32.mrb[0].mxu0
      %v647 = vadd.f32 %v543, %v646
      %v648 = vpop.f32.mrb[0].mxu0
      %649 = vmatprep.mubr.bf16.mxu0 0
      %650 = vmatmul.mubr.bf16.gmra.mrb[0].mxu0 %v509
      %v651 = vpop.f32.mrb[0].mxu0
      %v652 = vadd.f32 %v543, %v651
      %v653 = vpop.f32.mrb[0].mxu0
      %v654 = vpop.f32.mrb[0].mxu0
      %v655 = vadd.f32 %v543, %v654
      %v656 = vpop.f32.mrb[0].mxu0
      %657 = vmatprep.mubr.bf16.mxu0 0
      %658 = vmatmul.mubr.bf16.gmra.mrb[0].mxu0 %v510
      %v659 = vpop.f32.mrb[0].mxu0
      %v660 = vadd.f32 %v543, %v659
      %v661 = vpop.f32.mrb[0].mxu0
      %v662 = vpop.f32.mrb[0].mxu0
      %v663 = vadd.f32 %v543, %v662
      %v664 = vpop.f32.mrb[0].mxu0
      %665 = vmatprep.mubr.bf16.mxu0 0
      %666 = vmatmul.mubr.bf16.gmra.mrb[0].mxu0 %v511
      %v667 = vpop.f32.mrb[0].mxu0
      %v668 = vadd.f32 %v543, %v667
      %v669 = vpop.f32.mrb[0].mxu0
      %v670 = vpop.f32.mrb[0].mxu0
      %v671 = vadd.f32 %v543, %v670
      %v672 = vpop.f32.mrb[0].mxu0
      %673 = vmatprep.mubr.bf16.mxu0 0
      %674 = vmatmul.mubr.bf16.gmra.mrb[0].mxu0 %v512
      %v675 = vpop.f32.mrb[0].mxu0
      %v676 = vadd.f32 %v543, %v675
      %v677 = vpop.f32.mrb[0].mxu0
      %v678 = vpop.f32.mrb[0].mxu0
      %v679 = vadd.f32 %v543, %v678
      %v680 = vpop.f32.mrb[0].mxu0
      %681 = vmatprep.mubr.bf16.mxu0 0
      %682 = vmatmul.mubr.bf16.gmra.mrb[0].mxu0 %v513
      %v683 = vpop.f32.mrb[0].mxu0
      %v684 = vadd.f32 %v543, %v683
      %v685 = vpop.f32.mrb[0].mxu0
      %v686 = vpop.f32.mrb[0].mxu0
      %v687 = vadd.f32 %v543, %v686
      %v688 = vpop.f32.mrb[0].mxu0
      %689 = vmatprep.mubr.bf16.mxu0 0
      %690 = vmatmul.mubr.bf16.gmra.mrb[0].mxu0 %v514
      %v691 = vpop.f32.mrb[0].mxu0
      %v692 = vadd.f32 %v543, %v691
      %v693 = vpop.f32.mrb[0].mxu0
      %v694 = vpop.f32.mrb[0].mxu0
      %v695 = vadd.f32 %v543, %v694
      %v696 = vpop.f32.mrb[0].mxu0
      %697 = vmatprep.mubr.bf16.mxu0 0
      %698 = vmatmul.mubr.bf16.gmra.mrb[0].mxu0 %v515
      %v699 = vpop.f32.mrb[0].mxu0
      %v700 = vadd.f32 %v543, %v699
      %v701 = vpop.f32.mrb[0].mxu0
      %v702 = vpop.f32.mrb[0].mxu0
      %v703 = vadd.f32 %v543, %v702
      %v704 = vpop.f32.mrb[0].mxu0
      %705 = vmatprep.mubr.bf16.mxu0 0
      %706 = vmatmul.mubr.bf16.gmra.mrb[0].mxu0 %v516
      %v707 = vpop.f32.mrb[0].mxu0
      %v708 = vadd.f32 %v543, %v707
      %v709 = vpop.f32.mrb[0].mxu0
      %v710 = vpop.f32.mrb[0].mxu0
      %v711 = vadd.f32 %v543, %v710
      %v712 = vpop.f32.mrb[0].mxu0
      %713 = vmatprep.mubr.bf16.mxu0 0
      %714 = vmatmul.mubr.bf16.gmra.mrb[0].mxu0 %v517
      %v715 = vpop.f32.mrb[0].mxu0
      %v716 = vadd.f32 %v543, %v715
      %v717 = vpop.f32.mrb[0].mxu0
      %v718 = vpop.f32.mrb[0].mxu0
      %v719 = vadd.f32 %v543, %v718
      %v720 = vpop.f32.mrb[0].mxu0
      %721 = vmatprep.mubr.bf16.mxu0 0
      %722 = vmatmul.mubr.bf16.gmra.mrb[0].mxu0 %v518
      %v723 = vpop.f32.mrb[0].mxu0
      %v724 = vadd.f32 %v543, %v723
      %v725 = vpop.f32.mrb[0].mxu0
      %v726 = vpop.f32.mrb[0].mxu0
      %v727 = vadd.f32 %v543, %v726
      %v728 = vpop.f32.mrb[0].mxu0
      %729 = vmatprep.mubr.bf16.mxu0 0
      %730 = vmatmul.mubr.bf16.gmra.mrb[0].mxu0 %v519
      %v731 = vpop.f32.mrb[0].mxu0
      %v732 = vadd.f32 %v543, %v731
      %v733 = vpop.f32.mrb[0].mxu0
      %v734 = vpop.f32.mrb[0].mxu0
      %v735 = vadd.f32 %v543, %v734
      %v736 = vpop.f32.mrb[0].mxu0
      %737 = vmatprep.mubr.bf16.mxu0 0
      %738 = vmatmul.mubr.bf16.gmra.mrb[0].mxu0 %v520
      %v739 = vpop.f32.mrb[0].mxu0
      %v740 = vadd.f32 %v543, %v739
      %v741 = vpop.f32.mrb[0].mxu0
      %v742 = vpop.f32.mrb[0].mxu0
      %v743 = vadd.f32 %v543, %v742
      %v744 = vpop.f32.mrb[0].mxu0
      %745 = vmatprep.mubr.bf16.mxu0 0
      %746 = vmatmul.mubr.bf16.gmra.mrb[0].mxu0 %v521
      %v747 = vpop.f32.mrb[0].mxu0
      %v748 = vadd.f32 %v543, %v747
      %v749 = vpop.f32.mrb[0].mxu0
      %v750 = vpop.f32.mrb[0].mxu0
      %v751 = vadd.f32 %v543, %v750
      %v752 = vpop.f32.mrb[0].mxu0
      %753 = vdwg.mxu0
      %v754 = vld [vmem:[%s323] sm:$0xff]
      %v755 = vld [vmem:[%s323 + $0x8] sm:$0xff]
      %v756 = vld [vmem:[%s323 + $0x10] sm:$0xff]
      %v757 = vld [vmem:[%s323 + $0x18] sm:$0xff]
      %v758 = vld [vmem:[%s323 + $0x20] sm:$0xff]
      %v759 = vld [vmem:[%s323 + $0x28] sm:$0xff]
      %v760 = vld [vmem:[%s323 + $0x30] sm:$0xff]
      %v761 = vld [vmem:[%s323 + $0x38] sm:$0xff]
      %v762 = vld [vmem:[%s323 + $0x40] sm:$0xff]
      %v763 = vld [vmem:[%s323 + $0x48] sm:$0xff]
      %v764 = vld [vmem:[%s323 + $0x50] sm:$0xff]
      %v765 = vld [vmem:[%s323 + $0x58] sm:$0xff]
      %v766 = vld [vmem:[%s323 + $0x60] sm:$0xff]
      %v767 = vld [vmem:[%s323 + $0x68] sm:$0xff]
      %v768 = vld [vmem:[%s323 + $0x70] sm:$0xff]
      %v769 = vld [vmem:[%s323 + $0x78] sm:$0xff]
      %v770 = vld [vmem:[%s323 + $0x80] sm:$0xff]
      %v771 = vld [vmem:[%s323 + $0x88] sm:$0xff]
      %v772 = vld [vmem:[%s323 + $0x90] sm:$0xff]
      %v773 = vld [vmem:[%s323 + $0x98] sm:$0xff]
      %v774 = vld [vmem:[%s323 + $0xa0] sm:$0xff]
      %v775 = vld [vmem:[%s323 + $0xa8] sm:$0xff]
      %v776 = vld [vmem:[%s323 + $0xb0] sm:$0xff]
      %v777 = vld [vmem:[%s323 + $0xb8] sm:$0xff]
      %v778 = vld [vmem:[%s323 + $0xc0] sm:$0xff]
      %v779 = vld [vmem:[%s323 + $0xc8] sm:$0xff]
      %v780 = vld [vmem:[%s323 + $0xd0] sm:$0xff]
      %v781 = vld [vmem:[%s323 + $0xd8] sm:$0xff]
      %v782 = vld [vmem:[%s323 + $0xe0] sm:$0xff]
      %v783 = vld [vmem:[%s323 + $0xe8] sm:$0xff]
      %v784 = vld [vmem:[%s323 + $0xf0] sm:$0xff]
      %v785 = vld [vmem:[%s323 + $0xf8] sm:$0xff]
      %v786 = vpack.c.bf16 %v755, %v754
      %v787 = vpack.c.bf16 %v757, %v756
      %v788 = vpack.c.bf16 %v759, %v758
      %v789 = vpack.c.bf16 %v761, %v760
      %v790 = vpack.c.bf16 %v763, %v762
      %v791 = vpack.c.bf16 %v765, %v764
      %v792 = vpack.c.bf16 %v767, %v766
      %v793 = vpack.c.bf16 %v769, %v768
      %v794 = vpack.c.bf16 %v771, %v770
      %v795 = vpack.c.bf16 %v773, %v772
      %v796 = vpack.c.bf16 %v775, %v774
      %v797 = vpack.c.bf16 %v777, %v776
      %v798 = vpack.c.bf16 %v779, %v778
      %v799 = vpack.c.bf16 %v781, %v780
      %v800 = vpack.c.bf16 %v783, %v782
      %v801 = vpack.c.bf16 %v785, %v784
      %v802 = vld [vmem:[%s6] sm:$0xf]
      %v803 = vld [vmem:[%s6 + $0x4] sm:$0xf]
      %v804 = vld [vmem:[%s6 + $0x8] sm:$0xf]
      %v805 = vld [vmem:[%s6 + $0xc] sm:$0xf]
      %v806 = vld [vmem:[%s6 + $0x10] sm:$0xf]
      %v807 = vld [vmem:[%s6 + $0x14] sm:$0xf]
      %v808 = vld [vmem:[%s6 + $0x18] sm:$0xf]
      %v809 = vld [vmem:[%s6 + $0x1c] sm:$0xf]
      %v810 = vld [vmem:[%s6 + $0x20] sm:$0xf]
      %v811 = vld [vmem:[%s6 + $0x24] sm:$0xf]
      %v812 = vld [vmem:[%s6 + $0x28] sm:$0xf]
      %v813 = vld [vmem:[%s6 + $0x2c] sm:$0xf]
      %v814 = vld [vmem:[%s6 + $0x30] sm:$0xf]
      %v815 = vld [vmem:[%s6 + $0x34] sm:$0xf]
      %v816 = vld [vmem:[%s6 + $0x38] sm:$0xf]
      %v817 = vld [vmem:[%s6 + $0x3c] sm:$0xf]
      %v818 = vld [vmem:[%s7] sm:$0x1]
      %v820 = vlaneseq
      %v821 = vshrl.u32 %v820, 7
      %v822 = vsub.s32 0, %v821
      %v823 = vrot.slane %v818, %v822
      %v841 = vunpack.c.l.b16 %v802
      %v842 = vunpack.c.l.b16 %v803
      %v843 = vunpack.c.l.b16 %v804
      %v844 = vunpack.c.l.b16 %v805
      %v845 = vunpack.c.l.b16 %v806
      %v846 = vunpack.c.l.b16 %v807
      %v847 = vunpack.c.l.b16 %v808
      %v848 = vunpack.c.l.b16 %v809
      %v849 = vunpack.c.l.b16 %v810
      %v850 = vunpack.c.l.b16 %v811
      %v851 = vunpack.c.l.b16 %v812
      %v852 = vunpack.c.l.b16 %v813
      %v853 = vunpack.c.l.b16 %v814
      %v854 = vunpack.c.l.b16 %v815
      %v855 = vunpack.c.l.b16 %v816
      %v856 = vunpack.c.l.b16 %v817
      %v857 = vpack.c.b16 %v842, %v841
      %v858 = vpack.c.b16 %v844, %v843
      %v859 = vpack.c.b16 %v846, %v845
      %v860 = vpack.c.b16 %v848, %v847
      %v861 = vpack.c.b16 %v850, %v849
      %v862 = vpack.c.b16 %v852, %v851
      %v863 = vpack.c.b16 %v854, %v853
      %v864 = vpack.c.b16 %v856, %v855
      %873 = vmatprep.subr.bf16.mxu0 0
      %874 = vmatpush1.bf16.msra.mxu0 %v857
      %875 = vmatprep.subr.bf16.mxu0 0
      %876 = vmatpush1.bf16.msra.mxu0 %v858
      %877 = vmatprep.subr.bf16.mxu0 0
      %878 = vmatpush1.bf16.msra.mxu0 %v859
      %879 = vmatprep.subr.bf16.mxu0 0
      %880 = vmatpush1.bf16.msra.mxu0 %v860
      %881 = vmatprep.subr.bf16.mxu0 0
      %882 = vmatpush1.bf16.msra.mxu0 %v861
      %883 = vmatprep.subr.bf16.mxu0 0
      %884 = vmatpush1.bf16.msra.mxu0 %v862
      %885 = vmatprep.subr.bf16.mxu0 0
      %886 = vmatpush1.bf16.msra.mxu0 %v863
      %887 = vmatprep.subr.bf16.mxu0 0
      %888 = vmatpush1.bf16.msra.mxu0 %v864
      %889 = vmatprep.subr.bf16.mxu0 0
      %890 = vmatpush1.bf16.msra.mxu0 0
      %891 = vmatprep.subr.bf16.mxu0 0
      %892 = vmatpush1.bf16.msra.mxu0 0
      %893 = vmatprep.subr.bf16.mxu0 0
      %894 = vmatpush1.bf16.msra.mxu0 0
      %895 = vmatprep.subr.bf16.mxu0 0
      %896 = vmatpush1.bf16.msra.mxu0 0
      %897 = vmatprep.subr.bf16.mxu0 0
      %898 = vmatpush1.bf16.msra.mxu0 0
      %899 = vmatprep.subr.bf16.mxu0 0
      %900 = vmatpush1.bf16.msra.mxu0 0
      %901 = vmatprep.subr.bf16.mxu0 0
      %902 = vmatpush1.bf16.msra.mxu0 0
      %903 = vmatprep.subr.bf16.mxu0 0
      %904 = vmatpush1.bf16.msra.mxu0 0
      %905 = vmatprep.mubr.bf16.mxu0 0
      %906 = vmatmul.mubr.bf16.gmra.mrb[0].mxu0 %v786
      %v907 = vpop.f32.mrb[0].mxu0
      %v908 = vadd.f32 %v823, %v907
      %v909 = vpop.f32.mrb[0].mxu0
      %v910 = vpop.f32.mrb[0].mxu0
      %v911 = vadd.f32 %v823, %v910
      %v912 = vpop.f32.mrb[0].mxu0
      %913 = vmatprep.mubr.bf16.mxu0 0
      %914 = vmatmul.mubr.bf16.gmra.mrb[0].mxu0 %v787
      %v915 = vpop.f32.mrb[0].mxu0
      %v916 = vadd.f32 %v823, %v915
      %v917 = vpop.f32.mrb[0].mxu0
      %v918 = vpop.f32.mrb[0].mxu0
      %v919 = vadd.f32 %v823, %v918
      %v920 = vpop.f32.mrb[0].mxu0
      %921 = vmatprep.mubr.bf16.mxu0 0
      %922 = vmatmul.mubr.bf16.gmra.mrb[0].mxu0 %v788
      %v923 = vpop.f32.mrb[0].mxu0
      %v924 = vadd.f32 %v823, %v923
      %v925 = vpop.f32.mrb[0].mxu0
      %v926 = vpop.f32.mrb[0].mxu0
      %v927 = vadd.f32 %v823, %v926
      %v928 = vpop.f32.mrb[0].mxu0
      %929 = vmatprep.mubr.bf16.mxu0 0
      %930 = vmatmul.mubr.bf16.gmra.mrb[0].mxu0 %v789
      %v931 = vpop.f32.mrb[0].mxu0
      %v932 = vadd.f32 %v823, %v931
      %v933 = vpop.f32.mrb[0].mxu0
      %v934 = vpop.f32.mrb[0].mxu0
      %v935 = vadd.f32 %v823, %v934
      %v936 = vpop.f32.mrb[0].mxu0
      %937 = vmatprep.mubr.bf16.mxu0 0
      %938 = vmatmul.mubr.bf16.gmra.mrb[0].mxu0 %v790
      %v939 = vpop.f32.mrb[0].mxu0
      %v940 = vadd.f32 %v823, %v939
      %v941 = vpop.f32.mrb[0].mxu0
      %v942 = vpop.f32.mrb[0].mxu0
      %v943 = vadd.f32 %v823, %v942
      %v944 = vpop.f32.mrb[0].mxu0
      %945 = vmatprep.mubr.bf16.mxu0 0
      %946 = vmatmul.mubr.bf16.gmra.mrb[0].mxu0 %v791
      %v947 = vpop.f32.mrb[0].mxu0
      %v948 = vadd.f32 %v823, %v947
      %v949 = vpop.f32.mrb[0].mxu0
      %v950 = vpop.f32.mrb[0].mxu0
      %v951 = vadd.f32 %v823, %v950
      %v952 = vpop.f32.mrb[0].mxu0
      %953 = vmatprep.mubr.bf16.mxu0 0
      %954 = vmatmul.mubr.bf16.gmra.mrb[0].mxu0 %v792
      %v955 = vpop.f32.mrb[0].mxu0
      %v956 = vadd.f32 %v823, %v955
      %v957 = vpop.f32.mrb[0].mxu0
      %v958 = vpop.f32.mrb[0].mxu0
      %v959 = vadd.f32 %v823, %v958
      %v960 = vpop.f32.mrb[0].mxu0
      %961 = vmatprep.mubr.bf16.mxu0 0
      %962 = vmatmul.mubr.bf16.gmra.mrb[0].mxu0 %v793
      %v963 = vpop.f32.mrb[0].mxu0
      %v964 = vadd.f32 %v823, %v963
      %v965 = vpop.f32.mrb[0].mxu0
      %v966 = vpop.f32.mrb[0].mxu0
      %v967 = vadd.f32 %v823, %v966
      %v968 = vpop.f32.mrb[0].mxu0
      %969 = vmatprep.mubr.bf16.mxu0 0
      %970 = vmatmul.mubr.bf16.gmra.mrb[0].mxu0 %v794
      %v971 = vpop.f32.mrb[0].mxu0
      %v972 = vadd.f32 %v823, %v971
      %v973 = vpop.f32.mrb[0].mxu0
      %v974 = vpop.f32.mrb[0].mxu0
      %v975 = vadd.f32 %v823, %v974
      %v976 = vpop.f32.mrb[0].mxu0
      %977 = vmatprep.mubr.bf16.mxu0 0
      %978 = vmatmul.mubr.bf16.gmra.mrb[0].mxu0 %v795
      %v979 = vpop.f32.mrb[0].mxu0
      %v980 = vadd.f32 %v823, %v979
      %v981 = vpop.f32.mrb[0].mxu0
      %v982 = vpop.f32.mrb[0].mxu0
      %v983 = vadd.f32 %v823, %v982
      %v984 = vpop.f32.mrb[0].mxu0
      %985 = vmatprep.mubr.bf16.mxu0 0
      %986 = vmatmul.mubr.bf16.gmra.mrb[0].mxu0 %v796
      %v987 = vpop.f32.mrb[0].mxu0
      %v988 = vadd.f32 %v823, %v987
      %v989 = vpop.f32.mrb[0].mxu0
      %v990 = vpop.f32.mrb[0].mxu0
      %v991 = vadd.f32 %v823, %v990
      %v992 = vpop.f32.mrb[0].mxu0
      %993 = vmatprep.mubr.bf16.mxu0 0
      %994 = vmatmul.mubr.bf16.gmra.mrb[0].mxu0 %v797
      %v995 = vpop.f32.mrb[0].mxu0
      %v996 = vadd.f32 %v823, %v995
      %v997 = vpop.f32.mrb[0].mxu0
      %v998 = vpop.f32.mrb[0].mxu0
      %v999 = vadd.f32 %v823, %v998
      %v1000 = vpop.f32.mrb[0].mxu0
      %1001 = vmatprep.mubr.bf16.mxu0 0
      %1002 = vmatmul.mubr.bf16.gmra.mrb[0].mxu0 %v798
      %v1003 = vpop.f32.mrb[0].mxu0
      %v1004 = vadd.f32 %v823, %v1003
      %v1005 = vpop.f32.mrb[0].mxu0
      %v1006 = vpop.f32.mrb[0].mxu0
      %v1007 = vadd.f32 %v823, %v1006
      %v1008 = vpop.f32.mrb[0].mxu0
      %1009 = vmatprep.mubr.bf16.mxu0 0
      %1010 = vmatmul.mubr.bf16.gmra.mrb[0].mxu0 %v799
      %v1011 = vpop.f32.mrb[0].mxu0
      %v1012 = vadd.f32 %v823, %v1011
      %v1013 = vpop.f32.mrb[0].mxu0
      %v1014 = vpop.f32.mrb[0].mxu0
      %v1015 = vadd.f32 %v823, %v1014
      %v1016 = vpop.f32.mrb[0].mxu0
      %1017 = vmatprep.mubr.bf16.mxu0 0
      %1018 = vmatmul.mubr.bf16.gmra.mrb[0].mxu0 %v800
      %v1019 = vpop.f32.mrb[0].mxu0
      %v1020 = vadd.f32 %v823, %v1019
      %v1021 = vpop.f32.mrb[0].mxu0
      %v1022 = vpop.f32.mrb[0].mxu0
      %v1023 = vadd.f32 %v823, %v1022
      %v1024 = vpop.f32.mrb[0].mxu0
      %1025 = vmatprep.mubr.bf16.mxu0 0
      %1026 = vmatmul.mubr.bf16.gmra.mrb[0].mxu0 %v801
      %v1027 = vpop.f32.mrb[0].mxu0
      %v1028 = vadd.f32 %v823, %v1027
      %v1029 = vpop.f32.mrb[0].mxu0
      %v1030 = vpop.f32.mrb[0].mxu0
      %v1031 = vadd.f32 %v823, %v1030
      %v1032 = vpop.f32.mrb[0].mxu0
      %1033 = vdwg.mxu0
      %v1034 = vadd.f32 %v628, %v908
      %v1035 = vadd.f32 %v631, %v911
      %v1036 = vadd.f32 %v636, %v916
      %v1037 = vadd.f32 %v639, %v919
      %v1038 = vadd.f32 %v644, %v924
      %v1039 = vadd.f32 %v647, %v927
      %v1040 = vadd.f32 %v652, %v932
      %v1041 = vadd.f32 %v655, %v935
      %v1042 = vadd.f32 %v660, %v940
      %v1043 = vadd.f32 %v663, %v943
      %v1044 = vadd.f32 %v668, %v948
      %v1045 = vadd.f32 %v671, %v951
      %v1046 = vadd.f32 %v676, %v956
      %v1047 = vadd.f32 %v679, %v959
      %v1048 = vadd.f32 %v684, %v964
      %v1049 = vadd.f32 %v687, %v967
      %v1050 = vadd.f32 %v692, %v972
      %v1051 = vadd.f32 %v695, %v975
      %v1052 = vadd.f32 %v700, %v980
      %v1053 = vadd.f32 %v703, %v983
      %v1054 = vadd.f32 %v708, %v988
      %v1055 = vadd.f32 %v711, %v991
      %v1056 = vadd.f32 %v716, %v996
      %v1057 = vadd.f32 %v719, %v999
      %v1058 = vadd.f32 %v724, %v1004
      %v1059 = vadd.f32 %v727, %v1007
      %v1060 = vadd.f32 %v732, %v1012
      %v1061 = vadd.f32 %v735, %v1015
      %v1062 = vadd.f32 %v740, %v1020
      %v1063 = vadd.f32 %v743, %v1023
      %v1064 = vadd.f32 %v748, %v1028
      %v1065 = vadd.f32 %v751, %v1031
      %1066 = vst [vmem:[%s329] sm:$0xff] %v1034
      %1067 = vst [vmem:[%s329 + $0x8] sm:$0xff] %v1035
      %1068 = vst [vmem:[%s329 + $0x10] sm:$0xff] %v1036
      %1069 = vst [vmem:[%s329 + $0x18] sm:$0xff] %v1037
      %1070 = vst [vmem:[%s329 + $0x20] sm:$0xff] %v1038
      %1071 = vst [vmem:[%s329 + $0x28] sm:$0xff] %v1039
      %1072 = vst [vmem:[%s329 + $0x30] sm:$0xff] %v1040
      %1073 = vst [vmem:[%s329 + $0x38] sm:$0xff] %v1041
      %1074 = vst [vmem:[%s329 + $0x40] sm:$0xff] %v1042
      %1075 = vst [vmem:[%s329 + $0x48] sm:$0xff] %v1043
      %1076 = vst [vmem:[%s329 + $0x50] sm:$0xff] %v1044
      %1077 = vst [vmem:[%s329 + $0x58] sm:$0xff] %v1045
      %1078 = vst [vmem:[%s329 + $0x60] sm:$0xff] %v1046
      %1079 = vst [vmem:[%s329 + $0x68] sm:$0xff] %v1047
      %1080 = vst [vmem:[%s329 + $0x70] sm:$0xff] %v1048
      %1081 = vst [vmem:[%s329 + $0x78] sm:$0xff] %v1049
      %1082 = vst [vmem:[%s329 + $0x80] sm:$0xff] %v1050
      %1083 = vst [vmem:[%s329 + $0x88] sm:$0xff] %v1051
      %1084 = vst [vmem:[%s329 + $0x90] sm:$0xff] %v1052
      %1085 = vst [vmem:[%s329 + $0x98] sm:$0xff] %v1053
      %1086 = vst [vmem:[%s329 + $0xa0] sm:$0xff] %v1054
      %1087 = vst [vmem:[%s329 + $0xa8] sm:$0xff] %v1055
      %1088 = vst [vmem:[%s329 + $0xb0] sm:$0xff] %v1056
      %1089 = vst [vmem:[%s329 + $0xb8] sm:$0xff] %v1057
      %1090 = vst [vmem:[%s329 + $0xc0] sm:$0xff] %v1058
      %1091 = vst [vmem:[%s329 + $0xc8] sm:$0xff] %v1059
      %1092 = vst [vmem:[%s329 + $0xd0] sm:$0xff] %v1060
      %1093 = vst [vmem:[%s329 + $0xd8] sm:$0xff] %v1061
      %1094 = vst [vmem:[%s329 + $0xe0] sm:$0xff] %v1062
      %1095 = vst [vmem:[%s329 + $0xe8] sm:$0xff] %v1063
      %1096 = vst [vmem:[%s329 + $0xf0] sm:$0xff] %v1064
      %1097 = vst [vmem:[%s329 + $0xf8] sm:$0xff] %v1065
      %s1098 = smul.u32 32, %s19
      %p1099 = scmp.lt.s32.totalorder %s1098, 63
      %s1100 = scalar_select %p1099, %s1098, 63
      %s1101 = smul.addr %s1100, 8
      %s1102 = scalar_lea.vmem %s8, %s1101
      // Predicated region
      $region53: #{bottleneck_forward.7} parent=51 // pred_check
        %p1103 = pneg %p215
      $region54: #{bottleneck_forward.7} parent=51 // pred_check_branch
        %1105 = sbr.rel (%p1103) target = $region56
      $region55: #{bottleneck_forward.7} parent=51 // pred_region
        %s1106 = smul.u32 32, %s19
      $region56: #{bottleneck_forward.7} parent=51 // pred_fallthru
        _
    $region52: #{bottleneck_forward.7} parent=5 // pred_fallthru
      _
    %p1107 = scmp.le.s32.totalorder 2, %s14
    // Predicated region
    $region57: #{bottleneck_forward.7} parent=5 // pred_check
      %p1108 = pneg %p1107
    $region58: #{bottleneck_forward.7} parent=5 // pred_check_branch
      %1110 = sbr.rel (%p1108) target = $region60
    $region59: #{bottleneck_forward.7} parent=5 // pred_region
      %s1111 = ssub.s32 %s14, 2
      // Predicated region
      $region61: #{bottleneck_forward.7} parent=59 // pred_check
        %p1112 = pneg %p221
      $region62: #{bottleneck_forward.7} parent=59 // pred_check_branch
        %1114 = sbr.rel (%p1112) target = $region64
      $region63: #{bottleneck_forward.7} parent=59 // pred_region
        %s1115 = smul.u32 32, %s20
        %p1116 = scmp.lt.s32.totalorder %s1115, 63
        %s1117 = scalar_select %p1116, %s1115, 63
        %s1118 = smul.addr %s1117, 8
        %s1119 = scalar_lea.vmem %s8, %s1118
      $region64: #{bottleneck_forward.7} parent=59 // pred_fallthru
        _
    $region60: #{bottleneck_forward.7} parent=5 // pred_fallthru
      _
  $region6: #{bottleneck_forward.7} parent=0 // loop_footer
    %s18 = sadd.s32 1, %s14
  $region7: #{bottleneck_forward.7} parent=0 // loop_footer_branch
    %13 = sbr.rel target = $region3
  $region8: #{bottleneck_forward.7} parent=0 // loop_exit
    _

// kernel: bottleneck_forward.6
$region0: #{bottleneck_forward.6}
  #allocation0 [shape = 'u32[]', space=smem, size = 0x4, offset = 0x4, fixed_abs, tag = 'smem constant byte address 0x4 - core index']
  #allocation1 [shape = 'u32[144,128]{1,0:T(1,128)}', space=vmem, size = 0x12000, scoped, tag = 'internal scratch']
  #allocation2 [shape = 'bf16[912,128]{1,0:T(16,128)(2,1)}', space=vmem, size = 0x39000, scoped, tag = 'scratch operand']
  %s0 = inlined_call_operand.vmem [shape: bf16[2,256,128], index: 0, kind: input, shape index: {}]
  %s1 = inlined_call_operand.vmem [shape: f32[1,128], index: 1, kind: input, shape index: {}]
  %s2 = inlined_call_operand.vmem [shape: f32[1,128], index: 2, kind: input, shape index: {}]
  %s3 = inlined_call_operand.vmem [shape: bf16[1152,128], index: 3, kind: input, shape index: {}]
  %s4 = inlined_call_operand.vmem [shape: f32[1,128], index: 4, kind: input, shape index: {}]
  %s5 = inlined_call_operand.vmem [shape: bf16[2,256,128], index: 5, kind: output, shape index: {0}]
  %s6 = inlined_call_operand.vmem [shape: f32[1,128], index: 6, kind: output, shape index: {1}]
  %s7 = inlined_call_operand.vmem [shape: f32[1,128], index: 7, kind: output, shape index: {2}]
  %8 = xla_tuple %s5, %s6, %s7
  %s9 = sld [smem:[#allocation0]]
  $region73: #{bottleneck_forward.6} parent=0
    _
  %s11 = ssub.s32 1, %s9
  %s12 = scalar_select 0, %s11, %s9
  loop: start=0, step=1, limit=4
  $region2: #{bottleneck_forward.6} parent=0 // loop_pre_header
    _
  $region3: #{bottleneck_forward.6} parent=0 // loop_header
    %s14 = sphi 0, %s18
    %p15 = scmp.ge.s32.totalorder %s14, 4
    %s24 = sphi 0, %s26
    %s27 = sphi 0, %s24
    %s28 = sphi 0, %s27
    %s44 = sphi 0, %s28
    %s48 = sphi 0, %s48
    %s50 = sphi 0, %s48
    %s51 = sphi 0, %s50
    %s65 = sphi 0, %s51
    %s69 = sphi 0, %s69
    %s71 = sphi 0, %s69
    %s72 = sphi 0, %s71
    %s86 = sphi 0, %s72
    %s90 = sphi 0, %s90
    %s92 = sphi 0, %s90
    %s93 = sphi 0, %s92
    %s107 = sphi 0, %s93
    %s111 = sphi 0, %s111
    %s113 = sphi 0, %s111
    %s114 = sphi 0, %s113
    %s128 = sphi 0, %s114
    %s134 = sphi 0, %s136
    %s137 = sphi 0, %s134
    %s138 = sphi 0, %s137
    %s154 = sphi 0, %s138
    %s158 = sphi 0, %s158
    %s160 = sphi 0, %s158
    %s161 = sphi 0, %s160
    %s175 = sphi 0, %s161
    %s179 = sphi 0, %s179
    %s181 = sphi 0, %s179
    %s182 = sphi 0, %s181
    %s196 = sphi 0, %s182
  $region4: #{bottleneck_forward.6} parent=0 // loop_header_branch
    %17 = sbr.rel (%p15) target = $region8
  $region5: #{bottleneck_forward.6} parent=0 // loop_body
    %s19 = ssub.s32 %s14, 1
    %s20 = ssub.s32 %s14, 2
    %s21 = sadd.s32 %s14, 1
    %s22 = ssub.s32 %s14, %s21
    %p23 = scmp.eq.s32.totalorder %s22, 0
    %s25 = sadd.s32 %s24, 1
    %s26 = scalar_select %p23, %s24, %s25
    %p29 = pneg %p23
    %p30 = scmp.eq.s32.totalorder %s14, 1
    %p31 = por %p29, %p30
    %p32 = scmp.ne.s32.totalorder %s24, %s27
    %p33 = scmp.eq.s32.totalorder %s14, 0
    %p34 = por %p32, %p33
    %p35 = scmp.ne.s32.totalorder %s24, %s27
    %p36 = scmp.eq.s32.totalorder %s19, 1
    %p37 = por %p35, %p36
    %p38 = scmp.ne.s32.totalorder %s27, %s28
    %p39 = scmp.eq.s32.totalorder %s19, 0
    %p40 = por %p38, %p39
    %p41 = scmp.ne.s32.totalorder %s27, %s28
    %p42 = scmp.eq.s32.totalorder %s20, 1
    %p43 = por %p41, %p42
    %p45 = scmp.ne.s32.totalorder %s28, %s44
    %p46 = scmp.eq.s32.totalorder %s20, 0
    %p47 = por %p45, %p46
    %s49 = sadd.s32 %s48, 1
    %p52 = scmp.eq.s32.totalorder %s14, 1
    %p53 = scmp.ne.s32.totalorder %s48, %s50
    %p54 = scmp.eq.s32.totalorder %s14, 0
    %p55 = por %p53, %p54
    %p56 = scmp.ne.s32.totalorder %s48, %s50
    %p57 = scmp.eq.s32.totalorder %s19, 1
    %p58 = por %p56, %p57
    %p59 = scmp.ne.s32.totalorder %s50, %s51
    %p60 = scmp.eq.s32.totalorder %s19, 0
    %p61 = por %p59, %p60
    %p62 = scmp.ne.s32.totalorder %s50, %s51
    %p63 = scmp.eq.s32.totalorder %s20, 1
    %p64 = por %p62, %p63
    %p66 = scmp.ne.s32.totalorder %s51, %s65
    %p67 = scmp.eq.s32.totalorder %s20, 0
    %p68 = por %p66, %p67
    %s70 = sadd.s32 %s69, 1
    %p73 = scmp.eq.s32.totalorder %s14, 1
    %p74 = scmp.ne.s32.totalorder %s69, %s71
    %p75 = scmp.eq.s32.totalorder %s14, 0
    %p76 = por %p74, %p75
    %p77 = scmp.ne.s32.totalorder %s69, %s71
    %p78 = scmp.eq.s32.totalorder %s19, 1
    %p79 = por %p77, %p78
    %p80 = scmp.ne.s32.totalorder %s71, %s72
    %p81 = scmp.eq.s32.totalorder %s19, 0
    %p82 = por %p80, %p81
    %p83 = scmp.ne.s32.totalorder %s71, %s72
    %p84 = scmp.eq.s32.totalorder %s20, 1
    %p85 = por %p83, %p84
    %p87 = scmp.ne.s32.totalorder %s72, %s86
    %p88 = scmp.eq.s32.totalorder %s20, 0
    %p89 = por %p87, %p88
    %s91 = sadd.s32 %s90, 1
    %p94 = scmp.eq.s32.totalorder %s14, 1
    %p95 = scmp.ne.s32.totalorder %s90, %s92
    %p96 = scmp.eq.s32.totalorder %s14, 0
    %p97 = por %p95, %p96
    %p98 = scmp.ne.s32.totalorder %s90, %s92
    %p99 = scmp.eq.s32.totalorder %s19, 1
    %p100 = por %p98, %p99
    %p101 = scmp.ne.s32.totalorder %s92, %s93
    %p102 = scmp.eq.s32.totalorder %s19, 0
    %p103 = por %p101, %p102
    %p104 = scmp.ne.s32.totalorder %s92, %s93
    %p105 = scmp.eq.s32.totalorder %s20, 1
    %p106 = por %p104, %p105
    %p108 = scmp.ne.s32.totalorder %s93, %s107
    %p109 = scmp.eq.s32.totalorder %s20, 0
    %p110 = por %p108, %p109
    %s112 = sadd.s32 %s111, 1
    %p115 = scmp.eq.s32.totalorder %s14, 1
    %p116 = scmp.ne.s32.totalorder %s111, %s113
    %p117 = scmp.eq.s32.totalorder %s14, 0
    %p118 = por %p116, %p117
    %p119 = scmp.ne.s32.totalorder %s111, %s113
    %p120 = scmp.eq.s32.totalorder %s19, 1
    %p121 = por %p119, %p120
    %p122 = scmp.ne.s32.totalorder %s113, %s114
    %p123 = scmp.eq.s32.totalorder %s19, 0
    %p124 = por %p122, %p123
    %p125 = scmp.ne.s32.totalorder %s113, %s114
    %p126 = scmp.eq.s32.totalorder %s20, 1
    %p127 = por %p125, %p126
    %p129 = scmp.ne.s32.totalorder %s114, %s128
    %p130 = scmp.eq.s32.totalorder %s20, 0
    %p131 = por %p129, %p130
    %s132 = ssub.s32 %s14, %s21
    %p133 = scmp.eq.s32.totalorder %s132, 0
    %s135 = sadd.s32 %s134, 1
    %s136 = scalar_select %p133, %s134, %s135
    %p139 = pneg %p133
    %p140 = scmp.eq.s32.totalorder %s14, 1
    %p141 = por %p139, %p140
    %p142 = scmp.ne.s32.totalorder %s134, %s137
    %p143 = scmp.eq.s32.totalorder %s14, 0
    %p144 = por %p142, %p143
    %p145 = scmp.ne.s32.totalorder %s134, %s137
    %p146 = scmp.eq.s32.totalorder %s19, 1
    %p147 = por %p145, %p146
    %p148 = scmp.ne.s32.totalorder %s137, %s138
    %p149 = scmp.eq.s32.totalorder %s19, 0
    %p150 = por %p148, %p149
    %p151 = scmp.ne.s32.totalorder %s137, %s138
    %p152 = scmp.eq.s32.totalorder %s20, 1
    %p153 = por %p151, %p152
    %p155 = scmp.ne.s32.totalorder %s138, %s154
    %p156 = scmp.eq.s32.totalorder %s20, 0
    %p157 = por %p155, %p156
    %s159 = sadd.s32 %s158, 1
    %p162 = scmp.eq.s32.totalorder %s14, 1
    %p163 = scmp.ne.s32.totalorder %s158, %s160
    %p164 = scmp.eq.s32.totalorder %s14, 0
    %p165 = por %p163, %p164
    %p166 = scmp.ne.s32.totalorder %s158, %s160
    %p167 = scmp.eq.s32.totalorder %s19, 1
    %p168 = por %p166, %p167
    %p169 = scmp.ne.s32.totalorder %s160, %s161
    %p170 = scmp.eq.s32.totalorder %s19, 0
    %p171 = por %p169, %p170
    %p172 = scmp.ne.s32.totalorder %s160, %s161
    %p173 = scmp.eq.s32.totalorder %s20, 1
    %p174 = por %p172, %p173
    %p176 = scmp.ne.s32.totalorder %s161, %s175
    %p177 = scmp.eq.s32.totalorder %s20, 0
    %p178 = por %p176, %p177
    %s180 = sadd.s32 %s179, 1
    %p183 = scmp.eq.s32.totalorder %s14, 1
    %p184 = scmp.ne.s32.totalorder %s179, %s181
    %p185 = scmp.eq.s32.totalorder %s14, 0
    %p186 = por %p184, %p185
    %p187 = scmp.ne.s32.totalorder %s179, %s181
    %p188 = scmp.eq.s32.totalorder %s19, 1
    %p189 = por %p187, %p188
    %p190 = scmp.ne.s32.totalorder %s181, %s182
    %p191 = scmp.eq.s32.totalorder %s19, 0
    %p192 = por %p190, %p191
    %p193 = scmp.ne.s32.totalorder %s181, %s182
    %p194 = scmp.eq.s32.totalorder %s20, 1
    %p195 = por %p193, %p194
    %p197 = scmp.ne.s32.totalorder %s182, %s196
    %p198 = scmp.eq.s32.totalorder %s20, 0
    %p199 = por %p197, %p198
    %p200 = scmp.le.s32.totalorder 1, %s14
    %p201 = scmp.lt.s32.totalorder %s14, 3
    %p202 = pnand %p200, %p201
    %p203 = pneg %p202
    // Predicated region
    $region9: #{bottleneck_forward.6} parent=5 // pred_check
      _
    $region10: #{bottleneck_forward.6} parent=5 // pred_check_branch
      %205 = sbr.rel (%p202) target = $region12
    $region11: #{bottleneck_forward.6} parent=5 // pred_region
      %s206 = ssub.s32 %s14, 1
      // Predicated region
      $region13: #{bottleneck_forward.6} parent=11 // pred_check
        %p207 = pneg %p61
      $region14: #{bottleneck_forward.6} parent=11 // pred_check_branch
        %209 = sbr.rel (%p207) target = $region16
      $region15: #{bottleneck_forward.6} parent=11 // pred_region
        _
      $region16: #{bottleneck_forward.6} parent=11 // pred_fallthru
        _
      // Predicated region
      $region17: #{bottleneck_forward.6} parent=11 // pred_check
        %p210 = pneg %p82
      $region18: #{bottleneck_forward.6} parent=11 // pred_check_branch
        %212 = sbr.rel (%p210) target = $region20
      $region19: #{bottleneck_forward.6} parent=11 // pred_region
        _
      $region20: #{bottleneck_forward.6} parent=11 // pred_fallthru
        _
      // Predicated region
      $region21: #{bottleneck_forward.6} parent=11 // pred_check
        %p213 = pneg %p103
      $region22: #{bottleneck_forward.6} parent=11 // pred_check_branch
        %215 = sbr.rel (%p213) target = $region24
      $region23: #{bottleneck_forward.6} parent=11 // pred_region
        _
      $region24: #{bottleneck_forward.6} parent=11 // pred_fallthru
        _
      // Predicated region
      $region25: #{bottleneck_forward.6} parent=11 // pred_check
        %p216 = pneg %p124
      $region26: #{bottleneck_forward.6} parent=11 // pred_check_branch
        %218 = sbr.rel (%p216) target = $region28
      $region27: #{bottleneck_forward.6} parent=11 // pred_region
        _
      $region28: #{bottleneck_forward.6} parent=11 // pred_fallthru
        _
    $region12: #{bottleneck_forward.6} parent=5 // pred_fallthru
      _
    %p219 = scmp.lt.s32.totalorder %s14, 2
    // Predicated region
    $region29: #{bottleneck_forward.6} parent=5 // pred_check
      %p220 = pneg %p219
    $region30: #{bottleneck_forward.6} parent=5 // pred_check_branch
      %222 = sbr.rel (%p220) target = $region32
    $region31: #{bottleneck_forward.6} parent=5 // pred_region
      // Predicated region
      $region33: #{bottleneck_forward.6} parent=31 // pred_check
        %p223 = pneg %p34
      $region34: #{bottleneck_forward.6} parent=31 // pred_check_branch
        %225 = sbr.rel (%p223) target = $region36
      $region35: #{bottleneck_forward.6} parent=31 // pred_region
        %p226 = scmp.lt.s32.totalorder %s14, 1
        %s227 = scalar_select %p226, %s14, 1
        %s228 = smul.addr %s227, 32
        %s229 = smul.addr %s228, 4
        %s230 = scalar_lea.vmem %s0, %s229
      $region36: #{bottleneck_forward.6} parent=31 // pred_fallthru
        _
    $region32: #{bottleneck_forward.6} parent=5 // pred_fallthru
      _
    %p231 = scmp.le.s32.totalorder 1, %s14
    %p232 = scmp.lt.s32.totalorder %s14, 3
    %p233 = pnand %p231, %p232
    %p234 = pneg %p233
    // Predicated region
    $region37: #{bottleneck_forward.6} parent=5 // pred_check
      _
    $region38: #{bottleneck_forward.6} parent=5 // pred_check_branch
      %236 = sbr.rel (%p233) target = $region40
    $region39: #{bottleneck_forward.6} parent=5 // pred_region
      %s237 = ssub.s32 %s14, 1
      %p238 = scmp.lt.s32.totalorder %s19, 1
      %s239 = scalar_select %p238, %s19, 1
      %s240 = smul.addr %s239, 32
      %s241 = smul.addr %s240, 4
      %s242 = scalar_lea.vmem %s0, %s241
      %p243 = pneg %p40
      %p244 = pneg %p37
      %p245 = pneg %p61
      %p246 = pneg %p58
      %p247 = pneg %p82
      %p248 = pneg %p79
      %p249 = pneg %p103
      %p250 = pneg %p100
      %p251 = pneg %p124
      %p252 = pneg %p121
      %p253 = pneg %p150
      %p254 = pneg %p147
      %p255 = scmp.lt.s32.totalorder %s19, 1
      %s256 = scalar_select %p255, %s19, 1
      %s257 = smul.addr %s256, 32
      %s258 = smul.addr %s257, 4
      %s259 = scalar_lea.vmem %s5, %s258
      %p260 = pneg %p171
      %p261 = pneg %p168
      %p262 = pneg %p192
      %p263 = pneg %p189
      %p264 = scmp.lt.s32.totalorder %s19, 1
      %s265 = scalar_select %p264, %s19, 1
      %s266 = smul.addr %s265, 32
      %s267 = smul.addr %s266, 4
      %s268 = scalar_lea.vmem %s0, %s267
      %p269 = scmp.lt.s32.totalorder %s19, 1
      %s270 = scalar_select %p269, %s19, 1
      %s271 = smul.addr %s270, 32
      %s272 = smul.addr %s271, 4
      %s273 = scalar_lea.vmem %s5, %s272
      %p275 = scmp.eq.s32.totalorder %s19, 0
      // Predicated region
      $region41: #{bottleneck_forward.6} parent=39 // pred_check
        %p276 = pneg %p275
      $region42: #{bottleneck_forward.6} parent=39 // pred_check_branch
        %278 = sbr.rel (%p276) target = $region44
      $region43: #{bottleneck_forward.6} parent=39 // pred_region
        %279 = vst [vmem:[%s6] sm:$0x1] 0.0
        %280 = vst [vmem:[%s7] sm:$0x1] 0.0
        %281 = vst [vmem:[#allocation2] sm:$0xff] 0
        %282 = vst [vmem:[#allocation2 + $0x8] sm:$0xff] 0
        %283 = vst [vmem:[#allocation2 + $0x10] sm:$0xff] 0
        %284 = vst [vmem:[#allocation2 + $0x18] sm:$0xff] 0
        %285 = vst [vmem:[#allocation2 + $0x20] sm:$0xff] 0
        %286 = vst [vmem:[#allocation2 + $0x28] sm:$0xff] 0
        %287 = vst [vmem:[#allocation2 + $0x30] sm:$0xff] 0
        %288 = vst [vmem:[#allocation2 + $0x38] sm:$0xff] 0
        %289 = vst [vmem:[#allocation2 + $0x40] sm:$0xff] 0
        %290 = vst [vmem:[#allocation2 + $0x48] sm:$0xff] 0
        %291 = vst [vmem:[#allocation2 + $0x50] sm:$0xff] 0
        %292 = vst [vmem:[#allocation2 + $0x58] sm:$0xff] 0
        %293 = vst [vmem:[#allocation2 + $0x60] sm:$0xff] 0
        %294 = vst [vmem:[#allocation2 + $0x68] sm:$0xff] 0
        %295 = vst [vmem:[#allocation2 + $0x70] sm:$0xff] 0
        %296 = vst [vmem:[#allocation2 + $0x78] sm:$0xff] 0
        %297 = vst [vmem:[#allocation2 + $0x80] sm:$0xff] 0
        %298 = vst [vmem:[#allocation2 + $0x88] sm:$0xff] 0
        %299 = vst [vmem:[#allocation2 + $0x90] sm:$0xff] 0
        %300 = vst [vmem:[#allocation2 + $0x98] sm:$0xff] 0
        %301 = vst [vmem:[#allocation2 + $0xa0] sm:$0xff] 0
        %302 = vst [vmem:[#allocation2 + $0xa8] sm:$0xff] 0
        %303 = vst [vmem:[#allocation2 + $0xb0] sm:$0xff] 0
        %304 = vst [vmem:[#allocation2 + $0xb8] sm:$0xff] 0
        %305 = vst [vmem:[#allocation2 + $0xc0] sm:$0xff] 0
        %306 = vst [vmem:[#allocation2 + $0xc8] sm:$0xff] 0
        %307 = vst [vmem:[#allocation2 + $0xd0] sm:$0xff] 0
        %308 = vst [vmem:[#allocation2 + $0xd8] sm:$0xff] 0
        %309 = vst [vmem:[#allocation2 + $0xe0] sm:$0xff] 0
        %310 = vst [vmem:[#allocation2 + $0xe8] sm:$0xff] 0
        %311 = vst [vmem:[#allocation2 + $0xf0] sm:$0xff] 0
        %312 = vst [vmem:[#allocation2 + $0xf8] sm:$0xff] 0
        %313 = vst [vmem:[#allocation2 + $0x100] sm:$0xff] 0
        %314 = vst [vmem:[#allocation2 + $0x108] sm:$0xff] 0
        %315 = vst [vmem:[#allocation2 + $0x110] sm:$0xff] 0
        %316 = vst [vmem:[#allocation2 + $0x118] sm:$0xff] 0
        %317 = vst [vmem:[#allocation2 + $0x120] sm:$0xff] 0
        %318 = vst [vmem:[#allocation2 + $0x128] sm:$0xff] 0
        %319 = vst [vmem:[#allocation2 + $0x130] sm:$0xff] 0
        %320 = vst [vmem:[#allocation2 + $0x138] sm:$0xff] 0
        %321 = vst [vmem:[#allocation2 + $0x140] sm:$0xff] 0
        %322 = vst [vmem:[#allocation2 + $0x148] sm:$0xff] 0
        %323 = vst [vmem:[#allocation2 + $0x150] sm:$0xff] 0
        %324 = vst [vmem:[#allocation2 + $0x158] sm:$0xff] 0
        %325 = vst [vmem:[#allocation2 + $0x160] sm:$0xff] 0
        %326 = vst [vmem:[#allocation2 + $0x168] sm:$0xff] 0
        %327 = vst [vmem:[#allocation2 + $0x170] sm:$0xff] 0
        %328 = vst [vmem:[#allocation2 + $0x178] sm:$0xff] 0
        %329 = vst [vmem:[#allocation2 + $0x180] sm:$0xff] 0
        %330 = vst [vmem:[#allocation2 + $0x188] sm:$0xff] 0
        %331 = vst [vmem:[#allocation2 + $0x190] sm:$0xff] 0
        %332 = vst [vmem:[#allocation2 + $0x198] sm:$0xff] 0
        %333 = vst [vmem:[#allocation2 + $0x1a0] sm:$0xff] 0
        %334 = vst [vmem:[#allocation2 + $0x1a8] sm:$0xff] 0
        %335 = vst [vmem:[#allocation2 + $0x1b0] sm:$0xff] 0
        %336 = vst [vmem:[#allocation2 + $0x1b8] sm:$0xff] 0
        %337 = vst [vmem:[#allocation2 + $0x1c0] sm:$0xff] 0
      $region44: #{bottleneck_forward.6} parent=39 // pred_fallthru
        _
      %v338 = vld [vmem:[%s268] sm:$0xf]
      %v339 = vld [vmem:[%s268 + $0x4] sm:$0xf]
      %v340 = vld [vmem:[%s268 + $0x8] sm:$0xf]
      %v341 = vld [vmem:[%s268 + $0xc] sm:$0xf]
      %v342 = vld [vmem:[%s268 + $0x10] sm:$0xf]
      %v343 = vld [vmem:[%s268 + $0x14] sm:$0xf]
      %v344 = vld [vmem:[%s268 + $0x18] sm:$0xf]
      %v345 = vld [vmem:[%s268 + $0x1c] sm:$0xf]
      %v346 = vld [vmem:[%s268 + $0x20] sm:$0xf]
      %v347 = vld [vmem:[%s268 + $0x24] sm:$0xf]
      %v348 = vld [vmem:[%s268 + $0x28] sm:$0xf]
      %v349 = vld [vmem:[%s268 + $0x2c] sm:$0xf]
      %v350 = vld [vmem:[%s268 + $0x30] sm:$0xf]
      %v351 = vld [vmem:[%s268 + $0x34] sm:$0xf]
      %v352 = vld [vmem:[%s268 + $0x38] sm:$0xf]
      %v353 = vld [vmem:[%s268 + $0x3c] sm:$0xf]
      %v354 = vld [vmem:[%s268 + $0x40] sm:$0xf]
      %v355 = vld [vmem:[%s268 + $0x44] sm:$0xf]
      %v356 = vld [vmem:[%s268 + $0x48] sm:$0xf]
      %v357 = vld [vmem:[%s268 + $0x4c] sm:$0xf]
      %v358 = vld [vmem:[%s268 + $0x50] sm:$0xf]
      %v359 = vld [vmem:[%s268 + $0x54] sm:$0xf]
      %v360 = vld [vmem:[%s268 + $0x58] sm:$0xf]
      %v361 = vld [vmem:[%s268 + $0x5c] sm:$0xf]
      %v362 = vld [vmem:[%s268 + $0x60] sm:$0xf]
      %v363 = vld [vmem:[%s268 + $0x64] sm:$0xf]
      %v364 = vld [vmem:[%s268 + $0x68] sm:$0xf]
      %v365 = vld [vmem:[%s268 + $0x6c] sm:$0xf]
      %v366 = vld [vmem:[%s268 + $0x70] sm:$0xf]
      %v367 = vld [vmem:[%s268 + $0x74] sm:$0xf]
      %v368 = vld [vmem:[%s268 + $0x78] sm:$0xf]
      %v369 = vld [vmem:[%s268 + $0x7c] sm:$0xf]
      %v370 = vunpack.c.l.bf16 %v338
      %v371 = vunpack.c.l.bf16 %v339
      %v372 = vunpack.c.l.bf16 %v340
      %v373 = vunpack.c.l.bf16 %v341
      %v374 = vunpack.c.l.bf16 %v342
      %v375 = vunpack.c.l.bf16 %v343
      %v376 = vunpack.c.l.bf16 %v344
      %v377 = vunpack.c.l.bf16 %v345
      %v378 = vunpack.c.l.bf16 %v346
      %v379 = vunpack.c.l.bf16 %v347
      %v380 = vunpack.c.l.bf16 %v348
      %v381 = vunpack.c.l.bf16 %v349
      %v382 = vunpack.c.l.bf16 %v350
      %v383 = vunpack.c.l.bf16 %v351
      %v384 = vunpack.c.l.bf16 %v352
      %v385 = vunpack.c.l.bf16 %v353
      %v386 = vunpack.c.l.bf16 %v354
      %v387 = vunpack.c.l.bf16 %v355
      %v388 = vunpack.c.l.bf16 %v356
      %v389 = vunpack.c.l.bf16 %v357
      %v390 = vunpack.c.l.bf16 %v358
      %v391 = vunpack.c.l.bf16 %v359
      %v392 = vunpack.c.l.bf16 %v360
      %v393 = vunpack.c.l.bf16 %v361
      %v394 = vunpack.c.l.bf16 %v362
      %v395 = vunpack.c.l.bf16 %v363
      %v396 = vunpack.c.l.bf16 %v364
      %v397 = vunpack.c.l.bf16 %v365
      %v398 = vunpack.c.l.bf16 %v366
      %v399 = vunpack.c.l.bf16 %v367
      %v400 = vunpack.c.l.bf16 %v368
      %v401 = vunpack.c.l.bf16 %v369
      %v402 = vld [vmem:[%s1] sm:$0x1]
      %v404 = vlaneseq
      %v405 = vshrl.u32 %v404, 7
      %v406 = vsub.s32 0, %v405
      %v407 = vrot.slane %v402, %v406
      %v409 = vmul.f32 %v370, %v407
      %v410 = vmul.f32 %v371, %v407
      %v411 = vmul.f32 %v372, %v407
      %v412 = vmul.f32 %v373, %v407
      %v413 = vmul.f32 %v374, %v407
      %v414 = vmul.f32 %v375, %v407
      %v415 = vmul.f32 %v376, %v407
      %v416 = vmul.f32 %v377, %v407
      %v417 = vmul.f32 %v378, %v407
      %v418 = vmul.f32 %v379, %v407
      %v419 = vmul.f32 %v380, %v407
      %v420 = vmul.f32 %v381, %v407
      %v421 = vmul.f32 %v382, %v407
      %v422 = vmul.f32 %v383, %v407
      %v423 = vmul.f32 %v384, %v407
      %v424 = vmul.f32 %v385, %v407
      %v425 = vmul.f32 %v386, %v407
      %v426 = vmul.f32 %v387, %v407
      %v427 = vmul.f32 %v388, %v407
      %v428 = vmul.f32 %v389, %v407
      %v429 = vmul.f32 %v390, %v407
      %v430 = vmul.f32 %v391, %v407
      %v431 = vmul.f32 %v392, %v407
      %v432 = vmul.f32 %v393, %v407
      %v433 = vmul.f32 %v394, %v407
      %v434 = vmul.f32 %v395, %v407
      %v435 = vmul.f32 %v396, %v407
      %v436 = vmul.f32 %v397, %v407
      %v437 = vmul.f32 %v398, %v407
      %v438 = vmul.f32 %v399, %v407
      %v439 = vmul.f32 %v400, %v407
      %v440 = vmul.f32 %v401, %v407
      %v441 = vld [vmem:[%s2] sm:$0x1]
      %v443 = vlaneseq
      %v444 = vshrl.u32 %v443, 7
      %v445 = vsub.s32 0, %v444
      %v446 = vrot.slane %v441, %v445
      %v448 = vadd.f32 %v409, %v446
      %v449 = vadd.f32 %v410, %v446
      %v450 = vadd.f32 %v411, %v446
      %v451 = vadd.f32 %v412, %v446
      %v452 = vadd.f32 %v413, %v446
      %v453 = vadd.f32 %v414, %v446
      %v454 = vadd.f32 %v415, %v446
      %v455 = vadd.f32 %v416, %v446
      %v456 = vadd.f32 %v417, %v446
      %v457 = vadd.f32 %v418, %v446
      %v458 = vadd.f32 %v419, %v446
      %v459 = vadd.f32 %v420, %v446
      %v460 = vadd.f32 %v421, %v446
      %v461 = vadd.f32 %v422, %v446
      %v462 = vadd.f32 %v423, %v446
      %v463 = vadd.f32 %v424, %v446
      %v464 = vadd.f32 %v425, %v446
      %v465 = vadd.f32 %v426, %v446
      %v466 = vadd.f32 %v427, %v446
      %v467 = vadd.f32 %v428, %v446
      %v468 = vadd.f32 %v429, %v446
      %v469 = vadd.f32 %v430, %v446
      %v470 = vadd.f32 %v431, %v446
      %v471 = vadd.f32 %v432, %v446
      %v472 = vadd.f32 %v433, %v446
      %v473 = vadd.f32 %v434, %v446
      %v474 = vadd.f32 %v435, %v446
      %v475 = vadd.f32 %v436, %v446
      %v476 = vadd.f32 %v437, %v446
      %v477 = vadd.f32 %v438, %v446
      %v478 = vadd.f32 %v439, %v446
      %v479 = vadd.f32 %v440, %v446
      %v480 = vmax.f32 %v448, 0.0
      %v481 = vmax.f32 %v449, 0.0
      %v482 = vmax.f32 %v450, 0.0
      %v483 = vmax.f32 %v451, 0.0
      %v484 = vmax.f32 %v452, 0.0
      %v485 = vmax.f32 %v453, 0.0
      %v486 = vmax.f32 %v454, 0.0
      %v487 = vmax.f32 %v455, 0.0
      %v488 = vmax.f32 %v456, 0.0
      %v489 = vmax.f32 %v457, 0.0
      %v490 = vmax.f32 %v458, 0.0
      %v491 = vmax.f32 %v459, 0.0
      %v492 = vmax.f32 %v460, 0.0
      %v493 = vmax.f32 %v461, 0.0
      %v494 = vmax.f32 %v462, 0.0
      %v495 = vmax.f32 %v463, 0.0
      %v496 = vmax.f32 %v464, 0.0
      %v497 = vmax.f32 %v465, 0.0
      %v498 = vmax.f32 %v466, 0.0
      %v499 = vmax.f32 %v467, 0.0
      %v500 = vmax.f32 %v468, 0.0
      %v501 = vmax.f32 %v469, 0.0
      %v502 = vmax.f32 %v470, 0.0
      %v503 = vmax.f32 %v471, 0.0
      %v504 = vmax.f32 %v472, 0.0
      %v505 = vmax.f32 %v473, 0.0
      %v506 = vmax.f32 %v474, 0.0
      %v507 = vmax.f32 %v475, 0.0
      %v508 = vmax.f32 %v476, 0.0
      %v509 = vmax.f32 %v477, 0.0
      %v510 = vmax.f32 %v478, 0.0
      %v511 = vmax.f32 %v479, 0.0
      %v512 = vlaneseq
      %v513 = vshrl.u32 %v512, 7
      %v514 = vadd.s32 %v513, 8
      %v515 = vadd.s32 %v513, 16
      %v516 = vadd.s32 %v513, 24
      %v517 = vadd.s32 %v513, 32
      %v518 = vadd.s32 %v513, 40
      %v519 = vadd.s32 %v513, 48
      %v520 = vadd.s32 %v513, 56
      %v521 = vadd.s32 %v513, 64
      %v522 = vadd.s32 %v513, 72
      %v523 = vadd.s32 %v513, 80
      %v524 = vadd.s32 %v513, 88
      %v525 = vadd.s32 %v513, 96
      %v526 = vadd.s32 %v513, 104
      %v527 = vadd.s32 %v513, 112
      %v528 = vadd.s32 %v513, 120
      %v529 = vadd.s32 %v513, 128
      %v530 = vadd.s32 %v513, 136
      %v531 = vadd.s32 %v513, 144
      %v532 = vadd.s32 %v513, 152
      %v533 = vadd.s32 %v513, 160
      %v534 = vadd.s32 %v513, 168
      %v535 = vadd.s32 %v513, 176
      %v536 = vadd.s32 %v513, 184
      %v537 = vadd.s32 %v513, 192
      %v538 = vadd.s32 %v513, 200
      %v539 = vadd.s32 %v513, 208
      %v540 = vadd.s32 %v513, 216
      %v541 = vadd.s32 %v513, 224
      %v542 = vadd.s32 %v513, 232
      %v543 = vadd.s32 %v513, 240
      %v544 = vadd.s32 %v513, 248
      %vm545 = vcmp.lt.s32.totalorder %v513, 0
      %v546 = vsub.s32 0, %v513
      %v547 = vsel %vm545, %v546, %v513
      %v548 = vshrl.u32 %v547, 4
      %v549 = vand.u32 %v547, 15
      %v550 = vsub.s32 0, %v549
      %v551 = vsel %vm545, %v550, %v549
      %vm552 = vcmp.lt.s32.totalorder %v514, 0
      %v553 = vsub.s32 0, %v514
      %v554 = vsel %vm552, %v553, %v514
      %v555 = vshrl.u32 %v554, 4
      %v556 = vand.u32 %v554, 15
      %v557 = vsub.s32 0, %v556
      %v558 = vsel %vm552, %v557, %v556
      %vm559 = vcmp.lt.s32.totalorder %v515, 0
      %v560 = vsub.s32 0, %v515
      %v561 = vsel %vm559, %v560, %v515
      %v562 = vshrl.u32 %v561, 4
      %v563 = vand.u32 %v561, 15
      %v564 = vsub.s32 0, %v563
      %v565 = vsel %vm559, %v564, %v563
      %vm566 = vcmp.lt.s32.totalorder %v516, 0
      %v567 = vsub.s32 0, %v516
      %v568 = vsel %vm566, %v567, %v516
      %v569 = vshrl.u32 %v568, 4
      %v570 = vand.u32 %v568, 15
      %v571 = vsub.s32 0, %v570
      %v572 = vsel %vm566, %v571, %v570
      %vm573 = vcmp.lt.s32.totalorder %v517, 0
      %v574 = vsub.s32 0, %v517
      %v575 = vsel %vm573, %v574, %v517
      %v576 = vshrl.u32 %v575, 4
      %v577 = vand.u32 %v575, 15
      %v578 = vsub.s32 0, %v577
      %v579 = vsel %vm573, %v578, %v577
      %vm580 = vcmp.lt.s32.totalorder %v518, 0
      %v581 = vsub.s32 0, %v518
      %v582 = vsel %vm580, %v581, %v518
      %v583 = vshrl.u32 %v582, 4
      %v584 = vand.u32 %v582, 15
      %v585 = vsub.s32 0, %v584
      %v586 = vsel %vm580, %v585, %v584
      %vm587 = vcmp.lt.s32.totalorder %v519, 0
      %v588 = vsub.s32 0, %v519
      %v589 = vsel %vm587, %v588, %v519
      %v590 = vshrl.u32 %v589, 4
      %v591 = vand.u32 %v589, 15
      %v592 = vsub.s32 0, %v591
      %v593 = vsel %vm587, %v592, %v591
      %vm594 = vcmp.lt.s32.totalorder %v520, 0
      %v595 = vsub.s32 0, %v520
      %v596 = vsel %vm594, %v595, %v520
      %v597 = vshrl.u32 %v596, 4
      %v598 = vand.u32 %v596, 15
      %v599 = vsub.s32 0, %v598
      %v600 = vsel %vm594, %v599, %v598
      %vm601 = vcmp.lt.s32.totalorder %v521, 0
      %v602 = vsub.s32 0, %v521
      %v603 = vsel %vm601, %v602, %v521
      %v604 = vshrl.u32 %v603, 4
      %v605 = vand.u32 %v603, 15
      %v606 = vsub.s32 0, %v605
      %v607 = vsel %vm601, %v606, %v605
      %vm608 = vcmp.lt.s32.totalorder %v522, 0
      %v609 = vsub.s32 0, %v522
      %v610 = vsel %vm608, %v609, %v522
      %v611 = vshrl.u32 %v610, 4
      %v612 = vand.u32 %v610, 15
      %v613 = vsub.s32 0, %v612
      %v614 = vsel %vm608, %v613, %v612
      %vm615 = vcmp.lt.s32.totalorder %v523, 0
      %v616 = vsub.s32 0, %v523
      %v617 = vsel %vm615, %v616, %v523
      %v618 = vshrl.u32 %v617, 4
      %v619 = vand.u32 %v617, 15
      %v620 = vsub.s32 0, %v619
      %v621 = vsel %vm615, %v620, %v619
      %vm622 = vcmp.lt.s32.totalorder %v524, 0
      %v623 = vsub.s32 0, %v524
      %v624 = vsel %vm622, %v623, %v524
      %v625 = vshrl.u32 %v624, 4
      %v626 = vand.u32 %v624, 15
      %v627 = vsub.s32 0, %v626
      %v628 = vsel %vm622, %v627, %v626
      %vm629 = vcmp.lt.s32.totalorder %v525, 0
      %v630 = vsub.s32 0, %v525
      %v631 = vsel %vm629, %v630, %v525
      %v632 = vshrl.u32 %v631, 4
      %v633 = vand.u32 %v631, 15
      %v634 = vsub.s32 0, %v633
      %v635 = vsel %vm629, %v634, %v633
      %vm636 = vcmp.lt.s32.totalorder %v526, 0
      %v637 = vsub.s32 0, %v526
      %v638 = vsel %vm636, %v637, %v526
      %v639 = vshrl.u32 %v638, 4
      %v640 = vand.u32 %v638, 15
      %v641 = vsub.s32 0, %v640
      %v642 = vsel %vm636, %v641, %v640
      %vm643 = vcmp.lt.s32.totalorder %v527, 0
      %v644 = vsub.s32 0, %v527
      %v645 = vsel %vm643, %v644, %v527
      %v646 = vshrl.u32 %v645, 4
      %v647 = vand.u32 %v645, 15
      %v648 = vsub.s32 0, %v647
      %v649 = vsel %vm643, %v648, %v647
      %vm650 = vcmp.lt.s32.totalorder %v528, 0
      %v651 = vsub.s32 0, %v528
      %v652 = vsel %vm650, %v651, %v528
      %v653 = vshrl.u32 %v652, 4
      %v654 = vand.u32 %v652, 15
      %v655 = vsub.s32 0, %v654
      %v656 = vsel %vm650, %v655, %v654
      %vm657 = vcmp.lt.s32.totalorder %v529, 0
      %v658 = vsub.s32 0, %v529
      %v659 = vsel %vm657, %v658, %v529
      %v660 = vshrl.u32 %v659, 4
      %v661 = vand.u32 %v659, 15
      %v662 = vsub.s32 0, %v661
      %v663 = vsel %vm657, %v662, %v661
      %vm664 = vcmp.lt.s32.totalorder %v530, 0
      %v665 = vsub.s32 0, %v530
      %v666 = vsel %vm664, %v665, %v530
      %v667 = vshrl.u32 %v666, 4
      %v668 = vand.u32 %v666, 15
      %v669 = vsub.s32 0, %v668
      %v670 = vsel %vm664, %v669, %v668
      %vm671 = vcmp.lt.s32.totalorder %v531, 0
      %v672 = vsub.s32 0, %v531
      %v673 = vsel %vm671, %v672, %v531
      %v674 = vshrl.u32 %v673, 4
      %v675 = vand.u32 %v673, 15
      %v676 = vsub.s32 0, %v675
      %v677 = vsel %vm671, %v676, %v675
      %vm678 = vcmp.lt.s32.totalorder %v532, 0
      %v679 = vsub.s32 0, %v532
      %v680 = vsel %vm678, %v679, %v532
      %v681 = vshrl.u32 %v680, 4
      %v682 = vand.u32 %v680, 15
      %v683 = vsub.s32 0, %v682
      %v684 = vsel %vm678, %v683, %v682
      %vm685 = vcmp.lt.s32.totalorder %v533, 0
      %v686 = vsub.s32 0, %v533
      %v687 = vsel %vm685, %v686, %v533
      %v688 = vshrl.u32 %v687, 4
      %v689 = vand.u32 %v687, 15
      %v690 = vsub.s32 0, %v689
      %v691 = vsel %vm685, %v690, %v689
      %vm692 = vcmp.lt.s32.totalorder %v534, 0
      %v693 = vsub.s32 0, %v534
      %v694 = vsel %vm692, %v693, %v534
      %v695 = vshrl.u32 %v694, 4
      %v696 = vand.u32 %v694, 15
      %v697 = vsub.s32 0, %v696
      %v698 = vsel %vm692, %v697, %v696
      %vm699 = vcmp.lt.s32.totalorder %v535, 0
      %v700 = vsub.s32 0, %v535
      %v701 = vsel %vm699, %v700, %v535
      %v702 = vshrl.u32 %v701, 4
      %v703 = vand.u32 %v701, 15
      %v704 = vsub.s32 0, %v703
      %v705 = vsel %vm699, %v704, %v703
      %vm706 = vcmp.lt.s32.totalorder %v536, 0
      %v707 = vsub.s32 0, %v536
      %v708 = vsel %vm706, %v707, %v536
      %v709 = vshrl.u32 %v708, 4
      %v710 = vand.u32 %v708, 15
      %v711 = vsub.s32 0, %v710
      %v712 = vsel %vm706, %v711, %v710
      %vm713 = vcmp.lt.s32.totalorder %v537, 0
      %v714 = vsub.s32 0, %v537
      %v715 = vsel %vm713, %v714, %v537
      %v716 = vshrl.u32 %v715, 4
      %v717 = vand.u32 %v715, 15
      %v718 = vsub.s32 0, %v717
      %v719 = vsel %vm713, %v718, %v717
      %vm720 = vcmp.lt.s32.totalorder %v538, 0
      %v721 = vsub.s32 0, %v538
      %v722 = vsel %vm720, %v721, %v538
      %v723 = vshrl.u32 %v722, 4
      %v724 = vand.u32 %v722, 15
      %v725 = vsub.s32 0, %v724
      %v726 = vsel %vm720, %v725, %v724
      %vm727 = vcmp.lt.s32.totalorder %v539, 0
      %v728 = vsub.s32 0, %v539
      %v729 = vsel %vm727, %v728, %v539
      %v730 = vshrl.u32 %v729, 4
      %v731 = vand.u32 %v729, 15
      %v732 = vsub.s32 0, %v731
      %v733 = vsel %vm727, %v732, %v731
      %vm734 = vcmp.lt.s32.totalorder %v540, 0
      %v735 = vsub.s32 0, %v540
      %v736 = vsel %vm734, %v735, %v540
      %v737 = vshrl.u32 %v736, 4
      %v738 = vand.u32 %v736, 15
      %v739 = vsub.s32 0, %v738
      %v740 = vsel %vm734, %v739, %v738
      %vm741 = vcmp.lt.s32.totalorder %v541, 0
      %v742 = vsub.s32 0, %v541
      %v743 = vsel %vm741, %v742, %v541
      %v744 = vshrl.u32 %v743, 4
      %v745 = vand.u32 %v743, 15
      %v746 = vsub.s32 0, %v745
      %v747 = vsel %vm741, %v746, %v745
      %vm748 = vcmp.lt.s32.totalorder %v542, 0
      %v749 = vsub.s32 0, %v542
      %v750 = vsel %vm748, %v749, %v542
      %v751 = vshrl.u32 %v750, 4
      %v752 = vand.u32 %v750, 15
      %v753 = vsub.s32 0, %v752
      %v754 = vsel %vm748, %v753, %v752
      %vm755 = vcmp.lt.s32.totalorder %v543, 0
      %v756 = vsub.s32 0, %v543
      %v757 = vsel %vm755, %v756, %v543
      %v758 = vshrl.u32 %v757, 4
      %v759 = vand.u32 %v757, 15
      %v760 = vsub.s32 0, %v759
      %v761 = vsel %vm755, %v760, %v759
      %vm762 = vcmp.lt.s32.totalorder %v544, 0
      %v763 = vsub.s32 0, %v544
      %v764 = vsel %vm762, %v763, %v544
      %v765 = vshrl.u32 %v764, 4
      %v766 = vand.u32 %v764, 15
      %v767 = vsub.s32 0, %v766
      %v768 = vsel %vm762, %v767, %v766
      %vm769 = vcmp.ne.s32.totalorder %v551, 0
      %vm770 = vcmp.ne.s32.totalorder %v558, 0
      %vm771 = vcmp.ne.s32.totalorder %v565, 0
      %vm772 = vcmp.ne.s32.totalorder %v572, 0
      %vm773 = vcmp.ne.s32.totalorder %v579, 0
      %vm774 = vcmp.ne.s32.totalorder %v586, 0
      %vm775 = vcmp.ne.s32.totalorder %v593, 0
      %vm776 = vcmp.ne.s32.totalorder %v600, 0
      %vm777 = vcmp.ne.s32.totalorder %v607, 0
      %vm778 = vcmp.ne.s32.totalorder %v614, 0
      %vm779 = vcmp.ne.s32.totalorder %v621, 0
      %vm780 = vcmp.ne.s32.totalorder %v628, 0
      %vm781 = vcmp.ne.s32.totalorder %v635, 0
      %vm782 = vcmp.ne.s32.totalorder %v642, 0
      %vm783 = vcmp.ne.s32.totalorder %v649, 0
      %vm784 = vcmp.ne.s32.totalorder %v656, 0
      %vm785 = vcmp.ne.s32.totalorder %v663, 0
      %vm786 = vcmp.ne.s32.totalorder %v670, 0
      %vm787 = vcmp.ne.s32.totalorder %v677, 0
      %vm788 = vcmp.ne.s32.totalorder %v684, 0
      %vm789 = vcmp.ne.s32.totalorder %v691, 0
      %vm790 = vcmp.ne.s32.totalorder %v698, 0
      %vm791 = vcmp.ne.s32.totalorder %v705, 0
      %vm792 = vcmp.ne.s32.totalorder %v712, 0
      %vm793 = vcmp.ne.s32.totalorder %v719, 0
      %vm794 = vcmp.ne.s32.totalorder %v726, 0
      %vm795 = vcmp.ne.s32.totalorder %v733, 0
      %vm796 = vcmp.ne.s32.totalorder %v740, 0
      %vm797 = vcmp.ne.s32.totalorder %v747, 0
      %vm798 = vcmp.ne.s32.totalorder %v754, 0
      %vm799 = vcmp.ne.s32.totalorder %v761, 0
      %vm800 = vcmp.ne.s32.totalorder %v768, 0
      %vm801 = vcmp.lt.s32.totalorder %v551, 0
      %vm802 = vcmp.lt.s32.totalorder %v558, 0
      %vm803 = vcmp.lt.s32.totalorder %v565, 0
      %vm804 = vcmp.lt.s32.totalorder %v572, 0
      %vm805 = vcmp.lt.s32.totalorder %v579, 0
      %vm806 = vcmp.lt.s32.totalorder %v586, 0
      %vm807 = vcmp.lt.s32.totalorder %v593, 0
      %vm808 = vcmp.lt.s32.totalorder %v600, 0
      %vm809 = vcmp.lt.s32.totalorder %v607, 0
      %vm810 = vcmp.lt.s32.totalorder %v614, 0
      %vm811 = vcmp.lt.s32.totalorder %v621, 0
      %vm812 = vcmp.lt.s32.totalorder %v628, 0
      %vm813 = vcmp.lt.s32.totalorder %v635, 0
      %vm814 = vcmp.lt.s32.totalorder %v642, 0
      %vm815 = vcmp.lt.s32.totalorder %v649, 0
      %vm816 = vcmp.lt.s32.totalorder %v656, 0
      %vm817 = vcmp.lt.s32.totalorder %v663, 0
      %vm818 = vcmp.lt.s32.totalorder %v670, 0
      %vm819 = vcmp.lt.s32.totalorder %v677, 0
      %vm820 = vcmp.lt.s32.totalorder %v684, 0
      %vm821 = vcmp.lt.s32.totalorder %v691, 0
      %vm822 = vcmp.lt.s32.totalorder %v698, 0
      %vm823 = vcmp.lt.s32.totalorder %v705, 0
      %vm824 = vcmp.lt.s32.totalorder %v712, 0
      %vm825 = vcmp.lt.s32.totalorder %v719, 0
      %vm826 = vcmp.lt.s32.totalorder %v726, 0
      %vm827 = vcmp.lt.s32.totalorder %v733, 0
      %vm828 = vcmp.lt.s32.totalorder %v740, 0
      %vm829 = vcmp.lt.s32.totalorder %v747, 0
      %vm830 = vcmp.lt.s32.totalorder %v754, 0
      %vm831 = vcmp.lt.s32.totalorder %v761, 0
      %vm832 = vcmp.lt.s32.totalorder %v768, 0
      %vm833 = vmand %vm801, %vm769
      %vm834 = vmand %vm802, %vm770
      %vm835 = vmand %vm803, %vm771
      %vm836 = vmand %vm804, %vm772
      %vm837 = vmand %vm805, %vm773
      %vm838 = vmand %vm806, %vm774
      %vm839 = vmand %vm807, %vm775
      %vm840 = vmand %vm808, %vm776
      %vm841 = vmand %vm809, %vm777
      %vm842 = vmand %vm810, %vm778
      %vm843 = vmand %vm811, %vm779
      %vm844 = vmand %vm812, %vm780
      %vm845 = vmand %vm813, %vm781
      %vm846 = vmand %vm814, %vm782
      %vm847 = vmand %vm815, %vm783
      %vm848 = vmand %vm816, %vm784
      %vm849 = vmand %vm817, %vm785
      %vm850 = vmand %vm818, %vm786
      %vm851 = vmand %vm819, %vm787
      %vm852 = vmand %vm820, %vm788
      %vm853 = vmand %vm821, %vm789
      %vm854 = vmand %vm822, %vm790
      %vm855 = vmand %vm823, %vm791
      %vm856 = vmand %vm824, %vm792
      %vm857 = vmand %vm825, %vm793
      %vm858 = vmand %vm826, %vm794
      %vm859 = vmand %vm827, %vm795
      %vm860 = vmand %vm828, %vm796
      %vm861 = vmand %vm829, %vm797
      %vm862 = vmand %vm830, %vm798
      %vm863 = vmand %vm831, %vm799
      %vm864 = vmand %vm832, %vm800
      %v865 = vadd.s32 %v551, 16
      %v866 = vadd.s32 %v558, 16
      %v867 = vadd.s32 %v565, 16
      %v868 = vadd.s32 %v572, 16
      %v869 = vadd.s32 %v579, 16
      %v870 = vadd.s32 %v586, 16
      %v871 = vadd.s32 %v593, 16
      %v872 = vadd.s32 %v600, 16
      %v873 = vadd.s32 %v607, 16
      %v874 = vadd.s32 %v614, 16
      %v875 = vadd.s32 %v621, 16
      %v876 = vadd.s32 %v628, 16
      %v877 = vadd.s32 %v635, 16
      %v878 = vadd.s32 %v642, 16
      %v879 = vadd.s32 %v649, 16
      %v880 = vadd.s32 %v656, 16
      %v881 = vadd.s32 %v663, 16
      %v882 = vadd.s32 %v670, 16
      %v883 = vadd.s32 %v677, 16
      %v884 = vadd.s32 %v684, 16
      %v885 = vadd.s32 %v691, 16
      %v886 = vadd.s32 %v698, 16
      %v887 = vadd.s32 %v705, 16
      %v888 = vadd.s32 %v712, 16
      %v889 = vadd.s32 %v719, 16
      %v890 = vadd.s32 %v726, 16
      %v891 = vadd.s32 %v733, 16
      %v892 = vadd.s32 %v740, 16
      %v893 = vadd.s32 %v747, 16
      %v894 = vadd.s32 %v754, 16
      %v895 = vadd.s32 %v761, 16
      %v896 = vadd.s32 %v768, 16
      %v897 = vsel %vm833, %v865, %v551
      %v898 = vsel %vm834, %v866, %v558
      %v899 = vsel %vm835, %v867, %v565
      %v900 = vsel %vm836, %v868, %v572
      %v901 = vsel %vm837, %v869, %v579
      %v902 = vsel %vm838, %v870, %v586
      %v903 = vsel %vm839, %v871, %v593
      %v904 = vsel %vm840, %v872, %v600
      %v905 = vsel %vm841, %v873, %v607
      %v906 = vsel %vm842, %v874, %v614
      %v907 = vsel %vm843, %v875, %v621
      %v908 = vsel %vm844, %v876, %v628
      %v909 = vsel %vm845, %v877, %v635
      %v910 = vsel %vm846, %v878, %v642
      %v911 = vsel %vm847, %v879, %v649
      %v912 = vsel %vm848, %v880, %v656
      %v913 = vsel %vm849, %v881, %v663
      %v914 = vsel %vm850, %v882, %v670
      %v915 = vsel %vm851, %v883, %v677
      %v916 = vsel %vm852, %v884, %v684
      %v917 = vsel %vm853, %v885, %v691
      %v918 = vsel %vm854, %v886, %v698
      %v919 = vsel %vm855, %v887, %v705
      %v920 = vsel %vm856, %v888, %v712
      %v921 = vsel %vm857, %v889, %v719
      %v922 = vsel %vm858, %v890, %v726
      %v923 = vsel %vm859, %v891, %v733
      %v924 = vsel %vm860, %v892, %v740
      %v925 = vsel %vm861, %v893, %v747
      %v926 = vsel %vm862, %v894, %v754
      %v927 = vsel %vm863, %v895, %v761
      %v928 = vsel %vm864, %v896, %v768
      %v929 = vpack.c.bf16 %v481, %v480
      %v930 = vpack.c.bf16 %v483, %v482
      %v931 = vpack.c.bf16 %v485, %v484
      %v932 = vpack.c.bf16 %v487, %v486
      %v933 = vpack.c.bf16 %v489, %v488
      %v934 = vpack.c.bf16 %v491, %v490
      %v935 = vpack.c.bf16 %v493, %v492
      %v936 = vpack.c.bf16 %v495, %v494
      %v937 = vpack.c.bf16 %v497, %v496
      %v938 = vpack.c.bf16 %v499, %v498
      %v939 = vpack.c.bf16 %v501, %v500
      %v940 = vpack.c.bf16 %v503, %v502
      %v941 = vpack.c.bf16 %v505, %v504
      %v942 = vpack.c.bf16 %v507, %v506
      %v943 = vpack.c.bf16 %v509, %v508
      %v944 = vpack.c.bf16 %v511, %v510
      %vm945 = vcmp.le.s32.totalorder %v897, 14
      %vm946 = vcmp.le.s32.totalorder %v898, 14
      %vm947 = vcmp.le.s32.totalorder %v899, 14
      %vm948 = vcmp.le.s32.totalorder %v900, 14
      %vm949 = vcmp.le.s32.totalorder %v901, 14
      %vm950 = vcmp.le.s32.totalorder %v902, 14
      %vm951 = vcmp.le.s32.totalorder %v903, 14
      %vm952 = vcmp.le.s32.totalorder %v904, 14
      %vm953 = vcmp.le.s32.totalorder %v905, 14
      %vm954 = vcmp.le.s32.totalorder %v906, 14
      %vm955 = vcmp.le.s32.totalorder %v907, 14
      %vm956 = vcmp.le.s32.totalorder %v908, 14
      %vm957 = vcmp.le.s32.totalorder %v909, 14
      %vm958 = vcmp.le.s32.totalorder %v910, 14
      %vm959 = vcmp.le.s32.totalorder %v911, 14
      %vm960 = vcmp.le.s32.totalorder %v912, 14
      %vm961 = vcmp.le.s32.totalorder %v913, 14
      %vm962 = vcmp.le.s32.totalorder %v914, 14
      %vm963 = vcmp.le.s32.totalorder %v915, 14
      %vm964 = vcmp.le.s32.totalorder %v916, 14
      %vm965 = vcmp.le.s32.totalorder %v917, 14
      %vm966 = vcmp.le.s32.totalorder %v918, 14
      %vm967 = vcmp.le.s32.totalorder %v919, 14
      %vm968 = vcmp.le.s32.totalorder %v920, 14
      %vm969 = vcmp.le.s32.totalorder %v921, 14
      %vm970 = vcmp.le.s32.totalorder %v922, 14
      %vm971 = vcmp.le.s32.totalorder %v923, 14
      %vm972 = vcmp.le.s32.totalorder %v924, 14
      %vm973 = vcmp.le.s32.totalorder %v925, 14
      %vm974 = vcmp.le.s32.totalorder %v926, 14
      %vm975 = vcmp.le.s32.totalorder %v927, 14
      %vm976 = vcmp.le.s32.totalorder %v928, 14
      %v977 = vsel %vm945, 1, 0
      %v978 = vsel %vm946, 1, 0
      %v979 = vsel %vm947, 1, 0
      %v980 = vsel %vm948, 1, 0
      %v981 = vsel %vm949, 1, 0
      %v982 = vsel %vm950, 1, 0
      %v983 = vsel %vm951, 1, 0
      %v984 = vsel %vm952, 1, 0
      %v985 = vsel %vm953, 1, 0
      %v986 = vsel %vm954, 1, 0
      %v987 = vsel %vm955, 1, 0
      %v988 = vsel %vm956, 1, 0
      %v989 = vsel %vm957, 1, 0
      %v990 = vsel %vm958, 1, 0
      %v991 = vsel %vm959, 1, 0
      %v992 = vsel %vm960, 1, 0
      %v993 = vsel %vm961, 1, 0
      %v994 = vsel %vm962, 1, 0
      %v995 = vsel %vm963, 1, 0
      %v996 = vsel %vm964, 1, 0
      %v997 = vsel %vm965, 1, 0
      %v998 = vsel %vm966, 1, 0
      %v999 = vsel %vm967, 1, 0
      %v1000 = vsel %vm968, 1, 0
      %v1001 = vsel %vm969, 1, 0
      %v1002 = vsel %vm970, 1, 0
      %v1003 = vsel %vm971, 1, 0
      %v1004 = vsel %vm972, 1, 0
      %v1005 = vsel %vm973, 1, 0
      %v1006 = vsel %vm974, 1, 0
      %v1007 = vsel %vm975, 1, 0
      %v1008 = vsel %vm976, 1, 0
      %vm1009 = vcmp.eq.s32.totalorder %v977, 1
      %vm1010 = vcmp.eq.s32.totalorder %v978, 1
      %vm1011 = vcmp.eq.s32.totalorder %v979, 1
      %vm1012 = vcmp.eq.s32.totalorder %v980, 1
      %vm1013 = vcmp.eq.s32.totalorder %v981, 1
      %vm1014 = vcmp.eq.s32.totalorder %v982, 1
      %vm1015 = vcmp.eq.s32.totalorder %v983, 1
      %vm1016 = vcmp.eq.s32.totalorder %v984, 1
      %vm1017 = vcmp.eq.s32.totalorder %v985, 1
      %vm1018 = vcmp.eq.s32.totalorder %v986, 1
      %vm1019 = vcmp.eq.s32.totalorder %v987, 1
      %vm1020 = vcmp.eq.s32.totalorder %v988, 1
      %vm1021 = vcmp.eq.s32.totalorder %v989, 1
      %vm1022 = vcmp.eq.s32.totalorder %v990, 1
      %vm1023 = vcmp.eq.s32.totalorder %v991, 1
      %vm1024 = vcmp.eq.s32.totalorder %v992, 1
      %vm1025 = vcmp.eq.s32.totalorder %v993, 1
      %vm1026 = vcmp.eq.s32.totalorder %v994, 1
      %vm1027 = vcmp.eq.s32.totalorder %v995, 1
      %vm1028 = vcmp.eq.s32.totalorder %v996, 1
      %vm1029 = vcmp.eq.s32.totalorder %v997, 1
      %vm1030 = vcmp.eq.s32.totalorder %v998, 1
      %vm1031 = vcmp.eq.s32.totalorder %v999, 1
      %vm1032 = vcmp.eq.s32.totalorder %v1000, 1
      %vm1033 = vcmp.eq.s32.totalorder %v1001, 1
      %vm1034 = vcmp.eq.s32.totalorder %v1002, 1
      %vm1035 = vcmp.eq.s32.totalorder %v1003, 1
      %vm1036 = vcmp.eq.s32.totalorder %v1004, 1
      %vm1037 = vcmp.eq.s32.totalorder %v1005, 1
      %vm1038 = vcmp.eq.s32.totalorder %v1006, 1
      %vm1039 = vcmp.eq.s32.totalorder %v1007, 1
      %vm1040 = vcmp.eq.s32.totalorder %v1008, 1
      %v1041 = vsel %vm1009, %v480, 0.0
      %v1042 = vsel %vm1010, %v481, 0.0
      %v1043 = vsel %vm1011, %v482, 0.0
      %v1044 = vsel %vm1012, %v483, 0.0
      %v1045 = vsel %vm1013, %v484, 0.0
      %v1046 = vsel %vm1014, %v485, 0.0
      %v1047 = vsel %vm1015, %v486, 0.0
      %v1048 = vsel %vm1016, %v487, 0.0
      %v1049 = vsel %vm1017, %v488, 0.0
      %v1050 = vsel %vm1018, %v489, 0.0
      %v1051 = vsel %vm1019, %v490, 0.0
      %v1052 = vsel %vm1020, %v491, 0.0
      %v1053 = vsel %vm1021, %v492, 0.0
      %v1054 = vsel %vm1022, %v493, 0.0
      %v1055 = vsel %vm1023, %v494, 0.0
      %v1056 = vsel %vm1024, %v495, 0.0
      %v1057 = vsel %vm1025, %v496, 0.0
      %v1058 = vsel %vm1026, %v497, 0.0
      %v1059 = vsel %vm1027, %v498, 0.0
      %v1060 = vsel %vm1028, %v499, 0.0
      %v1061 = vsel %vm1029, %v500, 0.0
      %v1062 = vsel %vm1030, %v501, 0.0
      %v1063 = vsel %vm1031, %v502, 0.0
      %v1064 = vsel %vm1032, %v503, 0.0
      %v1065 = vsel %vm1033, %v504, 0.0
      %v1066 = vsel %vm1034, %v505, 0.0
      %v1067 = vsel %vm1035, %v506, 0.0
      %v1068 = vsel %vm1036, %v507, 0.0
      %v1069 = vsel %vm1037, %v508, 0.0
      %v1070 = vsel %vm1038, %v509, 0.0
      %v1071 = vsel %vm1039, %v510, 0.0
      %v1072 = vsel %vm1040, %v511, 0.0
      %v1073 = vpack.c.bf16 %v1042, %v1041
      %v1074 = vpack.c.bf16 %v1044, %v1043
      %v1075 = vpack.c.bf16 %v1046, %v1045
      %v1076 = vpack.c.bf16 %v1048, %v1047
      %v1077 = vpack.c.bf16 %v1050, %v1049
      %v1078 = vpack.c.bf16 %v1052, %v1051
      %v1079 = vpack.c.bf16 %v1054, %v1053
      %v1080 = vpack.c.bf16 %v1056, %v1055
      %v1081 = vpack.c.bf16 %v1058, %v1057
      %v1082 = vpack.c.bf16 %v1060, %v1059
      %v1083 = vpack.c.bf16 %v1062, %v1061
      %v1084 = vpack.c.bf16 %v1064, %v1063
      %v1085 = vpack.c.bf16 %v1066, %v1065
      %v1086 = vpack.c.bf16 %v1068, %v1067
      %v1087 = vpack.c.bf16 %v1070, %v1069
      %v1088 = vpack.c.bf16 %v1072, %v1071
      %vm1089 = vcmp.ge.s32.totalorder %v897, 1
      %vm1090 = vcmp.ge.s32.totalorder %v898, 1
      %vm1091 = vcmp.ge.s32.totalorder %v899, 1
      %vm1092 = vcmp.ge.s32.totalorder %v900, 1
      %vm1093 = vcmp.ge.s32.totalorder %v901, 1
      %vm1094 = vcmp.ge.s32.totalorder %v902, 1
      %vm1095 = vcmp.ge.s32.totalorder %v903, 1
      %vm1096 = vcmp.ge.s32.totalorder %v904, 1
      %vm1097 = vcmp.ge.s32.totalorder %v905, 1
      %vm1098 = vcmp.ge.s32.totalorder %v906, 1
      %vm1099 = vcmp.ge.s32.totalorder %v907, 1
      %vm1100 = vcmp.ge.s32.totalorder %v908, 1
      %vm1101 = vcmp.ge.s32.totalorder %v909, 1
      %vm1102 = vcmp.ge.s32.totalorder %v910, 1
      %vm1103 = vcmp.ge.s32.totalorder %v911, 1
      %vm1104 = vcmp.ge.s32.totalorder %v912, 1
      %vm1105 = vcmp.ge.s32.totalorder %v913, 1
      %vm1106 = vcmp.ge.s32.totalorder %v914, 1
      %vm1107 = vcmp.ge.s32.totalorder %v915, 1
      %vm1108 = vcmp.ge.s32.totalorder %v916, 1
      %vm1109 = vcmp.ge.s32.totalorder %v917, 1
      %vm1110 = vcmp.ge.s32.totalorder %v918, 1
      %vm1111 = vcmp.ge.s32.totalorder %v919, 1
      %vm1112 = vcmp.ge.s32.totalorder %v920, 1
      %vm1113 = vcmp.ge.s32.totalorder %v921, 1
      %vm1114 = vcmp.ge.s32.totalorder %v922, 1
      %vm1115 = vcmp.ge.s32.totalorder %v923, 1
      %vm1116 = vcmp.ge.s32.totalorder %v924, 1
      %vm1117 = vcmp.ge.s32.totalorder %v925, 1
      %vm1118 = vcmp.ge.s32.totalorder %v926, 1
      %vm1119 = vcmp.ge.s32.totalorder %v927, 1
      %vm1120 = vcmp.ge.s32.totalorder %v928, 1
      %v1121 = vsel %vm1089, 1, 0
      %v1122 = vsel %vm1090, 1, 0
      %v1123 = vsel %vm1091, 1, 0
      %v1124 = vsel %vm1092, 1, 0
      %v1125 = vsel %vm1093, 1, 0
      %v1126 = vsel %vm1094, 1, 0
      %v1127 = vsel %vm1095, 1, 0
      %v1128 = vsel %vm1096, 1, 0
      %v1129 = vsel %vm1097, 1, 0
      %v1130 = vsel %vm1098, 1, 0
      %v1131 = vsel %vm1099, 1, 0
      %v1132 = vsel %vm1100, 1, 0
      %v1133 = vsel %vm1101, 1, 0
      %v1134 = vsel %vm1102, 1, 0
      %v1135 = vsel %vm1103, 1, 0
      %v1136 = vsel %vm1104, 1, 0
      %v1137 = vsel %vm1105, 1, 0
      %v1138 = vsel %vm1106, 1, 0
      %v1139 = vsel %vm1107, 1, 0
      %v1140 = vsel %vm1108, 1, 0
      %v1141 = vsel %vm1109, 1, 0
      %v1142 = vsel %vm1110, 1, 0
      %v1143 = vsel %vm1111, 1, 0
      %v1144 = vsel %vm1112, 1, 0
      %v1145 = vsel %vm1113, 1, 0
      %v1146 = vsel %vm1114, 1, 0
      %v1147 = vsel %vm1115, 1, 0
      %v1148 = vsel %vm1116, 1, 0
      %v1149 = vsel %vm1117, 1, 0
      %v1150 = vsel %vm1118, 1, 0
      %v1151 = vsel %vm1119, 1, 0
      %v1152 = vsel %vm1120, 1, 0
      %vm1153 = vcmp.eq.s32.totalorder %v1121, 1
      %vm1154 = vcmp.eq.s32.totalorder %v1122, 1
      %vm1155 = vcmp.eq.s32.totalorder %v1123, 1
      %vm1156 = vcmp.eq.s32.totalorder %v1124, 1
      %vm1157 = vcmp.eq.s32.totalorder %v1125, 1
      %vm1158 = vcmp.eq.s32.totalorder %v1126, 1
      %vm1159 = vcmp.eq.s32.totalorder %v1127, 1
      %vm1160 = vcmp.eq.s32.totalorder %v1128, 1
      %vm1161 = vcmp.eq.s32.totalorder %v1129, 1
      %vm1162 = vcmp.eq.s32.totalorder %v1130, 1
      %vm1163 = vcmp.eq.s32.totalorder %v1131, 1
      %vm1164 = vcmp.eq.s32.totalorder %v1132, 1
      %vm1165 = vcmp.eq.s32.totalorder %v1133, 1
      %vm1166 = vcmp.eq.s32.totalorder %v1134, 1
      %vm1167 = vcmp.eq.s32.totalorder %v1135, 1
      %vm1168 = vcmp.eq.s32.totalorder %v1136, 1
      %vm1169 = vcmp.eq.s32.totalorder %v1137, 1
      %vm1170 = vcmp.eq.s32.totalorder %v1138, 1
      %vm1171 = vcmp.eq.s32.totalorder %v1139, 1
      %vm1172 = vcmp.eq.s32.totalorder %v1140, 1
      %vm1173 = vcmp.eq.s32.totalorder %v1141, 1
      %vm1174 = vcmp.eq.s32.totalorder %v1142, 1
      %vm1175 = vcmp.eq.s32.totalorder %v1143, 1
      %vm1176 = vcmp.eq.s32.totalorder %v1144, 1
      %vm1177 = vcmp.eq.s32.totalorder %v1145, 1
      %vm1178 = vcmp.eq.s32.totalorder %v1146, 1
      %vm1179 = vcmp.eq.s32.totalorder %v1147, 1
      %vm1180 = vcmp.eq.s32.totalorder %v1148, 1
      %vm1181 = vcmp.eq.s32.totalorder %v1149, 1
      %vm1182 = vcmp.eq.s32.totalorder %v1150, 1
      %vm1183 = vcmp.eq.s32.totalorder %v1151, 1
      %vm1184 = vcmp.eq.s32.totalorder %v1152, 1
      %v1185 = vsel %vm1153, %v480, 0.0
      %v1186 = vsel %vm1154, %v481, 0.0
      %v1187 = vsel %vm1155, %v482, 0.0
      %v1188 = vsel %vm1156, %v483, 0.0
      %v1189 = vsel %vm1157, %v484, 0.0
      %v1190 = vsel %vm1158, %v485, 0.0
      %v1191 = vsel %vm1159, %v486, 0.0
      %v1192 = vsel %vm1160, %v487, 0.0
      %v1193 = vsel %vm1161, %v488, 0.0
      %v1194 = vsel %vm1162, %v489, 0.0
      %v1195 = vsel %vm1163, %v490, 0.0
      %v1196 = vsel %vm1164, %v491, 0.0
      %v1197 = vsel %vm1165, %v492, 0.0
      %v1198 = vsel %vm1166, %v493, 0.0
      %v1199 = vsel %vm1167, %v494, 0.0
      %v1200 = vsel %vm1168, %v495, 0.0
      %v1201 = vsel %vm1169, %v496, 0.0
      %v1202 = vsel %vm1170, %v497, 0.0
      %v1203 = vsel %vm1171, %v498, 0.0
      %v1204 = vsel %vm1172, %v499, 0.0
      %v1205 = vsel %vm1173, %v500, 0.0
      %v1206 = vsel %vm1174, %v501, 0.0
      %v1207 = vsel %vm1175, %v502, 0.0
      %v1208 = vsel %vm1176, %v503, 0.0
      %v1209 = vsel %vm1177, %v504, 0.0
      %v1210 = vsel %vm1178, %v505, 0.0
      %v1211 = vsel %vm1179, %v506, 0.0
      %v1212 = vsel %vm1180, %v507, 0.0
      %v1213 = vsel %vm1181, %v508, 0.0
      %v1214 = vsel %vm1182, %v509, 0.0
      %v1215 = vsel %vm1183, %v510, 0.0
      %v1216 = vsel %vm1184, %v511, 0.0
      %v1217 = vpack.c.bf16 %v1186, %v1185
      %v1218 = vpack.c.bf16 %v1188, %v1187
      %v1219 = vpack.c.bf16 %v1190, %v1189
      %v1220 = vpack.c.bf16 %v1192, %v1191
      %v1221 = vpack.c.bf16 %v1194, %v1193
      %v1222 = vpack.c.bf16 %v1196, %v1195
      %v1223 = vpack.c.bf16 %v1198, %v1197
      %v1224 = vpack.c.bf16 %v1200, %v1199
      %v1225 = vpack.c.bf16 %v1202, %v1201
      %v1226 = vpack.c.bf16 %v1204, %v1203
      %v1227 = vpack.c.bf16 %v1206, %v1205
      %v1228 = vpack.c.bf16 %v1208, %v1207
      %v1229 = vpack.c.bf16 %v1210, %v1209
      %v1230 = vpack.c.bf16 %v1212, %v1211
      %v1231 = vpack.c.bf16 %v1214, %v1213
      %v1232 = vpack.c.bf16 %v1216, %v1215
      %vm1249 = vcmask 1043456
      %v1250 = vrot.slane %v929, 4
      %v1251 = vrot.slane %v930, 4
      %v1252 = vsel %vm1249, %v1250, %v1251
      %v1253 = vrot.slane %v931, 4
      %v1254 = vsel %vm1249, %v1251, %v1253
      %v1255 = vrot.slane %v932, 4
      %v1256 = vsel %vm1249, %v1253, %v1255
      %v1257 = vrot.slane %v933, 4
      %v1258 = vsel %vm1249, %v1255, %v1257
      %v1259 = vrot.slane %v934, 4
      %v1260 = vsel %vm1249, %v1257, %v1259
      %v1261 = vrot.slane %v935, 4
      %v1262 = vsel %vm1249, %v1259, %v1261
      %v1263 = vrot.slane %v936, 4
      %v1264 = vsel %vm1249, %v1261, %v1263
      %v1265 = vrot.slane %v937, 4
      %v1266 = vsel %vm1249, %v1263, %v1265
      %v1267 = vrot.slane %v938, 4
      %v1268 = vsel %vm1249, %v1265, %v1267
      %v1269 = vrot.slane %v939, 4
      %v1270 = vsel %vm1249, %v1267, %v1269
      %v1271 = vrot.slane %v940, 4
      %v1272 = vsel %vm1249, %v1269, %v1271
      %v1273 = vrot.slane %v941, 4
      %v1274 = vsel %vm1249, %v1271, %v1273
      %v1275 = vrot.slane %v942, 4
      %v1276 = vsel %vm1249, %v1273, %v1275
      %v1277 = vrot.slane %v943, 4
      %v1278 = vsel %vm1249, %v1275, %v1277
      %v1279 = vrot.slane %v944, 4
      %v1280 = vsel %vm1249, %v1277, %v1279
      %1298 = vst [vmem:[#allocation2 + $0x8] sm:$0xf0] %v1250
      %1299 = vst [vmem:[#allocation2 + $0x10] sm:$0xff] %v1252
      %1300 = vst [vmem:[#allocation2 + $0x18] sm:$0xff] %v1254
      %1301 = vst [vmem:[#allocation2 + $0x20] sm:$0xff] %v1256
      %1302 = vst [vmem:[#allocation2 + $0x28] sm:$0xff] %v1258
      %1303 = vst [vmem:[#allocation2 + $0x30] sm:$0xff] %v1260
      %1304 = vst [vmem:[#allocation2 + $0x38] sm:$0xff] %v1262
      %1305 = vst [vmem:[#allocation2 + $0x40] sm:$0xff] %v1264
      %1306 = vst [vmem:[#allocation2 + $0x48] sm:$0xff] %v1266
      %1307 = vst [vmem:[#allocation2 + $0x50] sm:$0xff] %v1268
      %1308 = vst [vmem:[#allocation2 + $0x58] sm:$0xff] %v1270
      %1309 = vst [vmem:[#allocation2 + $0x60] sm:$0xff] %v1272
      %1310 = vst [vmem:[#allocation2 + $0x68] sm:$0xff] %v1274
      %1311 = vst [vmem:[#allocation2 + $0x70] sm:$0xff] %v1276
      %1312 = vst [vmem:[#allocation2 + $0x78] sm:$0xff] %v1278
      %1313 = vst [vmem:[#allocation2 + $0x80] sm:$0xff] %v1280
      %1314 = vst [vmem:[#allocation2 + $0x88] sm:$0xf] %v1279
      %v1331 = vrot.slane %v1073, 4
      %v1332 = vrot.slane %v1074, 4
      %v1333 = vsel %vm1249, %v1331, %v1332
      %v1334 = vrot.slane %v1075, 4
      %v1335 = vsel %vm1249, %v1332, %v1334
      %v1336 = vrot.slane %v1076, 4
      %v1337 = vsel %vm1249, %v1334, %v1336
      %v1338 = vrot.slane %v1077, 4
      %v1339 = vsel %vm1249, %v1336, %v1338
      %v1340 = vrot.slane %v1078, 4
      %v1341 = vsel %vm1249, %v1338, %v1340
      %v1342 = vrot.slane %v1079, 4
      %v1343 = vsel %vm1249, %v1340, %v1342
      %v1344 = vrot.slane %v1080, 4
      %v1345 = vsel %vm1249, %v1342, %v1344
      %v1346 = vrot.slane %v1081, 4
      %v1347 = vsel %vm1249, %v1344, %v1346
      %v1348 = vrot.slane %v1082, 4
      %v1349 = vsel %vm1249, %v1346, %v1348
      %v1350 = vrot.slane %v1083, 4
      %v1351 = vsel %vm1249, %v1348, %v1350
      %v1352 = vrot.slane %v1084, 4
      %v1353 = vsel %vm1249, %v1350, %v1352
      %v1354 = vrot.slane %v1085, 4
      %v1355 = vsel %vm1249, %v1352, %v1354
      %v1356 = vrot.slane %v1086, 4
      %v1357 = vsel %vm1249, %v1354, %v1356
      %v1358 = vrot.slane %v1087, 4
      %v1359 = vsel %vm1249, %v1356, %v1358
      %v1360 = vrot.slane %v1088, 4
      %v1361 = vsel %vm1249, %v1358, %v1360
      %1379 = vst [vmem:[#allocation2 + $0xa0] sm:$0xf0] %v1331
      %1380 = vst [vmem:[#allocation2 + $0xa8] sm:$0xff] %v1333
      %1381 = vst [vmem:[#allocation2 + $0xb0] sm:$0xff] %v1335
      %1382 = vst [vmem:[#allocation2 + $0xb8] sm:$0xff] %v1337
      %1383 = vst [vmem:[#allocation2 + $0xc0] sm:$0xff] %v1339
      %1384 = vst [vmem:[#allocation2 + $0xc8] sm:$0xff] %v1341
      %1385 = vst [vmem:[#allocation2 + $0xd0] sm:$0xff] %v1343
      %1386 = vst [vmem:[#allocation2 + $0xd8] sm:$0xff] %v1345
      %1387 = vst [vmem:[#allocation2 + $0xe0] sm:$0xff] %v1347
      %1388 = vst [vmem:[#allocation2 + $0xe8] sm:$0xff] %v1349
      %1389 = vst [vmem:[#allocation2 + $0xf0] sm:$0xff] %v1351
      %1390 = vst [vmem:[#allocation2 + $0xf8] sm:$0xff] %v1353
      %1391 = vst [vmem:[#allocation2 + $0x100] sm:$0xff] %v1355
      %1392 = vst [vmem:[#allocation2 + $0x108] sm:$0xff] %v1357
      %1393 = vst [vmem:[#allocation2 + $0x110] sm:$0xff] %v1359
      %1394 = vst [vmem:[#allocation2 + $0x118] sm:$0xff] %v1361
      %1395 = vst [vmem:[#allocation2 + $0x120] sm:$0xf] %v1360
      %v1412 = vrot.slane %v1217, 4
      %v1413 = vrot.slane %v1218, 4
      %v1414 = vsel %vm1249, %v1412, %v1413
      %v1415 = vrot.slane %v1219, 4
      %v1416 = vsel %vm1249, %v1413, %v1415
      %v1417 = vrot.slane %v1220, 4
      %v1418 = vsel %vm1249, %v1415, %v1417
      %v1419 = vrot.slane %v1221, 4
      %v1420 = vsel %vm1249, %v1417, %v1419
      %v1421 = vrot.slane %v1222, 4
      %v1422 = vsel %vm1249, %v1419, %v1421
      %v1423 = vrot.slane %v1223, 4
      %v1424 = vsel %vm1249, %v1421, %v1423
      %v1425 = vrot.slane %v1224, 4
      %v1426 = vsel %vm1249, %v1423, %v1425
      %v1427 = vrot.slane %v1225, 4
      %v1428 = vsel %vm1249, %v1425, %v1427
      %v1429 = vrot.slane %v1226, 4
      %v1430 = vsel %vm1249, %v1427, %v1429
      %v1431 = vrot.slane %v1227, 4
      %v1432 = vsel %vm1249, %v1429, %v1431
      %v1433 = vrot.slane %v1228, 4
      %v1434 = vsel %vm1249, %v1431, %v1433
      %v1435 = vrot.slane %v1229, 4
      %v1436 = vsel %vm1249, %v1433, %v1435
      %v1437 = vrot.slane %v1230, 4
      %v1438 = vsel %vm1249, %v1435, %v1437
      %v1439 = vrot.slane %v1231, 4
      %v1440 = vsel %vm1249, %v1437, %v1439
      %v1441 = vrot.slane %v1232, 4
      %v1442 = vsel %vm1249, %v1439, %v1441
      %1460 = vst [vmem:[#allocation2 + $0x138] sm:$0xf0] %v1412
      %1461 = vst [vmem:[#allocation2 + $0x140] sm:$0xff] %v1414
      %1462 = vst [vmem:[#allocation2 + $0x148] sm:$0xff] %v1416
      %1463 = vst [vmem:[#allocation2 + $0x150] sm:$0xff] %v1418
      %1464 = vst [vmem:[#allocation2 + $0x158] sm:$0xff] %v1420
      %1465 = vst [vmem:[#allocation2 + $0x160] sm:$0xff] %v1422
      %1466 = vst [vmem:[#allocation2 + $0x168] sm:$0xff] %v1424
      %1467 = vst [vmem:[#allocation2 + $0x170] sm:$0xff] %v1426
      %1468 = vst [vmem:[#allocation2 + $0x178] sm:$0xff] %v1428
      %1469 = vst [vmem:[#allocation2 + $0x180] sm:$0xff] %v1430
      %1470 = vst [vmem:[#allocation2 + $0x188] sm:$0xff] %v1432
      %1471 = vst [vmem:[#allocation2 + $0x190] sm:$0xff] %v1434
      %1472 = vst [vmem:[#allocation2 + $0x198] sm:$0xff] %v1436
      %1473 = vst [vmem:[#allocation2 + $0x1a0] sm:$0xff] %v1438
      %1474 = vst [vmem:[#allocation2 + $0x1a8] sm:$0xff] %v1440
      %1475 = vst [vmem:[#allocation2 + $0x1b0] sm:$0xff] %v1442
      %1476 = vst [vmem:[#allocation2 + $0x1b8] sm:$0xf] %v1441
      %v1477 = vld [vmem:[#allocation2 + $0x98] sm:$0xf8]
      %v1478 = vld [vmem:[#allocation2 + $0xa0] sm:$0xff]
      %v1479 = vld [vmem:[#allocation2 + $0xa8] sm:$0xff]
      %v1480 = vld [vmem:[#allocation2 + $0xb0] sm:$0xff]
      %v1481 = vld [vmem:[#allocation2 + $0xb8] sm:$0xff]
      %v1482 = vld [vmem:[#allocation2 + $0xc0] sm:$0xff]
      %v1483 = vld [vmem:[#allocation2 + $0xc8] sm:$0xff]
      %v1484 = vld [vmem:[#allocation2 + $0xd0] sm:$0xff]
      %v1485 = vld [vmem:[#allocation2 + $0xd8] sm:$0xff]
      %v1486 = vld [vmem:[#allocation2 + $0xe0] sm:$0xff]
      %v1487 = vld [vmem:[#allocation2 + $0xe8] sm:$0xff]
      %v1488 = vld [vmem:[#allocation2 + $0xf0] sm:$0xff]
      %v1489 = vld [vmem:[#allocation2 + $0xf8] sm:$0xff]
      %v1490 = vld [vmem:[#allocation2 + $0x100] sm:$0xff]
      %v1491 = vld [vmem:[#allocation2 + $0x108] sm:$0xff]
      %v1492 = vld [vmem:[#allocation2 + $0x110] sm:$0xff]
      %v1493 = vld [vmem:[#allocation2 + $0x118] sm:$0xf]
      %v1494 = vld [vmem:[#allocation2] sm:$0xf0]
      %v1495 = vld [vmem:[#allocation2 + $0x8] sm:$0xff]
      %v1496 = vld [vmem:[#allocation2 + $0x10] sm:$0xff]
      %v1497 = vld [vmem:[#allocation2 + $0x18] sm:$0xff]
      %v1498 = vld [vmem:[#allocation2 + $0x20] sm:$0xff]
      %v1499 = vld [vmem:[#allocation2 + $0x28] sm:$0xff]
      %v1500 = vld [vmem:[#allocation2 + $0x30] sm:$0xff]
      %v1501 = vld [vmem:[#allocation2 + $0x38] sm:$0xff]
      %v1502 = vld [vmem:[#allocation2 + $0x40] sm:$0xff]
      %v1503 = vld [vmem:[#allocation2 + $0x48] sm:$0xff]
      %v1504 = vld [vmem:[#allocation2 + $0x50] sm:$0xff]
      %v1505 = vld [vmem:[#allocation2 + $0x58] sm:$0xff]
      %v1506 = vld [vmem:[#allocation2 + $0x60] sm:$0xff]
      %v1507 = vld [vmem:[#allocation2 + $0x68] sm:$0xff]
      %v1508 = vld [vmem:[#allocation2 + $0x70] sm:$0xff]
      %v1509 = vld [vmem:[#allocation2 + $0x78] sm:$0xff]
      %v1510 = vld [vmem:[#allocation2 + $0x80] sm:$0xf]
      %v1511 = vld [vmem:[#allocation2 + $0x130] sm:$0xf0]
      %v1512 = vld [vmem:[#allocation2 + $0x138] sm:$0xff]
      %v1513 = vld [vmem:[#allocation2 + $0x140] sm:$0xff]
      %v1514 = vld [vmem:[#allocation2 + $0x148] sm:$0xff]
      %v1515 = vld [vmem:[#allocation2 + $0x150] sm:$0xff]
      %v1516 = vld [vmem:[#allocation2 + $0x158] sm:$0xff]
      %v1517 = vld [vmem:[#allocation2 + $0x160] sm:$0xff]
      %v1518 = vld [vmem:[#allocation2 + $0x168] sm:$0xff]
      %v1519 = vld [vmem:[#allocation2 + $0x170] sm:$0xff]
      %v1520 = vld [vmem:[#allocation2 + $0x178] sm:$0xff]
      %v1521 = vld [vmem:[#allocation2 + $0x180] sm:$0xff]
      %v1522 = vld [vmem:[#allocation2 + $0x188] sm:$0xff]
      %v1523 = vld [vmem:[#allocation2 + $0x190] sm:$0xff]
      %v1524 = vld [vmem:[#allocation2 + $0x198] sm:$0xff]
      %v1525 = vld [vmem:[#allocation2 + $0x1a0] sm:$0xff]
      %v1526 = vld [vmem:[#allocation2 + $0x1a8] sm:$0xff]
      %v1527 = vld [vmem:[#allocation2 + $0x1b0] sm:$0x1f]
      %v1528 = vld [vmem:[#allocation2 + $0xa0] sm:$0xf8]
      %v1529 = vld [vmem:[#allocation2 + $0x118] sm:$0xff]
      %v1530 = vld [vmem:[#allocation2 + $0x120] sm:$0xf]
      %v1531 = vld [vmem:[#allocation2 + $0x8] sm:$0xf0]
      %v1532 = vld [vmem:[#allocation2 + $0x80] sm:$0xff]
      %v1533 = vld [vmem:[#allocation2 + $0x88] sm:$0xf]
      %v1534 = vld [vmem:[#allocation2 + $0x138] sm:$0xf0]
      %v1535 = vld [vmem:[#allocation2 + $0x1b0] sm:$0xff]
      %v1536 = vld [vmem:[#allocation2 + $0x1b8] sm:$0x1f]
      %v1537 = vld [vmem:[#allocation2 + $0xa8] sm:$0xf8]
      %v1538 = vld [vmem:[#allocation2 + $0x120] sm:$0xff]
      %v1539 = vld [vmem:[#allocation2 + $0x128] sm:$0xf]
      %v1540 = vld [vmem:[#allocation2 + $0x10] sm:$0xf0]
      %v1541 = vld [vmem:[#allocation2 + $0x88] sm:$0xff]
      %v1542 = vld [vmem:[#allocation2 + $0x90] sm:$0xf]
      %v1543 = vld [vmem:[#allocation2 + $0x140] sm:$0xf0]
      %v1544 = vld [vmem:[#allocation2 + $0x148] sm:$0xff]
      %v1545 = vld [vmem:[#allocation2 + $0x150] sm:$0xff]
      %v1546 = vld [vmem:[#allocation2 + $0x158] sm:$0xff]
      %v1547 = vld [vmem:[#allocation2 + $0x160] sm:$0xff]
      %v1548 = vld [vmem:[#allocation2 + $0x168] sm:$0xff]
      %v1549 = vld [vmem:[#allocation2 + $0x170] sm:$0xff]
      %v1550 = vld [vmem:[#allocation2 + $0x178] sm:$0xff]
      %v1551 = vld [vmem:[#allocation2 + $0x180] sm:$0xff]
      %v1552 = vld [vmem:[#allocation2 + $0x188] sm:$0xff]
      %v1553 = vld [vmem:[#allocation2 + $0x190] sm:$0xff]
      %v1554 = vld [vmem:[#allocation2 + $0x198] sm:$0xff]
      %v1555 = vld [vmem:[#allocation2 + $0x1a0] sm:$0xff]
      %v1556 = vld [vmem:[#allocation2 + $0x1a8] sm:$0xff]
      %v1557 = vld [vmem:[#allocation2 + $0x1b0] sm:$0xff]
      %v1558 = vld [vmem:[#allocation2 + $0x1b8] sm:$0xff]
      %v1559 = vld [vmem:[#allocation2 + $0x1c0] sm:$0x1f]
      %vm1560 = vsmask.f32 7424
      %v1562 = vshrl.u32 %v1494, 16
      %v1564 = vshll.u32 %v1494, 16
      %v1566 = vrot.slane %v1564, 1
      %v1567 = vor.u32 %v1562, %v1566
      %v1569 = vshll.u32 %v1495, 16
      %v1571 = vrot.slane %v1569, 1
      %v1572 = vsel %vm1560, %v1567, %v1571
      %v1573 = vshrl.u32 %v1495, 16
      %v1575 = vor.u32 %v1573, %v1571
      %v1577 = vshll.u32 %v1496, 16
      %v1579 = vrot.slane %v1577, 1
      %v1580 = vsel %vm1560, %v1575, %v1579
      %v1581 = vshrl.u32 %v1496, 16
      %v1583 = vor.u32 %v1581, %v1579
      %v1585 = vshll.u32 %v1497, 16
      %v1587 = vrot.slane %v1585, 1
      %v1588 = vsel %vm1560, %v1583, %v1587
      %v1589 = vshrl.u32 %v1497, 16
      %v1591 = vor.u32 %v1589, %v1587
      %v1593 = vshll.u32 %v1498, 16
      %v1595 = vrot.slane %v1593, 1
      %v1596 = vsel %vm1560, %v1591, %v1595
      %v1597 = vshrl.u32 %v1498, 16
      %v1599 = vor.u32 %v1597, %v1595
      %v1601 = vshll.u32 %v1499, 16
      %v1603 = vrot.slane %v1601, 1
      %v1604 = vsel %vm1560, %v1599, %v1603
      %v1605 = vshrl.u32 %v1499, 16
      %v1607 = vor.u32 %v1605, %v1603
      %v1609 = vshll.u32 %v1500, 16
      %v1611 = vrot.slane %v1609, 1
      %v1612 = vsel %vm1560, %v1607, %v1611
      %v1613 = vshrl.u32 %v1500, 16
      %v1615 = vor.u32 %v1613, %v1611
      %v1617 = vshll.u32 %v1501, 16
      %v1619 = vrot.slane %v1617, 1
      %v1620 = vsel %vm1560, %v1615, %v1619
      %v1621 = vshrl.u32 %v1501, 16
      %v1623 = vor.u32 %v1621, %v1619
      %v1625 = vshll.u32 %v1502, 16
      %v1627 = vrot.slane %v1625, 1
      %v1628 = vsel %vm1560, %v1623, %v1627
      %v1629 = vshrl.u32 %v1502, 16
      %v1631 = vor.u32 %v1629, %v1627
      %v1633 = vshll.u32 %v1503, 16
      %v1635 = vrot.slane %v1633, 1
      %v1636 = vsel %vm1560, %v1631, %v1635
      %v1637 = vshrl.u32 %v1503, 16
      %v1639 = vor.u32 %v1637, %v1635
      %v1641 = vshll.u32 %v1504, 16
      %v1643 = vrot.slane %v1641, 1
      %v1644 = vsel %vm1560, %v1639, %v1643
      %v1645 = vshrl.u32 %v1504, 16
      %v1647 = vor.u32 %v1645, %v1643
      %v1649 = vshll.u32 %v1505, 16
      %v1651 = vrot.slane %v1649, 1
      %v1652 = vsel %vm1560, %v1647, %v1651
      %v1653 = vshrl.u32 %v1505, 16
      %v1655 = vor.u32 %v1653, %v1651
      %v1657 = vshll.u32 %v1506, 16
      %v1659 = vrot.slane %v1657, 1
      %v1660 = vsel %vm1560, %v1655, %v1659
      %v1661 = vshrl.u32 %v1506, 16
      %v1663 = vor.u32 %v1661, %v1659
      %v1665 = vshll.u32 %v1507, 16
      %v1667 = vrot.slane %v1665, 1
      %v1668 = vsel %vm1560, %v1663, %v1667
      %v1669 = vshrl.u32 %v1507, 16
      %v1671 = vor.u32 %v1669, %v1667
      %v1673 = vshll.u32 %v1508, 16
      %v1675 = vrot.slane %v1673, 1
      %v1676 = vsel %vm1560, %v1671, %v1675
      %v1677 = vshrl.u32 %v1508, 16
      %v1679 = vor.u32 %v1677, %v1675
      %v1681 = vshll.u32 %v1509, 16
      %v1683 = vrot.slane %v1681, 1
      %v1684 = vsel %vm1560, %v1679, %v1683
      %v1685 = vshrl.u32 %v1509, 16
      %v1687 = vor.u32 %v1685, %v1683
      %v1689 = vshll.u32 %v1510, 16
      %v1691 = vrot.slane %v1689, 1
      %v1692 = vsel %vm1560, %v1687, %v1691
      %v1693 = vshrl.u32 %v1510, 16
      %v1695 = vor.u32 %v1693, %v1691
      %vm1713 = vcmask 1046528
      %v1714 = vrot.slane %v1511, 1
      %v1715 = vrot.slane %v1512, 1
      %v1716 = vsel %vm1713, %v1714, %v1715
      %v1717 = vrot.slane %v1513, 1
      %v1718 = vsel %vm1713, %v1715, %v1717
      %v1719 = vrot.slane %v1514, 1
      %v1720 = vsel %vm1713, %v1717, %v1719
      %v1721 = vrot.slane %v1515, 1
      %v1722 = vsel %vm1713, %v1719, %v1721
      %v1723 = vrot.slane %v1516, 1
      %v1724 = vsel %vm1713, %v1721, %v1723
      %v1725 = vrot.slane %v1517, 1
      %v1726 = vsel %vm1713, %v1723, %v1725
      %v1727 = vrot.slane %v1518, 1
      %v1728 = vsel %vm1713, %v1725, %v1727
      %v1729 = vrot.slane %v1519, 1
      %v1730 = vsel %vm1713, %v1727, %v1729
      %v1731 = vrot.slane %v1520, 1
      %v1732 = vsel %vm1713, %v1729, %v1731
      %v1733 = vrot.slane %v1521, 1
      %v1734 = vsel %vm1713, %v1731, %v1733
      %v1735 = vrot.slane %v1522, 1
      %v1736 = vsel %vm1713, %v1733, %v1735
      %v1737 = vrot.slane %v1523, 1
      %v1738 = vsel %vm1713, %v1735, %v1737
      %v1739 = vrot.slane %v1524, 1
      %v1740 = vsel %vm1713, %v1737, %v1739
      %v1741 = vrot.slane %v1525, 1
      %v1742 = vsel %vm1713, %v1739, %v1741
      %v1743 = vrot.slane %v1526, 1
      %v1744 = vsel %vm1713, %v1741, %v1743
      %v1745 = vrot.slane %v1527, 1
      %v1746 = vsel %vm1713, %v1743, %v1745
      %v1748 = vshrl.u32 %v1531, 16
      %v1750 = vshll.u32 %v1531, 16
      %v1752 = vrot.slane %v1750, 1
      %v1753 = vor.u32 %v1748, %v1752
      %v1754 = vsel %vm1560, %v1753, %v1579
      %v1756 = vshll.u32 %v1532, 16
      %v1758 = vrot.slane %v1756, 1
      %v1759 = vsel %vm1560, %v1687, %v1758
      %v1760 = vshrl.u32 %v1532, 16
      %v1762 = vor.u32 %v1760, %v1758
      %v1764 = vshll.u32 %v1533, 16
      %v1766 = vrot.slane %v1764, 1
      %v1767 = vsel %vm1560, %v1762, %v1766
      %v1768 = vshrl.u32 %v1533, 16
      %v1770 = vor.u32 %v1768, %v1766
      %v1774 = vrot.slane %v1534, 1
      %v1775 = vsel %vm1713, %v1774, %v1717
      %v1776 = vrot.slane %v1535, 1
      %v1777 = vsel %vm1713, %v1743, %v1776
      %v1778 = vrot.slane %v1536, 1
      %v1779 = vsel %vm1713, %v1776, %v1778
      %v1781 = vshrl.u32 %v1540, 16
      %v1783 = vshll.u32 %v1540, 16
      %v1785 = vrot.slane %v1783, 1
      %v1786 = vor.u32 %v1781, %v1785
      %v1787 = vsel %vm1560, %v1786, %v1587
      %v1789 = vshll.u32 %v1541, 16
      %v1791 = vrot.slane %v1789, 1
      %v1792 = vsel %vm1560, %v1762, %v1791
      %v1793 = vshrl.u32 %v1541, 16
      %v1795 = vor.u32 %v1793, %v1791
      %v1797 = vshll.u32 %v1542, 16
      %v1799 = vrot.slane %v1797, 1
      %v1800 = vsel %vm1560, %v1795, %v1799
      %v1801 = vshrl.u32 %v1542, 16
      %v1803 = vor.u32 %v1801, %v1799
      %v1821 = vrot.slane %v1543, 1
      %v1822 = vrot.slane %v1544, 1
      %v1823 = vsel %vm1713, %v1821, %v1822
      %v1824 = vrot.slane %v1545, 1
      %v1825 = vsel %vm1713, %v1822, %v1824
      %v1826 = vrot.slane %v1546, 1
      %v1827 = vsel %vm1713, %v1824, %v1826
      %v1828 = vrot.slane %v1547, 1
      %v1829 = vsel %vm1713, %v1826, %v1828
      %v1830 = vrot.slane %v1548, 1
      %v1831 = vsel %vm1713, %v1828, %v1830
      %v1832 = vrot.slane %v1549, 1
      %v1833 = vsel %vm1713, %v1830, %v1832
      %v1834 = vrot.slane %v1550, 1
      %v1835 = vsel %vm1713, %v1832, %v1834
      %v1836 = vrot.slane %v1551, 1
      %v1837 = vsel %vm1713, %v1834, %v1836
      %v1838 = vrot.slane %v1552, 1
      %v1839 = vsel %vm1713, %v1836, %v1838
      %v1840 = vrot.slane %v1553, 1
      %v1841 = vsel %vm1713, %v1838, %v1840
      %v1842 = vrot.slane %v1554, 1
      %v1843 = vsel %vm1713, %v1840, %v1842
      %v1844 = vrot.slane %v1555, 1
      %v1845 = vsel %vm1713, %v1842, %v1844
      %v1846 = vrot.slane %v1556, 1
      %v1847 = vsel %vm1713, %v1844, %v1846
      %v1848 = vrot.slane %v1557, 1
      %v1849 = vsel %vm1713, %v1846, %v1848
      %v1850 = vrot.slane %v1558, 1
      %v1851 = vsel %vm1713, %v1848, %v1850
      %v1852 = vrot.slane %v1559, 1
      %v1853 = vsel %vm1713, %v1850, %v1852
      %v1854 = vld [vmem:[%s3] sm:$0xf]
      %v1855 = vld [vmem:[%s3 + $0x4] sm:$0xf]
      %v1856 = vld [vmem:[%s3 + $0x8] sm:$0xf]
      %v1857 = vld [vmem:[%s3 + $0xc] sm:$0xf]
      %v1858 = vld [vmem:[%s3 + $0x10] sm:$0xf]
      %v1859 = vld [vmem:[%s3 + $0x14] sm:$0xf]
      %v1860 = vld [vmem:[%s3 + $0x18] sm:$0xf]
      %v1861 = vld [vmem:[%s3 + $0x1c] sm:$0xf]
      %v1862 = vld [vmem:[%s3 + $0x20] sm:$0xf]
      %v1863 = vld [vmem:[%s3 + $0x24] sm:$0xf]
      %v1864 = vld [vmem:[%s3 + $0x28] sm:$0xf]
      %v1865 = vld [vmem:[%s3 + $0x2c] sm:$0xf]
      %v1866 = vld [vmem:[%s3 + $0x30] sm:$0xf]
      %v1867 = vld [vmem:[%s3 + $0x34] sm:$0xf]
      %v1868 = vld [vmem:[%s3 + $0x38] sm:$0xf]
      %v1869 = vld [vmem:[%s3 + $0x3c] sm:$0xf]
      %v1870 = vld [vmem:[%s3 + $0x40] sm:$0xf]
      %v1871 = vld [vmem:[%s3 + $0x44] sm:$0xf]
      %v1872 = vld [vmem:[%s3 + $0x48] sm:$0xf]
      %v1873 = vld [vmem:[%s3 + $0x4c] sm:$0xf]
      %v1874 = vld [vmem:[%s3 + $0x50] sm:$0xf]
      %v1875 = vld [vmem:[%s3 + $0x54] sm:$0xf]
      %v1876 = vld [vmem:[%s3 + $0x58] sm:$0xf]
      %v1877 = vld [vmem:[%s3 + $0x5c] sm:$0xf]
      %v1878 = vld [vmem:[%s3 + $0x60] sm:$0xf]
      %v1879 = vld [vmem:[%s3 + $0x64] sm:$0xf]
      %v1880 = vld [vmem:[%s3 + $0x68] sm:$0xf]
      %v1881 = vld [vmem:[%s3 + $0x6c] sm:$0xf]
      %v1882 = vld [vmem:[%s3 + $0x70] sm:$0xf]
      %v1883 = vld [vmem:[%s3 + $0x74] sm:$0xf]
      %v1884 = vld [vmem:[%s3 + $0x78] sm:$0xf]
      %v1885 = vld [vmem:[%s3 + $0x7c] sm:$0xf]
      %v1886 = vld [vmem:[%s3 + $0x80] sm:$0xf]
      %v1887 = vld [vmem:[%s3 + $0x84] sm:$0xf]
      %v1888 = vld [vmem:[%s3 + $0x88] sm:$0xf]
      %v1889 = vld [vmem:[%s3 + $0x8c] sm:$0xf]
      %v1890 = vld [vmem:[%s3 + $0x90] sm:$0xf]
      %v1891 = vld [vmem:[%s3 + $0x94] sm:$0xf]
      %v1892 = vld [vmem:[%s3 + $0x98] sm:$0xf]
      %v1893 = vld [vmem:[%s3 + $0x9c] sm:$0xf]
      %v1894 = vld [vmem:[%s3 + $0xa0] sm:$0xf]
      %v1895 = vld [vmem:[%s3 + $0xa4] sm:$0xf]
      %v1896 = vld [vmem:[%s3 + $0xa8] sm:$0xf]
      %v1897 = vld [vmem:[%s3 + $0xac] sm:$0xf]
      %v1898 = vld [vmem:[%s3 + $0xb0] sm:$0xf]
      %v1899 = vld [vmem:[%s3 + $0xb4] sm:$0xf]
      %v1900 = vld [vmem:[%s3 + $0xb8] sm:$0xf]
      %v1901 = vld [vmem:[%s3 + $0xbc] sm:$0xf]
      %v1902 = vld [vmem:[%s3 + $0xc0] sm:$0xf]
      %v1903 = vld [vmem:[%s3 + $0xc4] sm:$0xf]
      %v1904 = vld [vmem:[%s3 + $0xc8] sm:$0xf]
      %v1905 = vld [vmem:[%s3 + $0xcc] sm:$0xf]
      %v1906 = vld [vmem:[%s3 + $0xd0] sm:$0xf]
      %v1907 = vld [vmem:[%s3 + $0xd4] sm:$0xf]
      %v1908 = vld [vmem:[%s3 + $0xd8] sm:$0xf]
      %v1909 = vld [vmem:[%s3 + $0xdc] sm:$0xf]
      %v1910 = vld [vmem:[%s3 + $0xe0] sm:$0xf]
      %v1911 = vld [vmem:[%s3 + $0xe4] sm:$0xf]
      %v1912 = vld [vmem:[%s3 + $0xe8] sm:$0xf]
      %v1913 = vld [vmem:[%s3 + $0xec] sm:$0xf]
      %v1914 = vld [vmem:[%s3 + $0xf0] sm:$0xf]
      %v1915 = vld [vmem:[%s3 + $0xf4] sm:$0xf]
      %v1916 = vld [vmem:[%s3 + $0xf8] sm:$0xf]
      %v1917 = vld [vmem:[%s3 + $0xfc] sm:$0xf]
      %v1918 = vld [vmem:[%s3 + $0x100] sm:$0xf]
      %v1919 = vld [vmem:[%s3 + $0x104] sm:$0xf]
      %v1920 = vld [vmem:[%s3 + $0x108] sm:$0xf]
      %v1921 = vld [vmem:[%s3 + $0x10c] sm:$0xf]
      %v1922 = vld [vmem:[%s3 + $0x110] sm:$0xf]
      %v1923 = vld [vmem:[%s3 + $0x114] sm:$0xf]
      %v1924 = vld [vmem:[%s3 + $0x118] sm:$0xf]
      %v1925 = vld [vmem:[%s3 + $0x11c] sm:$0xf]
      %v1926 = vld [vmem:[%s3 + $0x120] sm:$0xf]
      %v1927 = vld [vmem:[%s3 + $0x124] sm:$0xf]
      %v1928 = vld [vmem:[%s3 + $0x128] sm:$0xf]
      %v1929 = vld [vmem:[%s3 + $0x12c] sm:$0xf]
      %v1930 = vld [vmem:[%s3 + $0x130] sm:$0xf]
      %v1931 = vld [vmem:[%s3 + $0x134] sm:$0xf]
      %v1932 = vld [vmem:[%s3 + $0x138] sm:$0xf]
      %v1933 = vld [vmem:[%s3 + $0x13c] sm:$0xf]
      %v1934 = vld [vmem:[%s3 + $0x140] sm:$0xf]
      %v1935 = vld [vmem:[%s3 + $0x144] sm:$0xf]
      %v1936 = vld [vmem:[%s3 + $0x148] sm:$0xf]
      %v1937 = vld [vmem:[%s3 + $0x14c] sm:$0xf]
      %v1938 = vld [vmem:[%s3 + $0x150] sm:$0xf]
      %v1939 = vld [vmem:[%s3 + $0x154] sm:$0xf]
      %v1940 = vld [vmem:[%s3 + $0x158] sm:$0xf]
      %v1941 = vld [vmem:[%s3 + $0x15c] sm:$0xf]
      %v1942 = vld [vmem:[%s3 + $0x160] sm:$0xf]
      %v1943 = vld [vmem:[%s3 + $0x164] sm:$0xf]
      %v1944 = vld [vmem:[%s3 + $0x168] sm:$0xf]
      %v1945 = vld [vmem:[%s3 + $0x16c] sm:$0xf]
      %v1946 = vld [vmem:[%s3 + $0x170] sm:$0xf]
      %v1947 = vld [vmem:[%s3 + $0x174] sm:$0xf]
      %v1948 = vld [vmem:[%s3 + $0x178] sm:$0xf]
      %v1949 = vld [vmem:[%s3 + $0x17c] sm:$0xf]
      %v1950 = vld [vmem:[%s3 + $0x180] sm:$0xf]
      %v1951 = vld [vmem:[%s3 + $0x184] sm:$0xf]
      %v1952 = vld [vmem:[%s3 + $0x188] sm:$0xf]
      %v1953 = vld [vmem:[%s3 + $0x18c] sm:$0xf]
      %v1954 = vld [vmem:[%s3 + $0x190] sm:$0xf]
      %v1955 = vld [vmem:[%s3 + $0x194] sm:$0xf]
      %v1956 = vld [vmem:[%s3 + $0x198] sm:$0xf]
      %v1957 = vld [vmem:[%s3 + $0x19c] sm:$0xf]
      %v1958 = vld [vmem:[%s3 + $0x1a0] sm:$0xf]
      %v1959 = vld [vmem:[%s3 + $0x1a4] sm:$0xf]
      %v1960 = vld [vmem:[%s3 + $0x1a8] sm:$0xf]
      %v1961 = vld [vmem:[%s3 + $0x1ac] sm:$0xf]
      %v1962 = vld [vmem:[%s3 + $0x1b0] sm:$0xf]
      %v1963 = vld [vmem:[%s3 + $0x1b4] sm:$0xf]
      %v1964 = vld [vmem:[%s3 + $0x1b8] sm:$0xf]
      %v1965 = vld [vmem:[%s3 + $0x1bc] sm:$0xf]
      %v1966 = vld [vmem:[%s3 + $0x1c0] sm:$0xf]
      %v1967 = vld [vmem:[%s3 + $0x1c4] sm:$0xf]
      %v1968 = vld [vmem:[%s3 + $0x1c8] sm:$0xf]
      %v1969 = vld [vmem:[%s3 + $0x1cc] sm:$0xf]
      %v1970 = vld [vmem:[%s3 + $0x1d0] sm:$0xf]
      %v1971 = vld [vmem:[%s3 + $0x1d4] sm:$0xf]
      %v1972 = vld [vmem:[%s3 + $0x1d8] sm:$0xf]
      %v1973 = vld [vmem:[%s3 + $0x1dc] sm:$0xf]
      %v1974 = vld [vmem:[%s3 + $0x1e0] sm:$0xf]
      %v1975 = vld [vmem:[%s3 + $0x1e4] sm:$0xf]
      %v1976 = vld [vmem:[%s3 + $0x1e8] sm:$0xf]
      %v1977 = vld [vmem:[%s3 + $0x1ec] sm:$0xf]
      %v1978 = vld [vmem:[%s3 + $0x1f0] sm:$0xf]
      %v1979 = vld [vmem:[%s3 + $0x1f4] sm:$0xf]
      %v1980 = vld [vmem:[%s3 + $0x1f8] sm:$0xf]
      %v1981 = vld [vmem:[%s3 + $0x1fc] sm:$0xf]
      %v1982 = vld [vmem:[%s3 + $0x200] sm:$0xf]
      %v1983 = vld [vmem:[%s3 + $0x204] sm:$0xf]
      %v1984 = vld [vmem:[%s3 + $0x208] sm:$0xf]
      %v1985 = vld [vmem:[%s3 + $0x20c] sm:$0xf]
      %v1986 = vld [vmem:[%s3 + $0x210] sm:$0xf]
      %v1987 = vld [vmem:[%s3 + $0x214] sm:$0xf]
      %v1988 = vld [vmem:[%s3 + $0x218] sm:$0xf]
      %v1989 = vld [vmem:[%s3 + $0x21c] sm:$0xf]
      %v1990 = vld [vmem:[%s3 + $0x220] sm:$0xf]
      %v1991 = vld [vmem:[%s3 + $0x224] sm:$0xf]
      %v1992 = vld [vmem:[%s3 + $0x228] sm:$0xf]
      %v1993 = vld [vmem:[%s3 + $0x22c] sm:$0xf]
      %v1994 = vld [vmem:[%s3 + $0x230] sm:$0xf]
      %v1995 = vld [vmem:[%s3 + $0x234] sm:$0xf]
      %v1996 = vld [vmem:[%s3 + $0x238] sm:$0xf]
      %v1997 = vld [vmem:[%s3 + $0x23c] sm:$0xf]
      %v1998 = vld [vmem:[%s4] sm:$0x1]
      %v2000 = vlaneseq
      %v2001 = vshrl.u32 %v2000, 7
      %v2002 = vsub.s32 0, %v2001
      %v2003 = vrot.slane %v1998, %v2002
      %vm2005 = vsmask.f32 4352
      %v2007 = vshrl.u32 %v1477, 16
      %v2009 = vrot.slane %v2007, 3
      %v2010 = vshll.u32 %v1477, 16
      %v2012 = vrot.slane %v2010, 4
      %v2013 = vor.u32 %v2009, %v2012
      %v2015 = vshrl.u32 %v1478, 16
      %v2017 = vrot.slane %v2015, 3
      %v2018 = vshll.u32 %v1478, 16
      %v2020 = vrot.slane %v2018, 4
      %v2021 = vor.u32 %v2017, %v2020
      %v2022 = vsel %vm2005, %v2013, %v2021
      %v2024 = vshrl.u32 %v1572, 16
      %v2026 = vrot.slane %v2024, 3
      %v2027 = vshll.u32 %v1572, 16
      %v2029 = vrot.slane %v2027, 4
      %v2030 = vor.u32 %v2026, %v2029
      %v2032 = vshrl.u32 %v1580, 16
      %v2034 = vrot.slane %v2032, 3
      %v2035 = vshll.u32 %v1580, 16
      %v2037 = vrot.slane %v2035, 4
      %v2038 = vor.u32 %v2034, %v2037
      %v2039 = vsel %vm2005, %v2030, %v2038
      %v2041 = vshrl.u32 %v1716, 16
      %v2043 = vrot.slane %v2041, 3
      %v2044 = vshll.u32 %v1716, 16
      %v2046 = vrot.slane %v2044, 4
      %v2047 = vor.u32 %v2043, %v2046
      %v2049 = vshrl.u32 %v1718, 16
      %v2051 = vrot.slane %v2049, 3
      %v2052 = vshll.u32 %v1718, 16
      %v2054 = vrot.slane %v2052, 4
      %v2055 = vor.u32 %v2051, %v2054
      %v2056 = vsel %vm2005, %v2047, %v2055
      %v2058 = vshrl.u32 %v1528, 16
      %v2060 = vrot.slane %v2058, 3
      %v2061 = vshll.u32 %v1528, 16
      %v2063 = vrot.slane %v2061, 4
      %v2064 = vor.u32 %v2060, %v2063
      %v2066 = vshrl.u32 %v1479, 16
      %v2068 = vrot.slane %v2066, 3
      %v2069 = vshll.u32 %v1479, 16
      %v2071 = vrot.slane %v2069, 4
      %v2072 = vor.u32 %v2068, %v2071
      %v2073 = vsel %vm2005, %v2064, %v2072
      %v2075 = vshrl.u32 %v1754, 16
      %v2077 = vrot.slane %v2075, 3
      %v2078 = vshll.u32 %v1754, 16
      %v2080 = vrot.slane %v2078, 4
      %v2081 = vor.u32 %v2077, %v2080
      %v2083 = vshrl.u32 %v1588, 16
      %v2085 = vrot.slane %v2083, 3
      %v2086 = vshll.u32 %v1588, 16
      %v2088 = vrot.slane %v2086, 4
      %v2089 = vor.u32 %v2085, %v2088
      %v2090 = vsel %vm2005, %v2081, %v2089
      %v2092 = vshrl.u32 %v1775, 16
      %v2094 = vrot.slane %v2092, 3
      %v2095 = vshll.u32 %v1775, 16
      %v2097 = vrot.slane %v2095, 4
      %v2098 = vor.u32 %v2094, %v2097
      %v2100 = vshrl.u32 %v1720, 16
      %v2102 = vrot.slane %v2100, 3
      %v2103 = vshll.u32 %v1720, 16
      %v2105 = vrot.slane %v2103, 4
      %v2106 = vor.u32 %v2102, %v2105
      %v2107 = vsel %vm2005, %v2098, %v2106
      %v2109 = vshrl.u32 %v1537, 16
      %v2111 = vrot.slane %v2109, 3
      %v2112 = vshll.u32 %v1537, 16
      %v2114 = vrot.slane %v2112, 4
      %v2115 = vor.u32 %v2111, %v2114
      %v2117 = vshrl.u32 %v1480, 16
      %v2119 = vrot.slane %v2117, 3
      %v2120 = vshll.u32 %v1480, 16
      %v2122 = vrot.slane %v2120, 4
      %v2123 = vor.u32 %v2119, %v2122
      %v2124 = vsel %vm2005, %v2115, %v2123
      %v2126 = vshrl.u32 %v1787, 16
      %v2128 = vrot.slane %v2126, 3
      %v2129 = vshll.u32 %v1787, 16
      %v2131 = vrot.slane %v2129, 4
      %v2132 = vor.u32 %v2128, %v2131
      %v2134 = vshrl.u32 %v1596, 16
      %v2136 = vrot.slane %v2134, 3
      %v2137 = vshll.u32 %v1596, 16
      %v2139 = vrot.slane %v2137, 4
      %v2140 = vor.u32 %v2136, %v2139
      %v2141 = vsel %vm2005, %v2132, %v2140
      %v2143 = vshrl.u32 %v1823, 16
      %v2145 = vrot.slane %v2143, 3
      %v2146 = vshll.u32 %v1823, 16
      %v2148 = vrot.slane %v2146, 4
      %v2149 = vor.u32 %v2145, %v2148
      %v2151 = vshrl.u32 %v1825, 16
      %v2153 = vrot.slane %v2151, 3
      %v2154 = vshll.u32 %v1825, 16
      %v2156 = vrot.slane %v2154, 4
      %v2157 = vor.u32 %v2153, %v2156
      %v2158 = vsel %vm2005, %v2149, %v2157
      %v2159 = vsel %vm2005, %v2021, %v2072
      %v2160 = vsel %vm2005, %v2038, %v2089
      %v2161 = vsel %vm2005, %v2055, %v2106
      %v2162 = vsel %vm2005, %v2072, %v2123
      %v2163 = vsel %vm2005, %v2089, %v2140
      %v2165 = vshrl.u32 %v1722, 16
      %v2167 = vrot.slane %v2165, 3
      %v2168 = vshll.u32 %v1722, 16
      %v2170 = vrot.slane %v2168, 4
      %v2171 = vor.u32 %v2167, %v2170
      %v2172 = vsel %vm2005, %v2106, %v2171
      %v2174 = vshrl.u32 %v1481, 16
      %v2176 = vrot.slane %v2174, 3
      %v2177 = vshll.u32 %v1481, 16
      %v2179 = vrot.slane %v2177, 4
      %v2180 = vor.u32 %v2176, %v2179
      %v2181 = vsel %vm2005, %v2123, %v2180
      %v2183 = vshrl.u32 %v1604, 16
      %v2185 = vrot.slane %v2183, 3
      %v2186 = vshll.u32 %v1604, 16
      %v2188 = vrot.slane %v2186, 4
      %v2189 = vor.u32 %v2185, %v2188
      %v2190 = vsel %vm2005, %v2140, %v2189
      %v2192 = vshrl.u32 %v1827, 16
      %v2194 = vrot.slane %v2192, 3
      %v2195 = vshll.u32 %v1827, 16
      %v2197 = vrot.slane %v2195, 4
      %v2198 = vor.u32 %v2194, %v2197
      %v2199 = vsel %vm2005, %v2157, %v2198
      %v2201 = vshrl.u32 %v1724, 16
      %v2203 = vrot.slane %v2201, 3
      %v2204 = vshll.u32 %v1724, 16
      %v2206 = vrot.slane %v2204, 4
      %v2207 = vor.u32 %v2203, %v2206
      %v2208 = vsel %vm2005, %v2171, %v2207
      %v2210 = vshrl.u32 %v1482, 16
      %v2212 = vrot.slane %v2210, 3
      %v2213 = vshll.u32 %v1482, 16
      %v2215 = vrot.slane %v2213, 4
      %v2216 = vor.u32 %v2212, %v2215
      %v2217 = vsel %vm2005, %v2180, %v2216
      %v2219 = vshrl.u32 %v1612, 16
      %v2221 = vrot.slane %v2219, 3
      %v2222 = vshll.u32 %v1612, 16
      %v2224 = vrot.slane %v2222, 4
      %v2225 = vor.u32 %v2221, %v2224
      %v2226 = vsel %vm2005, %v2189, %v2225
      %v2228 = vshrl.u32 %v1829, 16
      %v2230 = vrot.slane %v2228, 3
      %v2231 = vshll.u32 %v1829, 16
      %v2233 = vrot.slane %v2231, 4
      %v2234 = vor.u32 %v2230, %v2233
      %v2235 = vsel %vm2005, %v2198, %v2234
      %v2237 = vshrl.u32 %v1726, 16
      %v2239 = vrot.slane %v2237, 3
      %v2240 = vshll.u32 %v1726, 16
      %v2242 = vrot.slane %v2240, 4
      %v2243 = vor.u32 %v2239, %v2242
      %v2244 = vsel %vm2005, %v2207, %v2243
      %v2246 = vshrl.u32 %v1483, 16
      %v2248 = vrot.slane %v2246, 3
      %v2249 = vshll.u32 %v1483, 16
      %v2251 = vrot.slane %v2249, 4
      %v2252 = vor.u32 %v2248, %v2251
      %v2253 = vsel %vm2005, %v2216, %v2252
      %v2255 = vshrl.u32 %v1620, 16
      %v2257 = vrot.slane %v2255, 3
      %v2258 = vshll.u32 %v1620, 16
      %v2260 = vrot.slane %v2258, 4
      %v2261 = vor.u32 %v2257, %v2260
      %v2262 = vsel %vm2005, %v2225, %v2261
      %v2264 = vshrl.u32 %v1831, 16
      %v2266 = vrot.slane %v2264, 3
      %v2267 = vshll.u32 %v1831, 16
      %v2269 = vrot.slane %v2267, 4
      %v2270 = vor.u32 %v2266, %v2269
      %v2271 = vsel %vm2005, %v2234, %v2270
      %v2273 = vshrl.u32 %v1728, 16
      %v2275 = vrot.slane %v2273, 3
      %v2276 = vshll.u32 %v1728, 16
      %v2278 = vrot.slane %v2276, 4
      %v2279 = vor.u32 %v2275, %v2278
      %v2280 = vsel %vm2005, %v2243, %v2279
      %v2282 = vshrl.u32 %v1484, 16
      %v2284 = vrot.slane %v2282, 3
      %v2285 = vshll.u32 %v1484, 16
      %v2287 = vrot.slane %v2285, 4
      %v2288 = vor.u32 %v2284, %v2287
      %v2289 = vsel %vm2005, %v2252, %v2288
      %v2291 = vshrl.u32 %v1628, 16
      %v2293 = vrot.slane %v2291, 3
      %v2294 = vshll.u32 %v1628, 16
      %v2296 = vrot.slane %v2294, 4
      %v2297 = vor.u32 %v2293, %v2296
      %v2298 = vsel %vm2005, %v2261, %v2297
      %v2300 = vshrl.u32 %v1833, 16
      %v2302 = vrot.slane %v2300, 3
      %v2303 = vshll.u32 %v1833, 16
      %v2305 = vrot.slane %v2303, 4
      %v2306 = vor.u32 %v2302, %v2305
      %v2307 = vsel %vm2005, %v2270, %v2306
      %v2309 = vshrl.u32 %v1730, 16
      %v2311 = vrot.slane %v2309, 3
      %v2312 = vshll.u32 %v1730, 16
      %v2314 = vrot.slane %v2312, 4
      %v2315 = vor.u32 %v2311, %v2314
      %v2316 = vsel %vm2005, %v2279, %v2315
      %v2318 = vshrl.u32 %v1485, 16
      %v2320 = vrot.slane %v2318, 3
      %v2321 = vshll.u32 %v1485, 16
      %v2323 = vrot.slane %v2321, 4
      %v2324 = vor.u32 %v2320, %v2323
      %v2325 = vsel %vm2005, %v2288, %v2324
      %v2327 = vshrl.u32 %v1636, 16
      %v2329 = vrot.slane %v2327, 3
      %v2330 = vshll.u32 %v1636, 16
      %v2332 = vrot.slane %v2330, 4
      %v2333 = vor.u32 %v2329, %v2332
      %v2334 = vsel %vm2005, %v2297, %v2333
      %v2336 = vshrl.u32 %v1835, 16
      %v2338 = vrot.slane %v2336, 3
      %v2339 = vshll.u32 %v1835, 16
      %v2341 = vrot.slane %v2339, 4
      %v2342 = vor.u32 %v2338, %v2341
      %v2343 = vsel %vm2005, %v2306, %v2342
      %v2345 = vshrl.u32 %v1732, 16
      %v2347 = vrot.slane %v2345, 3
      %v2348 = vshll.u32 %v1732, 16
      %v2350 = vrot.slane %v2348, 4
      %v2351 = vor.u32 %v2347, %v2350
      %v2352 = vsel %vm2005, %v2315, %v2351
      %v2354 = vshrl.u32 %v1486, 16
      %v2356 = vrot.slane %v2354, 3
      %v2357 = vshll.u32 %v1486, 16
      %v2359 = vrot.slane %v2357, 4
      %v2360 = vor.u32 %v2356, %v2359
      %v2361 = vsel %vm2005, %v2324, %v2360
      %v2363 = vshrl.u32 %v1644, 16
      %v2365 = vrot.slane %v2363, 3
      %v2366 = vshll.u32 %v1644, 16
      %v2368 = vrot.slane %v2366, 4
      %v2369 = vor.u32 %v2365, %v2368
      %v2370 = vsel %vm2005, %v2333, %v2369
      %v2372 = vshrl.u32 %v1837, 16
      %v2374 = vrot.slane %v2372, 3
      %v2375 = vshll.u32 %v1837, 16
      %v2377 = vrot.slane %v2375, 4
      %v2378 = vor.u32 %v2374, %v2377
      %v2379 = vsel %vm2005, %v2342, %v2378
      %v2381 = vshrl.u32 %v1734, 16
      %v2383 = vrot.slane %v2381, 3
      %v2384 = vshll.u32 %v1734, 16
      %v2386 = vrot.slane %v2384, 4
      %v2387 = vor.u32 %v2383, %v2386
      %v2388 = vsel %vm2005, %v2351, %v2387
      %v2390 = vshrl.u32 %v1487, 16
      %v2392 = vrot.slane %v2390, 3
      %v2393 = vshll.u32 %v1487, 16
      %v2395 = vrot.slane %v2393, 4
      %v2396 = vor.u32 %v2392, %v2395
      %v2397 = vsel %vm2005, %v2360, %v2396
      %v2399 = vshrl.u32 %v1652, 16
      %v2401 = vrot.slane %v2399, 3
      %v2402 = vshll.u32 %v1652, 16
      %v2404 = vrot.slane %v2402, 4
      %v2405 = vor.u32 %v2401, %v2404
      %v2406 = vsel %vm2005, %v2369, %v2405
      %v2408 = vshrl.u32 %v1839, 16
      %v2410 = vrot.slane %v2408, 3
      %v2411 = vshll.u32 %v1839, 16
      %v2413 = vrot.slane %v2411, 4
      %v2414 = vor.u32 %v2410, %v2413
      %v2415 = vsel %vm2005, %v2378, %v2414
      %v2417 = vshrl.u32 %v1736, 16
      %v2419 = vrot.slane %v2417, 3
      %v2420 = vshll.u32 %v1736, 16
      %v2422 = vrot.slane %v2420, 4
      %v2423 = vor.u32 %v2419, %v2422
      %v2424 = vsel %vm2005, %v2387, %v2423
      %v2426 = vshrl.u32 %v1488, 16
      %v2428 = vrot.slane %v2426, 3
      %v2429 = vshll.u32 %v1488, 16
      %v2431 = vrot.slane %v2429, 4
      %v2432 = vor.u32 %v2428, %v2431
      %v2433 = vsel %vm2005, %v2396, %v2432
      %v2435 = vshrl.u32 %v1660, 16
      %v2437 = vrot.slane %v2435, 3
      %v2438 = vshll.u32 %v1660, 16
      %v2440 = vrot.slane %v2438, 4
      %v2441 = vor.u32 %v2437, %v2440
      %v2442 = vsel %vm2005, %v2405, %v2441
      %v2444 = vshrl.u32 %v1841, 16
      %v2446 = vrot.slane %v2444, 3
      %v2447 = vshll.u32 %v1841, 16
      %v2449 = vrot.slane %v2447, 4
      %v2450 = vor.u32 %v2446, %v2449
      %v2451 = vsel %vm2005, %v2414, %v2450
      %v2453 = vshrl.u32 %v1738, 16
      %v2455 = vrot.slane %v2453, 3
      %v2456 = vshll.u32 %v1738, 16
      %v2458 = vrot.slane %v2456, 4
      %v2459 = vor.u32 %v2455, %v2458
      %v2460 = vsel %vm2005, %v2423, %v2459
      %v2462 = vshrl.u32 %v1489, 16
      %v2464 = vrot.slane %v2462, 3
      %v2465 = vshll.u32 %v1489, 16
      %v2467 = vrot.slane %v2465, 4
      %v2468 = vor.u32 %v2464, %v2467
      %v2469 = vsel %vm2005, %v2432, %v2468
      %v2471 = vshrl.u32 %v1668, 16
      %v2473 = vrot.slane %v2471, 3
      %v2474 = vshll.u32 %v1668, 16
      %v2476 = vrot.slane %v2474, 4
      %v2477 = vor.u32 %v2473, %v2476
      %v2478 = vsel %vm2005, %v2441, %v2477
      %v2480 = vshrl.u32 %v1843, 16
      %v2482 = vrot.slane %v2480, 3
      %v2483 = vshll.u32 %v1843, 16
      %v2485 = vrot.slane %v2483, 4
      %v2486 = vor.u32 %v2482, %v2485
      %v2487 = vsel %vm2005, %v2450, %v2486
      %v2489 = vshrl.u32 %v1740, 16
      %v2491 = vrot.slane %v2489, 3
      %v2492 = vshll.u32 %v1740, 16
      %v2494 = vrot.slane %v2492, 4
      %v2495 = vor.u32 %v2491, %v2494
      %v2496 = vsel %vm2005, %v2459, %v2495
      %v2498 = vshrl.u32 %v1490, 16
      %v2500 = vrot.slane %v2498, 3
      %v2501 = vshll.u32 %v1490, 16
      %v2503 = vrot.slane %v2501, 4
      %v2504 = vor.u32 %v2500, %v2503
      %v2505 = vsel %vm2005, %v2468, %v2504
      %v2507 = vshrl.u32 %v1676, 16
      %v2509 = vrot.slane %v2507, 3
      %v2510 = vshll.u32 %v1676, 16
      %v2512 = vrot.slane %v2510, 4
      %v2513 = vor.u32 %v2509, %v2512
      %v2514 = vsel %vm2005, %v2477, %v2513
      %v2516 = vshrl.u32 %v1845, 16
      %v2518 = vrot.slane %v2516, 3
      %v2519 = vshll.u32 %v1845, 16
      %v2521 = vrot.slane %v2519, 4
      %v2522 = vor.u32 %v2518, %v2521
      %v2523 = vsel %vm2005, %v2486, %v2522
      %v2525 = vshrl.u32 %v1742, 16
      %v2527 = vrot.slane %v2525, 3
      %v2528 = vshll.u32 %v1742, 16
      %v2530 = vrot.slane %v2528, 4
      %v2531 = vor.u32 %v2527, %v2530
      %v2532 = vsel %vm2005, %v2495, %v2531
      %v2534 = vshrl.u32 %v1491, 16
      %v2536 = vrot.slane %v2534, 3
      %v2537 = vshll.u32 %v1491, 16
      %v2539 = vrot.slane %v2537, 4
      %v2540 = vor.u32 %v2536, %v2539
      %v2541 = vsel %vm2005, %v2504, %v2540
      %v2543 = vshrl.u32 %v1684, 16
      %v2545 = vrot.slane %v2543, 3
      %v2546 = vshll.u32 %v1684, 16
      %v2548 = vrot.slane %v2546, 4
      %v2549 = vor.u32 %v2545, %v2548
      %v2550 = vsel %vm2005, %v2513, %v2549
      %v2552 = vshrl.u32 %v1847, 16
      %v2554 = vrot.slane %v2552, 3
      %v2555 = vshll.u32 %v1847, 16
      %v2557 = vrot.slane %v2555, 4
      %v2558 = vor.u32 %v2554, %v2557
      %v2559 = vsel %vm2005, %v2522, %v2558
      %v2561 = vshrl.u32 %v1744, 16
      %v2563 = vrot.slane %v2561, 3
      %v2564 = vshll.u32 %v1744, 16
      %v2566 = vrot.slane %v2564, 4
      %v2567 = vor.u32 %v2563, %v2566
      %v2568 = vsel %vm2005, %v2531, %v2567
      %v2570 = vshrl.u32 %v1492, 16
      %v2572 = vrot.slane %v2570, 3
      %v2573 = vshll.u32 %v1492, 16
      %v2575 = vrot.slane %v2573, 4
      %v2576 = vor.u32 %v2572, %v2575
      %v2577 = vsel %vm2005, %v2540, %v2576
      %v2579 = vshrl.u32 %v1759, 16
      %v2581 = vrot.slane %v2579, 3
      %v2582 = vshll.u32 %v1759, 16
      %v2584 = vrot.slane %v2582, 4
      %v2585 = vor.u32 %v2581, %v2584
      %v2586 = vsel %vm2005, %v2549, %v2585
      %v2588 = vshrl.u32 %v1849, 16
      %v2590 = vrot.slane %v2588, 3
      %v2591 = vshll.u32 %v1849, 16
      %v2593 = vrot.slane %v2591, 4
      %v2594 = vor.u32 %v2590, %v2593
      %v2595 = vsel %vm2005, %v2558, %v2594
      %v2597 = vshrl.u32 %v1777, 16
      %v2599 = vrot.slane %v2597, 3
      %v2600 = vshll.u32 %v1777, 16
      %v2602 = vrot.slane %v2600, 4
      %v2603 = vor.u32 %v2599, %v2602
      %v2604 = vsel %vm2005, %v2567, %v2603
      %v2606 = vshrl.u32 %v1529, 16
      %v2608 = vrot.slane %v2606, 3
      %v2609 = vshll.u32 %v1529, 16
      %v2611 = vrot.slane %v2609, 4
      %v2612 = vor.u32 %v2608, %v2611
      %v2613 = vsel %vm2005, %v2576, %v2612
      %v2615 = vshrl.u32 %v1792, 16
      %v2617 = vrot.slane %v2615, 3
      %v2618 = vshll.u32 %v1792, 16
      %v2620 = vrot.slane %v2618, 4
      %v2621 = vor.u32 %v2617, %v2620
      %v2622 = vsel %vm2005, %v2585, %v2621
      %v2624 = vshrl.u32 %v1851, 16
      %v2626 = vrot.slane %v2624, 3
      %v2627 = vshll.u32 %v1851, 16
      %v2629 = vrot.slane %v2627, 4
      %v2630 = vor.u32 %v2626, %v2629
      %v2631 = vsel %vm2005, %v2594, %v2630
      %v2633 = vshrl.u32 %v1692, 16
      %v2635 = vrot.slane %v2633, 3
      %v2636 = vshll.u32 %v1692, 16
      %v2638 = vrot.slane %v2636, 4
      %v2639 = vor.u32 %v2635, %v2638
      %v2640 = vsel %vm2005, %v2549, %v2639
      %v2642 = vshrl.u32 %v1746, 16
      %v2644 = vrot.slane %v2642, 3
      %v2645 = vshll.u32 %v1746, 16
      %v2647 = vrot.slane %v2645, 4
      %v2648 = vor.u32 %v2644, %v2647
      %v2649 = vsel %vm2005, %v2567, %v2648
      %v2651 = vshrl.u32 %v1767, 16
      %v2653 = vrot.slane %v2651, 3
      %v2654 = vshll.u32 %v1767, 16
      %v2656 = vrot.slane %v2654, 4
      %v2657 = vor.u32 %v2653, %v2656
      %v2658 = vsel %vm2005, %v2585, %v2657
      %v2660 = vshrl.u32 %v1779, 16
      %v2662 = vrot.slane %v2660, 3
      %v2663 = vshll.u32 %v1779, 16
      %v2665 = vrot.slane %v2663, 4
      %v2666 = vor.u32 %v2662, %v2665
      %v2667 = vsel %vm2005, %v2603, %v2666
      %v2669 = vshrl.u32 %v1538, 16
      %v2671 = vrot.slane %v2669, 3
      %v2672 = vshll.u32 %v1538, 16
      %v2674 = vrot.slane %v2672, 4
      %v2675 = vor.u32 %v2671, %v2674
      %v2676 = vsel %vm2005, %v2612, %v2675
      %v2678 = vshrl.u32 %v1800, 16
      %v2680 = vrot.slane %v2678, 3
      %v2681 = vshll.u32 %v1800, 16
      %v2683 = vrot.slane %v2681, 4
      %v2684 = vor.u32 %v2680, %v2683
      %v2685 = vsel %vm2005, %v2621, %v2684
      %v2687 = vshrl.u32 %v1853, 16
      %v2689 = vrot.slane %v2687, 3
      %v2690 = vshll.u32 %v1853, 16
      %v2692 = vrot.slane %v2690, 4
      %v2693 = vor.u32 %v2689, %v2692
      %v2694 = vsel %vm2005, %v2630, %v2693
      %v2696 = vshrl.u32 %v1493, 16
      %v2698 = vrot.slane %v2696, 3
      %v2699 = vshll.u32 %v1493, 16
      %v2701 = vrot.slane %v2699, 4
      %v2702 = vor.u32 %v2698, %v2701
      %v2703 = vsel %vm2005, %v2576, %v2702
      %v2705 = vshrl.u32 %v1695, 16
      %v2707 = vrot.slane %v2705, 3
      %v2708 = vshll.u32 %v1695, 16
      %v2710 = vrot.slane %v2708, 4
      %v2711 = vor.u32 %v2707, %v2710
      %v2712 = vsel %vm2005, %v2639, %v2711
      %v2714 = vshrl.u32 %v1745, 16
      %v2716 = vrot.slane %v2714, 3
      %v2717 = vshll.u32 %v1745, 16
      %v2719 = vrot.slane %v2717, 4
      %v2720 = vor.u32 %v2716, %v2719
      %v2721 = vsel %vm2005, %v2648, %v2720
      %v2723 = vshrl.u32 %v1530, 16
      %v2725 = vrot.slane %v2723, 3
      %v2726 = vshll.u32 %v1530, 16
      %v2728 = vrot.slane %v2726, 4
      %v2729 = vor.u32 %v2725, %v2728
      %v2730 = vsel %vm2005, %v2612, %v2729
      %v2732 = vshrl.u32 %v1770, 16
      %v2734 = vrot.slane %v2732, 3
      %v2735 = vshll.u32 %v1770, 16
      %v2737 = vrot.slane %v2735, 4
      %v2738 = vor.u32 %v2734, %v2737
      %v2739 = vsel %vm2005, %v2657, %v2738
      %v2741 = vshrl.u32 %v1778, 16
      %v2743 = vrot.slane %v2741, 3
      %v2744 = vshll.u32 %v1778, 16
      %v2746 = vrot.slane %v2744, 4
      %v2747 = vor.u32 %v2743, %v2746
      %v2748 = vsel %vm2005, %v2666, %v2747
      %v2750 = vshrl.u32 %v1539, 16
      %v2752 = vrot.slane %v2750, 3
      %v2753 = vshll.u32 %v1539, 16
      %v2755 = vrot.slane %v2753, 4
      %v2756 = vor.u32 %v2752, %v2755
      %v2757 = vsel %vm2005, %v2675, %v2756
      %v2759 = vshrl.u32 %v1803, 16
      %v2761 = vrot.slane %v2759, 3
      %v2762 = vshll.u32 %v1803, 16
      %v2764 = vrot.slane %v2762, 4
      %v2765 = vor.u32 %v2761, %v2764
      %v2766 = vsel %vm2005, %v2684, %v2765
      %v2768 = vshrl.u32 %v1852, 16
      %v2770 = vrot.slane %v2768, 3
      %v2771 = vshll.u32 %v1852, 16
      %v2773 = vrot.slane %v2771, 4
      %v2774 = vor.u32 %v2770, %v2773
      %v2775 = vsel %vm2005, %v2693, %v2774
      %v3002 = vunpack.c.l.b16 %v1854
      %v3003 = vunpack.c.l.b16 %v1855
      %v3004 = vunpack.c.l.b16 %v1856
      %v3005 = vunpack.c.l.b16 %v1857
      %v3006 = vunpack.c.l.b16 %v1858
      %v3007 = vunpack.c.l.b16 %v1859
      %v3008 = vunpack.c.l.b16 %v1860
      %v3009 = vunpack.c.l.b16 %v1861
      %v3010 = vunpack.c.l.b16 %v1862
      %v3011 = vunpack.c.l.b16 %v1863
      %v3012 = vunpack.c.l.b16 %v1864
      %v3013 = vunpack.c.l.b16 %v1865
      %v3014 = vunpack.c.l.b16 %v1866
      %v3015 = vunpack.c.l.b16 %v1867
      %v3016 = vunpack.c.l.b16 %v1868
      %v3017 = vunpack.c.l.b16 %v1869
      %v3018 = vunpack.c.l.b16 %v1870
      %v3019 = vunpack.c.l.b16 %v1871
      %v3020 = vunpack.c.l.b16 %v1872
      %v3021 = vunpack.c.l.b16 %v1873
      %v3022 = vunpack.c.l.b16 %v1874
      %v3023 = vunpack.c.l.b16 %v1875
      %v3024 = vunpack.c.l.b16 %v1876
      %v3025 = vunpack.c.l.b16 %v1877
      %v3026 = vunpack.c.l.b16 %v1878
      %v3027 = vunpack.c.l.b16 %v1879
      %v3028 = vunpack.c.l.b16 %v1880
      %v3029 = vunpack.c.l.b16 %v1881
      %v3030 = vunpack.c.l.b16 %v1882
      %v3031 = vunpack.c.l.b16 %v1883
      %v3032 = vunpack.c.l.b16 %v1884
      %v3033 = vunpack.c.l.b16 %v1885
      %v3034 = vunpack.c.l.b16 %v1886
      %v3035 = vunpack.c.l.b16 %v1887
      %v3036 = vunpack.c.l.b16 %v1888
      %v3037 = vunpack.c.l.b16 %v1889
      %v3038 = vunpack.c.l.b16 %v1890
      %v3039 = vunpack.c.l.b16 %v1891
      %v3040 = vunpack.c.l.b16 %v1892
      %v3041 = vunpack.c.l.b16 %v1893
      %v3042 = vunpack.c.l.b16 %v1894
      %v3043 = vunpack.c.l.b16 %v1895
      %v3044 = vunpack.c.l.b16 %v1896
      %v3045 = vunpack.c.l.b16 %v1897
      %v3046 = vunpack.c.l.b16 %v1898
      %v3047 = vunpack.c.l.b16 %v1899
      %v3048 = vunpack.c.l.b16 %v1900
      %v3049 = vunpack.c.l.b16 %v1901
      %v3050 = vunpack.c.l.b16 %v1902
      %v3051 = vunpack.c.l.b16 %v1903
      %v3052 = vunpack.c.l.b16 %v1904
      %v3053 = vunpack.c.l.b16 %v1905
      %v3054 = vunpack.c.l.b16 %v1906
      %v3055 = vunpack.c.l.b16 %v1907
      %v3056 = vunpack.c.l.b16 %v1908
      %v3057 = vunpack.c.l.b16 %v1909
      %v3058 = vunpack.c.l.b16 %v1910
      %v3059 = vunpack.c.l.b16 %v1911
      %v3060 = vunpack.c.l.b16 %v1912
      %v3061 = vunpack.c.l.b16 %v1913
      %v3062 = vunpack.c.l.b16 %v1914
      %v3063 = vunpack.c.l.b16 %v1915
      %v3064 = vunpack.c.l.b16 %v1916
      %v3065 = vunpack.c.l.b16 %v1917
      %v3066 = vunpack.c.l.b16 %v1918
      %v3067 = vunpack.c.l.b16 %v1919
      %v3068 = vunpack.c.l.b16 %v1920
      %v3069 = vunpack.c.l.b16 %v1921
      %v3070 = vunpack.c.l.b16 %v1922
      %v3071 = vunpack.c.l.b16 %v1923
      %v3072 = vunpack.c.l.b16 %v1924
      %v3073 = vunpack.c.l.b16 %v1925
      %v3074 = vunpack.c.l.b16 %v1926
      %v3075 = vunpack.c.l.b16 %v1927
      %v3076 = vunpack.c.l.b16 %v1928
      %v3077 = vunpack.c.l.b16 %v1929
      %v3078 = vunpack.c.l.b16 %v1930
      %v3079 = vunpack.c.l.b16 %v1931
      %v3080 = vunpack.c.l.b16 %v1932
      %v3081 = vunpack.c.l.b16 %v1933
      %v3082 = vunpack.c.l.b16 %v1934
      %v3083 = vunpack.c.l.b16 %v1935
      %v3084 = vunpack.c.l.b16 %v1936
      %v3085 = vunpack.c.l.b16 %v1937
      %v3086 = vunpack.c.l.b16 %v1938
      %v3087 = vunpack.c.l.b16 %v1939
      %v3088 = vunpack.c.l.b16 %v1940
      %v3089 = vunpack.c.l.b16 %v1941
      %v3090 = vunpack.c.l.b16 %v1942
      %v3091 = vunpack.c.l.b16 %v1943
      %v3092 = vunpack.c.l.b16 %v1944
      %v3093 = vunpack.c.l.b16 %v1945
      %v3094 = vunpack.c.l.b16 %v1946
      %v3095 = vunpack.c.l.b16 %v1947
      %v3096 = vunpack.c.l.b16 %v1948
      %v3097 = vunpack.c.l.b16 %v1949
      %v3098 = vunpack.c.l.b16 %v1950
      %v3099 = vunpack.c.l.b16 %v1951
      %v3100 = vunpack.c.l.b16 %v1952
      %v3101 = vunpack.c.l.b16 %v1953
      %v3102 = vunpack.c.l.b16 %v1954
      %v3103 = vunpack.c.l.b16 %v1955
      %v3104 = vunpack.c.l.b16 %v1956
      %v3105 = vunpack.c.l.b16 %v1957
      %v3106 = vunpack.c.l.b16 %v1958
      %v3107 = vunpack.c.l.b16 %v1959
      %v3108 = vunpack.c.l.b16 %v1960
      %v3109 = vunpack.c.l.b16 %v1961
      %v3110 = vunpack.c.l.b16 %v1962
      %v3111 = vunpack.c.l.b16 %v1963
      %v3112 = vunpack.c.l.b16 %v1964
      %v3113 = vunpack.c.l.b16 %v1965
      %v3114 = vunpack.c.l.b16 %v1966
      %v3115 = vunpack.c.l.b16 %v1967
      %v3116 = vunpack.c.l.b16 %v1968
      %v3117 = vunpack.c.l.b16 %v1969
      %v3118 = vunpack.c.l.b16 %v1970
      %v3119 = vunpack.c.l.b16 %v1971
      %v3120 = vunpack.c.l.b16 %v1972
      %v3121 = vunpack.c.l.b16 %v1973
      %v3122 = vunpack.c.l.b16 %v1974
      %v3123 = vunpack.c.l.b16 %v1975
      %v3124 = vunpack.c.l.b16 %v1976
      %v3125 = vunpack.c.l.b16 %v1977
      %v3126 = vunpack.c.l.b16 %v1978
      %v3127 = vunpack.c.l.b16 %v1979
      %v3128 = vunpack.c.l.b16 %v1980
      %v3129 = vunpack.c.l.b16 %v1981
      %v3130 = vunpack.c.l.b16 %v1982
      %v3131 = vunpack.c.l.b16 %v1983
      %v3132 = vunpack.c.l.b16 %v1984
      %v3133 = vunpack.c.l.b16 %v1985
      %v3134 = vunpack.c.l.b16 %v1986
      %v3135 = vunpack.c.l.b16 %v1987
      %v3136 = vunpack.c.l.b16 %v1988
      %v3137 = vunpack.c.l.b16 %v1989
      %v3138 = vunpack.c.l.b16 %v1990
      %v3139 = vunpack.c.l.b16 %v1991
      %v3140 = vunpack.c.l.b16 %v1992
      %v3141 = vunpack.c.l.b16 %v1993
      %v3142 = vunpack.c.l.b16 %v1994
      %v3143 = vunpack.c.l.b16 %v1995
      %v3144 = vunpack.c.l.b16 %v1996
      %v3145 = vunpack.c.l.b16 %v1997
      %v3146 = vpack.c.b16 %v3003, %v3002
      %v3147 = vpack.c.b16 %v3005, %v3004
      %v3148 = vpack.c.b16 %v3007, %v3006
      %v3149 = vpack.c.b16 %v3009, %v3008
      %v3150 = vpack.c.b16 %v3011, %v3010
      %v3151 = vpack.c.b16 %v3013, %v3012
      %v3152 = vpack.c.b16 %v3015, %v3014
      %v3153 = vpack.c.b16 %v3017, %v3016
      %v3154 = vpack.c.b16 %v3019, %v3018
      %v3155 = vpack.c.b16 %v3021, %v3020
      %v3156 = vpack.c.b16 %v3023, %v3022
      %v3157 = vpack.c.b16 %v3025, %v3024
      %v3158 = vpack.c.b16 %v3027, %v3026
      %v3159 = vpack.c.b16 %v3029, %v3028
      %v3160 = vpack.c.b16 %v3031, %v3030
      %v3161 = vpack.c.b16 %v3033, %v3032
      %v3162 = vpack.c.b16 %v3035, %v3034
      %v3163 = vpack.c.b16 %v3037, %v3036
      %v3164 = vpack.c.b16 %v3039, %v3038
      %v3165 = vpack.c.b16 %v3041, %v3040
      %v3166 = vpack.c.b16 %v3043, %v3042
      %v3167 = vpack.c.b16 %v3045, %v3044
      %v3168 = vpack.c.b16 %v3047, %v3046
      %v3169 = vpack.c.b16 %v3049, %v3048
      %v3170 = vpack.c.b16 %v3051, %v3050
      %v3171 = vpack.c.b16 %v3053, %v3052
      %v3172 = vpack.c.b16 %v3055, %v3054
      %v3173 = vpack.c.b16 %v3057, %v3056
      %v3174 = vpack.c.b16 %v3059, %v3058
      %v3175 = vpack.c.b16 %v3061, %v3060
      %v3176 = vpack.c.b16 %v3063, %v3062
      %v3177 = vpack.c.b16 %v3065, %v3064
      %v3178 = vpack.c.b16 %v3067, %v3066
      %v3179 = vpack.c.b16 %v3069, %v3068
      %v3180 = vpack.c.b16 %v3071, %v3070
      %v3181 = vpack.c.b16 %v3073, %v3072
      %v3182 = vpack.c.b16 %v3075, %v3074
      %v3183 = vpack.c.b16 %v3077, %v3076
      %v3184 = vpack.c.b16 %v3079, %v3078
      %v3185 = vpack.c.b16 %v3081, %v3080
      %v3186 = vpack.c.b16 %v3083, %v3082
      %v3187 = vpack.c.b16 %v3085, %v3084
      %v3188 = vpack.c.b16 %v3087, %v3086
      %v3189 = vpack.c.b16 %v3089, %v3088
      %v3190 = vpack.c.b16 %v3091, %v3090
      %v3191 = vpack.c.b16 %v3093, %v3092
      %v3192 = vpack.c.b16 %v3095, %v3094
      %v3193 = vpack.c.b16 %v3097, %v3096
      %v3194 = vpack.c.b16 %v3099, %v3098
      %v3195 = vpack.c.b16 %v3101, %v3100
      %v3196 = vpack.c.b16 %v3103, %v3102
      %v3197 = vpack.c.b16 %v3105, %v3104
      %v3198 = vpack.c.b16 %v3107, %v3106
      %v3199 = vpack.c.b16 %v3109, %v3108
      %v3200 = vpack.c.b16 %v3111, %v3110
      %v3201 = vpack.c.b16 %v3113, %v3112
      %v3202 = vpack.c.b16 %v3115, %v3114
      %v3203 = vpack.c.b16 %v3117, %v3116
      %v3204 = vpack.c.b16 %v3119, %v3118
      %v3205 = vpack.c.b16 %v3121, %v3120
      %v3206 = vpack.c.b16 %v3123, %v3122
      %v3207 = vpack.c.b16 %v3125, %v3124
      %v3208 = vpack.c.b16 %v3127, %v3126
      %v3209 = vpack.c.b16 %v3129, %v3128
      %v3210 = vpack.c.b16 %v3131, %v3130
      %v3211 = vpack.c.b16 %v3133, %v3132
      %v3212 = vpack.c.b16 %v3135, %v3134
      %v3213 = vpack.c.b16 %v3137, %v3136
      %v3214 = vpack.c.b16 %v3139, %v3138
      %v3215 = vpack.c.b16 %v3141, %v3140
      %v3216 = vpack.c.b16 %v3143, %v3142
      %v3217 = vpack.c.b16 %v3145, %v3144
      %3290 = vmatprep.subr.bf16.mxu0 0
      %3291 = vmatpush1.bf16.msra.mxu0 %v3146
      %3292 = vmatprep.subr.bf16.mxu0 0
      %3293 = vmatpush1.bf16.msra.mxu0 %v3147
      %3294 = vmatprep.subr.bf16.mxu0 0
      %3295 = vmatpush1.bf16.msra.mxu0 %v3148
      %3296 = vmatprep.subr.bf16.mxu0 0
      %3297 = vmatpush1.bf16.msra.mxu0 %v3149
      %3298 = vmatprep.subr.bf16.mxu0 0
      %3299 = vmatpush1.bf16.msra.mxu0 %v3150
      %3300 = vmatprep.subr.bf16.mxu0 0
      %3301 = vmatpush1.bf16.msra.mxu0 %v3151
      %3302 = vmatprep.subr.bf16.mxu0 0
      %3303 = vmatpush1.bf16.msra.mxu0 %v3152
      %3304 = vmatprep.subr.bf16.mxu0 0
      %3305 = vmatpush1.bf16.msra.mxu0 %v3153
      %3306 = vmatprep.subr.bf16.mxu0 0
      %3307 = vmatpush1.bf16.msra.mxu0 %v3154
      %3308 = vmatprep.subr.bf16.mxu0 0
      %3309 = vmatpush1.bf16.msra.mxu0 %v3155
      %3310 = vmatprep.subr.bf16.mxu0 0
      %3311 = vmatpush1.bf16.msra.mxu0 %v3156
      %3312 = vmatprep.subr.bf16.mxu0 0
      %3313 = vmatpush1.bf16.msra.mxu0 %v3157
      %3314 = vmatprep.subr.bf16.mxu0 0
      %3315 = vmatpush1.bf16.msra.mxu0 %v3158
      %3316 = vmatprep.subr.bf16.mxu0 0
      %3317 = vmatpush1.bf16.msra.mxu0 %v3159
      %3318 = vmatprep.subr.bf16.mxu0 0
      %3319 = vmatpush1.bf16.msra.mxu0 %v3160
      %3320 = vmatprep.subr.bf16.mxu0 0
      %3321 = vmatpush1.bf16.msra.mxu0 %v3161
      %3322 = vmatprep.mubr.bf16.mxu0 %v2039
      %3323 = vmatmul.mubr.bf16.gmra.mrb[0].mxu0 %v2022
      %v3324 = vpop.f32.mrb[0].mxu0
      %v3325 = vadd.f32 %v2003, %v3324
      %v3326 = vpop.f32.mrb[0].mxu0
      %v3327 = vpop.f32.mrb[0].mxu0
      %v3328 = vadd.f32 %v2003, %v3327
      %v3329 = vpop.f32.mrb[0].mxu0
      %3330 = vmatprep.mubr.bf16.mxu0 %v2160
      %3331 = vmatmul.mubr.bf16.gmra.mrb[0].mxu0 %v2159
      %v3332 = vpop.f32.mrb[0].mxu0
      %v3333 = vadd.f32 %v2003, %v3332
      %v3334 = vpop.f32.mrb[0].mxu0
      %v3335 = vpop.f32.mrb[0].mxu0
      %v3336 = vadd.f32 %v2003, %v3335
      %v3337 = vpop.f32.mrb[0].mxu0
      %3338 = vmatprep.mubr.bf16.mxu0 %v2163
      %3339 = vmatmul.mubr.bf16.gmra.mrb[0].mxu0 %v2162
      %v3340 = vpop.f32.mrb[0].mxu0
      %v3341 = vadd.f32 %v2003, %v3340
      %v3342 = vpop.f32.mrb[0].mxu0
      %v3343 = vpop.f32.mrb[0].mxu0
      %v3344 = vadd.f32 %v2003, %v3343
      %v3345 = vpop.f32.mrb[0].mxu0
      %3346 = vmatprep.mubr.bf16.mxu0 %v2190
      %3347 = vmatmul.mubr.bf16.gmra.mrb[0].mxu0 %v2181
      %v3348 = vpop.f32.mrb[0].mxu0
      %v3349 = vadd.f32 %v2003, %v3348
      %v3350 = vpop.f32.mrb[0].mxu0
      %v3351 = vpop.f32.mrb[0].mxu0
      %v3352 = vadd.f32 %v2003, %v3351
      %v3353 = vpop.f32.mrb[0].mxu0
      %3354 = vmatprep.mubr.bf16.mxu0 %v2226
      %3355 = vmatmul.mubr.bf16.gmra.mrb[0].mxu0 %v2217
      %v3356 = vpop.f32.mrb[0].mxu0
      %v3357 = vadd.f32 %v2003, %v3356
      %v3358 = vpop.f32.mrb[0].mxu0
      %v3359 = vpop.f32.mrb[0].mxu0
      %v3360 = vadd.f32 %v2003, %v3359
      %v3361 = vpop.f32.mrb[0].mxu0
      %3362 = vmatprep.mubr.bf16.mxu0 %v2262
      %3363 = vmatmul.mubr.bf16.gmra.mrb[0].mxu0 %v2253
      %v3364 = vpop.f32.mrb[0].mxu0
      %v3365 = vadd.f32 %v2003, %v3364
      %v3366 = vpop.f32.mrb[0].mxu0
      %v3367 = vpop.f32.mrb[0].mxu0
      %v3368 = vadd.f32 %v2003, %v3367
      %v3369 = vpop.f32.mrb[0].mxu0
      %3370 = vmatprep.mubr.bf16.mxu0 %v2298
      %3371 = vmatmul.mubr.bf16.gmra.mrb[0].mxu0 %v2289
      %v3372 = vpop.f32.mrb[0].mxu0
      %v3373 = vadd.f32 %v2003, %v3372
      %v3374 = vpop.f32.mrb[0].mxu0
      %v3375 = vpop.f32.mrb[0].mxu0
      %v3376 = vadd.f32 %v2003, %v3375
      %v3377 = vpop.f32.mrb[0].mxu0
      %3378 = vmatprep.mubr.bf16.mxu0 %v2334
      %3379 = vmatmul.mubr.bf16.gmra.mrb[0].mxu0 %v2325
      %v3380 = vpop.f32.mrb[0].mxu0
      %v3381 = vadd.f32 %v2003, %v3380
      %v3382 = vpop.f32.mrb[0].mxu0
      %v3383 = vpop.f32.mrb[0].mxu0
      %v3384 = vadd.f32 %v2003, %v3383
      %v3385 = vpop.f32.mrb[0].mxu0
      %3386 = vmatprep.mubr.bf16.mxu0 %v2370
      %3387 = vmatmul.mubr.bf16.gmra.mrb[0].mxu0 %v2361
      %v3388 = vpop.f32.mrb[0].mxu0
      %v3389 = vadd.f32 %v2003, %v3388
      %v3390 = vpop.f32.mrb[0].mxu0
      %v3391 = vpop.f32.mrb[0].mxu0
      %v3392 = vadd.f32 %v2003, %v3391
      %v3393 = vpop.f32.mrb[0].mxu0
      %3394 = vmatprep.mubr.bf16.mxu0 %v2406
      %3395 = vmatmul.mubr.bf16.gmra.mrb[0].mxu0 %v2397
      %v3396 = vpop.f32.mrb[0].mxu0
      %v3397 = vadd.f32 %v2003, %v3396
      %v3398 = vpop.f32.mrb[0].mxu0
      %v3399 = vpop.f32.mrb[0].mxu0
      %v3400 = vadd.f32 %v2003, %v3399
      %v3401 = vpop.f32.mrb[0].mxu0
      %3402 = vmatprep.mubr.bf16.mxu0 %v2442
      %3403 = vmatmul.mubr.bf16.gmra.mrb[0].mxu0 %v2433
      %v3404 = vpop.f32.mrb[0].mxu0
      %v3405 = vadd.f32 %v2003, %v3404
      %v3406 = vpop.f32.mrb[0].mxu0
      %v3407 = vpop.f32.mrb[0].mxu0
      %v3408 = vadd.f32 %v2003, %v3407
      %v3409 = vpop.f32.mrb[0].mxu0
      %3410 = vmatprep.mubr.bf16.mxu0 %v2478
      %3411 = vmatmul.mubr.bf16.gmra.mrb[0].mxu0 %v2469
      %v3412 = vpop.f32.mrb[0].mxu0
      %v3413 = vadd.f32 %v2003, %v3412
      %v3414 = vpop.f32.mrb[0].mxu0
      %v3415 = vpop.f32.mrb[0].mxu0
      %v3416 = vadd.f32 %v2003, %v3415
      %v3417 = vpop.f32.mrb[0].mxu0
      %3418 = vmatprep.mubr.bf16.mxu0 %v2514
      %3419 = vmatmul.mubr.bf16.gmra.mrb[0].mxu0 %v2505
      %v3420 = vpop.f32.mrb[0].mxu0
      %v3421 = vadd.f32 %v2003, %v3420
      %v3422 = vpop.f32.mrb[0].mxu0
      %v3423 = vpop.f32.mrb[0].mxu0
      %v3424 = vadd.f32 %v2003, %v3423
      %v3425 = vpop.f32.mrb[0].mxu0
      %3426 = vmatprep.mubr.bf16.mxu0 %v2550
      %3427 = vmatmul.mubr.bf16.gmra.mrb[0].mxu0 %v2541
      %v3428 = vpop.f32.mrb[0].mxu0
      %v3429 = vadd.f32 %v2003, %v3428
      %v3430 = vpop.f32.mrb[0].mxu0
      %v3431 = vpop.f32.mrb[0].mxu0
      %v3432 = vadd.f32 %v2003, %v3431
      %v3433 = vpop.f32.mrb[0].mxu0
      %3434 = vmatprep.mubr.bf16.mxu0 %v2640
      %3435 = vmatmul.mubr.bf16.gmra.mrb[0].mxu0 %v2577
      %v3436 = vpop.f32.mrb[0].mxu0
      %v3437 = vadd.f32 %v2003, %v3436
      %v3438 = vpop.f32.mrb[0].mxu0
      %v3439 = vpop.f32.mrb[0].mxu0
      %v3440 = vadd.f32 %v2003, %v3439
      %v3441 = vpop.f32.mrb[0].mxu0
      %3442 = vmatprep.mubr.bf16.mxu0 %v2712
      %3443 = vmatmul.mubr.bf16.gmra.mrb[0].mxu0 %v2703
      %v3444 = vpop.f32.mrb[0].mxu0
      %v3445 = vadd.f32 %v2003, %v3444
      %v3446 = vpop.f32.mrb[0].mxu0
      %v3447 = vpop.f32.mrb[0].mxu0
      %v3448 = vadd.f32 %v2003, %v3447
      %v3449 = vpop.f32.mrb[0].mxu0
      %3450 = vdwg.mxu0
      %3451 = vmatprep.subr.bf16.mxu0 0
      %3452 = vmatpush1.bf16.msra.mxu0 %v3162
      %3453 = vmatprep.subr.bf16.mxu0 0
      %3454 = vmatpush1.bf16.msra.mxu0 %v3163
      %3455 = vmatprep.subr.bf16.mxu0 0
      %3456 = vmatpush1.bf16.msra.mxu0 %v3164
      %3457 = vmatprep.subr.bf16.mxu0 0
      %3458 = vmatpush1.bf16.msra.mxu0 %v3165
      %3459 = vmatprep.subr.bf16.mxu0 0
      %3460 = vmatpush1.bf16.msra.mxu0 %v3166
      %3461 = vmatprep.subr.bf16.mxu0 0
      %3462 = vmatpush1.bf16.msra.mxu0 %v3167
      %3463 = vmatprep.subr.bf16.mxu0 0
      %3464 = vmatpush1.bf16.msra.mxu0 %v3168
      %3465 = vmatprep.subr.bf16.mxu0 0
      %3466 = vmatpush1.bf16.msra.mxu0 %v3169
      %3467 = vmatprep.subr.bf16.mxu0 0
      %3468 = vmatpush1.bf16.msra.mxu0 %v3170
      %3469 = vmatprep.subr.bf16.mxu0 0
      %3470 = vmatpush1.bf16.msra.mxu0 %v3171
      %3471 = vmatprep.subr.bf16.mxu0 0
      %3472 = vmatpush1.bf16.msra.mxu0 %v3172
      %3473 = vmatprep.subr.bf16.mxu0 0
      %3474 = vmatpush1.bf16.msra.mxu0 %v3173
      %3475 = vmatprep.subr.bf16.mxu0 0
      %3476 = vmatpush1.bf16.msra.mxu0 %v3174
      %3477 = vmatprep.subr.bf16.mxu0 0
      %3478 = vmatpush1.bf16.msra.mxu0 %v3175
      %3479 = vmatprep.subr.bf16.mxu0 0
      %3480 = vmatpush1.bf16.msra.mxu0 %v3176
      %3481 = vmatprep.subr.bf16.mxu0 0
      %3482 = vmatpush1.bf16.msra.mxu0 %v3177
      %3483 = vmatprep.mubr.bf16.mxu0 %v2073
      %3484 = vmatmul.mubr.bf16.gmra.mrb[0].mxu0 %v2056
      %v3485 = vpop.f32.mrb[0].mxu0
      %v3486 = vadd.f32 %v3325, %v3485
      %v3487 = vpop.f32.mrb[0].mxu0
      %v3488 = vpop.f32.mrb[0].mxu0
      %v3489 = vadd.f32 %v3328, %v3488
      %v3490 = vpop.f32.mrb[0].mxu0
      %3491 = vmatprep.mubr.bf16.mxu0 %v2162
      %3492 = vmatmul.mubr.bf16.gmra.mrb[0].mxu0 %v2161
      %v3493 = vpop.f32.mrb[0].mxu0
      %v3494 = vadd.f32 %v3333, %v3493
      %v3495 = vpop.f32.mrb[0].mxu0
      %v3496 = vpop.f32.mrb[0].mxu0
      %v3497 = vadd.f32 %v3336, %v3496
      %v3498 = vpop.f32.mrb[0].mxu0
      %3499 = vmatprep.mubr.bf16.mxu0 %v2181
      %3500 = vmatmul.mubr.bf16.gmra.mrb[0].mxu0 %v2172
      %v3501 = vpop.f32.mrb[0].mxu0
      %v3502 = vadd.f32 %v3341, %v3501
      %v3503 = vpop.f32.mrb[0].mxu0
      %v3504 = vpop.f32.mrb[0].mxu0
      %v3505 = vadd.f32 %v3344, %v3504
      %v3506 = vpop.f32.mrb[0].mxu0
      %3507 = vmatprep.mubr.bf16.mxu0 %v2217
      %3508 = vmatmul.mubr.bf16.gmra.mrb[0].mxu0 %v2208
      %v3509 = vpop.f32.mrb[0].mxu0
      %v3510 = vadd.f32 %v3349, %v3509
      %v3511 = vpop.f32.mrb[0].mxu0
      %v3512 = vpop.f32.mrb[0].mxu0
      %v3513 = vadd.f32 %v3352, %v3512
      %v3514 = vpop.f32.mrb[0].mxu0
      %3515 = vmatprep.mubr.bf16.mxu0 %v2253
      %3516 = vmatmul.mubr.bf16.gmra.mrb[0].mxu0 %v2244
      %v3517 = vpop.f32.mrb[0].mxu0
      %v3518 = vadd.f32 %v3357, %v3517
      %v3519 = vpop.f32.mrb[0].mxu0
      %v3520 = vpop.f32.mrb[0].mxu0
      %v3521 = vadd.f32 %v3360, %v3520
      %v3522 = vpop.f32.mrb[0].mxu0
      %3523 = vmatprep.mubr.bf16.mxu0 %v2289
      %3524 = vmatmul.mubr.bf16.gmra.mrb[0].mxu0 %v2280
      %v3525 = vpop.f32.mrb[0].mxu0
      %v3526 = vadd.f32 %v3365, %v3525
      %v3527 = vpop.f32.mrb[0].mxu0
      %v3528 = vpop.f32.mrb[0].mxu0
      %v3529 = vadd.f32 %v3368, %v3528
      %v3530 = vpop.f32.mrb[0].mxu0
      %3531 = vmatprep.mubr.bf16.mxu0 %v2325
      %3532 = vmatmul.mubr.bf16.gmra.mrb[0].mxu0 %v2316
      %v3533 = vpop.f32.mrb[0].mxu0
      %v3534 = vadd.f32 %v3373, %v3533
      %v3535 = vpop.f32.mrb[0].mxu0
      %v3536 = vpop.f32.mrb[0].mxu0
      %v3537 = vadd.f32 %v3376, %v3536
      %v3538 = vpop.f32.mrb[0].mxu0
      %3539 = vmatprep.mubr.bf16.mxu0 %v2361
      %3540 = vmatmul.mubr.bf16.gmra.mrb[0].mxu0 %v2352
      %v3541 = vpop.f32.mrb[0].mxu0
      %v3542 = vadd.f32 %v3381, %v3541
      %v3543 = vpop.f32.mrb[0].mxu0
      %v3544 = vpop.f32.mrb[0].mxu0
      %v3545 = vadd.f32 %v3384, %v3544
      %v3546 = vpop.f32.mrb[0].mxu0
      %3547 = vmatprep.mubr.bf16.mxu0 %v2397
      %3548 = vmatmul.mubr.bf16.gmra.mrb[0].mxu0 %v2388
      %v3549 = vpop.f32.mrb[0].mxu0
      %v3550 = vadd.f32 %v3389, %v3549
      %v3551 = vpop.f32.mrb[0].mxu0
      %v3552 = vpop.f32.mrb[0].mxu0
      %v3553 = vadd.f32 %v3392, %v3552
      %v3554 = vpop.f32.mrb[0].mxu0
      %3555 = vmatprep.mubr.bf16.mxu0 %v2433
      %3556 = vmatmul.mubr.bf16.gmra.mrb[0].mxu0 %v2424
      %v3557 = vpop.f32.mrb[0].mxu0
      %v3558 = vadd.f32 %v3397, %v3557
      %v3559 = vpop.f32.mrb[0].mxu0
      %v3560 = vpop.f32.mrb[0].mxu0
      %v3561 = vadd.f32 %v3400, %v3560
      %v3562 = vpop.f32.mrb[0].mxu0
      %3563 = vmatprep.mubr.bf16.mxu0 %v2469
      %3564 = vmatmul.mubr.bf16.gmra.mrb[0].mxu0 %v2460
      %v3565 = vpop.f32.mrb[0].mxu0
      %v3566 = vadd.f32 %v3405, %v3565
      %v3567 = vpop.f32.mrb[0].mxu0
      %v3568 = vpop.f32.mrb[0].mxu0
      %v3569 = vadd.f32 %v3408, %v3568
      %v3570 = vpop.f32.mrb[0].mxu0
      %3571 = vmatprep.mubr.bf16.mxu0 %v2505
      %3572 = vmatmul.mubr.bf16.gmra.mrb[0].mxu0 %v2496
      %v3573 = vpop.f32.mrb[0].mxu0
      %v3574 = vadd.f32 %v3413, %v3573
      %v3575 = vpop.f32.mrb[0].mxu0
      %v3576 = vpop.f32.mrb[0].mxu0
      %v3577 = vadd.f32 %v3416, %v3576
      %v3578 = vpop.f32.mrb[0].mxu0
      %3579 = vmatprep.mubr.bf16.mxu0 %v2541
      %3580 = vmatmul.mubr.bf16.gmra.mrb[0].mxu0 %v2532
      %v3581 = vpop.f32.mrb[0].mxu0
      %v3582 = vadd.f32 %v3421, %v3581
      %v3583 = vpop.f32.mrb[0].mxu0
      %v3584 = vpop.f32.mrb[0].mxu0
      %v3585 = vadd.f32 %v3424, %v3584
      %v3586 = vpop.f32.mrb[0].mxu0
      %3587 = vmatprep.mubr.bf16.mxu0 %v2577
      %3588 = vmatmul.mubr.bf16.gmra.mrb[0].mxu0 %v2568
      %v3589 = vpop.f32.mrb[0].mxu0
      %v3590 = vadd.f32 %v3429, %v3589
      %v3591 = vpop.f32.mrb[0].mxu0
      %v3592 = vpop.f32.mrb[0].mxu0
      %v3593 = vadd.f32 %v3432, %v3592
      %v3594 = vpop.f32.mrb[0].mxu0
      %3595 = vmatprep.mubr.bf16.mxu0 %v2613
      %3596 = vmatmul.mubr.bf16.gmra.mrb[0].mxu0 %v2649
      %v3597 = vpop.f32.mrb[0].mxu0
      %v3598 = vadd.f32 %v3437, %v3597
      %v3599 = vpop.f32.mrb[0].mxu0
      %v3600 = vpop.f32.mrb[0].mxu0
      %v3601 = vadd.f32 %v3440, %v3600
      %v3602 = vpop.f32.mrb[0].mxu0
      %3603 = vmatprep.mubr.bf16.mxu0 %v2730
      %3604 = vmatmul.mubr.bf16.gmra.mrb[0].mxu0 %v2721
      %v3605 = vpop.f32.mrb[0].mxu0
      %v3606 = vadd.f32 %v3445, %v3605
      %v3607 = vpop.f32.mrb[0].mxu0
      %v3608 = vpop.f32.mrb[0].mxu0
      %v3609 = vadd.f32 %v3448, %v3608
      %v3610 = vpop.f32.mrb[0].mxu0
      %3611 = vdwg.mxu0
      %3612 = vmatprep.subr.bf16.mxu0 0
      %3613 = vmatpush1.bf16.msra.mxu0 %v3178
      %3614 = vmatprep.subr.bf16.mxu0 0
      %3615 = vmatpush1.bf16.msra.mxu0 %v3179
      %3616 = vmatprep.subr.bf16.mxu0 0
      %3617 = vmatpush1.bf16.msra.mxu0 %v3180
      %3618 = vmatprep.subr.bf16.mxu0 0
      %3619 = vmatpush1.bf16.msra.mxu0 %v3181
      %3620 = vmatprep.subr.bf16.mxu0 0
      %3621 = vmatpush1.bf16.msra.mxu0 %v3182
      %3622 = vmatprep.subr.bf16.mxu0 0
      %3623 = vmatpush1.bf16.msra.mxu0 %v3183
      %3624 = vmatprep.subr.bf16.mxu0 0
      %3625 = vmatpush1.bf16.msra.mxu0 %v3184
      %3626 = vmatprep.subr.bf16.mxu0 0
      %3627 = vmatpush1.bf16.msra.mxu0 %v3185
      %3628 = vmatprep.subr.bf16.mxu0 0
      %3629 = vmatpush1.bf16.msra.mxu0 %v3186
      %3630 = vmatprep.subr.bf16.mxu0 0
      %3631 = vmatpush1.bf16.msra.mxu0 %v3187
      %3632 = vmatprep.subr.bf16.mxu0 0
      %3633 = vmatpush1.bf16.msra.mxu0 %v3188
      %3634 = vmatprep.subr.bf16.mxu0 0
      %3635 = vmatpush1.bf16.msra.mxu0 %v3189
      %3636 = vmatprep.subr.bf16.mxu0 0
      %3637 = vmatpush1.bf16.msra.mxu0 %v3190
      %3638 = vmatprep.subr.bf16.mxu0 0
      %3639 = vmatpush1.bf16.msra.mxu0 %v3191
      %3640 = vmatprep.subr.bf16.mxu0 0
      %3641 = vmatpush1.bf16.msra.mxu0 %v3192
      %3642 = vmatprep.subr.bf16.mxu0 0
      %3643 = vmatpush1.bf16.msra.mxu0 %v3193
      %3644 = vmatprep.mubr.bf16.mxu0 %v2107
      %3645 = vmatmul.mubr.bf16.gmra.mrb[0].mxu0 %v2090
      %v3646 = vpop.f32.mrb[0].mxu0
      %v3647 = vadd.f32 %v3486, %v3646
      %v3648 = vpop.f32.mrb[0].mxu0
      %v3649 = vpop.f32.mrb[0].mxu0
      %v3650 = vadd.f32 %v3489, %v3649
      %v3651 = vpop.f32.mrb[0].mxu0
      %3652 = vmatprep.mubr.bf16.mxu0 %v2172
      %3653 = vmatmul.mubr.bf16.gmra.mrb[0].mxu0 %v2163
      %v3654 = vpop.f32.mrb[0].mxu0
      %v3655 = vadd.f32 %v3494, %v3654
      %v3656 = vpop.f32.mrb[0].mxu0
      %v3657 = vpop.f32.mrb[0].mxu0
      %v3658 = vadd.f32 %v3497, %v3657
      %v3659 = vpop.f32.mrb[0].mxu0
      %3660 = vmatprep.mubr.bf16.mxu0 %v2208
      %3661 = vmatmul.mubr.bf16.gmra.mrb[0].mxu0 %v2190
      %v3662 = vpop.f32.mrb[0].mxu0
      %v3663 = vadd.f32 %v3502, %v3662
      %v3664 = vpop.f32.mrb[0].mxu0
      %v3665 = vpop.f32.mrb[0].mxu0
      %v3666 = vadd.f32 %v3505, %v3665
      %v3667 = vpop.f32.mrb[0].mxu0
      %3668 = vmatprep.mubr.bf16.mxu0 %v2244
      %3669 = vmatmul.mubr.bf16.gmra.mrb[0].mxu0 %v2226
      %v3670 = vpop.f32.mrb[0].mxu0
      %v3671 = vadd.f32 %v3510, %v3670
      %v3672 = vpop.f32.mrb[0].mxu0
      %v3673 = vpop.f32.mrb[0].mxu0
      %v3674 = vadd.f32 %v3513, %v3673
      %v3675 = vpop.f32.mrb[0].mxu0
      %3676 = vmatprep.mubr.bf16.mxu0 %v2280
      %3677 = vmatmul.mubr.bf16.gmra.mrb[0].mxu0 %v2262
      %v3678 = vpop.f32.mrb[0].mxu0
      %v3679 = vadd.f32 %v3518, %v3678
      %v3680 = vpop.f32.mrb[0].mxu0
      %v3681 = vpop.f32.mrb[0].mxu0
      %v3682 = vadd.f32 %v3521, %v3681
      %v3683 = vpop.f32.mrb[0].mxu0
      %3684 = vmatprep.mubr.bf16.mxu0 %v2316
      %3685 = vmatmul.mubr.bf16.gmra.mrb[0].mxu0 %v2298
      %v3686 = vpop.f32.mrb[0].mxu0
      %v3687 = vadd.f32 %v3526, %v3686
      %v3688 = vpop.f32.mrb[0].mxu0
      %v3689 = vpop.f32.mrb[0].mxu0
      %v3690 = vadd.f32 %v3529, %v3689
      %v3691 = vpop.f32.mrb[0].mxu0
      %3692 = vmatprep.mubr.bf16.mxu0 %v2352
      %3693 = vmatmul.mubr.bf16.gmra.mrb[0].mxu0 %v2334
      %v3694 = vpop.f32.mrb[0].mxu0
      %v3695 = vadd.f32 %v3534, %v3694
      %v3696 = vpop.f32.mrb[0].mxu0
      %v3697 = vpop.f32.mrb[0].mxu0
      %v3698 = vadd.f32 %v3537, %v3697
      %v3699 = vpop.f32.mrb[0].mxu0
      %3700 = vmatprep.mubr.bf16.mxu0 %v2388
      %3701 = vmatmul.mubr.bf16.gmra.mrb[0].mxu0 %v2370
      %v3702 = vpop.f32.mrb[0].mxu0
      %v3703 = vadd.f32 %v3542, %v3702
      %v3704 = vpop.f32.mrb[0].mxu0
      %v3705 = vpop.f32.mrb[0].mxu0
      %v3706 = vadd.f32 %v3545, %v3705
      %v3707 = vpop.f32.mrb[0].mxu0
      %3708 = vmatprep.mubr.bf16.mxu0 %v2424
      %3709 = vmatmul.mubr.bf16.gmra.mrb[0].mxu0 %v2406
      %v3710 = vpop.f32.mrb[0].mxu0
      %v3711 = vadd.f32 %v3550, %v3710
      %v3712 = vpop.f32.mrb[0].mxu0
      %v3713 = vpop.f32.mrb[0].mxu0
      %v3714 = vadd.f32 %v3553, %v3713
      %v3715 = vpop.f32.mrb[0].mxu0
      %3716 = vmatprep.mubr.bf16.mxu0 %v2460
      %3717 = vmatmul.mubr.bf16.gmra.mrb[0].mxu0 %v2442
      %v3718 = vpop.f32.mrb[0].mxu0
      %v3719 = vadd.f32 %v3558, %v3718
      %v3720 = vpop.f32.mrb[0].mxu0
      %v3721 = vpop.f32.mrb[0].mxu0
      %v3722 = vadd.f32 %v3561, %v3721
      %v3723 = vpop.f32.mrb[0].mxu0
      %3724 = vmatprep.mubr.bf16.mxu0 %v2496
      %3725 = vmatmul.mubr.bf16.gmra.mrb[0].mxu0 %v2478
      %v3726 = vpop.f32.mrb[0].mxu0
      %v3727 = vadd.f32 %v3566, %v3726
      %v3728 = vpop.f32.mrb[0].mxu0
      %v3729 = vpop.f32.mrb[0].mxu0
      %v3730 = vadd.f32 %v3569, %v3729
      %v3731 = vpop.f32.mrb[0].mxu0
      %3732 = vmatprep.mubr.bf16.mxu0 %v2532
      %3733 = vmatmul.mubr.bf16.gmra.mrb[0].mxu0 %v2514
      %v3734 = vpop.f32.mrb[0].mxu0
      %v3735 = vadd.f32 %v3574, %v3734
      %v3736 = vpop.f32.mrb[0].mxu0
      %v3737 = vpop.f32.mrb[0].mxu0
      %v3738 = vadd.f32 %v3577, %v3737
      %v3739 = vpop.f32.mrb[0].mxu0
      %3740 = vmatprep.mubr.bf16.mxu0 %v2568
      %3741 = vmatmul.mubr.bf16.gmra.mrb[0].mxu0 %v2550
      %v3742 = vpop.f32.mrb[0].mxu0
      %v3743 = vadd.f32 %v3582, %v3742
      %v3744 = vpop.f32.mrb[0].mxu0
      %v3745 = vpop.f32.mrb[0].mxu0
      %v3746 = vadd.f32 %v3585, %v3745
      %v3747 = vpop.f32.mrb[0].mxu0
      %3748 = vmatprep.mubr.bf16.mxu0 %v2604
      %3749 = vmatmul.mubr.bf16.gmra.mrb[0].mxu0 %v2586
      %v3750 = vpop.f32.mrb[0].mxu0
      %v3751 = vadd.f32 %v3590, %v3750
      %v3752 = vpop.f32.mrb[0].mxu0
      %v3753 = vpop.f32.mrb[0].mxu0
      %v3754 = vadd.f32 %v3593, %v3753
      %v3755 = vpop.f32.mrb[0].mxu0
      %3756 = vmatprep.mubr.bf16.mxu0 %v2667
      %3757 = vmatmul.mubr.bf16.gmra.mrb[0].mxu0 %v2658
      %v3758 = vpop.f32.mrb[0].mxu0
      %v3759 = vadd.f32 %v3598, %v3758
      %v3760 = vpop.f32.mrb[0].mxu0
      %v3761 = vpop.f32.mrb[0].mxu0
      %v3762 = vadd.f32 %v3601, %v3761
      %v3763 = vpop.f32.mrb[0].mxu0
      %3764 = vmatprep.mubr.bf16.mxu0 %v2748
      %3765 = vmatmul.mubr.bf16.gmra.mrb[0].mxu0 %v2739
      %v3766 = vpop.f32.mrb[0].mxu0
      %v3767 = vadd.f32 %v3606, %v3766
      %v3768 = vpop.f32.mrb[0].mxu0
      %v3769 = vpop.f32.mrb[0].mxu0
      %v3770 = vadd.f32 %v3609, %v3769
      %v3771 = vpop.f32.mrb[0].mxu0
      %3772 = vdwg.mxu0
      %3773 = vmatprep.subr.bf16.mxu0 0
      %3774 = vmatpush1.bf16.msra.mxu0 %v3194
      %3775 = vmatprep.subr.bf16.mxu0 0
      %3776 = vmatpush1.bf16.msra.mxu0 %v3195
      %3777 = vmatprep.subr.bf16.mxu0 0
      %3778 = vmatpush1.bf16.msra.mxu0 %v3196
      %3779 = vmatprep.subr.bf16.mxu0 0
      %3780 = vmatpush1.bf16.msra.mxu0 %v3197
      %3781 = vmatprep.subr.bf16.mxu0 0
      %3782 = vmatpush1.bf16.msra.mxu0 %v3198
      %3783 = vmatprep.subr.bf16.mxu0 0
      %3784 = vmatpush1.bf16.msra.mxu0 %v3199
      %3785 = vmatprep.subr.bf16.mxu0 0
      %3786 = vmatpush1.bf16.msra.mxu0 %v3200
      %3787 = vmatprep.subr.bf16.mxu0 0
      %3788 = vmatpush1.bf16.msra.mxu0 %v3201
      %3789 = vmatprep.subr.bf16.mxu0 0
      %3790 = vmatpush1.bf16.msra.mxu0 %v3202
      %3791 = vmatprep.subr.bf16.mxu0 0
      %3792 = vmatpush1.bf16.msra.mxu0 %v3203
      %3793 = vmatprep.subr.bf16.mxu0 0
      %3794 = vmatpush1.bf16.msra.mxu0 %v3204
      %3795 = vmatprep.subr.bf16.mxu0 0
      %3796 = vmatpush1.bf16.msra.mxu0 %v3205
      %3797 = vmatprep.subr.bf16.mxu0 0
      %3798 = vmatpush1.bf16.msra.mxu0 %v3206
      %3799 = vmatprep.subr.bf16.mxu0 0
      %3800 = vmatpush1.bf16.msra.mxu0 %v3207
      %3801 = vmatprep.subr.bf16.mxu0 0
      %3802 = vmatpush1.bf16.msra.mxu0 %v3208
      %3803 = vmatprep.subr.bf16.mxu0 0
      %3804 = vmatpush1.bf16.msra.mxu0 %v3209
      %3805 = vmatprep.mubr.bf16.mxu0 %v2141
      %3806 = vmatmul.mubr.bf16.gmra.mrb[0].mxu0 %v2124
      %v3807 = vpop.f32.mrb[0].mxu0
      %v3808 = vadd.f32 %v3647, %v3807
      %v3809 = vpop.f32.mrb[0].mxu0
      %v3810 = vpop.f32.mrb[0].mxu0
      %v3811 = vadd.f32 %v3650, %v3810
      %v3812 = vpop.f32.mrb[0].mxu0
      %3813 = vmatprep.mubr.bf16.mxu0 %v2190
      %3814 = vmatmul.mubr.bf16.gmra.mrb[0].mxu0 %v2181
      %v3815 = vpop.f32.mrb[0].mxu0
      %v3816 = vadd.f32 %v3655, %v3815
      %v3817 = vpop.f32.mrb[0].mxu0
      %v3818 = vpop.f32.mrb[0].mxu0
      %v3819 = vadd.f32 %v3658, %v3818
      %v3820 = vpop.f32.mrb[0].mxu0
      %3821 = vmatprep.mubr.bf16.mxu0 %v2226
      %3822 = vmatmul.mubr.bf16.gmra.mrb[0].mxu0 %v2217
      %v3823 = vpop.f32.mrb[0].mxu0
      %v3824 = vadd.f32 %v3663, %v3823
      %v3825 = vpop.f32.mrb[0].mxu0
      %v3826 = vpop.f32.mrb[0].mxu0
      %v3827 = vadd.f32 %v3666, %v3826
      %v3828 = vpop.f32.mrb[0].mxu0
      %3829 = vmatprep.mubr.bf16.mxu0 %v2262
      %3830 = vmatmul.mubr.bf16.gmra.mrb[0].mxu0 %v2253
      %v3831 = vpop.f32.mrb[0].mxu0
      %v3832 = vadd.f32 %v3671, %v3831
      %v3833 = vpop.f32.mrb[0].mxu0
      %v3834 = vpop.f32.mrb[0].mxu0
      %v3835 = vadd.f32 %v3674, %v3834
      %v3836 = vpop.f32.mrb[0].mxu0
      %3837 = vmatprep.mubr.bf16.mxu0 %v2298
      %3838 = vmatmul.mubr.bf16.gmra.mrb[0].mxu0 %v2289
      %v3839 = vpop.f32.mrb[0].mxu0
      %v3840 = vadd.f32 %v3679, %v3839
      %v3841 = vpop.f32.mrb[0].mxu0
      %v3842 = vpop.f32.mrb[0].mxu0
      %v3843 = vadd.f32 %v3682, %v3842
      %v3844 = vpop.f32.mrb[0].mxu0
      %3845 = vmatprep.mubr.bf16.mxu0 %v2334
      %3846 = vmatmul.mubr.bf16.gmra.mrb[0].mxu0 %v2325
      %v3847 = vpop.f32.mrb[0].mxu0
      %v3848 = vadd.f32 %v3687, %v3847
      %v3849 = vpop.f32.mrb[0].mxu0
      %v3850 = vpop.f32.mrb[0].mxu0
      %v3851 = vadd.f32 %v3690, %v3850
      %v3852 = vpop.f32.mrb[0].mxu0
      %3853 = vmatprep.mubr.bf16.mxu0 %v2370
      %3854 = vmatmul.mubr.bf16.gmra.mrb[0].mxu0 %v2361
      %v3855 = vpop.f32.mrb[0].mxu0
      %v3856 = vadd.f32 %v3695, %v3855
      %v3857 = vpop.f32.mrb[0].mxu0
      %v3858 = vpop.f32.mrb[0].mxu0
      %v3859 = vadd.f32 %v3698, %v3858
      %v3860 = vpop.f32.mrb[0].mxu0
      %3861 = vmatprep.mubr.bf16.mxu0 %v2406
      %3862 = vmatmul.mubr.bf16.gmra.mrb[0].mxu0 %v2397
      %v3863 = vpop.f32.mrb[0].mxu0
      %v3864 = vadd.f32 %v3703, %v3863
      %v3865 = vpop.f32.mrb[0].mxu0
      %v3866 = vpop.f32.mrb[0].mxu0
      %v3867 = vadd.f32 %v3706, %v3866
      %v3868 = vpop.f32.mrb[0].mxu0
      %3869 = vmatprep.mubr.bf16.mxu0 %v2442
      %3870 = vmatmul.mubr.bf16.gmra.mrb[0].mxu0 %v2433
      %v3871 = vpop.f32.mrb[0].mxu0
      %v3872 = vadd.f32 %v3711, %v3871
      %v3873 = vpop.f32.mrb[0].mxu0
      %v3874 = vpop.f32.mrb[0].mxu0
      %v3875 = vadd.f32 %v3714, %v3874
      %v3876 = vpop.f32.mrb[0].mxu0
      %3877 = vmatprep.mubr.bf16.mxu0 %v2478
      %3878 = vmatmul.mubr.bf16.gmra.mrb[0].mxu0 %v2469
      %v3879 = vpop.f32.mrb[0].mxu0
      %v3880 = vadd.f32 %v3719, %v3879
      %v3881 = vpop.f32.mrb[0].mxu0
      %v3882 = vpop.f32.mrb[0].mxu0
      %v3883 = vadd.f32 %v3722, %v3882
      %v3884 = vpop.f32.mrb[0].mxu0
      %3885 = vmatprep.mubr.bf16.mxu0 %v2514
      %3886 = vmatmul.mubr.bf16.gmra.mrb[0].mxu0 %v2505
      %v3887 = vpop.f32.mrb[0].mxu0
      %v3888 = vadd.f32 %v3727, %v3887
      %v3889 = vpop.f32.mrb[0].mxu0
      %v3890 = vpop.f32.mrb[0].mxu0
      %v3891 = vadd.f32 %v3730, %v3890
      %v3892 = vpop.f32.mrb[0].mxu0
      %3893 = vmatprep.mubr.bf16.mxu0 %v2550
      %3894 = vmatmul.mubr.bf16.gmra.mrb[0].mxu0 %v2541
      %v3895 = vpop.f32.mrb[0].mxu0
      %v3896 = vadd.f32 %v3735, %v3895
      %v3897 = vpop.f32.mrb[0].mxu0
      %v3898 = vpop.f32.mrb[0].mxu0
      %v3899 = vadd.f32 %v3738, %v3898
      %v3900 = vpop.f32.mrb[0].mxu0
      %3901 = vmatprep.mubr.bf16.mxu0 %v2586
      %3902 = vmatmul.mubr.bf16.gmra.mrb[0].mxu0 %v2577
      %v3903 = vpop.f32.mrb[0].mxu0
      %v3904 = vadd.f32 %v3743, %v3903
      %v3905 = vpop.f32.mrb[0].mxu0
      %v3906 = vpop.f32.mrb[0].mxu0
      %v3907 = vadd.f32 %v3746, %v3906
      %v3908 = vpop.f32.mrb[0].mxu0
      %3909 = vmatprep.mubr.bf16.mxu0 %v2622
      %3910 = vmatmul.mubr.bf16.gmra.mrb[0].mxu0 %v2613
      %v3911 = vpop.f32.mrb[0].mxu0
      %v3912 = vadd.f32 %v3751, %v3911
      %v3913 = vpop.f32.mrb[0].mxu0
      %v3914 = vpop.f32.mrb[0].mxu0
      %v3915 = vadd.f32 %v3754, %v3914
      %v3916 = vpop.f32.mrb[0].mxu0
      %3917 = vmatprep.mubr.bf16.mxu0 %v2685
      %3918 = vmatmul.mubr.bf16.gmra.mrb[0].mxu0 %v2676
      %v3919 = vpop.f32.mrb[0].mxu0
      %v3920 = vadd.f32 %v3759, %v3919
      %v3921 = vpop.f32.mrb[0].mxu0
      %v3922 = vpop.f32.mrb[0].mxu0
      %v3923 = vadd.f32 %v3762, %v3922
      %v3924 = vpop.f32.mrb[0].mxu0
      %3925 = vmatprep.mubr.bf16.mxu0 %v2766
      %3926 = vmatmul.mubr.bf16.gmra.mrb[0].mxu0 %v2757
      %v3927 = vpop.f32.mrb[0].mxu0
      %v3928 = vadd.f32 %v3767, %v3927
      %v3929 = vpop.f32.mrb[0].mxu0
      %v3930 = vpop.f32.mrb[0].mxu0
      %v3931 = vadd.f32 %v3770, %v3930
      %v3932 = vpop.f32.mrb[0].mxu0
      %3933 = vdwg.mxu0
      %3934 = vmatprep.subr.bf16.mxu0 0
      %3935 = vmatpush1.bf16.msra.mxu0 %v3210
      %3936 = vmatprep.subr.bf16.mxu0 0
      %3937 = vmatpush1.bf16.msra.mxu0 %v3211
      %3938 = vmatprep.subr.bf16.mxu0 0
      %3939 = vmatpush1.bf16.msra.mxu0 %v3212
      %3940 = vmatprep.subr.bf16.mxu0 0
      %3941 = vmatpush1.bf16.msra.mxu0 %v3213
      %3942 = vmatprep.subr.bf16.mxu0 0
      %3943 = vmatpush1.bf16.msra.mxu0 %v3214
      %3944 = vmatprep.subr.bf16.mxu0 0
      %3945 = vmatpush1.bf16.msra.mxu0 %v3215
      %3946 = vmatprep.subr.bf16.mxu0 0
      %3947 = vmatpush1.bf16.msra.mxu0 %v3216
      %3948 = vmatprep.subr.bf16.mxu0 0
      %3949 = vmatpush1.bf16.msra.mxu0 %v3217
      %3950 = vmatprep.subr.bf16.mxu0 0
      %3951 = vmatpush1.bf16.msra.mxu0 0
      %3952 = vmatprep.subr.bf16.mxu0 0
      %3953 = vmatpush1.bf16.msra.mxu0 0
      %3954 = vmatprep.subr.bf16.mxu0 0
      %3955 = vmatpush1.bf16.msra.mxu0 0
      %3956 = vmatprep.subr.bf16.mxu0 0
      %3957 = vmatpush1.bf16.msra.mxu0 0
      %3958 = vmatprep.subr.bf16.mxu0 0
      %3959 = vmatpush1.bf16.msra.mxu0 0
      %3960 = vmatprep.subr.bf16.mxu0 0
      %3961 = vmatpush1.bf16.msra.mxu0 0
      %3962 = vmatprep.subr.bf16.mxu0 0
      %3963 = vmatpush1.bf16.msra.mxu0 0
      %3964 = vmatprep.subr.bf16.mxu0 0
      %3965 = vmatpush1.bf16.msra.mxu0 0
      %3966 = vmatprep.mubr.bf16.mxu0 0
      %3967 = vmatmul.mubr.bf16.gmra.mrb[0].mxu0 %v2158
      %v3968 = vpop.f32.mrb[0].mxu0
      %v3969 = vadd.f32 %v3808, %v3968
      %v3970 = vpop.f32.mrb[0].mxu0
      %v3971 = vpop.f32.mrb[0].mxu0
      %v3972 = vadd.f32 %v3811, %v3971
      %v3973 = vpop.f32.mrb[0].mxu0
      %3974 = vmatprep.mubr.bf16.mxu0 0
      %3975 = vmatmul.mubr.bf16.gmra.mrb[0].mxu0 %v2199
      %v3976 = vpop.f32.mrb[0].mxu0
      %v3977 = vadd.f32 %v3816, %v3976
      %v3978 = vpop.f32.mrb[0].mxu0
      %v3979 = vpop.f32.mrb[0].mxu0
      %v3980 = vadd.f32 %v3819, %v3979
      %v3981 = vpop.f32.mrb[0].mxu0
      %3982 = vmatprep.mubr.bf16.mxu0 0
      %3983 = vmatmul.mubr.bf16.gmra.mrb[0].mxu0 %v2235
      %v3984 = vpop.f32.mrb[0].mxu0
      %v3985 = vadd.f32 %v3824, %v3984
      %v3986 = vpop.f32.mrb[0].mxu0
      %v3987 = vpop.f32.mrb[0].mxu0
      %v3988 = vadd.f32 %v3827, %v3987
      %v3989 = vpop.f32.mrb[0].mxu0
      %3990 = vmatprep.mubr.bf16.mxu0 0
      %3991 = vmatmul.mubr.bf16.gmra.mrb[0].mxu0 %v2271
      %v3992 = vpop.f32.mrb[0].mxu0
      %v3993 = vadd.f32 %v3832, %v3992
      %v3994 = vpop.f32.mrb[0].mxu0
      %v3995 = vpop.f32.mrb[0].mxu0
      %v3996 = vadd.f32 %v3835, %v3995
      %v3997 = vpop.f32.mrb[0].mxu0
      %3998 = vmatprep.mubr.bf16.mxu0 0
      %3999 = vmatmul.mubr.bf16.gmra.mrb[0].mxu0 %v2307
      %v4000 = vpop.f32.mrb[0].mxu0
      %v4001 = vadd.f32 %v3840, %v4000
      %v4002 = vpop.f32.mrb[0].mxu0
      %v4003 = vpop.f32.mrb[0].mxu0
      %v4004 = vadd.f32 %v3843, %v4003
      %v4005 = vpop.f32.mrb[0].mxu0
      %4006 = vmatprep.mubr.bf16.mxu0 0
      %4007 = vmatmul.mubr.bf16.gmra.mrb[0].mxu0 %v2343
      %v4008 = vpop.f32.mrb[0].mxu0
      %v4009 = vadd.f32 %v3848, %v4008
      %v4010 = vpop.f32.mrb[0].mxu0
      %v4011 = vpop.f32.mrb[0].mxu0
      %v4012 = vadd.f32 %v3851, %v4011
      %v4013 = vpop.f32.mrb[0].mxu0
      %4014 = vmatprep.mubr.bf16.mxu0 0
      %4015 = vmatmul.mubr.bf16.gmra.mrb[0].mxu0 %v2379
      %v4016 = vpop.f32.mrb[0].mxu0
      %v4017 = vadd.f32 %v3856, %v4016
      %v4018 = vpop.f32.mrb[0].mxu0
      %v4019 = vpop.f32.mrb[0].mxu0
      %v4020 = vadd.f32 %v3859, %v4019
      %v4021 = vpop.f32.mrb[0].mxu0
      %4022 = vmatprep.mubr.bf16.mxu0 0
      %4023 = vmatmul.mubr.bf16.gmra.mrb[0].mxu0 %v2415
      %v4024 = vpop.f32.mrb[0].mxu0
      %v4025 = vadd.f32 %v3864, %v4024
      %v4026 = vpop.f32.mrb[0].mxu0
      %v4027 = vpop.f32.mrb[0].mxu0
      %v4028 = vadd.f32 %v3867, %v4027
      %v4029 = vpop.f32.mrb[0].mxu0
      %4030 = vmatprep.mubr.bf16.mxu0 0
      %4031 = vmatmul.mubr.bf16.gmra.mrb[0].mxu0 %v2451
      %v4032 = vpop.f32.mrb[0].mxu0
      %v4033 = vadd.f32 %v3872, %v4032
      %v4034 = vpop.f32.mrb[0].mxu0
      %v4035 = vpop.f32.mrb[0].mxu0
      %v4036 = vadd.f32 %v3875, %v4035
      %v4037 = vpop.f32.mrb[0].mxu0
      %4038 = vmatprep.mubr.bf16.mxu0 0
      %4039 = vmatmul.mubr.bf16.gmra.mrb[0].mxu0 %v2487
      %v4040 = vpop.f32.mrb[0].mxu0
      %v4041 = vadd.f32 %v3880, %v4040
      %v4042 = vpop.f32.mrb[0].mxu0
      %v4043 = vpop.f32.mrb[0].mxu0
      %v4044 = vadd.f32 %v3883, %v4043
      %v4045 = vpop.f32.mrb[0].mxu0
      %4046 = vmatprep.mubr.bf16.mxu0 0
      %4047 = vmatmul.mubr.bf16.gmra.mrb[0].mxu0 %v2523
      %v4048 = vpop.f32.mrb[0].mxu0
      %v4049 = vadd.f32 %v3888, %v4048
      %v4050 = vpop.f32.mrb[0].mxu0
      %v4051 = vpop.f32.mrb[0].mxu0
      %v4052 = vadd.f32 %v3891, %v4051
      %v4053 = vpop.f32.mrb[0].mxu0
      %4054 = vmatprep.mubr.bf16.mxu0 0
      %4055 = vmatmul.mubr.bf16.gmra.mrb[0].mxu0 %v2559
      %v4056 = vpop.f32.mrb[0].mxu0
      %v4057 = vadd.f32 %v3896, %v4056
      %v4058 = vpop.f32.mrb[0].mxu0
      %v4059 = vpop.f32.mrb[0].mxu0
      %v4060 = vadd.f32 %v3899, %v4059
      %v4061 = vpop.f32.mrb[0].mxu0
      %4062 = vmatprep.mubr.bf16.mxu0 0
      %4063 = vmatmul.mubr.bf16.gmra.mrb[0].mxu0 %v2595
      %v4064 = vpop.f32.mrb[0].mxu0
      %v4065 = vadd.f32 %v3904, %v4064
      %v4066 = vpop.f32.mrb[0].mxu0
      %v4067 = vpop.f32.mrb[0].mxu0
      %v4068 = vadd.f32 %v3907, %v4067
      %v4069 = vpop.f32.mrb[0].mxu0
      %4070 = vmatprep.mubr.bf16.mxu0 0
      %4071 = vmatmul.mubr.bf16.gmra.mrb[0].mxu0 %v2631
      %v4072 = vpop.f32.mrb[0].mxu0
      %v4073 = vadd.f32 %v3912, %v4072
      %v4074 = vpop.f32.mrb[0].mxu0
      %v4075 = vpop.f32.mrb[0].mxu0
      %v4076 = vadd.f32 %v3915, %v4075
      %v4077 = vpop.f32.mrb[0].mxu0
      %4078 = vmatprep.mubr.bf16.mxu0 0
      %4079 = vmatmul.mubr.bf16.gmra.mrb[0].mxu0 %v2694
      %v4080 = vpop.f32.mrb[0].mxu0
      %v4081 = vadd.f32 %v3920, %v4080
      %v4082 = vpop.f32.mrb[0].mxu0
      %v4083 = vpop.f32.mrb[0].mxu0
      %v4084 = vadd.f32 %v3923, %v4083
      %v4085 = vpop.f32.mrb[0].mxu0
      %4086 = vmatprep.mubr.bf16.mxu0 0
      %4087 = vmatmul.mubr.bf16.gmra.mrb[0].mxu0 %v2775
      %v4088 = vpop.f32.mrb[0].mxu0
      %v4089 = vadd.f32 %v3928, %v4088
      %v4090 = vpop.f32.mrb[0].mxu0
      %v4091 = vpop.f32.mrb[0].mxu0
      %v4092 = vadd.f32 %v3931, %v4091
      %v4093 = vpop.f32.mrb[0].mxu0
      %4094 = vdwg.mxu0
      %v4095 = vpack.c.bf16 %v3972, %v3969
      %v4096 = vpack.c.bf16 %v3980, %v3977
      %v4097 = vpack.c.bf16 %v3988, %v3985
      %v4098 = vpack.c.bf16 %v3996, %v3993
      %v4099 = vpack.c.bf16 %v4004, %v4001
      %v4100 = vpack.c.bf16 %v4012, %v4009
      %v4101 = vpack.c.bf16 %v4020, %v4017
      %v4102 = vpack.c.bf16 %v4028, %v4025
      %v4103 = vpack.c.bf16 %v4036, %v4033
      %v4104 = vpack.c.bf16 %v4044, %v4041
      %v4105 = vpack.c.bf16 %v4052, %v4049
      %v4106 = vpack.c.bf16 %v4060, %v4057
      %v4107 = vpack.c.bf16 %v4068, %v4065
      %v4108 = vpack.c.bf16 %v4076, %v4073
      %v4109 = vpack.c.bf16 %v4084, %v4081
      %v4110 = vpack.c.bf16 %v4092, %v4089
      %v4127 = vunpack.c.l.b16 %v4095
      %v4128 = vunpack.c.h.b16 %v4095
      %v4129 = vunpack.c.l.b16 %v4096
      %v4130 = vunpack.c.h.b16 %v4096
      %v4131 = vunpack.c.l.b16 %v4097
      %v4132 = vunpack.c.h.b16 %v4097
      %v4133 = vunpack.c.l.b16 %v4098
      %v4134 = vunpack.c.h.b16 %v4098
      %v4135 = vunpack.c.l.b16 %v4099
      %v4136 = vunpack.c.h.b16 %v4099
      %v4137 = vunpack.c.l.b16 %v4100
      %v4138 = vunpack.c.h.b16 %v4100
      %v4139 = vunpack.c.l.b16 %v4101
      %v4140 = vunpack.c.h.b16 %v4101
      %v4141 = vunpack.c.l.b16 %v4102
      %v4142 = vunpack.c.h.b16 %v4102
      %v4143 = vunpack.c.l.b16 %v4103
      %v4144 = vunpack.c.h.b16 %v4103
      %v4145 = vunpack.c.l.b16 %v4104
      %v4146 = vunpack.c.h.b16 %v4104
      %v4147 = vunpack.c.l.b16 %v4105
      %v4148 = vunpack.c.h.b16 %v4105
      %v4149 = vunpack.c.l.b16 %v4106
      %v4150 = vunpack.c.h.b16 %v4106
      %v4151 = vunpack.c.l.b16 %v4107
      %v4152 = vunpack.c.h.b16 %v4107
      %v4153 = vunpack.c.l.b16 %v4108
      %v4154 = vunpack.c.h.b16 %v4108
      %v4155 = vunpack.c.l.b16 %v4109
      %v4156 = vunpack.c.h.b16 %v4109
      %v4157 = vunpack.c.l.b16 %v4110
      %v4158 = vunpack.c.h.b16 %v4110
      %v4159 = vpack.c.b16 %v4127, %v4127
      %v4160 = vpack.c.b16 %v4128, %v4128
      %v4161 = vpack.c.b16 %v4129, %v4129
      %v4162 = vpack.c.b16 %v4130, %v4130
      %v4163 = vpack.c.b16 %v4131, %v4131
      %v4164 = vpack.c.b16 %v4132, %v4132
      %v4165 = vpack.c.b16 %v4133, %v4133
      %v4166 = vpack.c.b16 %v4134, %v4134
      %v4167 = vpack.c.b16 %v4135, %v4135
      %v4168 = vpack.c.b16 %v4136, %v4136
      %v4169 = vpack.c.b16 %v4137, %v4137
      %v4170 = vpack.c.b16 %v4138, %v4138
      %v4171 = vpack.c.b16 %v4139, %v4139
      %v4172 = vpack.c.b16 %v4140, %v4140
      %v4173 = vpack.c.b16 %v4141, %v4141
      %v4174 = vpack.c.b16 %v4142, %v4142
      %v4175 = vpack.c.b16 %v4143, %v4143
      %v4176 = vpack.c.b16 %v4144, %v4144
      %v4177 = vpack.c.b16 %v4145, %v4145
      %v4178 = vpack.c.b16 %v4146, %v4146
      %v4179 = vpack.c.b16 %v4147, %v4147
      %v4180 = vpack.c.b16 %v4148, %v4148
      %v4181 = vpack.c.b16 %v4149, %v4149
      %v4182 = vpack.c.b16 %v4150, %v4150
      %v4183 = vpack.c.b16 %v4151, %v4151
      %v4184 = vpack.c.b16 %v4152, %v4152
      %v4185 = vpack.c.b16 %v4153, %v4153
      %v4186 = vpack.c.b16 %v4154, %v4154
      %v4187 = vpack.c.b16 %v4155, %v4155
      %v4188 = vpack.c.b16 %v4156, %v4156
      %v4189 = vpack.c.b16 %v4157, %v4157
      %v4190 = vpack.c.b16 %v4158, %v4158
      %4223 = vst [vmem:[%s273] sm:$0xf] %v4159
      %4224 = vst [vmem:[%s273 + $0x4] sm:$0xf] %v4160
      %4225 = vst [vmem:[%s273 + $0x8] sm:$0xf] %v4161
      %4226 = vst [vmem:[%s273 + $0xc] sm:$0xf] %v4162
      %4227 = vst [vmem:[%s273 + $0x10] sm:$0xf] %v4163
      %4228 = vst [vmem:[%s273 + $0x14] sm:$0xf] %v4164
      %4229 = vst [vmem:[%s273 + $0x18] sm:$0xf] %v4165
      %4230 = vst [vmem:[%s273 + $0x1c] sm:$0xf] %v4166
      %4231 = vst [vmem:[%s273 + $0x20] sm:$0xf] %v4167
      %4232 = vst [vmem:[%s273 + $0x24] sm:$0xf] %v4168
      %4233 = vst [vmem:[%s273 + $0x28] sm:$0xf] %v4169
      %4234 = vst [vmem:[%s273 + $0x2c] sm:$0xf] %v4170
      %4235 = vst [vmem:[%s273 + $0x30] sm:$0xf] %v4171
      %4236 = vst [vmem:[%s273 + $0x34] sm:$0xf] %v4172
      %4237 = vst [vmem:[%s273 + $0x38] sm:$0xf] %v4173
      %4238 = vst [vmem:[%s273 + $0x3c] sm:$0xf] %v4174
      %4239 = vst [vmem:[%s273 + $0x40] sm:$0xf] %v4175
      %4240 = vst [vmem:[%s273 + $0x44] sm:$0xf] %v4176
      %4241 = vst [vmem:[%s273 + $0x48] sm:$0xf] %v4177
      %4242 = vst [vmem:[%s273 + $0x4c] sm:$0xf] %v4178
      %4243 = vst [vmem:[%s273 + $0x50] sm:$0xf] %v4179
      %4244 = vst [vmem:[%s273 + $0x54] sm:$0xf] %v4180
      %4245 = vst [vmem:[%s273 + $0x58] sm:$0xf] %v4181
      %4246 = vst [vmem:[%s273 + $0x5c] sm:$0xf] %v4182
      %4247 = vst [vmem:[%s273 + $0x60] sm:$0xf] %v4183
      %4248 = vst [vmem:[%s273 + $0x64] sm:$0xf] %v4184
      %4249 = vst [vmem:[%s273 + $0x68] sm:$0xf] %v4185
      %4250 = vst [vmem:[%s273 + $0x6c] sm:$0xf] %v4186
      %4251 = vst [vmem:[%s273 + $0x70] sm:$0xf] %v4187
      %4252 = vst [vmem:[%s273 + $0x74] sm:$0xf] %v4188
      %4253 = vst [vmem:[%s273 + $0x78] sm:$0xf] %v4189
      %4254 = vst [vmem:[%s273 + $0x7c] sm:$0xf] %v4190
      %v4255 = vld [vmem:[%s6] sm:$0x1]
      %v4256 = vadd.f32 %v3969, %v3972
      %v4257 = vadd.f32 %v4256, %v3977
      %v4258 = vadd.f32 %v4257, %v3980
      %v4259 = vadd.f32 %v4258, %v3985
      %v4260 = vadd.f32 %v4259, %v3988
      %v4261 = vadd.f32 %v4260, %v3993
      %v4262 = vadd.f32 %v4261, %v3996
      %v4263 = vadd.f32 %v4262, %v4001
      %v4264 = vadd.f32 %v4263, %v4004
      %v4265 = vadd.f32 %v4264, %v4009
      %v4266 = vadd.f32 %v4265, %v4012
      %v4267 = vadd.f32 %v4266, %v4017
      %v4268 = vadd.f32 %v4267, %v4020
      %v4269 = vadd.f32 %v4268, %v4025
      %v4270 = vadd.f32 %v4269, %v4028
      %v4271 = vadd.f32 %v4270, %v4033
      %v4272 = vadd.f32 %v4271, %v4036
      %v4273 = vadd.f32 %v4272, %v4041
      %v4274 = vadd.f32 %v4273, %v4044
      %v4275 = vadd.f32 %v4274, %v4049
      %v4276 = vadd.f32 %v4275, %v4052
      %v4277 = vadd.f32 %v4276, %v4057
      %v4278 = vadd.f32 %v4277, %v4060
      %v4279 = vadd.f32 %v4278, %v4065
      %v4280 = vadd.f32 %v4279, %v4068
      %v4281 = vadd.f32 %v4280, %v4073
      %v4282 = vadd.f32 %v4281, %v4076
      %v4283 = vadd.f32 %v4282, %v4081
      %v4284 = vadd.f32 %v4283, %v4084
      %v4285 = vadd.f32 %v4284, %v4089
      %v4286 = vadd.f32 %v4285, %v4092
      %v4287 = vrot.slane %v4286, 4
      %v4288 = vadd.f32 %v4286, %v4287
      %v4289 = vrot.slane %v4288, 2
      %v4290 = vadd.f32 %v4288, %v4289
      %v4291 = vrot.slane %v4290, 1
      %v4292 = vadd.f32 %v4290, %v4291
      %v4293 = vadd.f32 %v4255, %v4292
      %4294 = vst [vmem:[%s6] sm:$0x1] %v4293
      %v4295 = vld [vmem:[%s7] sm:$0x1]
      %v4296 = vmul.f32 %v3969, %v3969
      %v4297 = vmul.f32 %v3972, %v3972
      %v4298 = vmul.f32 %v3977, %v3977
      %v4299 = vmul.f32 %v3980, %v3980
      %v4300 = vmul.f32 %v3985, %v3985
      %v4301 = vmul.f32 %v3988, %v3988
      %v4302 = vmul.f32 %v3993, %v3993
      %v4303 = vmul.f32 %v3996, %v3996
      %v4304 = vmul.f32 %v4001, %v4001
      %v4305 = vmul.f32 %v4004, %v4004
      %v4306 = vmul.f32 %v4009, %v4009
      %v4307 = vmul.f32 %v4012, %v4012
      %v4308 = vmul.f32 %v4017, %v4017
      %v4309 = vmul.f32 %v4020, %v4020
      %v4310 = vmul.f32 %v4025, %v4025
      %v4311 = vmul.f32 %v4028, %v4028
      %v4312 = vmul.f32 %v4033, %v4033
      %v4313 = vmul.f32 %v4036, %v4036
      %v4314 = vmul.f32 %v4041, %v4041
      %v4315 = vmul.f32 %v4044, %v4044
      %v4316 = vmul.f32 %v4049, %v4049
      %v4317 = vmul.f32 %v4052, %v4052
      %v4318 = vmul.f32 %v4057, %v4057
      %v4319 = vmul.f32 %v4060, %v4060
      %v4320 = vmul.f32 %v4065, %v4065
      %v4321 = vmul.f32 %v4068, %v4068
      %v4322 = vmul.f32 %v4073, %v4073
      %v4323 = vmul.f32 %v4076, %v4076
      %v4324 = vmul.f32 %v4081, %v4081
      %v4325 = vmul.f32 %v4084, %v4084
      %v4326 = vmul.f32 %v4089, %v4089
      %v4327 = vmul.f32 %v4092, %v4092
      %v4328 = vadd.f32 %v4296, %v4297
      %v4329 = vadd.f32 %v4328, %v4298
      %v4330 = vadd.f32 %v4329, %v4299
      %v4331 = vadd.f32 %v4330, %v4300
      %v4332 = vadd.f32 %v4331, %v4301
      %v4333 = vadd.f32 %v4332, %v4302
      %v4334 = vadd.f32 %v4333, %v4303
      %v4335 = vadd.f32 %v4334, %v4304
      %v4336 = vadd.f32 %v4335, %v4305
      %v4337 = vadd.f32 %v4336, %v4306
      %v4338 = vadd.f32 %v4337, %v4307
      %v4339 = vadd.f32 %v4338, %v4308
      %v4340 = vadd.f32 %v4339, %v4309
      %v4341 = vadd.f32 %v4340, %v4310
      %v4342 = vadd.f32 %v4341, %v4311
      %v4343 = vadd.f32 %v4342, %v4312
      %v4344 = vadd.f32 %v4343, %v4313
      %v4345 = vadd.f32 %v4344, %v4314
      %v4346 = vadd.f32 %v4345, %v4315
      %v4347 = vadd.f32 %v4346, %v4316
      %v4348 = vadd.f32 %v4347, %v4317
      %v4349 = vadd.f32 %v4348, %v4318
      %v4350 = vadd.f32 %v4349, %v4319
      %v4351 = vadd.f32 %v4350, %v4320
      %v4352 = vadd.f32 %v4351, %v4321
      %v4353 = vadd.f32 %v4352, %v4322
      %v4354 = vadd.f32 %v4353, %v4323
      %v4355 = vadd.f32 %v4354, %v4324
      %v4356 = vadd.f32 %v4355, %v4325
      %v4357 = vadd.f32 %v4356, %v4326
      %v4358 = vadd.f32 %v4357, %v4327
      %v4359 = vrot.slane %v4358, 4
      %v4360 = vadd.f32 %v4358, %v4359
      %v4361 = vrot.slane %v4360, 2
      %v4362 = vadd.f32 %v4360, %v4361
      %v4363 = vrot.slane %v4362, 1
      %v4364 = vadd.f32 %v4362, %v4363
      %v4365 = vadd.f32 %v4295, %v4364
      %4366 = vst [vmem:[%s7] sm:$0x1] %v4365
      %p4367 = scmp.lt.s32.totalorder %s19, 1
      %s4368 = scalar_select %p4367, %s19, 1
      %s4369 = smul.addr %s4368, 32
      %s4370 = smul.addr %s4369, 4
      %s4371 = scalar_lea.vmem %s5, %s4370
      // Predicated region
      $region45: #{bottleneck_forward.6} parent=39 // pred_check
        %p4372 = pneg %p147
      $region46: #{bottleneck_forward.6} parent=39 // pred_check_branch
        %4374 = sbr.rel (%p4372) target = $region48
      $region47: #{bottleneck_forward.6} parent=39 // pred_region
        _
      $region48: #{bottleneck_forward.6} parent=39 // pred_fallthru
        _
      // Predicated region
      $region49: #{bottleneck_forward.6} parent=39 // pred_check
        %p4375 = pneg %p168
      $region50: #{bottleneck_forward.6} parent=39 // pred_check_branch
        %4377 = sbr.rel (%p4375) target = $region52
      $region51: #{bottleneck_forward.6} parent=39 // pred_region
        _
      $region52: #{bottleneck_forward.6} parent=39 // pred_fallthru
        _
      // Predicated region
      $region53: #{bottleneck_forward.6} parent=39 // pred_check
        %p4378 = pneg %p189
      $region54: #{bottleneck_forward.6} parent=39 // pred_check_branch
        %4380 = sbr.rel (%p4378) target = $region56
      $region55: #{bottleneck_forward.6} parent=39 // pred_region
        _
      $region56: #{bottleneck_forward.6} parent=39 // pred_fallthru
        _
      // Predicated region
      $region57: #{bottleneck_forward.6} parent=39 // pred_check
        %p4381 = pneg %p168
      $region58: #{bottleneck_forward.6} parent=39 // pred_check_branch
        %4383 = sbr.rel (%p4381) target = $region60
      $region59: #{bottleneck_forward.6} parent=39 // pred_region
        _
      $region60: #{bottleneck_forward.6} parent=39 // pred_fallthru
        _
      // Predicated region
      $region61: #{bottleneck_forward.6} parent=39 // pred_check
        %p4384 = pneg %p189
      $region62: #{bottleneck_forward.6} parent=39 // pred_check_branch
        %4386 = sbr.rel (%p4384) target = $region64
      $region63: #{bottleneck_forward.6} parent=39 // pred_region
        _
      $region64: #{bottleneck_forward.6} parent=39 // pred_fallthru
        _
    $region40: #{bottleneck_forward.6} parent=5 // pred_fallthru
      _
    %p4387 = scmp.le.s32.totalorder 2, %s14
    // Predicated region
    $region65: #{bottleneck_forward.6} parent=5 // pred_check
      %p4388 = pneg %p4387
    $region66: #{bottleneck_forward.6} parent=5 // pred_check_branch
      %4390 = sbr.rel (%p4388) target = $region68
    $region67: #{bottleneck_forward.6} parent=5 // pred_region
      %s4391 = ssub.s32 %s14, 2
      // Predicated region
      $region69: #{bottleneck_forward.6} parent=67 // pred_check
        %p4392 = pneg %p153
      $region70: #{bottleneck_forward.6} parent=67 // pred_check_branch
        %4394 = sbr.rel (%p4392) target = $region72
      $region71: #{bottleneck_forward.6} parent=67 // pred_region
        %p4395 = scmp.lt.s32.totalorder %s20, 1
        %s4396 = scalar_select %p4395, %s20, 1
        %s4397 = smul.addr %s4396, 32
        %s4398 = smul.addr %s4397, 4
        %s4399 = scalar_lea.vmem %s5, %s4398
      $region72: #{bottleneck_forward.6} parent=67 // pred_fallthru
        _
    $region68: #{bottleneck_forward.6} parent=5 // pred_fallthru
      _
  $region6: #{bottleneck_forward.6} parent=0 // loop_footer
    %s18 = sadd.s32 1, %s14
  $region7: #{bottleneck_forward.6} parent=0 // loop_footer_branch
    %13 = sbr.rel target = $region3
  $region8: #{bottleneck_forward.6} parent=0 // loop_exit
    _

</llo_original>
